<compile_context>
chip_gen: v5e
topology: v5e:2x2
jax: 0.10.0
libtpu: 0.0.40
codegen_flags: <defaults>
</compile_context>

<pallas_src>
import jax
import jax.numpy as jnp
from jax.experimental import pallas as pl
from jax.experimental.pallas import tpu as pltpu

_VMEM_LIMIT_BYTES = 32 * 1024 * 1024  # raise scoped VMEM (v5e default is only 16 MiB)


def _round_up(x, m):
    return ((x + m - 1) // m) * m


def _pad2d(x, rows, cols):
    r, c = x.shape
    return jnp.pad(x, ((0, rows - r), (0, cols - c)))


def _pick_tiling(n):
    """Padded node count n_p and (tm, tk) row/aggregation tiles.

    All multiples of 128, tm | n_p and tk | n_p.  tk grows with N (A stream is HBM-bound:
    bigger tiles -> closer to bandwidth roofline, fewer ~0.35us grid steps); tm is capped
    at n_p//2 so the "parallel" row axis keeps >= 2 blocks (v7x megacore) and the A tile
    stays ~1 MiB per buffer (fits the 64 MiB v7x VMEM budget with headroom).
    """
    if n <= 128:
        return 128, 128, 128
    if n <= 256:
        return 256, 128, 256
    if n <= 512:
        return 512, 256, 512
    tk = 1024
    n_p = _round_up(n, tk)
    tm = min(512, n_p // 2)
    return n_p, tm, tk


# ----------------------------------------------------------------------------
# Kernel 1 (batched over meta-paths, fused):
#   t[m] = relu((A[m] @ X) @ W1[m] + b1[m]) @ W2[m]      -> bf16
# grid = (meta-path, row blocks, aggregation K); f32 accumulator holds A@X.
# ----------------------------------------------------------------------------
def _gcn_layer1_fused_kernel(a_ref, x_ref, w1_ref, b1_ref, w2_ref, t_ref, acc_ref):
    k = pl.program_id(2)

    @pl.when(k == 0)
    def _():
        acc_ref[...] = jnp.zeros_like(acc_ref)

    # Aggregate-first ordering (in_size << hidden): acc += A_tile @ X_tile
    acc_ref[...] += jnp.dot(a_ref[...], x_ref[...],
                            preferred_element_type=jnp.float32)

    @pl.when(k == pl.num_programs(2) - 1)
    def _():
        h = jnp.dot(acc_ref[...].astype(jnp.bfloat16), w1_ref[...],
                    preferred_element_type=jnp.float32)
        h = jnp.maximum(h + b1_ref[...], 0.0)                    # bias + ReLU in f32
        t = jnp.dot(h.astype(jnp.bfloat16), w2_ref[...],
                    preferred_element_type=jnp.float32)
        t_ref[...] = t.astype(t_ref.dtype)                       # bf16 straight to HBM


def gcn_layer1_fused(a_s, x_p, w1_s, b1_s, w2_s, *, tm, tk):
    m, n_p, _ = a_s.shape
    fin = x_p.shape[1]
    hid = w1_s.shape[2]
    fout = w2_s.shape[2]
    grid = (m, n_p // tm, n_p // tk)

    flops = m * (2 * n_p * n_p * fin + 2 * n_p * fin * hid + 2 * n_p * hid * fout)
    bytes_accessed = (a_s.size * 2 + x_p.size * 2 * m * (n_p // tm)
                      + w1_s.size * 2 + w2_s.size * 2 + b1_s.size * 4
                      + m * n_p * fout * 2)

    return pl.pallas_call(
        _gcn_layer1_fused_kernel,
        out_shape=jax.ShapeDtypeStruct((m, n_p, fout), jnp.bfloat16),
        grid=grid,
        in_specs=[
            pl.BlockSpec((None, tm, tk), lambda mp, i, k: (mp, i, k)),     # A tile
            pl.BlockSpec((tk, fin), lambda mp, i, k: (k, 0)),              # X K tile
            # W1/b1/W2 have constant block indices per meta-path (resident); a
            # Buffered(1) pipeline_mode would reclaim their idle 2nd buffer on v7x.
            pl.BlockSpec((None, fin, hid), lambda mp, i, k: (mp, 0, 0)),   # W1
            pl.BlockSpec((None, 1, hid), lambda mp, i, k: (mp, 0, 0)),     # b1
            pl.BlockSpec((None, hid, fout), lambda mp, i, k: (mp, 0, 0)),  # W2
        ],
        out_specs=pl.BlockSpec((None, tm, fout), lambda mp, i, k: (mp, i, 0)),
        scratch_shapes=[pltpu.VMEM((tm, fin), jnp.float32)],
        compiler_params=pltpu.CompilerParams(
            dimension_semantics=("parallel", "parallel", "arbitrary"),
            vmem_limit_bytes=_VMEM_LIMIT_BYTES),
        cost_estimate=pl.CostEstimate(flops=int(flops), transcendentals=0,
                                      bytes_accessed=int(bytes_accessed)),
    )(a_s, x_p, w1_s, b1_s, w2_s)


# ----------------------------------------------------------------------------
# Kernel 2 (batched over meta-paths): second GraphConv aggregation with the
# semantic-attention per-node score fused into the finalize.
#   e[m] = A[m] @ t[m] + b2[m]                            -> bf16
#   s[m] = tanh(e[m] @ Wp + bp) . q                       -> f32 (per node)
# ----------------------------------------------------------------------------
def _gcn_layer2_attn_kernel(a_ref, t_ref, b2_ref, wp_ref, bp_ref, q_ref,
                            e_ref, s_ref, acc_ref):
    k = pl.program_id(2)

    @pl.when(k == 0)
    def _():
        acc_ref[...] = jnp.zeros_like(acc_ref)

    acc_ref[...] += jnp.dot(a_ref[...], t_ref[...],
                            preferred_element_type=jnp.float32)

    @pl.when(k == pl.num_programs(2) - 1)
    def _():
        e = acc_ref[...] + b2_ref[...]                     # (tm, fout) f32
        e_bf = e.astype(jnp.bfloat16)
        e_ref[...] = e_bf
        # Attention score for this node tile (saves a whole HBM read of z later).
        p = jnp.tanh(jnp.dot(e_bf, wp_ref[...],
                             preferred_element_type=jnp.float32) + bp_ref[...])
        s_ref[...] = jnp.sum(p * q_ref[...], axis=-1, keepdims=True)


def gcn_layer2_attn(a_s, t_s, b2_s, wp_p, bp_row, q_row, *, tm, tk):
    m, n_p, _ = a_s.shape
    fout = t_s.shape[2]
    hat = wp_p.shape[1]
    grid = (m, n_p // tm, n_p // tk)

    flops = m * (2 * n_p * n_p * fout + 2 * n_p * fout * hat + 3 * n_p * hat)
    transcend = m * n_p * hat
    bytes_accessed = (a_s.size * 2 + t_s.size * 2 * (n_p // tm) + wp_p.size * 2
                      + m * n_p * fout * 2 + m * n_p * 4)

    return pl.pallas_call(
        _gcn_layer2_attn_kernel,
        out_shape=(jax.ShapeDtypeStruct((m, n_p, fout), jnp.bfloat16),   # e (= z)
                   jax.ShapeDtypeStruct((m, n_p, 1), jnp.float32)),      # per-node score
        grid=grid,
        in_specs=[
            pl.BlockSpec((None, tm, tk), lambda mp, i, k: (mp, i, k)),     # A tile
            pl.BlockSpec((None, tk, fout), lambda mp, i, k: (mp, k, 0)),   # t K tile
            pl.BlockSpec((None, 1, fout), lambda mp, i, k: (mp, 0, 0)),    # b2
            pl.BlockSpec((fout, hat), lambda mp, i, k: (0, 0)),            # Wp (shared)
            pl.BlockSpec((1, hat), lambda mp, i, k: (0, 0)),               # bp
            pl.BlockSpec((1, hat), lambda mp, i, k: (0, 0)),               # q
        ],
        out_specs=[
            pl.BlockSpec((None, tm, fout), lambda mp, i, k: (mp, i, 0)),
            pl.BlockSpec((None, tm, 1), lambda mp, i, k: (mp, i, 0)),
        ],
        scratch_shapes=[pltpu.VMEM((tm, fout), jnp.float32)],
        compiler_params=pltpu.CompilerParams(
            dimension_semantics=("parallel", "parallel", "arbitrary"),
            vmem_limit_bytes=_VMEM_LIMIT_BYTES),
        cost_estimate=pl.CostEstimate(flops=int(flops), transcendentals=int(transcend),
                                      bytes_accessed=int(bytes_accessed)),
    )(a_s, t_s, b2_s, wp_p, bp_row, q_row)


# ----------------------------------------------------------------------------
# Kernel 3: node-tiled weighted combine  out = sum_m beta_m * z[m]
# beta is passed pre-broadcast as (M, 1, F) so the kernel is pure VPU work
# (no scalar extraction); z is streamed one node tile at a time, so VMEM use is
# O(M * tm * F) regardless of N.
# ----------------------------------------------------------------------------
def _semantic_combine_kernel(beta_ref, z_ref, o_ref):
    z = z_ref[...].astype(jnp.float32)                    # (M, tm, F)
    o_ref[...] = jnp.sum(z * beta_ref[...], axis=0)       # (tm, F)


def semantic_combine(beta_b, e_s, *, tm):
    m, n_p, fout = e_s.shape
    grid = (n_p // tm,)
    return pl.pallas_call(
        _semantic_combine_kernel,
        out_shape=jax.ShapeDtypeStruct((n_p, fout), jnp.float32),
        grid=grid,
        in_specs=[
            pl.BlockSpec((m, 1, fout), lambda i: (0, 0, 0)),     # beta (resident)
            pl.BlockSpec((m, tm, fout), lambda i: (0, i, 0)),    # z node tile
        ],
        out_specs=pl.BlockSpec((tm, fout), lambda i: (i, 0)),
        compiler_params=pltpu.CompilerParams(
            dimension_semantics=("parallel",),
            vmem_limit_bytes=_VMEM_LIMIT_BYTES),
        cost_estimate=pl.CostEstimate(flops=2 * m * n_p * fout, transcendentals=0,
                                      bytes_accessed=int(e_s.size * 2 + n_p * fout * 4)),
    )(beta_b, e_s)


# ----------------------------------------------------------------------------
# One-time preparation (hoisted out of the hot path) + jitted forward
# ----------------------------------------------------------------------------
def prepare_multi_layer_gcn(gs, h, gcn_params, attn_params):
    """Pad to lane-dense tiles, cast to bf16, and stack the meta-path axis ONCE.

    Keeping this out of the forward removes a full extra HBM pass over every A_hat
    (the dominant memory stream) per call.
    """
    n, in_size = h.shape
    hidden = gcn_params[0][0].shape[1]
    out_size = gcn_params[0][2].shape[1]
    wp, bp, q = attn_params
    attn_hidden = wp.shape[1]

    n_p, tm, tk = _pick_tiling(n)
    fin_p = _round_up(in_size, 128)
    hid_p = _round_up(hidden, 128)
    fout_p = _round_up(out_size, 128)
    hat_p = _round_up(attn_hidden, 128)

    x_p = _pad2d(h, n_p, fin_p).astype(jnp.bfloat16)
    a_s = jnp.stack([_pad2d(a, n_p, n_p) for a in gs]).astype(jnp.bfloat16)
    w1_s = jnp.stack([_pad2d(w1, fin_p, hid_p)
                      for (w1, _, _, _) in gcn_params]).astype(jnp.bfloat16)
    b1_s = jnp.stack([jnp.pad(b1, (0, hid_p - hidden)).reshape(1, hid_p)
                      for (_, b1, _, _) in gcn_params]).astype(jnp.float32)
    w2_s = jnp.stack([_pad2d(w2, hid_p, fout_p)
                      for (_, _, w2, _) in gcn_params]).astype(jnp.bfloat16)
    b2_s = jnp.stack([jnp.pad(b2, (0, fout_p - out_size)).reshape(1, fout_p)
                      for (_, _, _, b2) in gcn_params]).astype(jnp.float32)

    wp_p = _pad2d(wp, fout_p, hat_p).astype(jnp.bfloat16)
    bp_row = jnp.pad(bp, (0, hat_p - attn_hidden)).reshape(1, hat_p).astype(jnp.float32)
    q_row = jnp.pad(q.reshape(-1), (0, hat_p - attn_hidden)).reshape(1, hat_p).astype(jnp.float32)

    arrays = (a_s, x_p, w1_s, b1_s, w2_s, b2_s, wp_p, bp_row, q_row)
    meta = dict(n=n, out_size=out_size, tm=tm, tk=tk)
    return arrays, meta


def make_multi_layer_gcn_forward(meta):
    n, out_size = meta["n"], meta["out_size"]
    tm, tk = meta["tm"], meta["tk"]

    @jax.jit
    def forward(a_s, x_p, w1_s, b1_s, w2_s, b2_s, wp_p, bp_row, q_row):
        # Stage 1: t = relu((A @ X) @ W1 + b1) @ W2 for every meta-path (one call).
        # TODO(synk): nn.Dropout between the two GraphConvs is identity in eval mode;
        # training-mode dropout masking is not implemented here.
        t = gcn_layer1_fused(a_s, x_p, w1_s, b1_s, w2_s, tm=tm, tk=tk)
        # Stage 2: z = A @ t + b2, with the per-node attention score fused in.
        e, s = gcn_layer2_attn(a_s, t, b2_s, wp_p, bp_row, q_row, tm=tm, tk=tk)
        # Tiny (M-wide) masked mean + softmax over meta-paths in plain XLA.
        w = jnp.mean(s[:, :n, 0], axis=1)
        beta = jax.nn.softmax(w)
        # Stage 3: node-tiled weighted combine  out = sum_m beta_m * z[m]
        m, _, fout_p = e.shape
        beta_b = jnp.broadcast_to(beta.reshape(m, 1, 1), (m, 1, fout_p)).astype(jnp.float32)
        out_p = semantic_combine(beta_b, e, tm=tm)
        return out_p[:n, :out_size]

    return forward


def multi_layer_gcn(gs, h, gcn_params, attn_params):
    arrays, meta = prepare_multi_layer_gcn(gs, h, gcn_params, attn_params)
    return make_multi_layer_gcn_forward(meta)(*arrays)


def reference_forward(gs, h, gcn_params, attn_params):
    """Pure-f32 XLA reference of the PyTorch module (eval mode)."""
    wp, bp, q = attn_params
    zs = []
    for a, (w1, b1, w2, b2) in zip(gs, gcn_params):
        h1 = jax.nn.relu(a @ h @ w1 + b1)
        zs.append(a @ (h1 @ w2) + b2)
    z = jnp.stack(zs, axis=0)                               # (M, N, D)
    s = jnp.tanh(z @ wp + bp) @ q                           # (M, N, 1)
    beta = jax.nn.softmax(jnp.mean(s, axis=1), axis=0)      # (M, 1) softmax over paths
    return jnp.sum(beta[:, None, :] * z, axis=0)            # (N, D)


if __name__ == "__main__":
    key = jax.random.PRNGKey(0)
    num_meta_paths = 2
    N = 300             # number of graph nodes (pads to 512)
    in_size = 32
    hidden_size = 1000  # hard-coded in MultiLayerGCN.__init__
    out_size = 16
    attn_hidden = 128   # SemanticAttention hidden_size default

    keys = jax.random.split(key, 16)

    # node features
    h = jax.random.normal(keys[0], (N, in_size), jnp.float32)

    # dense normalized adjacencies (one per meta-path), with self-loops
    gs = []
    for i in range(num_meta_paths):
        a = (jax.random.uniform(keys[1 + i], (N, N)) < 0.05).astype(jnp.float32)
        a = jnp.maximum(a, a.T)
        a = jnp.minimum(a + jnp.eye(N, dtype=jnp.float32), 1.0)
        deg_inv_sqrt = 1.0 / jnp.sqrt(a.sum(axis=1))
        gs.append(a * deg_inv_sqrt[:, None] * deg_inv_sqrt[None, :])

    # per-meta-path GCNLayer parameters (two GraphConvs each), nonzero biases
    gcn_params = []
    for i in range(num_meta_paths):
        k1, k2, k3, k4 = jax.random.split(keys[4 + i], 4)
        w1 = jax.random.normal(k1, (in_size, hidden_size), jnp.float32) * 0.05
        b1 = jax.random.normal(k2, (hidden_size,), jnp.float32) * 0.02
        w2 = jax.random.normal(k3, (hidden_size, out_size), jnp.float32) * 0.05
        b2 = jax.random.normal(k4, (out_size,), jnp.float32) * 0.02
        gcn_params.append((w1, b1, w2, b2))

    # SemanticAttention params: Linear(out_size, 128) -> Tanh -> Linear(128, 1, no bias)
    wp = jax.random.normal(keys[10], (out_size, attn_hidden), jnp.float32) * 0.1
    bp = jax.random.normal(keys[11], (attn_hidden,), jnp.float32) * 0.02
    q = jax.random.normal(keys[12], (attn_hidden, 1), jnp.float32) * 0.1
    attn_params = (wp, bp, q)

    # One-time prep (pad/cast/stack) hoisted out of the hot path, then jitted forward.
    arrays, meta = prepare_multi_layer_gcn(gs, h, gcn_params, attn_params)
    forward = make_multi_layer_gcn_forward(meta)
    out = jax.block_until_ready(forward(*arrays))

    assert out.shape == (N, out_size) and out.dtype == jnp.float32
    assert bool(jnp.all(jnp.isfinite(out)))

    # bf16 MXU inputs give ~1% drift vs the f32 reference; check with a loose tolerance.
    ref = reference_forward(gs, h, gcn_params, attn_params)
    err = float(jnp.max(jnp.abs(out - ref)))
    scale = float(jnp.max(jnp.abs(ref)))
    assert err <= 5e-2 * (scale + 1.0), (err, scale)

    print("KERNEL_OK")
</pallas_src>

<mosaic_0001>
module attributes {stable_mosaic.version = 11 : i64} {
  func.func @_gcn_layer1_fused_kernel(%arg0: i32, %arg1: i32, %arg2: i32, %arg3: memref<1x256x512xbf16, #tpu.memory_space<vmem>>, %arg4: memref<512x128xbf16, #tpu.memory_space<vmem>>, %arg5: memref<1x128x1024xbf16, #tpu.memory_space<vmem>>, %arg6: memref<1x1x1024xf32, #tpu.memory_space<vmem>>, %arg7: memref<1x1024x128xbf16, #tpu.memory_space<vmem>>, %arg8: memref<1x256x128xbf16, #tpu.memory_space<vmem>>, %arg9: memref<256x128xf32, #tpu.memory_space<vmem>>) attributes {dimension_semantics = [#tpu.dimension_semantics<parallel>, #tpu.dimension_semantics<parallel>, #tpu.dimension_semantics<arbitrary>], iteration_bounds = array<i64: 2, 2, 1>, scalar_prefetch = 0 : i64, scratch_operands = 1 : i64, tpu.core_type = #tpu.core_type<tc>, window_params = [{transform_indices = @transform_0, window_bounds = array<i64: 1, 256, 512>}, {transform_indices = @transform_1, window_bounds = array<i64: 512, 128>}, {transform_indices = @transform_2, window_bounds = array<i64: 1, 128, 1024>}, {transform_indices = @transform_3, window_bounds = array<i64: 1, 1, 1024>}, {transform_indices = @transform_4, window_bounds = array<i64: 1, 1024, 128>}, {transform_indices = @transform_5, window_bounds = array<i64: 1, 256, 128>}]} {
    %c0_i32 = arith.constant 0 : i32
    %0 = arith.cmpi eq, %arg2, %c0_i32 : i32
    %1 = arith.extui %0 : i1 to i32
    %c0_i32_0 = arith.constant 0 : i32
    %2 = arith.cmpi ne, %1, %c0_i32_0 : i32
    scf.if %2 {
      %cst_11 = arith.constant 0.000000e+00 : f32
      %13 = vector.broadcast %cst_11 : f32 to vector<256x128xf32>
      %c0_12 = arith.constant 0 : index
      %c0_13 = arith.constant 0 : index
      %14 = vector.load %arg9[%c0_12, %c0_13] : memref<256x128xf32, #tpu.memory_space<vmem>>, vector<256x128xf32>
      tpu.vector_store %arg9[%c0_12, %c0_13], %13 {strides = array<i32>} : memref<256x128xf32, #tpu.memory_space<vmem>>, vector<256x128xf32>,
    } else {
    }
    %c0 = arith.constant 0 : index
    %c0_1 = arith.constant 0 : index
    %3 = vector.load %arg9[%c0, %c0_1] : memref<256x128xf32, #tpu.memory_space<vmem>>, vector<256x128xf32>
    %c0_2 = arith.constant 0 : index
    %c0_3 = arith.constant 0 : index
    %c0_4 = arith.constant 0 : index
    %4 = vector.load %arg3[%c0_2, %c0_3, %c0_4] : memref<1x256x512xbf16, #tpu.memory_space<vmem>>, vector<1x256x512xbf16>
    %5 = vector.shape_cast %4 : vector<1x256x512xbf16> to vector<256x512xbf16>
    %c0_5 = arith.constant 0 : index
    %c0_6 = arith.constant 0 : index
    %6 = vector.load %arg4[%c0_5, %c0_6] : memref<512x128xbf16, #tpu.memory_space<vmem>>, vector<512x128xbf16>
    %cst = arith.constant dense<0.000000e+00> : vector<256x128xf32>
    %7 = tpu.matmul %5, %6, %cst {dimension_numbers = #tpu.dot_dimension_numbers<[1], [0], [0], [1], [0, 0, 1, 1], [], []>} : vector<256x512xbf16>, vector<512x128xbf16>, vector<256x128xf32> -> vector<256x128xf32>
    %8 = arith.addf %3, %7 : vector<256x128xf32>
    %c0_7 = arith.constant 0 : index
    %c0_8 = arith.constant 0 : index
    %9 = vector.load %arg9[%c0_7, %c0_8] : memref<256x128xf32, #tpu.memory_space<vmem>>, vector<256x128xf32>
    tpu.vector_store %arg9[%c0_7, %c0_8], %8 {strides = array<i32>} : memref<256x128xf32, #tpu.memory_space<vmem>>, vector<256x128xf32>,
    %c0_i32_9 = arith.constant 0 : i32
    %10 = arith.cmpi eq, %arg2, %c0_i32_9 : i32
    %11 = arith.extui %10 : i1 to i32
    %c0_i32_10 = arith.constant 0 : i32
    %12 = arith.cmpi ne, %11, %c0_i32_10 : i32
    scf.if %12 {
      %c0_11 = arith.constant 0 : index
      %c0_12 = arith.constant 0 : index
      %13 = vector.load %arg9[%c0_11, %c0_12] : memref<256x128xf32, #tpu.memory_space<vmem>>, vector<256x128xf32>
      %14 = arith.truncf %13 : vector<256x128xf32> to vector<256x128xbf16>
      %c0_13 = arith.constant 0 : index
      %c0_14 = arith.constant 0 : index
      %c0_15 = arith.constant 0 : index
      %15 = vector.load %arg5[%c0_13, %c0_14, %c0_15] : memref<1x128x1024xbf16, #tpu.memory_space<vmem>>, vector<1x128x1024xbf16>
      %16 = vector.shape_cast %15 : vector<1x128x1024xbf16> to vector<128x1024xbf16>
      %cst_16 = arith.constant dense<0.000000e+00> : vector<256x1024xf32>
      %17 = tpu.matmul %14, %16, %cst_16 {dimension_numbers = #tpu.dot_dimension_numbers<[1], [0], [0], [1], [0, 0, 1, 1], [], []>} : vector<256x128xbf16>, vector<128x1024xbf16>, vector<256x1024xf32> -> vector<256x1024xf32>
      %c0_17 = arith.constant 0 : index
      %c0_18 = arith.constant 0 : index
      %c0_19 = arith.constant 0 : index
      %18 = vector.load %arg6[%c0_17, %c0_18, %c0_19] : memref<1x1x1024xf32, #tpu.memory_space<vmem>>, vector<1x1x1024xf32>
      %19 = vector.shape_cast %18 : vector<1x1x1024xf32> to vector<1x1024xf32>
      %20 = vector.broadcast %19 : vector<1x1024xf32> to vector<256x1024xf32>
      %21 = arith.addf %17, %20 : vector<256x1024xf32>
      %cst_20 = arith.constant 0.000000e+00 : f32
      %22 = vector.broadcast %cst_20 : f32 to vector<256x1024xf32>
      %23 = arith.maximumf %21, %22 : vector<256x1024xf32>
      %24 = arith.truncf %23 : vector<256x1024xf32> to vector<256x1024xbf16>
      %c0_21 = arith.constant 0 : index
      %c0_22 = arith.constant 0 : index
      %c0_23 = arith.constant 0 : index
      %25 = vector.load %arg7[%c0_21, %c0_22, %c0_23] : memref<1x1024x128xbf16, #tpu.memory_space<vmem>>, vector<1x1024x128xbf16>
      %26 = vector.shape_cast %25 : vector<1x1024x128xbf16> to vector<1024x128xbf16>
      %cst_24 = arith.constant dense<0.000000e+00> : vector<256x128xf32>
      %27 = tpu.matmul %24, %26, %cst_24 {dimension_numbers = #tpu.dot_dimension_numbers<[1], [0], [0], [1], [0, 0, 1, 1], [], []>} : vector<256x1024xbf16>, vector<1024x128xbf16>, vector<256x128xf32> -> vector<256x128xf32>
      %28 = arith.truncf %27 : vector<256x128xf32> to vector<256x128xbf16>
      %c0_25 = arith.constant 0 : index
      %c0_26 = arith.constant 0 : index
      %c0_27 = arith.constant 0 : index
      %29 = vector.load %arg8[%c0_25, %c0_26, %c0_27] : memref<1x256x128xbf16, #tpu.memory_space<vmem>>, vector<1x256x128xbf16>
      %30 = vector.shape_cast %29 : vector<1x256x128xbf16> to vector<256x128xbf16>
      %31 = vector.shape_cast %28 : vector<256x128xbf16> to vector<1x256x128xbf16>
      tpu.vector_store %arg8[%c0_25, %c0_26, %c0_27], %31 {strides = array<i32>} : memref<1x256x128xbf16, #tpu.memory_space<vmem>>, vector<1x256x128xbf16>,
    } else {
    }
    return
  }
  func.func @transform_0(%arg0: i32, %arg1: i32, %arg2: i32) -> (i32, i32, i32) {
    %c0_i32 = arith.constant 0 : i32
    return %arg0, %arg1, %arg2 : i32, i32, i32
  }
  func.func @transform_1(%arg0: i32, %arg1: i32, %arg2: i32) -> (i32, i32) {
    %c0_i32 = arith.constant 0 : i32
    %c0_i32_0 = arith.constant 0 : i32
    return %arg2, %c0_i32 : i32, i32
  }
  func.func @transform_2(%arg0: i32, %arg1: i32, %arg2: i32) -> (i32, i32, i32) {
    %c0_i32 = arith.constant 0 : i32
    %c0_i32_0 = arith.constant 0 : i32
    %c0_i32_1 = arith.constant 0 : i32
    return %arg0, %c0_i32, %c0_i32_0 : i32, i32, i32
  }
  func.func @transform_3(%arg0: i32, %arg1: i32, %arg2: i32) -> (i32, i32, i32) {
    %c0_i32 = arith.constant 0 : i32
    %c0_i32_0 = arith.constant 0 : i32
    %c0_i32_1 = arith.constant 0 : i32
    return %arg0, %c0_i32, %c0_i32_0 : i32, i32, i32
  }
  func.func @transform_4(%arg0: i32, %arg1: i32, %arg2: i32) -> (i32, i32, i32) {
    %c0_i32 = arith.constant 0 : i32
    %c0_i32_0 = arith.constant 0 : i32
    %c0_i32_1 = arith.constant 0 : i32
    return %arg0, %c0_i32, %c0_i32_0 : i32, i32, i32
  }
  func.func @transform_5(%arg0: i32, %arg1: i32, %arg2: i32) -> (i32, i32, i32) {
    %c0_i32 = arith.constant 0 : i32
    %c0_i32_0 = arith.constant 0 : i32
    return %arg0, %arg1, %c0_i32 : i32, i32, i32
  }
}

module attributes {stable_mosaic.version = 11 : i64} {
  func.func @_gcn_layer2_attn_kernel(%arg0: i32, %arg1: i32, %arg2: i32, %arg3: memref<1x256x512xbf16, #tpu.memory_space<vmem>>, %arg4: memref<1x512x128xbf16, #tpu.memory_space<vmem>>, %arg5: memref<1x1x128xf32, #tpu.memory_space<vmem>>, %arg6: memref<128x128xbf16, #tpu.memory_space<vmem>>, %arg7: memref<1x128xf32, #tpu.memory_space<vmem>>, %arg8: memref<1x128xf32, #tpu.memory_space<vmem>>, %arg9: memref<1x256x128xbf16, #tpu.memory_space<vmem>>, %arg10: memref<1x256x1xf32, #tpu.memory_space<vmem>>, %arg11: memref<256x128xf32, #tpu.memory_space<vmem>>) attributes {dimension_semantics = [#tpu.dimension_semantics<parallel>, #tpu.dimension_semantics<parallel>, #tpu.dimension_semantics<arbitrary>], iteration_bounds = array<i64: 2, 2, 1>, scalar_prefetch = 0 : i64, scratch_operands = 1 : i64, tpu.core_type = #tpu.core_type<tc>, window_params = [{transform_indices = @transform_0, window_bounds = array<i64: 1, 256, 512>}, {transform_indices = @transform_1, window_bounds = array<i64: 1, 512, 128>}, {transform_indices = @transform_2, window_bounds = array<i64: 1, 1, 128>}, {pipeline_mode = #tpu.pipeline_mode<synchronous>, transform_indices = @transform_3, window_bounds = array<i64: 128, 128>}, {pipeline_mode = #tpu.pipeline_mode<synchronous>, transform_indices = @transform_4, window_bounds = array<i64: 1, 128>}, {pipeline_mode = #tpu.pipeline_mode<synchronous>, transform_indices = @transform_5, window_bounds = array<i64: 1, 128>}, {transform_indices = @transform_6, window_bounds = array<i64: 1, 256, 128>}, {transform_indices = @transform_7, window_bounds = array<i64: 1, 256, 1>}]} {
    %c0_i32 = arith.constant 0 : i32
    %0 = arith.cmpi eq, %arg2, %c0_i32 : i32
    %1 = arith.extui %0 : i1 to i32
    %c0_i32_0 = arith.constant 0 : i32
    %2 = arith.cmpi ne, %1, %c0_i32_0 : i32
    scf.if %2 {
      %cst_12 = arith.constant 0.000000e+00 : f32
      %14 = vector.broadcast %cst_12 : f32 to vector<256x128xf32>
      %c0_13 = arith.constant 0 : index
      %c0_14 = arith.constant 0 : index
      %15 = vector.load %arg11[%c0_13, %c0_14] : memref<256x128xf32, #tpu.memory_space<vmem>>, vector<256x128xf32>
      tpu.vector_store %arg11[%c0_13, %c0_14], %14 {strides = array<i32>} : memref<256x128xf32, #tpu.memory_space<vmem>>, vector<256x128xf32>,
    } else {
    }
    %c0 = arith.constant 0 : index
    %c0_1 = arith.constant 0 : index
    %3 = vector.load %arg11[%c0, %c0_1] : memref<256x128xf32, #tpu.memory_space<vmem>>, vector<256x128xf32>
    %c0_2 = arith.constant 0 : index
    %c0_3 = arith.constant 0 : index
    %c0_4 = arith.constant 0 : index
    %4 = vector.load %arg3[%c0_2, %c0_3, %c0_4] : memref<1x256x512xbf16, #tpu.memory_space<vmem>>, vector<1x256x512xbf16>
    %5 = vector.shape_cast %4 : vector<1x256x512xbf16> to vector<256x512xbf16>
    %c0_5 = arith.constant 0 : index
    %c0_6 = arith.constant 0 : index
    %c0_7 = arith.constant 0 : index
    %6 = vector.load %arg4[%c0_5, %c0_6, %c0_7] : memref<1x512x128xbf16, #tpu.memory_space<vmem>>, vector<1x512x128xbf16>
    %7 = vector.shape_cast %6 : vector<1x512x128xbf16> to vector<512x128xbf16>
    %cst = arith.constant dense<0.000000e+00> : vector<256x128xf32>
    %8 = tpu.matmul %5, %7, %cst {dimension_numbers = #tpu.dot_dimension_numbers<[1], [0], [0], [1], [0, 0, 1, 1], [], []>} : vector<256x512xbf16>, vector<512x128xbf16>, vector<256x128xf32> -> vector<256x128xf32>
    %9 = arith.addf %3, %8 : vector<256x128xf32>
    %c0_8 = arith.constant 0 : index
    %c0_9 = arith.constant 0 : index
    %10 = vector.load %arg11[%c0_8, %c0_9] : memref<256x128xf32, #tpu.memory_space<vmem>>, vector<256x128xf32>
    tpu.vector_store %arg11[%c0_8, %c0_9], %9 {strides = array<i32>} : memref<256x128xf32, #tpu.memory_space<vmem>>, vector<256x128xf32>,
    %c0_i32_10 = arith.constant 0 : i32
    %11 = arith.cmpi eq, %arg2, %c0_i32_10 : i32
    %12 = arith.extui %11 : i1 to i32
    %c0_i32_11 = arith.constant 0 : i32
    %13 = arith.cmpi ne, %12, %c0_i32_11 : i32
    scf.if %13 {
      %c0_12 = arith.constant 0 : index
      %c0_13 = arith.constant 0 : index
      %14 = vector.load %arg11[%c0_12, %c0_13] : memref<256x128xf32, #tpu.memory_space<vmem>>, vector<256x128xf32>
      %c0_14 = arith.constant 0 : index
      %c0_15 = arith.constant 0 : index
      %c0_16 = arith.constant 0 : index
      %15 = vector.load %arg5[%c0_14, %c0_15, %c0_16] : memref<1x1x128xf32, #tpu.memory_space<vmem>>, vector<1x1x128xf32>
      %16 = vector.shape_cast %15 : vector<1x1x128xf32> to vector<1x128xf32>
      %17 = vector.broadcast %16 : vector<1x128xf32> to vector<256x128xf32>
      %18 = arith.addf %14, %17 : vector<256x128xf32>
      %19 = arith.truncf %18 : vector<256x128xf32> to vector<256x128xbf16>
      %c0_17 = arith.constant 0 : index
      %c0_18 = arith.constant 0 : index
      %c0_19 = arith.constant 0 : index
      %20 = vector.load %arg9[%c0_17, %c0_18, %c0_19] : memref<1x256x128xbf16, #tpu.memory_space<vmem>>, vector<1x256x128xbf16>
      %21 = vector.shape_cast %20 : vector<1x256x128xbf16> to vector<256x128xbf16>
      %22 = vector.shape_cast %19 : vector<256x128xbf16> to vector<1x256x128xbf16>
      tpu.vector_store %arg9[%c0_17, %c0_18, %c0_19], %22 {strides = array<i32>} : memref<1x256x128xbf16, #tpu.memory_space<vmem>>, vector<1x256x128xbf16>,
      %c0_20 = arith.constant 0 : index
      %c0_21 = arith.constant 0 : index
      %23 = vector.load %arg6[%c0_20, %c0_21] : memref<128x128xbf16, #tpu.memory_space<vmem>>, vector<128x128xbf16>
      %cst_22 = arith.constant dense<0.000000e+00> : vector<256x128xf32>
      %24 = tpu.matmul %19, %23, %cst_22 {dimension_numbers = #tpu.dot_dimension_numbers<[1], [0], [0], [1], [0, 0, 1, 1], [], []>} : vector<256x128xbf16>, vector<128x128xbf16>, vector<256x128xf32> -> vector<256x128xf32>
      %c0_23 = arith.constant 0 : index
      %c0_24 = arith.constant 0 : index
      %25 = vector.load %arg7[%c0_23, %c0_24] : memref<1x128xf32, #tpu.memory_space<vmem>>, vector<1x128xf32>
      %26 = vector.broadcast %25 : vector<1x128xf32> to vector<256x128xf32>
      %27 = arith.addf %24, %26 : vector<256x128xf32>
      %28 = math.tanh %27 : vector<256x128xf32>
      %c0_25 = arith.constant 0 : index
      %c0_26 = arith.constant 0 : index
      %29 = vector.load %arg8[%c0_25, %c0_26] : memref<1x128xf32, #tpu.memory_space<vmem>>, vector<1x128xf32>
      %30 = vector.broadcast %29 : vector<1x128xf32> to vector<256x128xf32>
      %31 = arith.mulf %28, %30 : vector<256x128xf32>
      %cst_27 = arith.constant dense<0.000000e+00> : vector<256xf32>
      %32 = vector.multi_reduction <add>, %31, %cst_27 [1] : vector<256x128xf32> to vector<256xf32>
      %33 = vector.shape_cast %32 : vector<256xf32> to vector<256x1xf32>
      %c0_28 = arith.constant 0 : index
      %c0_29 = arith.constant 0 : index
      %c0_30 = arith.constant 0 : index
      %34 = vector.load %arg10[%c0_28, %c0_29, %c0_30] : memref<1x256x1xf32, #tpu.memory_space<vmem>>, vector<1x256x1xf32>
      %35 = vector.shape_cast %34 : vector<1x256x1xf32> to vector<256x1xf32>
      %36 = vector.shape_cast %33 : vector<256x1xf32> to vector<1x256x1xf32>
      tpu.vector_store %arg10[%c0_28, %c0_29, %c0_30], %36 {strides = array<i32>} : memref<1x256x1xf32, #tpu.memory_space<vmem>>, vector<1x256x1xf32>,
    } else {
    }
    return
  }
  func.func @transform_0(%arg0: i32, %arg1: i32, %arg2: i32) -> (i32, i32, i32) {
    %c0_i32 = arith.constant 0 : i32
    return %arg0, %arg1, %arg2 : i32, i32, i32
  }
  func.func @transform_1(%arg0: i32, %arg1: i32, %arg2: i32) -> (i32, i32, i32) {
    %c0_i32 = arith.constant 0 : i32
    %c0_i32_0 = arith.constant 0 : i32
    return %arg0, %arg2, %c0_i32 : i32, i32, i32
  }
  func.func @transform_2(%arg0: i32, %arg1: i32, %arg2: i32) -> (i32, i32, i32) {
    %c0_i32 = arith.constant 0 : i32
    %c0_i32_0 = arith.constant 0 : i32
    %c0_i32_1 = arith.constant 0 : i32
    return %arg0, %c0_i32, %c0_i32_0 : i32, i32, i32
  }
  func.func @transform_3(%arg0: i32, %arg1: i32, %arg2: i32) -> (i32, i32) {
    %c0_i32 = arith.constant 0 : i32
    %c0_i32_0 = arith.constant 0 : i32
    %c0_i32_1 = arith.constant 0 : i32
    return %c0_i32, %c0_i32_0 : i32, i32
  }
  func.func @transform_4(%arg0: i32, %arg1: i32, %arg2: i32) -> (i32, i32) {
    %c0_i32 = arith.constant 0 : i32
    %c0_i32_0 = arith.constant 0 : i32
    %c0_i32_1 = arith.constant 0 : i32
    return %c0_i32, %c0_i32_0 : i32, i32
  }
  func.func @transform_5(%arg0: i32, %arg1: i32, %arg2: i32) -> (i32, i32) {
    %c0_i32 = arith.constant 0 : i32
    %c0_i32_0 = arith.constant 0 : i32
    %c0_i32_1 = arith.constant 0 : i32
    return %c0_i32, %c0_i32_0 : i32, i32
  }
  func.func @transform_6(%arg0: i32, %arg1: i32, %arg2: i32) -> (i32, i32, i32) {
    %c0_i32 = arith.constant 0 : i32
    %c0_i32_0 = arith.constant 0 : i32
    return %arg0, %arg1, %c0_i32 : i32, i32, i32
  }
  func.func @transform_7(%arg0: i32, %arg1: i32, %arg2: i32) -> (i32, i32, i32) {
    %c0_i32 = arith.constant 0 : i32
    %c0_i32_0 = arith.constant 0 : i32
    return %arg0, %arg1, %c0_i32 : i32, i32, i32
  }
}

module attributes {stable_mosaic.version = 11 : i64} {
  func.func @_semantic_combine_kernel(%arg0: i32, %arg1: memref<2x1x128xf32, #tpu.memory_space<vmem>>, %arg2: memref<2x256x128xbf16, #tpu.memory_space<vmem>>, %arg3: memref<256x128xf32, #tpu.memory_space<vmem>>) attributes {dimension_semantics = [#tpu.dimension_semantics<parallel>], iteration_bounds = array<i64: 2>, scalar_prefetch = 0 : i64, scratch_operands = 0 : i64, tpu.core_type = #tpu.core_type<tc>, window_params = [{pipeline_mode = #tpu.pipeline_mode<synchronous>, transform_indices = @transform_0, window_bounds = array<i64: 2, 1, 128>}, {transform_indices = @transform_1, window_bounds = array<i64: 2, 256, 128>}, {transform_indices = @transform_2, window_bounds = array<i64: 256, 128>}]} {
    %c0 = arith.constant 0 : index
    %c0_0 = arith.constant 0 : index
    %c0_1 = arith.constant 0 : index
    %0 = vector.load %arg2[%c0, %c0_0, %c0_1] : memref<2x256x128xbf16, #tpu.memory_space<vmem>>, vector<2x256x128xbf16>
    %1 = arith.extf %0 : vector<2x256x128xbf16> to vector<2x256x128xf32>
    %c0_2 = arith.constant 0 : index
    %c0_3 = arith.constant 0 : index
    %c0_4 = arith.constant 0 : index
    %2 = vector.load %arg1[%c0_2, %c0_3, %c0_4] : memref<2x1x128xf32, #tpu.memory_space<vmem>>, vector<2x1x128xf32>
    %3 = vector.broadcast %2 : vector<2x1x128xf32> to vector<2x256x128xf32>
    %4 = arith.mulf %1, %3 : vector<2x256x128xf32>
    %cst = arith.constant dense<0.000000e+00> : vector<256x128xf32>
    %5 = vector.multi_reduction <add>, %4, %cst [0] : vector<2x256x128xf32> to vector<256x128xf32>
    %c0_5 = arith.constant 0 : index
    %c0_6 = arith.constant 0 : index
    %6 = vector.load %arg3[%c0_5, %c0_6] : memref<256x128xf32, #tpu.memory_space<vmem>>, vector<256x128xf32>
    tpu.vector_store %arg3[%c0_5, %c0_6], %5 {strides = array<i32>} : memref<256x128xf32, #tpu.memory_space<vmem>>, vector<256x128xf32>,
    return
  }
  func.func @transform_0(%arg0: i32) -> (i32, i32, i32) {
    %c0_i32 = arith.constant 0 : i32
    %c0_i32_0 = arith.constant 0 : i32
    %c0_i32_1 = arith.constant 0 : i32
    %c0_i32_2 = arith.constant 0 : i32
    return %c0_i32, %c0_i32_0, %c0_i32_1 : i32, i32, i32
  }
  func.func @transform_1(%arg0: i32) -> (i32, i32, i32) {
    %c0_i32 = arith.constant 0 : i32
    %c0_i32_0 = arith.constant 0 : i32
    %c0_i32_1 = arith.constant 0 : i32
    return %c0_i32, %arg0, %c0_i32_0 : i32, i32, i32
  }
  func.func @transform_2(%arg0: i32) -> (i32, i32) {
    %c0_i32 = arith.constant 0 : i32
    %c0_i32_0 = arith.constant 0 : i32
    return %arg0, %c0_i32 : i32, i32
  }
}

</mosaic_0001>

<llo_original>
// kernel: forward.5
$region0: #{forward.5}
  #allocation0 [shape = 'u32[]', space=smem, size = 0x4, offset = 0x4, fixed_abs, tag = 'smem constant byte address 0x4 - core index']
  #allocation1 [shape = 'u32[72,128]{1,0:T(1,128)}', space=vmem, size = 0x9000, scoped, tag = 'internal scratch']
  %s0 = inlined_call_operand.vmem [shape: f32[2,1,128], index: 0, kind: input, shape index: {}]
  %s1 = inlined_call_operand.vmem [shape: bf16[2,512,128], index: 1, kind: input, shape index: {}]
  %s2 = inlined_call_operand.vmem [shape: f32[512,128], index: 2, kind: output, shape index: {}]
  %s3 = sld [smem:[#allocation0]]
  $region82: #{forward.5} parent=0
    _
  %s5 = ssub.s32 1, %s3
  %s6 = scalar_select 0, %s5, %s3
  $region1: #{forward.5} parent=0
    #allocation2 [shape = 'u8[262144]{0}', space=vmem, size = 0x40000, scoped, tag = 'input window, operand 1']
    loop: start=0, step=1, limit=4
    $region2: #{forward.5} parent=1 // loop_pre_header
      _
    $region3: #{forward.5} parent=1 // loop_header
      %s8 = sphi 0, %s12
      %p9 = scmp.ge.s32.totalorder %s8, 4
      %s16 = sphi 0, %s16
      %s18 = sphi 0, %s16
      %s19 = sphi 0, %s18
      %s33 = sphi 0, %s19
      %s39 = sphi 0, %s41
      %s42 = sphi 0, %s39
      %s43 = sphi 0, %s42
      %s59 = sphi 0, %s43
      %s65 = sphi 0, %s67
      %s68 = sphi 0, %s65
      %s69 = sphi 0, %s68
      %s85 = sphi 0, %s69
    $region4: #{forward.5} parent=1 // loop_header_branch
      %11 = sbr.rel (%p9) target = $region8
    $region5: #{forward.5} parent=1 // loop_body
      %s13 = ssub.s32 %s8, 1
      %s14 = ssub.s32 %s8, 2
      %s15 = sadd.s32 %s8, 1
      %s17 = sadd.s32 %s16, 1
      %p20 = scmp.eq.s32.totalorder %s8, 1
      %p21 = scmp.ne.s32.totalorder %s16, %s18
      %p22 = scmp.eq.s32.totalorder %s8, 0
      %p23 = por %p21, %p22
      %p24 = scmp.ne.s32.totalorder %s16, %s18
      %p25 = scmp.eq.s32.totalorder %s13, 1
      %p26 = por %p24, %p25
      %p27 = scmp.ne.s32.totalorder %s18, %s19
      %p28 = scmp.eq.s32.totalorder %s13, 0
      %p29 = por %p27, %p28
      %p30 = scmp.ne.s32.totalorder %s18, %s19
      %p31 = scmp.eq.s32.totalorder %s14, 1
      %p32 = por %p30, %p31
      %p34 = scmp.ne.s32.totalorder %s19, %s33
      %p35 = scmp.eq.s32.totalorder %s14, 0
      %p36 = por %p34, %p35
      %s37 = ssub.s32 %s8, %s15
      %p38 = scmp.eq.s32.totalorder %s37, 0
      %s40 = sadd.s32 %s39, 1
      %s41 = scalar_select %p38, %s39, %s40
      %p44 = pneg %p38
      %p45 = scmp.eq.s32.totalorder %s8, 1
      %p46 = por %p44, %p45
      %p47 = scmp.ne.s32.totalorder %s39, %s42
      %p48 = scmp.eq.s32.totalorder %s8, 0
      %p49 = por %p47, %p48
      %p50 = scmp.ne.s32.totalorder %s39, %s42
      %p51 = scmp.eq.s32.totalorder %s13, 1
      %p52 = por %p50, %p51
      %p53 = scmp.ne.s32.totalorder %s42, %s43
      %p54 = scmp.eq.s32.totalorder %s13, 0
      %p55 = por %p53, %p54
      %p56 = scmp.ne.s32.totalorder %s42, %s43
      %p57 = scmp.eq.s32.totalorder %s14, 1
      %p58 = por %p56, %p57
      %p60 = scmp.ne.s32.totalorder %s43, %s59
      %p61 = scmp.eq.s32.totalorder %s14, 0
      %p62 = por %p60, %p61
      %s63 = ssub.s32 %s8, %s15
      %p64 = scmp.eq.s32.totalorder %s63, 0
      %s66 = sadd.s32 %s65, 1
      %s67 = scalar_select %p64, %s65, %s66
      %p70 = pneg %p64
      %p71 = scmp.eq.s32.totalorder %s8, 1
      %p72 = por %p70, %p71
      %p73 = scmp.ne.s32.totalorder %s65, %s68
      %p74 = scmp.eq.s32.totalorder %s8, 0
      %p75 = por %p73, %p74
      %p76 = scmp.ne.s32.totalorder %s65, %s68
      %p77 = scmp.eq.s32.totalorder %s13, 1
      %p78 = por %p76, %p77
      %p79 = scmp.ne.s32.totalorder %s68, %s69
      %p80 = scmp.eq.s32.totalorder %s13, 0
      %p81 = por %p79, %p80
      %p82 = scmp.ne.s32.totalorder %s68, %s69
      %p83 = scmp.eq.s32.totalorder %s14, 1
      %p84 = por %p82, %p83
      %p86 = scmp.ne.s32.totalorder %s69, %s85
      %p87 = scmp.eq.s32.totalorder %s14, 0
      %p88 = por %p86, %p87
      %p89 = scmp.le.s32.totalorder 1, %s8
      %p90 = scmp.lt.s32.totalorder %s8, 3
      %p91 = pnand %p89, %p90
      %p92 = pneg %p91
      // Predicated region
      $region9: #{forward.5} parent=5 // pred_check
        _
      $region10: #{forward.5} parent=5 // pred_check_branch
        %94 = sbr.rel (%p91) target = $region12
      $region11: #{forward.5} parent=5 // pred_region
        %s95 = ssub.s32 %s8, 1
        // Predicated region
        $region13: #{forward.5} parent=11 // pred_check
          %p96 = pneg %p29
        $region14: #{forward.5} parent=11 // pred_check_branch
          %98 = sbr.rel (%p96) target = $region16
        $region15: #{forward.5} parent=11 // pred_region
          _
        $region16: #{forward.5} parent=11 // pred_fallthru
          _
      $region12: #{forward.5} parent=5 // pred_fallthru
        _
      %p99 = scmp.lt.s32.totalorder %s8, 2
      // Predicated region
      $region17: #{forward.5} parent=5 // pred_check
        %p100 = pneg %p99
      $region18: #{forward.5} parent=5 // pred_check_branch
        %102 = sbr.rel (%p100) target = $region20
      $region19: #{forward.5} parent=5 // pred_region
        // Predicated region
        $region21: #{forward.5} parent=19 // pred_check
          %p103 = pneg %p49
        $region22: #{forward.5} parent=19 // pred_check_branch
          %105 = sbr.rel (%p103) target = $region24
        $region23: #{forward.5} parent=19 // pred_region
          %s106 = sand.u32 %s39, 1
          %s107 = sand.u32 %s39, 1
          %s108 = smul.addr %s107, 256
          %s109 = scalar_lea.vmem [#allocation2], %s108
          %s110 = smul.u32 32, %s8
          %s111 = smul.addr %s110, 4
          %s112 = scalar_lea.vmem %s1, %s111
          // Predicated region
          $region25: #{forward.5} parent=23 // pred_check
            _
          $region26: #{forward.5} parent=23 // pred_check_branch
            %114 = sbr.rel (0) target = $region28
          $region27: #{forward.5} parent=23 // pred_region
            // Predicated region
            $region29: #{forward.5} parent=27 // pred_check
              _
            $region30: #{forward.5} parent=27 // pred_check_branch
              %116 = sbr.rel target = $region32
            $region31: #{forward.5} parent=27 // pred_region
              // Predicated region
              $region44: #{forward.5} parent=31 // pred_check
                _
              $region45: #{forward.5} parent=31 // pred_check_branch
                %258 = sbr.rel (0) target = $region47
              $region46: #{forward.5} parent=31 // pred_region
                loop: start=0, step=1, limit=1
                $region48: #{forward.5} parent=46 // loop_pre_header
                  _
                $region49: #{forward.5} parent=46 // loop_header
                  %s260 = sphi 0, %s264
                  %p261 = scmp.ge.s32.totalorder %s260, 1
                  %s265 = sphi %s112, %s112
                  %s266 = sphi %s109, %s109
                $region50: #{forward.5} parent=46 // loop_header_branch
                  %263 = sbr.rel (%p261) target = $region54
                $region51: #{forward.5} parent=46 // loop_body
                  _
                $region52: #{forward.5} parent=46 // loop_footer
                  %s264 = sadd.s32 1, %s260
                $region53: #{forward.5} parent=46 // loop_footer_branch
                  %259 = sbr.rel target = $region49
                $region54: #{forward.5} parent=46 // loop_exit
                  _
                %s268 = ssub.s32 16, 1
                loop: start=0, step=1, limit=1
                $region55: #{forward.5} parent=46 // loop_pre_header
                  _
                $region56: #{forward.5} parent=46 // loop_header
                  %s270 = sphi 0, %s274
                  %p271 = scmp.ge.s32.totalorder %s270, 1
                  %s275 = sphi %s112, %s112
                  %s276 = sphi %s109, %s109
                $region57: #{forward.5} parent=46 // loop_header_branch
                  %273 = sbr.rel (%p271) target = $region61
                $region58: #{forward.5} parent=46 // loop_body
                  %v277 = vld [vmem:[%s275] sm:%s268]
                  %278 = vst [vmem:[%s276] sm:%s268] %v277
                  %v279 = vld [vmem:[%s275 + $0x4] sm:%s268]
                  %280 = vst [vmem:[%s276 + $0x4] sm:%s268] %v279
                  %v281 = vld [vmem:[%s275 + $0x8] sm:%s268]
                  %282 = vst [vmem:[%s276 + $0x8] sm:%s268] %v281
                  %v283 = vld [vmem:[%s275 + $0xc] sm:%s268]
                  %284 = vst [vmem:[%s276 + $0xc] sm:%s268] %v283
                  %v285 = vld [vmem:[%s275 + $0x10] sm:%s268]
                  %286 = vst [vmem:[%s276 + $0x10] sm:%s268] %v285
                  %v287 = vld [vmem:[%s275 + $0x14] sm:%s268]
                  %288 = vst [vmem:[%s276 + $0x14] sm:%s268] %v287
                  %v289 = vld [vmem:[%s275 + $0x18] sm:%s268]
                  %290 = vst [vmem:[%s276 + $0x18] sm:%s268] %v289
                  %v291 = vld [vmem:[%s275 + $0x1c] sm:%s268]
                  %292 = vst [vmem:[%s276 + $0x1c] sm:%s268] %v291
                  %v293 = vld [vmem:[%s275 + $0x20] sm:%s268]
                  %294 = vst [vmem:[%s276 + $0x20] sm:%s268] %v293
                  %v295 = vld [vmem:[%s275 + $0x24] sm:%s268]
                  %296 = vst [vmem:[%s276 + $0x24] sm:%s268] %v295
                  %v297 = vld [vmem:[%s275 + $0x28] sm:%s268]
                  %298 = vst [vmem:[%s276 + $0x28] sm:%s268] %v297
                  %v299 = vld [vmem:[%s275 + $0x2c] sm:%s268]
                  %300 = vst [vmem:[%s276 + $0x2c] sm:%s268] %v299
                  %v301 = vld [vmem:[%s275 + $0x30] sm:%s268]
                  %302 = vst [vmem:[%s276 + $0x30] sm:%s268] %v301
                  %v303 = vld [vmem:[%s275 + $0x34] sm:%s268]
                  %304 = vst [vmem:[%s276 + $0x34] sm:%s268] %v303
                  %v305 = vld [vmem:[%s275 + $0x38] sm:%s268]
                  %306 = vst [vmem:[%s276 + $0x38] sm:%s268] %v305
                  %v307 = vld [vmem:[%s275 + $0x3c] sm:%s268]
                  %308 = vst [vmem:[%s276 + $0x3c] sm:%s268] %v307
                  %v309 = vld [vmem:[%s275 + $0x40] sm:%s268]
                  %310 = vst [vmem:[%s276 + $0x40] sm:%s268] %v309
                  %v311 = vld [vmem:[%s275 + $0x44] sm:%s268]
                  %312 = vst [vmem:[%s276 + $0x44] sm:%s268] %v311
                  %v313 = vld [vmem:[%s275 + $0x48] sm:%s268]
                  %314 = vst [vmem:[%s276 + $0x48] sm:%s268] %v313
                  %v315 = vld [vmem:[%s275 + $0x4c] sm:%s268]
                  %316 = vst [vmem:[%s276 + $0x4c] sm:%s268] %v315
                  %v317 = vld [vmem:[%s275 + $0x50] sm:%s268]
                  %318 = vst [vmem:[%s276 + $0x50] sm:%s268] %v317
                  %v319 = vld [vmem:[%s275 + $0x54] sm:%s268]
                  %320 = vst [vmem:[%s276 + $0x54] sm:%s268] %v319
                  %v321 = vld [vmem:[%s275 + $0x58] sm:%s268]
                  %322 = vst [vmem:[%s276 + $0x58] sm:%s268] %v321
                  %v323 = vld [vmem:[%s275 + $0x5c] sm:%s268]
                  %324 = vst [vmem:[%s276 + $0x5c] sm:%s268] %v323
                  %v325 = vld [vmem:[%s275 + $0x60] sm:%s268]
                  %326 = vst [vmem:[%s276 + $0x60] sm:%s268] %v325
                  %v327 = vld [vmem:[%s275 + $0x64] sm:%s268]
                  %328 = vst [vmem:[%s276 + $0x64] sm:%s268] %v327
                  %v329 = vld [vmem:[%s275 + $0x68] sm:%s268]
                  %330 = vst [vmem:[%s276 + $0x68] sm:%s268] %v329
                  %v331 = vld [vmem:[%s275 + $0x6c] sm:%s268]
                  %332 = vst [vmem:[%s276 + $0x6c] sm:%s268] %v331
                  %v333 = vld [vmem:[%s275 + $0x70] sm:%s268]
                  %334 = vst [vmem:[%s276 + $0x70] sm:%s268] %v333
                  %v335 = vld [vmem:[%s275 + $0x74] sm:%s268]
                  %336 = vst [vmem:[%s276 + $0x74] sm:%s268] %v335
                  %v337 = vld [vmem:[%s275 + $0x78] sm:%s268]
                  %338 = vst [vmem:[%s276 + $0x78] sm:%s268] %v337
                  %v339 = vld [vmem:[%s275 + $0x7c] sm:%s268]
                  %340 = vst [vmem:[%s276 + $0x7c] sm:%s268] %v339
                  %v341 = vld [vmem:[%s275 + $0x100] sm:%s268]
                  %342 = vst [vmem:[%s276 + $0x80] sm:%s268] %v341
                  %v343 = vld [vmem:[%s275 + $0x104] sm:%s268]
                  %344 = vst [vmem:[%s276 + $0x84] sm:%s268] %v343
                  %v345 = vld [vmem:[%s275 + $0x108] sm:%s268]
                  %346 = vst [vmem:[%s276 + $0x88] sm:%s268] %v345
                  %v347 = vld [vmem:[%s275 + $0x10c] sm:%s268]
                  %348 = vst [vmem:[%s276 + $0x8c] sm:%s268] %v347
                  %v349 = vld [vmem:[%s275 + $0x110] sm:%s268]
                  %350 = vst [vmem:[%s276 + $0x90] sm:%s268] %v349
                  %v351 = vld [vmem:[%s275 + $0x114] sm:%s268]
                  %352 = vst [vmem:[%s276 + $0x94] sm:%s268] %v351
                  %v353 = vld [vmem:[%s275 + $0x118] sm:%s268]
                  %354 = vst [vmem:[%s276 + $0x98] sm:%s268] %v353
                  %v355 = vld [vmem:[%s275 + $0x11c] sm:%s268]
                  %356 = vst [vmem:[%s276 + $0x9c] sm:%s268] %v355
                  %v357 = vld [vmem:[%s275 + $0x120] sm:%s268]
                  %358 = vst [vmem:[%s276 + $0xa0] sm:%s268] %v357
                  %v359 = vld [vmem:[%s275 + $0x124] sm:%s268]
                  %360 = vst [vmem:[%s276 + $0xa4] sm:%s268] %v359
                  %v361 = vld [vmem:[%s275 + $0x128] sm:%s268]
                  %362 = vst [vmem:[%s276 + $0xa8] sm:%s268] %v361
                  %v363 = vld [vmem:[%s275 + $0x12c] sm:%s268]
                  %364 = vst [vmem:[%s276 + $0xac] sm:%s268] %v363
                  %v365 = vld [vmem:[%s275 + $0x130] sm:%s268]
                  %366 = vst [vmem:[%s276 + $0xb0] sm:%s268] %v365
                  %v367 = vld [vmem:[%s275 + $0x134] sm:%s268]
                  %368 = vst [vmem:[%s276 + $0xb4] sm:%s268] %v367
                  %v369 = vld [vmem:[%s275 + $0x138] sm:%s268]
                  %370 = vst [vmem:[%s276 + $0xb8] sm:%s268] %v369
                  %v371 = vld [vmem:[%s275 + $0x13c] sm:%s268]
                  %372 = vst [vmem:[%s276 + $0xbc] sm:%s268] %v371
                  %v373 = vld [vmem:[%s275 + $0x140] sm:%s268]
                  %374 = vst [vmem:[%s276 + $0xc0] sm:%s268] %v373
                  %v375 = vld [vmem:[%s275 + $0x144] sm:%s268]
                  %376 = vst [vmem:[%s276 + $0xc4] sm:%s268] %v375
                  %v377 = vld [vmem:[%s275 + $0x148] sm:%s268]
                  %378 = vst [vmem:[%s276 + $0xc8] sm:%s268] %v377
                  %v379 = vld [vmem:[%s275 + $0x14c] sm:%s268]
                  %380 = vst [vmem:[%s276 + $0xcc] sm:%s268] %v379
                  %v381 = vld [vmem:[%s275 + $0x150] sm:%s268]
                  %382 = vst [vmem:[%s276 + $0xd0] sm:%s268] %v381
                  %v383 = vld [vmem:[%s275 + $0x154] sm:%s268]
                  %384 = vst [vmem:[%s276 + $0xd4] sm:%s268] %v383
                  %v385 = vld [vmem:[%s275 + $0x158] sm:%s268]
                  %386 = vst [vmem:[%s276 + $0xd8] sm:%s268] %v385
                  %v387 = vld [vmem:[%s275 + $0x15c] sm:%s268]
                  %388 = vst [vmem:[%s276 + $0xdc] sm:%s268] %v387
                  %v389 = vld [vmem:[%s275 + $0x160] sm:%s268]
                  %390 = vst [vmem:[%s276 + $0xe0] sm:%s268] %v389
                  %v391 = vld [vmem:[%s275 + $0x164] sm:%s268]
                  %392 = vst [vmem:[%s276 + $0xe4] sm:%s268] %v391
                  %v393 = vld [vmem:[%s275 + $0x168] sm:%s268]
                  %394 = vst [vmem:[%s276 + $0xe8] sm:%s268] %v393
                  %v395 = vld [vmem:[%s275 + $0x16c] sm:%s268]
                  %396 = vst [vmem:[%s276 + $0xec] sm:%s268] %v395
                  %v397 = vld [vmem:[%s275 + $0x170] sm:%s268]
                  %398 = vst [vmem:[%s276 + $0xf0] sm:%s268] %v397
                  %v399 = vld [vmem:[%s275 + $0x174] sm:%s268]
                  %400 = vst [vmem:[%s276 + $0xf4] sm:%s268] %v399
                  %v401 = vld [vmem:[%s275 + $0x178] sm:%s268]
                  %402 = vst [vmem:[%s276 + $0xf8] sm:%s268] %v401
                  %v403 = vld [vmem:[%s275 + $0x17c] sm:%s268]
                  %404 = vst [vmem:[%s276 + $0xfc] sm:%s268] %v403
                $region59: #{forward.5} parent=46 // loop_footer
                  %s274 = sadd.s32 1, %s270
                $region60: #{forward.5} parent=46 // loop_footer_branch
                  %269 = sbr.rel target = $region56
                $region61: #{forward.5} parent=46 // loop_exit
                  _
              $region47: #{forward.5} parent=31 // pred_fallthru
                _
            $region32: #{forward.5} parent=27 // pred_fallthru
              _
            // Predicated region
            $region33: #{forward.5} parent=27 // pred_check
              _
            $region34: #{forward.5} parent=27 // pred_check_branch
              %118 = sbr.rel (0) target = $region36
            $region35: #{forward.5} parent=27 // pred_region
              %s120 = ssub.s32 16, 1
              loop: start=0, step=1, limit=1
              $region37: #{forward.5} parent=35 // loop_pre_header
                _
              $region38: #{forward.5} parent=35 // loop_header
                %s122 = sphi 0, %s126
                %p123 = scmp.ge.s32.totalorder %s122, 1
                %s127 = sphi %s112, %s112
                %s128 = sphi %s109, %s109
              $region39: #{forward.5} parent=35 // loop_header_branch
                %125 = sbr.rel (%p123) target = $region43
              $region40: #{forward.5} parent=35 // loop_body
                %v129 = vld [vmem:[%s127] sm:%s120]
                %130 = vst [vmem:[%s128] sm:%s120] %v129
                %v131 = vld [vmem:[%s127 + $0x4] sm:%s120]
                %132 = vst [vmem:[%s128 + $0x4] sm:%s120] %v131
                %v133 = vld [vmem:[%s127 + $0x8] sm:%s120]
                %134 = vst [vmem:[%s128 + $0x8] sm:%s120] %v133
                %v135 = vld [vmem:[%s127 + $0xc] sm:%s120]
                %136 = vst [vmem:[%s128 + $0xc] sm:%s120] %v135
                %v137 = vld [vmem:[%s127 + $0x10] sm:%s120]
                %138 = vst [vmem:[%s128 + $0x10] sm:%s120] %v137
                %v139 = vld [vmem:[%s127 + $0x14] sm:%s120]
                %140 = vst [vmem:[%s128 + $0x14] sm:%s120] %v139
                %v141 = vld [vmem:[%s127 + $0x18] sm:%s120]
                %142 = vst [vmem:[%s128 + $0x18] sm:%s120] %v141
                %v143 = vld [vmem:[%s127 + $0x1c] sm:%s120]
                %144 = vst [vmem:[%s128 + $0x1c] sm:%s120] %v143
                %v145 = vld [vmem:[%s127 + $0x20] sm:%s120]
                %146 = vst [vmem:[%s128 + $0x20] sm:%s120] %v145
                %v147 = vld [vmem:[%s127 + $0x24] sm:%s120]
                %148 = vst [vmem:[%s128 + $0x24] sm:%s120] %v147
                %v149 = vld [vmem:[%s127 + $0x28] sm:%s120]
                %150 = vst [vmem:[%s128 + $0x28] sm:%s120] %v149
                %v151 = vld [vmem:[%s127 + $0x2c] sm:%s120]
                %152 = vst [vmem:[%s128 + $0x2c] sm:%s120] %v151
                %v153 = vld [vmem:[%s127 + $0x30] sm:%s120]
                %154 = vst [vmem:[%s128 + $0x30] sm:%s120] %v153
                %v155 = vld [vmem:[%s127 + $0x34] sm:%s120]
                %156 = vst [vmem:[%s128 + $0x34] sm:%s120] %v155
                %v157 = vld [vmem:[%s127 + $0x38] sm:%s120]
                %158 = vst [vmem:[%s128 + $0x38] sm:%s120] %v157
                %v159 = vld [vmem:[%s127 + $0x3c] sm:%s120]
                %160 = vst [vmem:[%s128 + $0x3c] sm:%s120] %v159
                %v161 = vld [vmem:[%s127 + $0x40] sm:%s120]
                %162 = vst [vmem:[%s128 + $0x40] sm:%s120] %v161
                %v163 = vld [vmem:[%s127 + $0x44] sm:%s120]
                %164 = vst [vmem:[%s128 + $0x44] sm:%s120] %v163
                %v165 = vld [vmem:[%s127 + $0x48] sm:%s120]
                %166 = vst [vmem:[%s128 + $0x48] sm:%s120] %v165
                %v167 = vld [vmem:[%s127 + $0x4c] sm:%s120]
                %168 = vst [vmem:[%s128 + $0x4c] sm:%s120] %v167
                %v169 = vld [vmem:[%s127 + $0x50] sm:%s120]
                %170 = vst [vmem:[%s128 + $0x50] sm:%s120] %v169
                %v171 = vld [vmem:[%s127 + $0x54] sm:%s120]
                %172 = vst [vmem:[%s128 + $0x54] sm:%s120] %v171
                %v173 = vld [vmem:[%s127 + $0x58] sm:%s120]
                %174 = vst [vmem:[%s128 + $0x58] sm:%s120] %v173
                %v175 = vld [vmem:[%s127 + $0x5c] sm:%s120]
                %176 = vst [vmem:[%s128 + $0x5c] sm:%s120] %v175
                %v177 = vld [vmem:[%s127 + $0x60] sm:%s120]
                %178 = vst [vmem:[%s128 + $0x60] sm:%s120] %v177
                %v179 = vld [vmem:[%s127 + $0x64] sm:%s120]
                %180 = vst [vmem:[%s128 + $0x64] sm:%s120] %v179
                %v181 = vld [vmem:[%s127 + $0x68] sm:%s120]
                %182 = vst [vmem:[%s128 + $0x68] sm:%s120] %v181
                %v183 = vld [vmem:[%s127 + $0x6c] sm:%s120]
                %184 = vst [vmem:[%s128 + $0x6c] sm:%s120] %v183
                %v185 = vld [vmem:[%s127 + $0x70] sm:%s120]
                %186 = vst [vmem:[%s128 + $0x70] sm:%s120] %v185
                %v187 = vld [vmem:[%s127 + $0x74] sm:%s120]
                %188 = vst [vmem:[%s128 + $0x74] sm:%s120] %v187
                %v189 = vld [vmem:[%s127 + $0x78] sm:%s120]
                %190 = vst [vmem:[%s128 + $0x78] sm:%s120] %v189
                %v191 = vld [vmem:[%s127 + $0x7c] sm:%s120]
                %192 = vst [vmem:[%s128 + $0x7c] sm:%s120] %v191
                %v193 = vld [vmem:[%s127 + $0x100] sm:%s120]
                %194 = vst [vmem:[%s128 + $0x80] sm:%s120] %v193
                %v195 = vld [vmem:[%s127 + $0x104] sm:%s120]
                %196 = vst [vmem:[%s128 + $0x84] sm:%s120] %v195
                %v197 = vld [vmem:[%s127 + $0x108] sm:%s120]
                %198 = vst [vmem:[%s128 + $0x88] sm:%s120] %v197
                %v199 = vld [vmem:[%s127 + $0x10c] sm:%s120]
                %200 = vst [vmem:[%s128 + $0x8c] sm:%s120] %v199
                %v201 = vld [vmem:[%s127 + $0x110] sm:%s120]
                %202 = vst [vmem:[%s128 + $0x90] sm:%s120] %v201
                %v203 = vld [vmem:[%s127 + $0x114] sm:%s120]
                %204 = vst [vmem:[%s128 + $0x94] sm:%s120] %v203
                %v205 = vld [vmem:[%s127 + $0x118] sm:%s120]
                %206 = vst [vmem:[%s128 + $0x98] sm:%s120] %v205
                %v207 = vld [vmem:[%s127 + $0x11c] sm:%s120]
                %208 = vst [vmem:[%s128 + $0x9c] sm:%s120] %v207
                %v209 = vld [vmem:[%s127 + $0x120] sm:%s120]
                %210 = vst [vmem:[%s128 + $0xa0] sm:%s120] %v209
                %v211 = vld [vmem:[%s127 + $0x124] sm:%s120]
                %212 = vst [vmem:[%s128 + $0xa4] sm:%s120] %v211
                %v213 = vld [vmem:[%s127 + $0x128] sm:%s120]
                %214 = vst [vmem:[%s128 + $0xa8] sm:%s120] %v213
                %v215 = vld [vmem:[%s127 + $0x12c] sm:%s120]
                %216 = vst [vmem:[%s128 + $0xac] sm:%s120] %v215
                %v217 = vld [vmem:[%s127 + $0x130] sm:%s120]
                %218 = vst [vmem:[%s128 + $0xb0] sm:%s120] %v217
                %v219 = vld [vmem:[%s127 + $0x134] sm:%s120]
                %220 = vst [vmem:[%s128 + $0xb4] sm:%s120] %v219
                %v221 = vld [vmem:[%s127 + $0x138] sm:%s120]
                %222 = vst [vmem:[%s128 + $0xb8] sm:%s120] %v221
                %v223 = vld [vmem:[%s127 + $0x13c] sm:%s120]
                %224 = vst [vmem:[%s128 + $0xbc] sm:%s120] %v223
                %v225 = vld [vmem:[%s127 + $0x140] sm:%s120]
                %226 = vst [vmem:[%s128 + $0xc0] sm:%s120] %v225
                %v227 = vld [vmem:[%s127 + $0x144] sm:%s120]
                %228 = vst [vmem:[%s128 + $0xc4] sm:%s120] %v227
                %v229 = vld [vmem:[%s127 + $0x148] sm:%s120]
                %230 = vst [vmem:[%s128 + $0xc8] sm:%s120] %v229
                %v231 = vld [vmem:[%s127 + $0x14c] sm:%s120]
                %232 = vst [vmem:[%s128 + $0xcc] sm:%s120] %v231
                %v233 = vld [vmem:[%s127 + $0x150] sm:%s120]
                %234 = vst [vmem:[%s128 + $0xd0] sm:%s120] %v233
                %v235 = vld [vmem:[%s127 + $0x154] sm:%s120]
                %236 = vst [vmem:[%s128 + $0xd4] sm:%s120] %v235
                %v237 = vld [vmem:[%s127 + $0x158] sm:%s120]
                %238 = vst [vmem:[%s128 + $0xd8] sm:%s120] %v237
                %v239 = vld [vmem:[%s127 + $0x15c] sm:%s120]
                %240 = vst [vmem:[%s128 + $0xdc] sm:%s120] %v239
                %v241 = vld [vmem:[%s127 + $0x160] sm:%s120]
                %242 = vst [vmem:[%s128 + $0xe0] sm:%s120] %v241
                %v243 = vld [vmem:[%s127 + $0x164] sm:%s120]
                %244 = vst [vmem:[%s128 + $0xe4] sm:%s120] %v243
                %v245 = vld [vmem:[%s127 + $0x168] sm:%s120]
                %246 = vst [vmem:[%s128 + $0xe8] sm:%s120] %v245
                %v247 = vld [vmem:[%s127 + $0x16c] sm:%s120]
                %248 = vst [vmem:[%s128 + $0xec] sm:%s120] %v247
                %v249 = vld [vmem:[%s127 + $0x170] sm:%s120]
                %250 = vst [vmem:[%s128 + $0xf0] sm:%s120] %v249
                %v251 = vld [vmem:[%s127 + $0x174] sm:%s120]
                %252 = vst [vmem:[%s128 + $0xf4] sm:%s120] %v251
                %v253 = vld [vmem:[%s127 + $0x178] sm:%s120]
                %254 = vst [vmem:[%s128 + $0xf8] sm:%s120] %v253
                %v255 = vld [vmem:[%s127 + $0x17c] sm:%s120]
                %256 = vst [vmem:[%s128 + $0xfc] sm:%s120] %v255
              $region41: #{forward.5} parent=35 // loop_footer
                %s126 = sadd.s32 1, %s122
              $region42: #{forward.5} parent=35 // loop_footer_branch
                %121 = sbr.rel target = $region38
              $region43: #{forward.5} parent=35 // loop_exit
                _
            $region36: #{forward.5} parent=27 // pred_fallthru
              _
          $region28: #{forward.5} parent=23 // pred_fallthru
            _
          %405 = vnop
        $region24: #{forward.5} parent=19 // pred_fallthru
          _
      $region20: #{forward.5} parent=5 // pred_fallthru
        _
      %p406 = scmp.le.s32.totalorder 1, %s8
      %p407 = scmp.lt.s32.totalorder %s8, 3
      %p408 = pnand %p406, %p407
      %p409 = pneg %p408
      // Predicated region
      $region62: #{forward.5} parent=5 // pred_check
        _
      $region63: #{forward.5} parent=5 // pred_check_branch
        %411 = sbr.rel (%p408) target = $region65
      $region64: #{forward.5} parent=5 // pred_region
        %s412 = ssub.s32 %s8, 1
        %s413 = sand.u32 %s42, 1
        %s414 = sand.u32 %s42, 1
        %s415 = smul.addr %s414, 256
        %s416 = scalar_lea.vmem [#allocation2], %s415
        // Predicated region
        $region66: #{forward.5} parent=64 // pred_check
          %p417 = pneg %p55
        $region67: #{forward.5} parent=64 // pred_check_branch
          %419 = sbr.rel (%p417) target = $region69
        $region68: #{forward.5} parent=64 // pred_region
          _
        $region69: #{forward.5} parent=64 // pred_fallthru
          _
        %p420 = pneg %p29
        %p421 = pneg %p26
        %s422 = sand.u32 %s42, 1
        %s423 = sand.u32 %s42, 1
        %s424 = smul.addr %s423, 256
        %s425 = scalar_lea.vmem [#allocation2], %s424
        %p426 = pneg %p55
        %p427 = pneg %p52
        %p428 = pneg %p81
        %p429 = pneg %p78
        %s430 = smul.u32 32, %s13
        %p431 = scmp.lt.s32.totalorder %s430, 63
        %s432 = scalar_select %p431, %s430, 63
        %s433 = smul.addr %s432, 8
        %s434 = scalar_lea.vmem %s2, %s433
        %s435 = smul.u32 32, %s13
        %s436 = smul.u32 32, %s13
        %p437 = scmp.lt.s32.totalorder %s436, 63
        %s438 = scalar_select %p437, %s436, 63
        %s439 = smul.addr %s438, 8
        %s440 = scalar_lea.vmem %s2, %s439
        %s441 = smul.u32 32, %s13
        %v442 = vld [vmem:[%s416] sm:$0xf]
        %v443 = vld [vmem:[%s416 + $0x4] sm:$0xf]
        %v444 = vld [vmem:[%s416 + $0x8] sm:$0xf]
        %v445 = vld [vmem:[%s416 + $0xc] sm:$0xf]
        %v446 = vld [vmem:[%s416 + $0x10] sm:$0xf]
        %v447 = vld [vmem:[%s416 + $0x14] sm:$0xf]
        %v448 = vld [vmem:[%s416 + $0x18] sm:$0xf]
        %v449 = vld [vmem:[%s416 + $0x1c] sm:$0xf]
        %v450 = vld [vmem:[%s416 + $0x20] sm:$0xf]
        %v451 = vld [vmem:[%s416 + $0x24] sm:$0xf]
        %v452 = vld [vmem:[%s416 + $0x28] sm:$0xf]
        %v453 = vld [vmem:[%s416 + $0x2c] sm:$0xf]
        %v454 = vld [vmem:[%s416 + $0x30] sm:$0xf]
        %v455 = vld [vmem:[%s416 + $0x34] sm:$0xf]
        %v456 = vld [vmem:[%s416 + $0x38] sm:$0xf]
        %v457 = vld [vmem:[%s416 + $0x3c] sm:$0xf]
        %v458 = vld [vmem:[%s416 + $0x40] sm:$0xf]
        %v459 = vld [vmem:[%s416 + $0x44] sm:$0xf]
        %v460 = vld [vmem:[%s416 + $0x48] sm:$0xf]
        %v461 = vld [vmem:[%s416 + $0x4c] sm:$0xf]
        %v462 = vld [vmem:[%s416 + $0x50] sm:$0xf]
        %v463 = vld [vmem:[%s416 + $0x54] sm:$0xf]
        %v464 = vld [vmem:[%s416 + $0x58] sm:$0xf]
        %v465 = vld [vmem:[%s416 + $0x5c] sm:$0xf]
        %v466 = vld [vmem:[%s416 + $0x60] sm:$0xf]
        %v467 = vld [vmem:[%s416 + $0x64] sm:$0xf]
        %v468 = vld [vmem:[%s416 + $0x68] sm:$0xf]
        %v469 = vld [vmem:[%s416 + $0x6c] sm:$0xf]
        %v470 = vld [vmem:[%s416 + $0x70] sm:$0xf]
        %v471 = vld [vmem:[%s416 + $0x74] sm:$0xf]
        %v472 = vld [vmem:[%s416 + $0x78] sm:$0xf]
        %v473 = vld [vmem:[%s416 + $0x7c] sm:$0xf]
        %v474 = vld [vmem:[%s416 + $0x80] sm:$0xf]
        %v475 = vld [vmem:[%s416 + $0x84] sm:$0xf]
        %v476 = vld [vmem:[%s416 + $0x88] sm:$0xf]
        %v477 = vld [vmem:[%s416 + $0x8c] sm:$0xf]
        %v478 = vld [vmem:[%s416 + $0x90] sm:$0xf]
        %v479 = vld [vmem:[%s416 + $0x94] sm:$0xf]
        %v480 = vld [vmem:[%s416 + $0x98] sm:$0xf]
        %v481 = vld [vmem:[%s416 + $0x9c] sm:$0xf]
        %v482 = vld [vmem:[%s416 + $0xa0] sm:$0xf]
        %v483 = vld [vmem:[%s416 + $0xa4] sm:$0xf]
        %v484 = vld [vmem:[%s416 + $0xa8] sm:$0xf]
        %v485 = vld [vmem:[%s416 + $0xac] sm:$0xf]
        %v486 = vld [vmem:[%s416 + $0xb0] sm:$0xf]
        %v487 = vld [vmem:[%s416 + $0xb4] sm:$0xf]
        %v488 = vld [vmem:[%s416 + $0xb8] sm:$0xf]
        %v489 = vld [vmem:[%s416 + $0xbc] sm:$0xf]
        %v490 = vld [vmem:[%s416 + $0xc0] sm:$0xf]
        %v491 = vld [vmem:[%s416 + $0xc4] sm:$0xf]
        %v492 = vld [vmem:[%s416 + $0xc8] sm:$0xf]
        %v493 = vld [vmem:[%s416 + $0xcc] sm:$0xf]
        %v494 = vld [vmem:[%s416 + $0xd0] sm:$0xf]
        %v495 = vld [vmem:[%s416 + $0xd4] sm:$0xf]
        %v496 = vld [vmem:[%s416 + $0xd8] sm:$0xf]
        %v497 = vld [vmem:[%s416 + $0xdc] sm:$0xf]
        %v498 = vld [vmem:[%s416 + $0xe0] sm:$0xf]
        %v499 = vld [vmem:[%s416 + $0xe4] sm:$0xf]
        %v500 = vld [vmem:[%s416 + $0xe8] sm:$0xf]
        %v501 = vld [vmem:[%s416 + $0xec] sm:$0xf]
        %v502 = vld [vmem:[%s416 + $0xf0] sm:$0xf]
        %v503 = vld [vmem:[%s416 + $0xf4] sm:$0xf]
        %v504 = vld [vmem:[%s416 + $0xf8] sm:$0xf]
        %v505 = vld [vmem:[%s416 + $0xfc] sm:$0xf]
        %v506 = vunpack.c.l.bf16 %v442
        %v507 = vunpack.c.l.bf16 %v443
        %v508 = vunpack.c.l.bf16 %v444
        %v509 = vunpack.c.l.bf16 %v445
        %v510 = vunpack.c.l.bf16 %v446
        %v511 = vunpack.c.l.bf16 %v447
        %v512 = vunpack.c.l.bf16 %v448
        %v513 = vunpack.c.l.bf16 %v449
        %v514 = vunpack.c.l.bf16 %v450
        %v515 = vunpack.c.l.bf16 %v451
        %v516 = vunpack.c.l.bf16 %v452
        %v517 = vunpack.c.l.bf16 %v453
        %v518 = vunpack.c.l.bf16 %v454
        %v519 = vunpack.c.l.bf16 %v455
        %v520 = vunpack.c.l.bf16 %v456
        %v521 = vunpack.c.l.bf16 %v457
        %v522 = vunpack.c.l.bf16 %v458
        %v523 = vunpack.c.l.bf16 %v459
        %v524 = vunpack.c.l.bf16 %v460
        %v525 = vunpack.c.l.bf16 %v461
        %v526 = vunpack.c.l.bf16 %v462
        %v527 = vunpack.c.l.bf16 %v463
        %v528 = vunpack.c.l.bf16 %v464
        %v529 = vunpack.c.l.bf16 %v465
        %v530 = vunpack.c.l.bf16 %v466
        %v531 = vunpack.c.l.bf16 %v467
        %v532 = vunpack.c.l.bf16 %v468
        %v533 = vunpack.c.l.bf16 %v469
        %v534 = vunpack.c.l.bf16 %v470
        %v535 = vunpack.c.l.bf16 %v471
        %v536 = vunpack.c.l.bf16 %v472
        %v537 = vunpack.c.l.bf16 %v473
        %v538 = vunpack.c.l.bf16 %v474
        %v539 = vunpack.c.l.bf16 %v475
        %v540 = vunpack.c.l.bf16 %v476
        %v541 = vunpack.c.l.bf16 %v477
        %v542 = vunpack.c.l.bf16 %v478
        %v543 = vunpack.c.l.bf16 %v479
        %v544 = vunpack.c.l.bf16 %v480
        %v545 = vunpack.c.l.bf16 %v481
        %v546 = vunpack.c.l.bf16 %v482
        %v547 = vunpack.c.l.bf16 %v483
        %v548 = vunpack.c.l.bf16 %v484
        %v549 = vunpack.c.l.bf16 %v485
        %v550 = vunpack.c.l.bf16 %v486
        %v551 = vunpack.c.l.bf16 %v487
        %v552 = vunpack.c.l.bf16 %v488
        %v553 = vunpack.c.l.bf16 %v489
        %v554 = vunpack.c.l.bf16 %v490
        %v555 = vunpack.c.l.bf16 %v491
        %v556 = vunpack.c.l.bf16 %v492
        %v557 = vunpack.c.l.bf16 %v493
        %v558 = vunpack.c.l.bf16 %v494
        %v559 = vunpack.c.l.bf16 %v495
        %v560 = vunpack.c.l.bf16 %v496
        %v561 = vunpack.c.l.bf16 %v497
        %v562 = vunpack.c.l.bf16 %v498
        %v563 = vunpack.c.l.bf16 %v499
        %v564 = vunpack.c.l.bf16 %v500
        %v565 = vunpack.c.l.bf16 %v501
        %v566 = vunpack.c.l.bf16 %v502
        %v567 = vunpack.c.l.bf16 %v503
        %v568 = vunpack.c.l.bf16 %v504
        %v569 = vunpack.c.l.bf16 %v505
        %v570 = vld [vmem:[%s0] sm:$0x1]
        %v571 = vld [vmem:[%s0 + $0x1] sm:$0x1]
        %v574 = vperm.slane %v570, 0
        %v575 = vperm.slane %v571, 0
        %v578 = vmul.f32 %v506, %v574
        %v579 = vmul.f32 %v507, %v574
        %v580 = vmul.f32 %v508, %v574
        %v581 = vmul.f32 %v509, %v574
        %v582 = vmul.f32 %v510, %v574
        %v583 = vmul.f32 %v511, %v574
        %v584 = vmul.f32 %v512, %v574
        %v585 = vmul.f32 %v513, %v574
        %v586 = vmul.f32 %v514, %v574
        %v587 = vmul.f32 %v515, %v574
        %v588 = vmul.f32 %v516, %v574
        %v589 = vmul.f32 %v517, %v574
        %v590 = vmul.f32 %v518, %v574
        %v591 = vmul.f32 %v519, %v574
        %v592 = vmul.f32 %v520, %v574
        %v593 = vmul.f32 %v521, %v574
        %v594 = vmul.f32 %v522, %v574
        %v595 = vmul.f32 %v523, %v574
        %v596 = vmul.f32 %v524, %v574
        %v597 = vmul.f32 %v525, %v574
        %v598 = vmul.f32 %v526, %v574
        %v599 = vmul.f32 %v527, %v574
        %v600 = vmul.f32 %v528, %v574
        %v601 = vmul.f32 %v529, %v574
        %v602 = vmul.f32 %v530, %v574
        %v603 = vmul.f32 %v531, %v574
        %v604 = vmul.f32 %v532, %v574
        %v605 = vmul.f32 %v533, %v574
        %v606 = vmul.f32 %v534, %v574
        %v607 = vmul.f32 %v535, %v574
        %v608 = vmul.f32 %v536, %v574
        %v609 = vmul.f32 %v537, %v574
        %v610 = vmul.f32 %v538, %v575
        %v611 = vmul.f32 %v539, %v575
        %v612 = vmul.f32 %v540, %v575
        %v613 = vmul.f32 %v541, %v575
        %v614 = vmul.f32 %v542, %v575
        %v615 = vmul.f32 %v543, %v575
        %v616 = vmul.f32 %v544, %v575
        %v617 = vmul.f32 %v545, %v575
        %v618 = vmul.f32 %v546, %v575
        %v619 = vmul.f32 %v547, %v575
        %v620 = vmul.f32 %v548, %v575
        %v621 = vmul.f32 %v549, %v575
        %v622 = vmul.f32 %v550, %v575
        %v623 = vmul.f32 %v551, %v575
        %v624 = vmul.f32 %v552, %v575
        %v625 = vmul.f32 %v553, %v575
        %v626 = vmul.f32 %v554, %v575
        %v627 = vmul.f32 %v555, %v575
        %v628 = vmul.f32 %v556, %v575
        %v629 = vmul.f32 %v557, %v575
        %v630 = vmul.f32 %v558, %v575
        %v631 = vmul.f32 %v559, %v575
        %v632 = vmul.f32 %v560, %v575
        %v633 = vmul.f32 %v561, %v575
        %v634 = vmul.f32 %v562, %v575
        %v635 = vmul.f32 %v563, %v575
        %v636 = vmul.f32 %v564, %v575
        %v637 = vmul.f32 %v565, %v575
        %v638 = vmul.f32 %v566, %v575
        %v639 = vmul.f32 %v567, %v575
        %v640 = vmul.f32 %v568, %v575
        %v641 = vmul.f32 %v569, %v575
        %v642 = vadd.f32 %v578, %v610
        %v643 = vadd.f32 %v579, %v611
        %v644 = vadd.f32 %v580, %v612
        %v645 = vadd.f32 %v581, %v613
        %v646 = vadd.f32 %v582, %v614
        %v647 = vadd.f32 %v583, %v615
        %v648 = vadd.f32 %v584, %v616
        %v649 = vadd.f32 %v585, %v617
        %v650 = vadd.f32 %v586, %v618
        %v651 = vadd.f32 %v587, %v619
        %v652 = vadd.f32 %v588, %v620
        %v653 = vadd.f32 %v589, %v621
        %v654 = vadd.f32 %v590, %v622
        %v655 = vadd.f32 %v591, %v623
        %v656 = vadd.f32 %v592, %v624
        %v657 = vadd.f32 %v593, %v625
        %v658 = vadd.f32 %v594, %v626
        %v659 = vadd.f32 %v595, %v627
        %v660 = vadd.f32 %v596, %v628
        %v661 = vadd.f32 %v597, %v629
        %v662 = vadd.f32 %v598, %v630
        %v663 = vadd.f32 %v599, %v631
        %v664 = vadd.f32 %v600, %v632
        %v665 = vadd.f32 %v601, %v633
        %v666 = vadd.f32 %v602, %v634
        %v667 = vadd.f32 %v603, %v635
        %v668 = vadd.f32 %v604, %v636
        %v669 = vadd.f32 %v605, %v637
        %v670 = vadd.f32 %v606, %v638
        %v671 = vadd.f32 %v607, %v639
        %v672 = vadd.f32 %v608, %v640
        %v673 = vadd.f32 %v609, %v641
        %674 = vst [vmem:[%s440] sm:$0xff] %v642
        %675 = vst [vmem:[%s440 + $0x8] sm:$0xff] %v643
        %676 = vst [vmem:[%s440 + $0x10] sm:$0xff] %v644
        %677 = vst [vmem:[%s440 + $0x18] sm:$0xff] %v645
        %678 = vst [vmem:[%s440 + $0x20] sm:$0xff] %v646
        %679 = vst [vmem:[%s440 + $0x28] sm:$0xff] %v647
        %680 = vst [vmem:[%s440 + $0x30] sm:$0xff] %v648
        %681 = vst [vmem:[%s440 + $0x38] sm:$0xff] %v649
        %682 = vst [vmem:[%s440 + $0x40] sm:$0xff] %v650
        %683 = vst [vmem:[%s440 + $0x48] sm:$0xff] %v651
        %684 = vst [vmem:[%s440 + $0x50] sm:$0xff] %v652
        %685 = vst [vmem:[%s440 + $0x58] sm:$0xff] %v653
        %686 = vst [vmem:[%s440 + $0x60] sm:$0xff] %v654
        %687 = vst [vmem:[%s440 + $0x68] sm:$0xff] %v655
        %688 = vst [vmem:[%s440 + $0x70] sm:$0xff] %v656
        %689 = vst [vmem:[%s440 + $0x78] sm:$0xff] %v657
        %690 = vst [vmem:[%s440 + $0x80] sm:$0xff] %v658
        %691 = vst [vmem:[%s440 + $0x88] sm:$0xff] %v659
        %692 = vst [vmem:[%s440 + $0x90] sm:$0xff] %v660
        %693 = vst [vmem:[%s440 + $0x98] sm:$0xff] %v661
        %694 = vst [vmem:[%s440 + $0xa0] sm:$0xff] %v662
        %695 = vst [vmem:[%s440 + $0xa8] sm:$0xff] %v663
        %696 = vst [vmem:[%s440 + $0xb0] sm:$0xff] %v664
        %697 = vst [vmem:[%s440 + $0xb8] sm:$0xff] %v665
        %698 = vst [vmem:[%s440 + $0xc0] sm:$0xff] %v666
        %699 = vst [vmem:[%s440 + $0xc8] sm:$0xff] %v667
        %700 = vst [vmem:[%s440 + $0xd0] sm:$0xff] %v668
        %701 = vst [vmem:[%s440 + $0xd8] sm:$0xff] %v669
        %702 = vst [vmem:[%s440 + $0xe0] sm:$0xff] %v670
        %703 = vst [vmem:[%s440 + $0xe8] sm:$0xff] %v671
        %704 = vst [vmem:[%s440 + $0xf0] sm:$0xff] %v672
        %705 = vst [vmem:[%s440 + $0xf8] sm:$0xff] %v673
        %s706 = smul.u32 32, %s13
        %p707 = scmp.lt.s32.totalorder %s706, 63
        %s708 = scalar_select %p707, %s706, 63
        %s709 = smul.addr %s708, 8
        %s710 = scalar_lea.vmem %s2, %s709
        // Predicated region
        $region70: #{forward.5} parent=64 // pred_check
          %p711 = pneg %p78
        $region71: #{forward.5} parent=64 // pred_check_branch
          %713 = sbr.rel (%p711) target = $region73
        $region72: #{forward.5} parent=64 // pred_region
          %s714 = smul.u32 32, %s13
        $region73: #{forward.5} parent=64 // pred_fallthru
          _
      $region65: #{forward.5} parent=5 // pred_fallthru
        _
      %p715 = scmp.le.s32.totalorder 2, %s8
      // Predicated region
      $region74: #{forward.5} parent=5 // pred_check
        %p716 = pneg %p715
      $region75: #{forward.5} parent=5 // pred_check_branch
        %718 = sbr.rel (%p716) target = $region77
      $region76: #{forward.5} parent=5 // pred_region
        %s719 = ssub.s32 %s8, 2
        // Predicated region
        $region78: #{forward.5} parent=76 // pred_check
          %p720 = pneg %p84
        $region79: #{forward.5} parent=76 // pred_check_branch
          %722 = sbr.rel (%p720) target = $region81
        $region80: #{forward.5} parent=76 // pred_region
          %s723 = smul.u32 32, %s14
          %p724 = scmp.lt.s32.totalorder %s723, 63
          %s725 = scalar_select %p724, %s723, 63
          %s726 = smul.addr %s725, 8
          %s727 = scalar_lea.vmem %s2, %s726
        $region81: #{forward.5} parent=76 // pred_fallthru
          _
      $region77: #{forward.5} parent=5 // pred_fallthru
        _
    $region6: #{forward.5} parent=1 // loop_footer
      %s12 = sadd.s32 1, %s8
    $region7: #{forward.5} parent=1 // loop_footer_branch
      %7 = sbr.rel target = $region3
    $region8: #{forward.5} parent=1 // loop_exit
      _

// kernel: forward.4
$region0: #{forward.4}
  #allocation0 [shape = 'u32[]', space=smem, size = 0x4, offset = 0x4, fixed_abs, tag = 'smem constant byte address 0x4 - core index']
  #allocation1 [shape = 'u32[72,128]{1,0:T(1,128)}', space=vmem, size = 0x9000, scoped, tag = 'internal scratch']
  #allocation2 [shape = 'f32[256,128]{1,0:T(8,128)}', space=vmem, size = 0x20000, scoped, tag = 'scratch operand']
  %s0 = inlined_call_operand.vmem [shape: bf16[2,512,512], index: 0, kind: input, shape index: {}]
  %s1 = inlined_call_operand.vmem [shape: bf16[2,512,128], index: 1, kind: input, shape index: {}]
  %s2 = inlined_call_operand.vmem [shape: f32[2,1,128], index: 2, kind: input, shape index: {}]
  %s3 = inlined_call_operand.vmem [shape: bf16[128,128], index: 3, kind: input, shape index: {}]
  %s4 = inlined_call_operand.vmem [shape: f32[1,128], index: 4, kind: input, shape index: {}]
  %s5 = inlined_call_operand.vmem [shape: f32[1,128], index: 5, kind: input, shape index: {}]
  %s6 = inlined_call_operand.vmem [shape: bf16[2,512,128], index: 6, kind: output, shape index: {0}]
  %s7 = inlined_call_operand.vmem [shape: f32[2,512,1], index: 7, kind: output, shape index: {1}]
  %8 = xla_tuple %s6, %s7
  %s9 = sld [smem:[#allocation0]]
  $region73: #{forward.4} parent=0
    _
  %s11 = ssub.s32 1, %s9
  %s12 = scalar_select 0, %s11, %s9
  loop: start=0, step=1, limit=6
  $region2: #{forward.4} parent=0 // loop_pre_header
    _
  $region3: #{forward.4} parent=0 // loop_header
    %s14 = sphi 0, %s18
    %p15 = scmp.ge.s32.totalorder %s14, 6
    %s21 = sphi 0, %s40
    %s22 = sphi 0, %s36
    %s23 = sphi 0, %s32
    %s24 = sphi 0, %s21
    %s25 = sphi 0, %s22
    %s26 = sphi 0, %s23
    %s27 = sphi 0, %s24
    %s28 = sphi 0, %s25
    %s29 = sphi 0, %s26
    %s47 = sphi 0, %s49
    %s50 = sphi 0, %s47
    %s51 = sphi 0, %s50
    %s67 = sphi 0, %s51
    %s75 = sphi 0, %s77
    %s78 = sphi 0, %s75
    %s79 = sphi 0, %s78
    %s95 = sphi 0, %s79
    %s101 = sphi 0, %s103
    %s104 = sphi 0, %s101
    %s105 = sphi 0, %s104
    %s121 = sphi 0, %s105
    %s125 = sphi 0, %s125
    %s127 = sphi 0, %s125
    %s128 = sphi 0, %s127
    %s142 = sphi 0, %s128
    %s146 = sphi 0, %s146
    %s148 = sphi 0, %s146
    %s149 = sphi 0, %s148
    %s163 = sphi 0, %s149
    %s167 = sphi 0, %s167
    %s169 = sphi 0, %s167
    %s170 = sphi 0, %s169
    %s184 = sphi 0, %s170
    %s192 = sphi 0, %s194
    %s195 = sphi 0, %s192
    %s196 = sphi 0, %s195
    %s212 = sphi 0, %s196
    %s220 = sphi 0, %s222
    %s223 = sphi 0, %s220
    %s224 = sphi 0, %s223
    %s240 = sphi 0, %s224
  $region4: #{forward.4} parent=0 // loop_header_branch
    %17 = sbr.rel (%p15) target = $region8
  $region5: #{forward.4} parent=0 // loop_body
    %s19 = ssub.s32 %s14, 1
    %s20 = ssub.s32 %s14, 2
    %s30 = sadd.s32 1, %s23
    %p31 = scmp.ge.s32.totalorder %s30, 1
    %s32 = scalar_select %p31, 0, %s30
    %s33 = sadd.s32 1, %s22
    %s34 = scalar_select %p31, %s33, %s22
    %p35 = scmp.ge.s32.totalorder %s34, 2
    %s36 = scalar_select %p35, 0, %s34
    %s37 = sadd.s32 1, %s21
    %s38 = scalar_select %p35, %s37, %s21
    %p39 = scmp.ge.s32.totalorder %s38, 2
    %s40 = scalar_select %p39, 0, %s38
    %s41 = ssub.s32 %s21, %s40
    %s42 = ssub.s32 %s22, %s36
    %s43 = sor.u32 %s41, %s42
    %s44 = ssub.s32 %s23, %s32
    %s45 = sor.u32 %s43, %s44
    %p46 = scmp.eq.s32.totalorder %s45, 0
    %s48 = sadd.s32 %s47, 1
    %s49 = scalar_select %p46, %s47, %s48
    %p52 = pneg %p46
    %p53 = scmp.eq.s32.totalorder %s14, 3
    %p54 = por %p52, %p53
    %p55 = scmp.ne.s32.totalorder %s47, %s50
    %p56 = scmp.eq.s32.totalorder %s14, 0
    %p57 = por %p55, %p56
    %p58 = scmp.ne.s32.totalorder %s47, %s50
    %p59 = scmp.eq.s32.totalorder %s19, 3
    %p60 = por %p58, %p59
    %p61 = scmp.ne.s32.totalorder %s50, %s51
    %p62 = scmp.eq.s32.totalorder %s19, 0
    %p63 = por %p61, %p62
    %p64 = scmp.ne.s32.totalorder %s50, %s51
    %p65 = scmp.eq.s32.totalorder %s20, 3
    %p66 = por %p64, %p65
    %p68 = scmp.ne.s32.totalorder %s51, %s67
    %p69 = scmp.eq.s32.totalorder %s20, 0
    %p70 = por %p68, %p69
    %s71 = ssub.s32 %s21, %s40
    %s72 = ssub.s32 %s23, %s32
    %s73 = sor.u32 %s71, %s72
    %p74 = scmp.eq.s32.totalorder %s73, 0
    %s76 = sadd.s32 %s75, 1
    %s77 = scalar_select %p74, %s75, %s76
    %p80 = pneg %p74
    %p81 = scmp.eq.s32.totalorder %s14, 3
    %p82 = por %p80, %p81
    %p83 = scmp.ne.s32.totalorder %s75, %s78
    %p84 = scmp.eq.s32.totalorder %s14, 0
    %p85 = por %p83, %p84
    %p86 = scmp.ne.s32.totalorder %s75, %s78
    %p87 = scmp.eq.s32.totalorder %s19, 3
    %p88 = por %p86, %p87
    %p89 = scmp.ne.s32.totalorder %s78, %s79
    %p90 = scmp.eq.s32.totalorder %s19, 0
    %p91 = por %p89, %p90
    %p92 = scmp.ne.s32.totalorder %s78, %s79
    %p93 = scmp.eq.s32.totalorder %s20, 3
    %p94 = por %p92, %p93
    %p96 = scmp.ne.s32.totalorder %s79, %s95
    %p97 = scmp.eq.s32.totalorder %s20, 0
    %p98 = por %p96, %p97
    %s99 = ssub.s32 %s21, %s40
    %p100 = scmp.eq.s32.totalorder %s99, 0
    %s102 = sadd.s32 %s101, 1
    %s103 = scalar_select %p100, %s101, %s102
    %p106 = pneg %p100
    %p107 = scmp.eq.s32.totalorder %s14, 3
    %p108 = por %p106, %p107
    %p109 = scmp.ne.s32.totalorder %s101, %s104
    %p110 = scmp.eq.s32.totalorder %s14, 0
    %p111 = por %p109, %p110
    %p112 = scmp.ne.s32.totalorder %s101, %s104
    %p113 = scmp.eq.s32.totalorder %s19, 3
    %p114 = por %p112, %p113
    %p115 = scmp.ne.s32.totalorder %s104, %s105
    %p116 = scmp.eq.s32.totalorder %s19, 0
    %p117 = por %p115, %p116
    %p118 = scmp.ne.s32.totalorder %s104, %s105
    %p119 = scmp.eq.s32.totalorder %s20, 3
    %p120 = por %p118, %p119
    %p122 = scmp.ne.s32.totalorder %s105, %s121
    %p123 = scmp.eq.s32.totalorder %s20, 0
    %p124 = por %p122, %p123
    %s126 = sadd.s32 %s125, 1
    %p129 = scmp.eq.s32.totalorder %s14, 3
    %p130 = scmp.ne.s32.totalorder %s125, %s127
    %p131 = scmp.eq.s32.totalorder %s14, 0
    %p132 = por %p130, %p131
    %p133 = scmp.ne.s32.totalorder %s125, %s127
    %p134 = scmp.eq.s32.totalorder %s19, 3
    %p135 = por %p133, %p134
    %p136 = scmp.ne.s32.totalorder %s127, %s128
    %p137 = scmp.eq.s32.totalorder %s19, 0
    %p138 = por %p136, %p137
    %p139 = scmp.ne.s32.totalorder %s127, %s128
    %p140 = scmp.eq.s32.totalorder %s20, 3
    %p141 = por %p139, %p140
    %p143 = scmp.ne.s32.totalorder %s128, %s142
    %p144 = scmp.eq.s32.totalorder %s20, 0
    %p145 = por %p143, %p144
    %s147 = sadd.s32 %s146, 1
    %p150 = scmp.eq.s32.totalorder %s14, 3
    %p151 = scmp.ne.s32.totalorder %s146, %s148
    %p152 = scmp.eq.s32.totalorder %s14, 0
    %p153 = por %p151, %p152
    %p154 = scmp.ne.s32.totalorder %s146, %s148
    %p155 = scmp.eq.s32.totalorder %s19, 3
    %p156 = por %p154, %p155
    %p157 = scmp.ne.s32.totalorder %s148, %s149
    %p158 = scmp.eq.s32.totalorder %s19, 0
    %p159 = por %p157, %p158
    %p160 = scmp.ne.s32.totalorder %s148, %s149
    %p161 = scmp.eq.s32.totalorder %s20, 3
    %p162 = por %p160, %p161
    %p164 = scmp.ne.s32.totalorder %s149, %s163
    %p165 = scmp.eq.s32.totalorder %s20, 0
    %p166 = por %p164, %p165
    %s168 = sadd.s32 %s167, 1
    %p171 = scmp.eq.s32.totalorder %s14, 3
    %p172 = scmp.ne.s32.totalorder %s167, %s169
    %p173 = scmp.eq.s32.totalorder %s14, 0
    %p174 = por %p172, %p173
    %p175 = scmp.ne.s32.totalorder %s167, %s169
    %p176 = scmp.eq.s32.totalorder %s19, 3
    %p177 = por %p175, %p176
    %p178 = scmp.ne.s32.totalorder %s169, %s170
    %p179 = scmp.eq.s32.totalorder %s19, 0
    %p180 = por %p178, %p179
    %p181 = scmp.ne.s32.totalorder %s169, %s170
    %p182 = scmp.eq.s32.totalorder %s20, 3
    %p183 = por %p181, %p182
    %p185 = scmp.ne.s32.totalorder %s170, %s184
    %p186 = scmp.eq.s32.totalorder %s20, 0
    %p187 = por %p185, %p186
    %s188 = ssub.s32 %s21, %s40
    %s189 = ssub.s32 %s22, %s36
    %s190 = sor.u32 %s188, %s189
    %p191 = scmp.eq.s32.totalorder %s190, 0
    %s193 = sadd.s32 %s192, 1
    %s194 = scalar_select %p191, %s192, %s193
    %p197 = pneg %p191
    %p198 = scmp.eq.s32.totalorder %s14, 3
    %p199 = por %p197, %p198
    %p200 = scmp.ne.s32.totalorder %s192, %s195
    %p201 = scmp.eq.s32.totalorder %s14, 0
    %p202 = por %p200, %p201
    %p203 = scmp.ne.s32.totalorder %s192, %s195
    %p204 = scmp.eq.s32.totalorder %s19, 3
    %p205 = por %p203, %p204
    %p206 = scmp.ne.s32.totalorder %s195, %s196
    %p207 = scmp.eq.s32.totalorder %s19, 0
    %p208 = por %p206, %p207
    %p209 = scmp.ne.s32.totalorder %s195, %s196
    %p210 = scmp.eq.s32.totalorder %s20, 3
    %p211 = por %p209, %p210
    %p213 = scmp.ne.s32.totalorder %s196, %s212
    %p214 = scmp.eq.s32.totalorder %s20, 0
    %p215 = por %p213, %p214
    %s216 = ssub.s32 %s21, %s40
    %s217 = ssub.s32 %s22, %s36
    %s218 = sor.u32 %s216, %s217
    %p219 = scmp.eq.s32.totalorder %s218, 0
    %s221 = sadd.s32 %s220, 1
    %s222 = scalar_select %p219, %s220, %s221
    %p225 = pneg %p219
    %p226 = scmp.eq.s32.totalorder %s14, 3
    %p227 = por %p225, %p226
    %p228 = scmp.ne.s32.totalorder %s220, %s223
    %p229 = scmp.eq.s32.totalorder %s14, 0
    %p230 = por %p228, %p229
    %p231 = scmp.ne.s32.totalorder %s220, %s223
    %p232 = scmp.eq.s32.totalorder %s19, 3
    %p233 = por %p231, %p232
    %p234 = scmp.ne.s32.totalorder %s223, %s224
    %p235 = scmp.eq.s32.totalorder %s19, 0
    %p236 = por %p234, %p235
    %p237 = scmp.ne.s32.totalorder %s223, %s224
    %p238 = scmp.eq.s32.totalorder %s20, 3
    %p239 = por %p237, %p238
    %p241 = scmp.ne.s32.totalorder %s224, %s240
    %p242 = scmp.eq.s32.totalorder %s20, 0
    %p243 = por %p241, %p242
    %p244 = scmp.le.s32.totalorder 1, %s14
    %p245 = scmp.lt.s32.totalorder %s14, 5
    %p246 = pnand %p244, %p245
    %p247 = pneg %p246
    // Predicated region
    $region9: #{forward.4} parent=5 // pred_check
      _
    $region10: #{forward.4} parent=5 // pred_check_branch
      %249 = sbr.rel (%p246) target = $region12
    $region11: #{forward.4} parent=5 // pred_region
      %s250 = ssub.s32 %s14, 1
      // Predicated region
      $region13: #{forward.4} parent=11 // pred_check
        %p251 = pneg %p138
      $region14: #{forward.4} parent=11 // pred_check_branch
        %253 = sbr.rel (%p251) target = $region16
      $region15: #{forward.4} parent=11 // pred_region
        _
      $region16: #{forward.4} parent=11 // pred_fallthru
        _
      // Predicated region
      $region17: #{forward.4} parent=11 // pred_check
        %p254 = pneg %p159
      $region18: #{forward.4} parent=11 // pred_check_branch
        %256 = sbr.rel (%p254) target = $region20
      $region19: #{forward.4} parent=11 // pred_region
        _
      $region20: #{forward.4} parent=11 // pred_fallthru
        _
      // Predicated region
      $region21: #{forward.4} parent=11 // pred_check
        %p257 = pneg %p180
      $region22: #{forward.4} parent=11 // pred_check_branch
        %259 = sbr.rel (%p257) target = $region24
      $region23: #{forward.4} parent=11 // pred_region
        _
      $region24: #{forward.4} parent=11 // pred_fallthru
        _
    $region12: #{forward.4} parent=5 // pred_fallthru
      _
    %p260 = scmp.lt.s32.totalorder %s14, 4
    // Predicated region
    $region25: #{forward.4} parent=5 // pred_check
      %p261 = pneg %p260
    $region26: #{forward.4} parent=5 // pred_check_branch
      %263 = sbr.rel (%p261) target = $region28
    $region27: #{forward.4} parent=5 // pred_region
      // Predicated region
      $region29: #{forward.4} parent=27 // pred_check
        %p264 = pneg %p57
      $region30: #{forward.4} parent=27 // pred_check_branch
        %266 = sbr.rel (%p264) target = $region32
      $region31: #{forward.4} parent=27 // pred_region
        %s267 = smul.u32 32, %s22
        %s268 = smul.u32 4, %s23
        %p269 = scmp.lt.s32.totalorder %s21, 1
        %s270 = scalar_select %p269, %s21, 1
        %p271 = scmp.lt.s32.totalorder %s267, 63
        %s272 = scalar_select %p271, %s267, 63
        %p273 = scmp.lt.s32.totalorder %s268, 3
        %s274 = scalar_select %p273, %s268, 3
        %s275 = smul.addr %s272, 4
        %s276 = sadd.s32 %s274, %s275
        %s277 = smul.addr %s270, 256
        %s278 = sadd.s32 %s276, %s277
        %s279 = smul.addr %s278, 4
        %s280 = scalar_lea.vmem %s0, %s279
        %s281 = smul.u32 32, %s22
        %s282 = smul.u32 4, %s23
      $region32: #{forward.4} parent=27 // pred_fallthru
        _
      // Predicated region
      $region33: #{forward.4} parent=27 // pred_check
        %p283 = pneg %p85
      $region34: #{forward.4} parent=27 // pred_check_branch
        %285 = sbr.rel (%p283) target = $region36
      $region35: #{forward.4} parent=27 // pred_region
        %s286 = smul.u32 64, %s23
        %p287 = scmp.lt.s32.totalorder %s21, 1
        %s288 = scalar_select %p287, %s21, 1
        %p289 = scmp.lt.s32.totalorder %s286, 63
        %s290 = scalar_select %p289, %s286, 63
        %s291 = smul.addr %s288, 64
        %s292 = sadd.s32 %s290, %s291
        %s293 = smul.addr %s292, 4
        %s294 = scalar_lea.vmem %s1, %s293
        %s295 = smul.u32 64, %s23
      $region36: #{forward.4} parent=27 // pred_fallthru
        _
      // Predicated region
      $region37: #{forward.4} parent=27 // pred_check
        %p296 = pneg %p111
      $region38: #{forward.4} parent=27 // pred_check_branch
        %298 = sbr.rel (%p296) target = $region40
      $region39: #{forward.4} parent=27 // pred_region
        %p299 = scmp.lt.s32.totalorder %s21, 1
        %s300 = scalar_select %p299, %s21, 1
        %s301 = scalar_lea.vmem %s2, %s300
      $region40: #{forward.4} parent=27 // pred_fallthru
        _
    $region28: #{forward.4} parent=5 // pred_fallthru
      _
    %p302 = scmp.le.s32.totalorder 1, %s14
    %p303 = scmp.lt.s32.totalorder %s14, 5
    %p304 = pnand %p302, %p303
    %p305 = pneg %p304
    // Predicated region
    $region41: #{forward.4} parent=5 // pred_check
      _
    $region42: #{forward.4} parent=5 // pred_check_branch
      %307 = sbr.rel (%p304) target = $region44
    $region43: #{forward.4} parent=5 // pred_region
      %s308 = ssub.s32 %s14, 1
      %s309 = smul.u32 32, %s25
      %s310 = smul.u32 4, %s26
      %p311 = scmp.lt.s32.totalorder %s24, 1
      %s312 = scalar_select %p311, %s24, 1
      %p313 = scmp.lt.s32.totalorder %s309, 63
      %s314 = scalar_select %p313, %s309, 63
      %p315 = scmp.lt.s32.totalorder %s310, 3
      %s316 = scalar_select %p315, %s310, 3
      %s317 = smul.addr %s314, 4
      %s318 = sadd.s32 %s316, %s317
      %s319 = smul.addr %s312, 256
      %s320 = sadd.s32 %s318, %s319
      %s321 = smul.addr %s320, 4
      %s322 = scalar_lea.vmem %s0, %s321
      %p323 = pneg %p63
      %p324 = pneg %p60
      %s325 = smul.u32 64, %s26
      %p326 = scmp.lt.s32.totalorder %s24, 1
      %s327 = scalar_select %p326, %s24, 1
      %p328 = scmp.lt.s32.totalorder %s325, 63
      %s329 = scalar_select %p328, %s325, 63
      %s330 = smul.addr %s327, 64
      %s331 = sadd.s32 %s329, %s330
      %s332 = smul.addr %s331, 4
      %s333 = scalar_lea.vmem %s1, %s332
      %p334 = pneg %p91
      %p335 = pneg %p88
      %p336 = scmp.lt.s32.totalorder %s24, 1
      %s337 = scalar_select %p336, %s24, 1
      %s338 = scalar_lea.vmem %s2, %s337
      %p339 = pneg %p117
      %p340 = pneg %p114
      %p341 = pneg %p138
      %p342 = pneg %p135
      %p343 = pneg %p159
      %p344 = pneg %p156
      %p345 = pneg %p180
      %p346 = pneg %p177
      %p347 = pneg %p208
      %p348 = pneg %p205
      %s349 = smul.u32 32, %s25
      %p350 = scmp.lt.s32.totalorder %s24, 1
      %s351 = scalar_select %p350, %s24, 1
      %p352 = scmp.lt.s32.totalorder %s349, 63
      %s353 = scalar_select %p352, %s349, 63
      %s354 = smul.addr %s351, 64
      %s355 = sadd.s32 %s353, %s354
      %s356 = smul.addr %s355, 4
      %s357 = scalar_lea.vmem %s6, %s356
      %p358 = pneg %p236
      %p359 = pneg %p233
      %s360 = smul.u32 32, %s25
      %p361 = scmp.lt.s32.totalorder %s24, 1
      %s362 = scalar_select %p361, %s24, 1
      %p363 = scmp.lt.s32.totalorder %s360, 63
      %s364 = scalar_select %p363, %s360, 63
      %s365 = smul.addr %s362, 64
      %s366 = sadd.s32 %s364, %s365
      %s367 = smul.addr %s366, 8
      %s368 = scalar_lea.vmem %s7, %s367
      %s369 = smul.u32 32, %s25
      %s370 = smul.u32 4, %s26
      %p371 = scmp.lt.s32.totalorder %s24, 1
      %s372 = scalar_select %p371, %s24, 1
      %p373 = scmp.lt.s32.totalorder %s369, 63
      %s374 = scalar_select %p373, %s369, 63
      %p375 = scmp.lt.s32.totalorder %s370, 3
      %s376 = scalar_select %p375, %s370, 3
      %s377 = smul.addr %s374, 4
      %s378 = sadd.s32 %s376, %s377
      %s379 = smul.addr %s372, 256
      %s380 = sadd.s32 %s378, %s379
      %s381 = smul.addr %s380, 4
      %s382 = scalar_lea.vmem %s0, %s381
      %s383 = smul.u32 32, %s25
      %s384 = smul.u32 4, %s26
      %s385 = smul.u32 64, %s26
      %p386 = scmp.lt.s32.totalorder %s24, 1
      %s387 = scalar_select %p386, %s24, 1
      %p388 = scmp.lt.s32.totalorder %s385, 63
      %s389 = scalar_select %p388, %s385, 63
      %s390 = smul.addr %s387, 64
      %s391 = sadd.s32 %s389, %s390
      %s392 = smul.addr %s391, 4
      %s393 = scalar_lea.vmem %s1, %s392
      %s394 = smul.u32 64, %s26
      %p395 = scmp.lt.s32.totalorder %s24, 1
      %s396 = scalar_select %p395, %s24, 1
      %s397 = scalar_lea.vmem %s2, %s396
      %s398 = smul.u32 32, %s25
      %p399 = scmp.lt.s32.totalorder %s24, 1
      %s400 = scalar_select %p399, %s24, 1
      %p401 = scmp.lt.s32.totalorder %s398, 63
      %s402 = scalar_select %p401, %s398, 63
      %s403 = smul.addr %s400, 64
      %s404 = sadd.s32 %s402, %s403
      %s405 = smul.addr %s404, 4
      %s406 = scalar_lea.vmem %s6, %s405
      %s407 = smul.u32 32, %s25
      %s408 = smul.u32 32, %s25
      %p409 = scmp.lt.s32.totalorder %s24, 1
      %s410 = scalar_select %p409, %s24, 1
      %p411 = scmp.lt.s32.totalorder %s408, 63
      %s412 = scalar_select %p411, %s408, 63
      %s413 = smul.addr %s410, 64
      %s414 = sadd.s32 %s412, %s413
      %s415 = smul.addr %s414, 8
      %s416 = scalar_lea.vmem %s7, %s415
      %s417 = smul.u32 32, %s25
      %p418 = scmp.eq.s32.totalorder %s26, 0
      // Predicated region
      $region45: #{forward.4} parent=43 // pred_check
        %p419 = pneg %p418
      $region46: #{forward.4} parent=43 // pred_check_branch
        %421 = sbr.rel (%p419) target = $region48
      $region47: #{forward.4} parent=43 // pred_region
        %422 = vst [vmem:[#allocation2] sm:$0xff] 0.0
        %423 = vst [vmem:[#allocation2 + $0x8] sm:$0xff] 0.0
        %424 = vst [vmem:[#allocation2 + $0x10] sm:$0xff] 0.0
        %425 = vst [vmem:[#allocation2 + $0x18] sm:$0xff] 0.0
        %426 = vst [vmem:[#allocation2 + $0x20] sm:$0xff] 0.0
        %427 = vst [vmem:[#allocation2 + $0x28] sm:$0xff] 0.0
        %428 = vst [vmem:[#allocation2 + $0x30] sm:$0xff] 0.0
        %429 = vst [vmem:[#allocation2 + $0x38] sm:$0xff] 0.0
        %430 = vst [vmem:[#allocation2 + $0x40] sm:$0xff] 0.0
        %431 = vst [vmem:[#allocation2 + $0x48] sm:$0xff] 0.0
        %432 = vst [vmem:[#allocation2 + $0x50] sm:$0xff] 0.0
        %433 = vst [vmem:[#allocation2 + $0x58] sm:$0xff] 0.0
        %434 = vst [vmem:[#allocation2 + $0x60] sm:$0xff] 0.0
        %435 = vst [vmem:[#allocation2 + $0x68] sm:$0xff] 0.0
        %436 = vst [vmem:[#allocation2 + $0x70] sm:$0xff] 0.0
        %437 = vst [vmem:[#allocation2 + $0x78] sm:$0xff] 0.0
        %438 = vst [vmem:[#allocation2 + $0x80] sm:$0xff] 0.0
        %439 = vst [vmem:[#allocation2 + $0x88] sm:$0xff] 0.0
        %440 = vst [vmem:[#allocation2 + $0x90] sm:$0xff] 0.0
        %441 = vst [vmem:[#allocation2 + $0x98] sm:$0xff] 0.0
        %442 = vst [vmem:[#allocation2 + $0xa0] sm:$0xff] 0.0
        %443 = vst [vmem:[#allocation2 + $0xa8] sm:$0xff] 0.0
        %444 = vst [vmem:[#allocation2 + $0xb0] sm:$0xff] 0.0
        %445 = vst [vmem:[#allocation2 + $0xb8] sm:$0xff] 0.0
        %446 = vst [vmem:[#allocation2 + $0xc0] sm:$0xff] 0.0
        %447 = vst [vmem:[#allocation2 + $0xc8] sm:$0xff] 0.0
        %448 = vst [vmem:[#allocation2 + $0xd0] sm:$0xff] 0.0
        %449 = vst [vmem:[#allocation2 + $0xd8] sm:$0xff] 0.0
        %450 = vst [vmem:[#allocation2 + $0xe0] sm:$0xff] 0.0
        %451 = vst [vmem:[#allocation2 + $0xe8] sm:$0xff] 0.0
        %452 = vst [vmem:[#allocation2 + $0xf0] sm:$0xff] 0.0
        %453 = vst [vmem:[#allocation2 + $0xf8] sm:$0xff] 0.0
      $region48: #{forward.4} parent=43 // pred_fallthru
        _
      %v454 = vld [vmem:[#allocation2] sm:$0xff]
      %v455 = vld [vmem:[#allocation2 + $0x8] sm:$0xff]
      %v456 = vld [vmem:[#allocation2 + $0x10] sm:$0xff]
      %v457 = vld [vmem:[#allocation2 + $0x18] sm:$0xff]
      %v458 = vld [vmem:[#allocation2 + $0x20] sm:$0xff]
      %v459 = vld [vmem:[#allocation2 + $0x28] sm:$0xff]
      %v460 = vld [vmem:[#allocation2 + $0x30] sm:$0xff]
      %v461 = vld [vmem:[#allocation2 + $0x38] sm:$0xff]
      %v462 = vld [vmem:[#allocation2 + $0x40] sm:$0xff]
      %v463 = vld [vmem:[#allocation2 + $0x48] sm:$0xff]
      %v464 = vld [vmem:[#allocation2 + $0x50] sm:$0xff]
      %v465 = vld [vmem:[#allocation2 + $0x58] sm:$0xff]
      %v466 = vld [vmem:[#allocation2 + $0x60] sm:$0xff]
      %v467 = vld [vmem:[#allocation2 + $0x68] sm:$0xff]
      %v468 = vld [vmem:[#allocation2 + $0x70] sm:$0xff]
      %v469 = vld [vmem:[#allocation2 + $0x78] sm:$0xff]
      %v470 = vld [vmem:[#allocation2 + $0x80] sm:$0xff]
      %v471 = vld [vmem:[#allocation2 + $0x88] sm:$0xff]
      %v472 = vld [vmem:[#allocation2 + $0x90] sm:$0xff]
      %v473 = vld [vmem:[#allocation2 + $0x98] sm:$0xff]
      %v474 = vld [vmem:[#allocation2 + $0xa0] sm:$0xff]
      %v475 = vld [vmem:[#allocation2 + $0xa8] sm:$0xff]
      %v476 = vld [vmem:[#allocation2 + $0xb0] sm:$0xff]
      %v477 = vld [vmem:[#allocation2 + $0xb8] sm:$0xff]
      %v478 = vld [vmem:[#allocation2 + $0xc0] sm:$0xff]
      %v479 = vld [vmem:[#allocation2 + $0xc8] sm:$0xff]
      %v480 = vld [vmem:[#allocation2 + $0xd0] sm:$0xff]
      %v481 = vld [vmem:[#allocation2 + $0xd8] sm:$0xff]
      %v482 = vld [vmem:[#allocation2 + $0xe0] sm:$0xff]
      %v483 = vld [vmem:[#allocation2 + $0xe8] sm:$0xff]
      %v484 = vld [vmem:[#allocation2 + $0xf0] sm:$0xff]
      %v485 = vld [vmem:[#allocation2 + $0xf8] sm:$0xff]
      %v486 = vld [vmem:[%s382] sm:$0xff]
      %v487 = vld [vmem:[%s382 + $0x8] sm:$0xff]
      %v488 = vld [vmem:[%s382 + $0x10] sm:$0xff]
      %v489 = vld [vmem:[%s382 + $0x18] sm:$0xff]
      %v490 = vld [vmem:[%s382 + $0x20] sm:$0xff]
      %v491 = vld [vmem:[%s382 + $0x28] sm:$0xff]
      %v492 = vld [vmem:[%s382 + $0x30] sm:$0xff]
      %v493 = vld [vmem:[%s382 + $0x38] sm:$0xff]
      %v494 = vld [vmem:[%s382 + $0x40] sm:$0xff]
      %v495 = vld [vmem:[%s382 + $0x48] sm:$0xff]
      %v496 = vld [vmem:[%s382 + $0x50] sm:$0xff]
      %v497 = vld [vmem:[%s382 + $0x58] sm:$0xff]
      %v498 = vld [vmem:[%s382 + $0x60] sm:$0xff]
      %v499 = vld [vmem:[%s382 + $0x68] sm:$0xff]
      %v500 = vld [vmem:[%s382 + $0x70] sm:$0xff]
      %v501 = vld [vmem:[%s382 + $0x78] sm:$0xff]
      %v502 = vld [vmem:[%s382 + $0x80] sm:$0xff]
      %v503 = vld [vmem:[%s382 + $0x88] sm:$0xff]
      %v504 = vld [vmem:[%s382 + $0x90] sm:$0xff]
      %v505 = vld [vmem:[%s382 + $0x98] sm:$0xff]
      %v506 = vld [vmem:[%s382 + $0xa0] sm:$0xff]
      %v507 = vld [vmem:[%s382 + $0xa8] sm:$0xff]
      %v508 = vld [vmem:[%s382 + $0xb0] sm:$0xff]
      %v509 = vld [vmem:[%s382 + $0xb8] sm:$0xff]
      %v510 = vld [vmem:[%s382 + $0xc0] sm:$0xff]
      %v511 = vld [vmem:[%s382 + $0xc8] sm:$0xff]
      %v512 = vld [vmem:[%s382 + $0xd0] sm:$0xff]
      %v513 = vld [vmem:[%s382 + $0xd8] sm:$0xff]
      %v514 = vld [vmem:[%s382 + $0xe0] sm:$0xff]
      %v515 = vld [vmem:[%s382 + $0xe8] sm:$0xff]
      %v516 = vld [vmem:[%s382 + $0xf0] sm:$0xff]
      %v517 = vld [vmem:[%s382 + $0xf8] sm:$0xff]
      %v518 = vld [vmem:[%s382 + $0x100] sm:$0xff]
      %v519 = vld [vmem:[%s382 + $0x108] sm:$0xff]
      %v520 = vld [vmem:[%s382 + $0x110] sm:$0xff]
      %v521 = vld [vmem:[%s382 + $0x118] sm:$0xff]
      %v522 = vld [vmem:[%s382 + $0x120] sm:$0xff]
      %v523 = vld [vmem:[%s382 + $0x128] sm:$0xff]
      %v524 = vld [vmem:[%s382 + $0x130] sm:$0xff]
      %v525 = vld [vmem:[%s382 + $0x138] sm:$0xff]
      %v526 = vld [vmem:[%s382 + $0x140] sm:$0xff]
      %v527 = vld [vmem:[%s382 + $0x148] sm:$0xff]
      %v528 = vld [vmem:[%s382 + $0x150] sm:$0xff]
      %v529 = vld [vmem:[%s382 + $0x158] sm:$0xff]
      %v530 = vld [vmem:[%s382 + $0x160] sm:$0xff]
      %v531 = vld [vmem:[%s382 + $0x168] sm:$0xff]
      %v532 = vld [vmem:[%s382 + $0x170] sm:$0xff]
      %v533 = vld [vmem:[%s382 + $0x178] sm:$0xff]
      %v534 = vld [vmem:[%s382 + $0x180] sm:$0xff]
      %v535 = vld [vmem:[%s382 + $0x188] sm:$0xff]
      %v536 = vld [vmem:[%s382 + $0x190] sm:$0xff]
      %v537 = vld [vmem:[%s382 + $0x198] sm:$0xff]
      %v538 = vld [vmem:[%s382 + $0x1a0] sm:$0xff]
      %v539 = vld [vmem:[%s382 + $0x1a8] sm:$0xff]
      %v540 = vld [vmem:[%s382 + $0x1b0] sm:$0xff]
      %v541 = vld [vmem:[%s382 + $0x1b8] sm:$0xff]
      %v542 = vld [vmem:[%s382 + $0x1c0] sm:$0xff]
      %v543 = vld [vmem:[%s382 + $0x1c8] sm:$0xff]
      %v544 = vld [vmem:[%s382 + $0x1d0] sm:$0xff]
      %v545 = vld [vmem:[%s382 + $0x1d8] sm:$0xff]
      %v546 = vld [vmem:[%s382 + $0x1e0] sm:$0xff]
      %v547 = vld [vmem:[%s382 + $0x1e8] sm:$0xff]
      %v548 = vld [vmem:[%s382 + $0x1f0] sm:$0xff]
      %v549 = vld [vmem:[%s382 + $0x1f8] sm:$0xff]
      %v550 = vld [vmem:[%s393] sm:$0xf]
      %v551 = vld [vmem:[%s393 + $0x4] sm:$0xf]
      %v552 = vld [vmem:[%s393 + $0x8] sm:$0xf]
      %v553 = vld [vmem:[%s393 + $0xc] sm:$0xf]
      %v554 = vld [vmem:[%s393 + $0x10] sm:$0xf]
      %v555 = vld [vmem:[%s393 + $0x14] sm:$0xf]
      %v556 = vld [vmem:[%s393 + $0x18] sm:$0xf]
      %v557 = vld [vmem:[%s393 + $0x1c] sm:$0xf]
      %v558 = vld [vmem:[%s393 + $0x20] sm:$0xf]
      %v559 = vld [vmem:[%s393 + $0x24] sm:$0xf]
      %v560 = vld [vmem:[%s393 + $0x28] sm:$0xf]
      %v561 = vld [vmem:[%s393 + $0x2c] sm:$0xf]
      %v562 = vld [vmem:[%s393 + $0x30] sm:$0xf]
      %v563 = vld [vmem:[%s393 + $0x34] sm:$0xf]
      %v564 = vld [vmem:[%s393 + $0x38] sm:$0xf]
      %v565 = vld [vmem:[%s393 + $0x3c] sm:$0xf]
      %v566 = vld [vmem:[%s393 + $0x40] sm:$0xf]
      %v567 = vld [vmem:[%s393 + $0x44] sm:$0xf]
      %v568 = vld [vmem:[%s393 + $0x48] sm:$0xf]
      %v569 = vld [vmem:[%s393 + $0x4c] sm:$0xf]
      %v570 = vld [vmem:[%s393 + $0x50] sm:$0xf]
      %v571 = vld [vmem:[%s393 + $0x54] sm:$0xf]
      %v572 = vld [vmem:[%s393 + $0x58] sm:$0xf]
      %v573 = vld [vmem:[%s393 + $0x5c] sm:$0xf]
      %v574 = vld [vmem:[%s393 + $0x60] sm:$0xf]
      %v575 = vld [vmem:[%s393 + $0x64] sm:$0xf]
      %v576 = vld [vmem:[%s393 + $0x68] sm:$0xf]
      %v577 = vld [vmem:[%s393 + $0x6c] sm:$0xf]
      %v578 = vld [vmem:[%s393 + $0x70] sm:$0xf]
      %v579 = vld [vmem:[%s393 + $0x74] sm:$0xf]
      %v580 = vld [vmem:[%s393 + $0x78] sm:$0xf]
      %v581 = vld [vmem:[%s393 + $0x7c] sm:$0xf]
      %v582 = vld [vmem:[%s393 + $0x80] sm:$0xf]
      %v583 = vld [vmem:[%s393 + $0x84] sm:$0xf]
      %v584 = vld [vmem:[%s393 + $0x88] sm:$0xf]
      %v585 = vld [vmem:[%s393 + $0x8c] sm:$0xf]
      %v586 = vld [vmem:[%s393 + $0x90] sm:$0xf]
      %v587 = vld [vmem:[%s393 + $0x94] sm:$0xf]
      %v588 = vld [vmem:[%s393 + $0x98] sm:$0xf]
      %v589 = vld [vmem:[%s393 + $0x9c] sm:$0xf]
      %v590 = vld [vmem:[%s393 + $0xa0] sm:$0xf]
      %v591 = vld [vmem:[%s393 + $0xa4] sm:$0xf]
      %v592 = vld [vmem:[%s393 + $0xa8] sm:$0xf]
      %v593 = vld [vmem:[%s393 + $0xac] sm:$0xf]
      %v594 = vld [vmem:[%s393 + $0xb0] sm:$0xf]
      %v595 = vld [vmem:[%s393 + $0xb4] sm:$0xf]
      %v596 = vld [vmem:[%s393 + $0xb8] sm:$0xf]
      %v597 = vld [vmem:[%s393 + $0xbc] sm:$0xf]
      %v598 = vld [vmem:[%s393 + $0xc0] sm:$0xf]
      %v599 = vld [vmem:[%s393 + $0xc4] sm:$0xf]
      %v600 = vld [vmem:[%s393 + $0xc8] sm:$0xf]
      %v601 = vld [vmem:[%s393 + $0xcc] sm:$0xf]
      %v602 = vld [vmem:[%s393 + $0xd0] sm:$0xf]
      %v603 = vld [vmem:[%s393 + $0xd4] sm:$0xf]
      %v604 = vld [vmem:[%s393 + $0xd8] sm:$0xf]
      %v605 = vld [vmem:[%s393 + $0xdc] sm:$0xf]
      %v606 = vld [vmem:[%s393 + $0xe0] sm:$0xf]
      %v607 = vld [vmem:[%s393 + $0xe4] sm:$0xf]
      %v608 = vld [vmem:[%s393 + $0xe8] sm:$0xf]
      %v609 = vld [vmem:[%s393 + $0xec] sm:$0xf]
      %v610 = vld [vmem:[%s393 + $0xf0] sm:$0xf]
      %v611 = vld [vmem:[%s393 + $0xf4] sm:$0xf]
      %v612 = vld [vmem:[%s393 + $0xf8] sm:$0xf]
      %v613 = vld [vmem:[%s393 + $0xfc] sm:$0xf]
      %v678 = vunpack.c.l.b16 %v486
      %v679 = vunpack.c.h.b16 %v486
      %v680 = vunpack.c.l.b16 %v487
      %v681 = vunpack.c.h.b16 %v487
      %v682 = vunpack.c.l.b16 %v488
      %v683 = vunpack.c.h.b16 %v488
      %v684 = vunpack.c.l.b16 %v489
      %v685 = vunpack.c.h.b16 %v489
      %v686 = vunpack.c.l.b16 %v490
      %v687 = vunpack.c.h.b16 %v490
      %v688 = vunpack.c.l.b16 %v491
      %v689 = vunpack.c.h.b16 %v491
      %v690 = vunpack.c.l.b16 %v492
      %v691 = vunpack.c.h.b16 %v492
      %v692 = vunpack.c.l.b16 %v493
      %v693 = vunpack.c.h.b16 %v493
      %v694 = vunpack.c.l.b16 %v494
      %v695 = vunpack.c.h.b16 %v494
      %v696 = vunpack.c.l.b16 %v495
      %v697 = vunpack.c.h.b16 %v495
      %v698 = vunpack.c.l.b16 %v496
      %v699 = vunpack.c.h.b16 %v496
      %v700 = vunpack.c.l.b16 %v497
      %v701 = vunpack.c.h.b16 %v497
      %v702 = vunpack.c.l.b16 %v498
      %v703 = vunpack.c.h.b16 %v498
      %v704 = vunpack.c.l.b16 %v499
      %v705 = vunpack.c.h.b16 %v499
      %v706 = vunpack.c.l.b16 %v500
      %v707 = vunpack.c.h.b16 %v500
      %v708 = vunpack.c.l.b16 %v501
      %v709 = vunpack.c.h.b16 %v501
      %v710 = vunpack.c.l.b16 %v502
      %v711 = vunpack.c.h.b16 %v502
      %v712 = vunpack.c.l.b16 %v503
      %v713 = vunpack.c.h.b16 %v503
      %v714 = vunpack.c.l.b16 %v504
      %v715 = vunpack.c.h.b16 %v504
      %v716 = vunpack.c.l.b16 %v505
      %v717 = vunpack.c.h.b16 %v505
      %v718 = vunpack.c.l.b16 %v506
      %v719 = vunpack.c.h.b16 %v506
      %v720 = vunpack.c.l.b16 %v507
      %v721 = vunpack.c.h.b16 %v507
      %v722 = vunpack.c.l.b16 %v508
      %v723 = vunpack.c.h.b16 %v508
      %v724 = vunpack.c.l.b16 %v509
      %v725 = vunpack.c.h.b16 %v509
      %v726 = vunpack.c.l.b16 %v510
      %v727 = vunpack.c.h.b16 %v510
      %v728 = vunpack.c.l.b16 %v511
      %v729 = vunpack.c.h.b16 %v511
      %v730 = vunpack.c.l.b16 %v512
      %v731 = vunpack.c.h.b16 %v512
      %v732 = vunpack.c.l.b16 %v513
      %v733 = vunpack.c.h.b16 %v513
      %v734 = vunpack.c.l.b16 %v514
      %v735 = vunpack.c.h.b16 %v514
      %v736 = vunpack.c.l.b16 %v515
      %v737 = vunpack.c.h.b16 %v515
      %v738 = vunpack.c.l.b16 %v516
      %v739 = vunpack.c.h.b16 %v516
      %v740 = vunpack.c.l.b16 %v517
      %v741 = vunpack.c.h.b16 %v517
      %v742 = vunpack.c.l.b16 %v518
      %v743 = vunpack.c.h.b16 %v518
      %v744 = vunpack.c.l.b16 %v519
      %v745 = vunpack.c.h.b16 %v519
      %v746 = vunpack.c.l.b16 %v520
      %v747 = vunpack.c.h.b16 %v520
      %v748 = vunpack.c.l.b16 %v521
      %v749 = vunpack.c.h.b16 %v521
      %v750 = vunpack.c.l.b16 %v522
      %v751 = vunpack.c.h.b16 %v522
      %v752 = vunpack.c.l.b16 %v523
      %v753 = vunpack.c.h.b16 %v523
      %v754 = vunpack.c.l.b16 %v524
      %v755 = vunpack.c.h.b16 %v524
      %v756 = vunpack.c.l.b16 %v525
      %v757 = vunpack.c.h.b16 %v525
      %v758 = vunpack.c.l.b16 %v526
      %v759 = vunpack.c.h.b16 %v526
      %v760 = vunpack.c.l.b16 %v527
      %v761 = vunpack.c.h.b16 %v527
      %v762 = vunpack.c.l.b16 %v528
      %v763 = vunpack.c.h.b16 %v528
      %v764 = vunpack.c.l.b16 %v529
      %v765 = vunpack.c.h.b16 %v529
      %v766 = vunpack.c.l.b16 %v530
      %v767 = vunpack.c.h.b16 %v530
      %v768 = vunpack.c.l.b16 %v531
      %v769 = vunpack.c.h.b16 %v531
      %v770 = vunpack.c.l.b16 %v532
      %v771 = vunpack.c.h.b16 %v532
      %v772 = vunpack.c.l.b16 %v533
      %v773 = vunpack.c.h.b16 %v533
      %v774 = vunpack.c.l.b16 %v534
      %v775 = vunpack.c.h.b16 %v534
      %v776 = vunpack.c.l.b16 %v535
      %v777 = vunpack.c.h.b16 %v535
      %v778 = vunpack.c.l.b16 %v536
      %v779 = vunpack.c.h.b16 %v536
      %v780 = vunpack.c.l.b16 %v537
      %v781 = vunpack.c.h.b16 %v537
      %v782 = vunpack.c.l.b16 %v538
      %v783 = vunpack.c.h.b16 %v538
      %v784 = vunpack.c.l.b16 %v539
      %v785 = vunpack.c.h.b16 %v539
      %v786 = vunpack.c.l.b16 %v540
      %v787 = vunpack.c.h.b16 %v540
      %v788 = vunpack.c.l.b16 %v541
      %v789 = vunpack.c.h.b16 %v541
      %v790 = vunpack.c.l.b16 %v542
      %v791 = vunpack.c.h.b16 %v542
      %v792 = vunpack.c.l.b16 %v543
      %v793 = vunpack.c.h.b16 %v543
      %v794 = vunpack.c.l.b16 %v544
      %v795 = vunpack.c.h.b16 %v544
      %v796 = vunpack.c.l.b16 %v545
      %v797 = vunpack.c.h.b16 %v545
      %v798 = vunpack.c.l.b16 %v546
      %v799 = vunpack.c.h.b16 %v546
      %v800 = vunpack.c.l.b16 %v547
      %v801 = vunpack.c.h.b16 %v547
      %v802 = vunpack.c.l.b16 %v548
      %v803 = vunpack.c.h.b16 %v548
      %v804 = vunpack.c.l.b16 %v549
      %v805 = vunpack.c.h.b16 %v549
      %v806 = vpack.c.b16 %v682, %v678
      %v807 = vpack.c.b16 %v683, %v679
      %v808 = vpack.c.b16 %v684, %v680
      %v809 = vpack.c.b16 %v685, %v681
      %v810 = vpack.c.b16 %v690, %v686
      %v811 = vpack.c.b16 %v691, %v687
      %v812 = vpack.c.b16 %v692, %v688
      %v813 = vpack.c.b16 %v693, %v689
      %v814 = vpack.c.b16 %v698, %v694
      %v815 = vpack.c.b16 %v699, %v695
      %v816 = vpack.c.b16 %v700, %v696
      %v817 = vpack.c.b16 %v701, %v697
      %v818 = vpack.c.b16 %v706, %v702
      %v819 = vpack.c.b16 %v707, %v703
      %v820 = vpack.c.b16 %v708, %v704
      %v821 = vpack.c.b16 %v709, %v705
      %v822 = vpack.c.b16 %v714, %v710
      %v823 = vpack.c.b16 %v715, %v711
      %v824 = vpack.c.b16 %v716, %v712
      %v825 = vpack.c.b16 %v717, %v713
      %v826 = vpack.c.b16 %v722, %v718
      %v827 = vpack.c.b16 %v723, %v719
      %v828 = vpack.c.b16 %v724, %v720
      %v829 = vpack.c.b16 %v725, %v721
      %v830 = vpack.c.b16 %v730, %v726
      %v831 = vpack.c.b16 %v731, %v727
      %v832 = vpack.c.b16 %v732, %v728
      %v833 = vpack.c.b16 %v733, %v729
      %v834 = vpack.c.b16 %v738, %v734
      %v835 = vpack.c.b16 %v739, %v735
      %v836 = vpack.c.b16 %v740, %v736
      %v837 = vpack.c.b16 %v741, %v737
      %v838 = vpack.c.b16 %v746, %v742
      %v839 = vpack.c.b16 %v747, %v743
      %v840 = vpack.c.b16 %v748, %v744
      %v841 = vpack.c.b16 %v749, %v745
      %v842 = vpack.c.b16 %v754, %v750
      %v843 = vpack.c.b16 %v755, %v751
      %v844 = vpack.c.b16 %v756, %v752
      %v845 = vpack.c.b16 %v757, %v753
      %v846 = vpack.c.b16 %v762, %v758
      %v847 = vpack.c.b16 %v763, %v759
      %v848 = vpack.c.b16 %v764, %v760
      %v849 = vpack.c.b16 %v765, %v761
      %v850 = vpack.c.b16 %v770, %v766
      %v851 = vpack.c.b16 %v771, %v767
      %v852 = vpack.c.b16 %v772, %v768
      %v853 = vpack.c.b16 %v773, %v769
      %v854 = vpack.c.b16 %v778, %v774
      %v855 = vpack.c.b16 %v779, %v775
      %v856 = vpack.c.b16 %v780, %v776
      %v857 = vpack.c.b16 %v781, %v777
      %v858 = vpack.c.b16 %v786, %v782
      %v859 = vpack.c.b16 %v787, %v783
      %v860 = vpack.c.b16 %v788, %v784
      %v861 = vpack.c.b16 %v789, %v785
      %v862 = vpack.c.b16 %v794, %v790
      %v863 = vpack.c.b16 %v795, %v791
      %v864 = vpack.c.b16 %v796, %v792
      %v865 = vpack.c.b16 %v797, %v793
      %v866 = vpack.c.b16 %v802, %v798
      %v867 = vpack.c.b16 %v803, %v799
      %v868 = vpack.c.b16 %v804, %v800
      %v869 = vpack.c.b16 %v805, %v801
      %v998 = vunpack.c.l.b16 %v550
      %v999 = vunpack.c.l.b16 %v551
      %v1000 = vunpack.c.l.b16 %v552
      %v1001 = vunpack.c.l.b16 %v553
      %v1002 = vunpack.c.l.b16 %v554
      %v1003 = vunpack.c.l.b16 %v555
      %v1004 = vunpack.c.l.b16 %v556
      %v1005 = vunpack.c.l.b16 %v557
      %v1006 = vunpack.c.l.b16 %v558
      %v1007 = vunpack.c.l.b16 %v559
      %v1008 = vunpack.c.l.b16 %v560
      %v1009 = vunpack.c.l.b16 %v561
      %v1010 = vunpack.c.l.b16 %v562
      %v1011 = vunpack.c.l.b16 %v563
      %v1012 = vunpack.c.l.b16 %v564
      %v1013 = vunpack.c.l.b16 %v565
      %v1014 = vunpack.c.l.b16 %v566
      %v1015 = vunpack.c.l.b16 %v567
      %v1016 = vunpack.c.l.b16 %v568
      %v1017 = vunpack.c.l.b16 %v569
      %v1018 = vunpack.c.l.b16 %v570
      %v1019 = vunpack.c.l.b16 %v571
      %v1020 = vunpack.c.l.b16 %v572
      %v1021 = vunpack.c.l.b16 %v573
      %v1022 = vunpack.c.l.b16 %v574
      %v1023 = vunpack.c.l.b16 %v575
      %v1024 = vunpack.c.l.b16 %v576
      %v1025 = vunpack.c.l.b16 %v577
      %v1026 = vunpack.c.l.b16 %v578
      %v1027 = vunpack.c.l.b16 %v579
      %v1028 = vunpack.c.l.b16 %v580
      %v1029 = vunpack.c.l.b16 %v581
      %v1030 = vunpack.c.l.b16 %v582
      %v1031 = vunpack.c.l.b16 %v583
      %v1032 = vunpack.c.l.b16 %v584
      %v1033 = vunpack.c.l.b16 %v585
      %v1034 = vunpack.c.l.b16 %v586
      %v1035 = vunpack.c.l.b16 %v587
      %v1036 = vunpack.c.l.b16 %v588
      %v1037 = vunpack.c.l.b16 %v589
      %v1038 = vunpack.c.l.b16 %v590
      %v1039 = vunpack.c.l.b16 %v591
      %v1040 = vunpack.c.l.b16 %v592
      %v1041 = vunpack.c.l.b16 %v593
      %v1042 = vunpack.c.l.b16 %v594
      %v1043 = vunpack.c.l.b16 %v595
      %v1044 = vunpack.c.l.b16 %v596
      %v1045 = vunpack.c.l.b16 %v597
      %v1046 = vunpack.c.l.b16 %v598
      %v1047 = vunpack.c.l.b16 %v599
      %v1048 = vunpack.c.l.b16 %v600
      %v1049 = vunpack.c.l.b16 %v601
      %v1050 = vunpack.c.l.b16 %v602
      %v1051 = vunpack.c.l.b16 %v603
      %v1052 = vunpack.c.l.b16 %v604
      %v1053 = vunpack.c.l.b16 %v605
      %v1054 = vunpack.c.l.b16 %v606
      %v1055 = vunpack.c.l.b16 %v607
      %v1056 = vunpack.c.l.b16 %v608
      %v1057 = vunpack.c.l.b16 %v609
      %v1058 = vunpack.c.l.b16 %v610
      %v1059 = vunpack.c.l.b16 %v611
      %v1060 = vunpack.c.l.b16 %v612
      %v1061 = vunpack.c.l.b16 %v613
      %v1062 = vpack.c.b16 %v999, %v998
      %v1063 = vpack.c.b16 %v1001, %v1000
      %v1064 = vpack.c.b16 %v1003, %v1002
      %v1065 = vpack.c.b16 %v1005, %v1004
      %v1066 = vpack.c.b16 %v1007, %v1006
      %v1067 = vpack.c.b16 %v1009, %v1008
      %v1068 = vpack.c.b16 %v1011, %v1010
      %v1069 = vpack.c.b16 %v1013, %v1012
      %v1070 = vpack.c.b16 %v1015, %v1014
      %v1071 = vpack.c.b16 %v1017, %v1016
      %v1072 = vpack.c.b16 %v1019, %v1018
      %v1073 = vpack.c.b16 %v1021, %v1020
      %v1074 = vpack.c.b16 %v1023, %v1022
      %v1075 = vpack.c.b16 %v1025, %v1024
      %v1076 = vpack.c.b16 %v1027, %v1026
      %v1077 = vpack.c.b16 %v1029, %v1028
      %v1078 = vpack.c.b16 %v1031, %v1030
      %v1079 = vpack.c.b16 %v1033, %v1032
      %v1080 = vpack.c.b16 %v1035, %v1034
      %v1081 = vpack.c.b16 %v1037, %v1036
      %v1082 = vpack.c.b16 %v1039, %v1038
      %v1083 = vpack.c.b16 %v1041, %v1040
      %v1084 = vpack.c.b16 %v1043, %v1042
      %v1085 = vpack.c.b16 %v1045, %v1044
      %v1086 = vpack.c.b16 %v1047, %v1046
      %v1087 = vpack.c.b16 %v1049, %v1048
      %v1088 = vpack.c.b16 %v1051, %v1050
      %v1089 = vpack.c.b16 %v1053, %v1052
      %v1090 = vpack.c.b16 %v1055, %v1054
      %v1091 = vpack.c.b16 %v1057, %v1056
      %v1092 = vpack.c.b16 %v1059, %v1058
      %v1093 = vpack.c.b16 %v1061, %v1060
      %1126 = vmatpush.bf16.msra.mxu0 %v1069
      %1127 = vmatpush.bf16.msra.mxu0 %v1068
      %1128 = vmatpush.bf16.msra.mxu0 %v1067
      %1129 = vmatpush.bf16.msra.mxu0 %v1066
      %1130 = vmatpush.bf16.msra.mxu0 %v1065
      %1131 = vmatpush.bf16.msra.mxu0 %v1064
      %1132 = vmatpush.bf16.msra.mxu0 %v1063
      %1133 = vmatpush.bf16.msra.mxu0 %v1062
      %1134 = vmatmul.bf16.gmra.mxu0 %v806
      %v1135 = vpop.f32.mrf.mxu0
      %v1136 = vadd.f32 0.0, %v1135
      %v1137 = vpop.f32.mrf.mxu0
      %v1138 = vadd.f32 0.0, %v1137
      %1139 = vmatmul.bf16.gmra.mxu0 %v810
      %v1140 = vpop.f32.mrf.mxu0
      %v1141 = vadd.f32 0.0, %v1140
      %v1142 = vpop.f32.mrf.mxu0
      %v1143 = vadd.f32 0.0, %v1142
      %1144 = vmatmul.bf16.gmra.mxu0 %v814
      %v1145 = vpop.f32.mrf.mxu0
      %v1146 = vadd.f32 0.0, %v1145
      %v1147 = vpop.f32.mrf.mxu0
      %v1148 = vadd.f32 0.0, %v1147
      %1149 = vmatmul.bf16.gmra.mxu0 %v818
      %v1150 = vpop.f32.mrf.mxu0
      %v1151 = vadd.f32 0.0, %v1150
      %v1152 = vpop.f32.mrf.mxu0
      %v1153 = vadd.f32 0.0, %v1152
      %1154 = vmatmul.bf16.gmra.mxu0 %v822
      %v1155 = vpop.f32.mrf.mxu0
      %v1156 = vadd.f32 0.0, %v1155
      %v1157 = vpop.f32.mrf.mxu0
      %v1158 = vadd.f32 0.0, %v1157
      %1159 = vmatmul.bf16.gmra.mxu0 %v826
      %v1160 = vpop.f32.mrf.mxu0
      %v1161 = vadd.f32 0.0, %v1160
      %v1162 = vpop.f32.mrf.mxu0
      %v1163 = vadd.f32 0.0, %v1162
      %1164 = vmatmul.bf16.gmra.mxu0 %v830
      %v1165 = vpop.f32.mrf.mxu0
      %v1166 = vadd.f32 0.0, %v1165
      %v1167 = vpop.f32.mrf.mxu0
      %v1168 = vadd.f32 0.0, %v1167
      %1169 = vmatmul.bf16.gmra.mxu0 %v834
      %v1170 = vpop.f32.mrf.mxu0
      %v1171 = vadd.f32 0.0, %v1170
      %v1172 = vpop.f32.mrf.mxu0
      %v1173 = vadd.f32 0.0, %v1172
      %1174 = vmatmul.bf16.gmra.mxu0 %v838
      %v1175 = vpop.f32.mrf.mxu0
      %v1176 = vadd.f32 0.0, %v1175
      %v1177 = vpop.f32.mrf.mxu0
      %v1178 = vadd.f32 0.0, %v1177
      %1179 = vmatmul.bf16.gmra.mxu0 %v842
      %v1180 = vpop.f32.mrf.mxu0
      %v1181 = vadd.f32 0.0, %v1180
      %v1182 = vpop.f32.mrf.mxu0
      %v1183 = vadd.f32 0.0, %v1182
      %1184 = vmatmul.bf16.gmra.mxu0 %v846
      %v1185 = vpop.f32.mrf.mxu0
      %v1186 = vadd.f32 0.0, %v1185
      %v1187 = vpop.f32.mrf.mxu0
      %v1188 = vadd.f32 0.0, %v1187
      %1189 = vmatmul.bf16.gmra.mxu0 %v850
      %v1190 = vpop.f32.mrf.mxu0
      %v1191 = vadd.f32 0.0, %v1190
      %v1192 = vpop.f32.mrf.mxu0
      %v1193 = vadd.f32 0.0, %v1192
      %1194 = vmatmul.bf16.gmra.mxu0 %v854
      %v1195 = vpop.f32.mrf.mxu0
      %v1196 = vadd.f32 0.0, %v1195
      %v1197 = vpop.f32.mrf.mxu0
      %v1198 = vadd.f32 0.0, %v1197
      %1199 = vmatmul.bf16.gmra.mxu0 %v858
      %v1200 = vpop.f32.mrf.mxu0
      %v1201 = vadd.f32 0.0, %v1200
      %v1202 = vpop.f32.mrf.mxu0
      %v1203 = vadd.f32 0.0, %v1202
      %1204 = vmatmul.bf16.gmra.mxu0 %v862
      %v1205 = vpop.f32.mrf.mxu0
      %v1206 = vadd.f32 0.0, %v1205
      %v1207 = vpop.f32.mrf.mxu0
      %v1208 = vadd.f32 0.0, %v1207
      %1209 = vmatmul.bf16.gmra.mxu0 %v866
      %v1210 = vpop.f32.mrf.mxu0
      %v1211 = vadd.f32 0.0, %v1210
      %v1212 = vpop.f32.mrf.mxu0
      %v1213 = vadd.f32 0.0, %v1212
      %1214 = vdwg.mxu0
      %1215 = vmatpush.bf16.msra.mxu0 %v1077
      %1216 = vmatpush.bf16.msra.mxu0 %v1076
      %1217 = vmatpush.bf16.msra.mxu0 %v1075
      %1218 = vmatpush.bf16.msra.mxu0 %v1074
      %1219 = vmatpush.bf16.msra.mxu0 %v1073
      %1220 = vmatpush.bf16.msra.mxu0 %v1072
      %1221 = vmatpush.bf16.msra.mxu0 %v1071
      %1222 = vmatpush.bf16.msra.mxu0 %v1070
      %1223 = vmatmul.bf16.gmra.mxu0 %v807
      %v1224 = vpop.f32.mrf.mxu0
      %v1225 = vadd.f32 %v1136, %v1224
      %v1226 = vpop.f32.mrf.mxu0
      %v1227 = vadd.f32 %v1138, %v1226
      %1228 = vmatmul.bf16.gmra.mxu0 %v811
      %v1229 = vpop.f32.mrf.mxu0
      %v1230 = vadd.f32 %v1141, %v1229
      %v1231 = vpop.f32.mrf.mxu0
      %v1232 = vadd.f32 %v1143, %v1231
      %1233 = vmatmul.bf16.gmra.mxu0 %v815
      %v1234 = vpop.f32.mrf.mxu0
      %v1235 = vadd.f32 %v1146, %v1234
      %v1236 = vpop.f32.mrf.mxu0
      %v1237 = vadd.f32 %v1148, %v1236
      %1238 = vmatmul.bf16.gmra.mxu0 %v819
      %v1239 = vpop.f32.mrf.mxu0
      %v1240 = vadd.f32 %v1151, %v1239
      %v1241 = vpop.f32.mrf.mxu0
      %v1242 = vadd.f32 %v1153, %v1241
      %1243 = vmatmul.bf16.gmra.mxu0 %v823
      %v1244 = vpop.f32.mrf.mxu0
      %v1245 = vadd.f32 %v1156, %v1244
      %v1246 = vpop.f32.mrf.mxu0
      %v1247 = vadd.f32 %v1158, %v1246
      %1248 = vmatmul.bf16.gmra.mxu0 %v827
      %v1249 = vpop.f32.mrf.mxu0
      %v1250 = vadd.f32 %v1161, %v1249
      %v1251 = vpop.f32.mrf.mxu0
      %v1252 = vadd.f32 %v1163, %v1251
      %1253 = vmatmul.bf16.gmra.mxu0 %v831
      %v1254 = vpop.f32.mrf.mxu0
      %v1255 = vadd.f32 %v1166, %v1254
      %v1256 = vpop.f32.mrf.mxu0
      %v1257 = vadd.f32 %v1168, %v1256
      %1258 = vmatmul.bf16.gmra.mxu0 %v835
      %v1259 = vpop.f32.mrf.mxu0
      %v1260 = vadd.f32 %v1171, %v1259
      %v1261 = vpop.f32.mrf.mxu0
      %v1262 = vadd.f32 %v1173, %v1261
      %1263 = vmatmul.bf16.gmra.mxu0 %v839
      %v1264 = vpop.f32.mrf.mxu0
      %v1265 = vadd.f32 %v1176, %v1264
      %v1266 = vpop.f32.mrf.mxu0
      %v1267 = vadd.f32 %v1178, %v1266
      %1268 = vmatmul.bf16.gmra.mxu0 %v843
      %v1269 = vpop.f32.mrf.mxu0
      %v1270 = vadd.f32 %v1181, %v1269
      %v1271 = vpop.f32.mrf.mxu0
      %v1272 = vadd.f32 %v1183, %v1271
      %1273 = vmatmul.bf16.gmra.mxu0 %v847
      %v1274 = vpop.f32.mrf.mxu0
      %v1275 = vadd.f32 %v1186, %v1274
      %v1276 = vpop.f32.mrf.mxu0
      %v1277 = vadd.f32 %v1188, %v1276
      %1278 = vmatmul.bf16.gmra.mxu0 %v851
      %v1279 = vpop.f32.mrf.mxu0
      %v1280 = vadd.f32 %v1191, %v1279
      %v1281 = vpop.f32.mrf.mxu0
      %v1282 = vadd.f32 %v1193, %v1281
      %1283 = vmatmul.bf16.gmra.mxu0 %v855
      %v1284 = vpop.f32.mrf.mxu0
      %v1285 = vadd.f32 %v1196, %v1284
      %v1286 = vpop.f32.mrf.mxu0
      %v1287 = vadd.f32 %v1198, %v1286
      %1288 = vmatmul.bf16.gmra.mxu0 %v859
      %v1289 = vpop.f32.mrf.mxu0
      %v1290 = vadd.f32 %v1201, %v1289
      %v1291 = vpop.f32.mrf.mxu0
      %v1292 = vadd.f32 %v1203, %v1291
      %1293 = vmatmul.bf16.gmra.mxu0 %v863
      %v1294 = vpop.f32.mrf.mxu0
      %v1295 = vadd.f32 %v1206, %v1294
      %v1296 = vpop.f32.mrf.mxu0
      %v1297 = vadd.f32 %v1208, %v1296
      %1298 = vmatmul.bf16.gmra.mxu0 %v867
      %v1299 = vpop.f32.mrf.mxu0
      %v1300 = vadd.f32 %v1211, %v1299
      %v1301 = vpop.f32.mrf.mxu0
      %v1302 = vadd.f32 %v1213, %v1301
      %1303 = vdwg.mxu0
      %1304 = vmatpush.bf16.msra.mxu0 %v1085
      %1305 = vmatpush.bf16.msra.mxu0 %v1084
      %1306 = vmatpush.bf16.msra.mxu0 %v1083
      %1307 = vmatpush.bf16.msra.mxu0 %v1082
      %1308 = vmatpush.bf16.msra.mxu0 %v1081
      %1309 = vmatpush.bf16.msra.mxu0 %v1080
      %1310 = vmatpush.bf16.msra.mxu0 %v1079
      %1311 = vmatpush.bf16.msra.mxu0 %v1078
      %1312 = vmatmul.bf16.gmra.mxu0 %v808
      %v1313 = vpop.f32.mrf.mxu0
      %v1314 = vadd.f32 %v1225, %v1313
      %v1315 = vpop.f32.mrf.mxu0
      %v1316 = vadd.f32 %v1227, %v1315
      %1317 = vmatmul.bf16.gmra.mxu0 %v812
      %v1318 = vpop.f32.mrf.mxu0
      %v1319 = vadd.f32 %v1230, %v1318
      %v1320 = vpop.f32.mrf.mxu0
      %v1321 = vadd.f32 %v1232, %v1320
      %1322 = vmatmul.bf16.gmra.mxu0 %v816
      %v1323 = vpop.f32.mrf.mxu0
      %v1324 = vadd.f32 %v1235, %v1323
      %v1325 = vpop.f32.mrf.mxu0
      %v1326 = vadd.f32 %v1237, %v1325
      %1327 = vmatmul.bf16.gmra.mxu0 %v820
      %v1328 = vpop.f32.mrf.mxu0
      %v1329 = vadd.f32 %v1240, %v1328
      %v1330 = vpop.f32.mrf.mxu0
      %v1331 = vadd.f32 %v1242, %v1330
      %1332 = vmatmul.bf16.gmra.mxu0 %v824
      %v1333 = vpop.f32.mrf.mxu0
      %v1334 = vadd.f32 %v1245, %v1333
      %v1335 = vpop.f32.mrf.mxu0
      %v1336 = vadd.f32 %v1247, %v1335
      %1337 = vmatmul.bf16.gmra.mxu0 %v828
      %v1338 = vpop.f32.mrf.mxu0
      %v1339 = vadd.f32 %v1250, %v1338
      %v1340 = vpop.f32.mrf.mxu0
      %v1341 = vadd.f32 %v1252, %v1340
      %1342 = vmatmul.bf16.gmra.mxu0 %v832
      %v1343 = vpop.f32.mrf.mxu0
      %v1344 = vadd.f32 %v1255, %v1343
      %v1345 = vpop.f32.mrf.mxu0
      %v1346 = vadd.f32 %v1257, %v1345
      %1347 = vmatmul.bf16.gmra.mxu0 %v836
      %v1348 = vpop.f32.mrf.mxu0
      %v1349 = vadd.f32 %v1260, %v1348
      %v1350 = vpop.f32.mrf.mxu0
      %v1351 = vadd.f32 %v1262, %v1350
      %1352 = vmatmul.bf16.gmra.mxu0 %v840
      %v1353 = vpop.f32.mrf.mxu0
      %v1354 = vadd.f32 %v1265, %v1353
      %v1355 = vpop.f32.mrf.mxu0
      %v1356 = vadd.f32 %v1267, %v1355
      %1357 = vmatmul.bf16.gmra.mxu0 %v844
      %v1358 = vpop.f32.mrf.mxu0
      %v1359 = vadd.f32 %v1270, %v1358
      %v1360 = vpop.f32.mrf.mxu0
      %v1361 = vadd.f32 %v1272, %v1360
      %1362 = vmatmul.bf16.gmra.mxu0 %v848
      %v1363 = vpop.f32.mrf.mxu0
      %v1364 = vadd.f32 %v1275, %v1363
      %v1365 = vpop.f32.mrf.mxu0
      %v1366 = vadd.f32 %v1277, %v1365
      %1367 = vmatmul.bf16.gmra.mxu0 %v852
      %v1368 = vpop.f32.mrf.mxu0
      %v1369 = vadd.f32 %v1280, %v1368
      %v1370 = vpop.f32.mrf.mxu0
      %v1371 = vadd.f32 %v1282, %v1370
      %1372 = vmatmul.bf16.gmra.mxu0 %v856
      %v1373 = vpop.f32.mrf.mxu0
      %v1374 = vadd.f32 %v1285, %v1373
      %v1375 = vpop.f32.mrf.mxu0
      %v1376 = vadd.f32 %v1287, %v1375
      %1377 = vmatmul.bf16.gmra.mxu0 %v860
      %v1378 = vpop.f32.mrf.mxu0
      %v1379 = vadd.f32 %v1290, %v1378
      %v1380 = vpop.f32.mrf.mxu0
      %v1381 = vadd.f32 %v1292, %v1380
      %1382 = vmatmul.bf16.gmra.mxu0 %v864
      %v1383 = vpop.f32.mrf.mxu0
      %v1384 = vadd.f32 %v1295, %v1383
      %v1385 = vpop.f32.mrf.mxu0
      %v1386 = vadd.f32 %v1297, %v1385
      %1387 = vmatmul.bf16.gmra.mxu0 %v868
      %v1388 = vpop.f32.mrf.mxu0
      %v1389 = vadd.f32 %v1300, %v1388
      %v1390 = vpop.f32.mrf.mxu0
      %v1391 = vadd.f32 %v1302, %v1390
      %1392 = vdwg.mxu0
      %1393 = vmatpush.bf16.msra.mxu0 %v1093
      %1394 = vmatpush.bf16.msra.mxu0 %v1092
      %1395 = vmatpush.bf16.msra.mxu0 %v1091
      %1396 = vmatpush.bf16.msra.mxu0 %v1090
      %1397 = vmatpush.bf16.msra.mxu0 %v1089
      %1398 = vmatpush.bf16.msra.mxu0 %v1088
      %1399 = vmatpush.bf16.msra.mxu0 %v1087
      %1400 = vmatpush.bf16.msra.mxu0 %v1086
      %1401 = vmatmul.bf16.gmra.mxu0 %v809
      %v1402 = vpop.f32.mrf.mxu0
      %v1403 = vadd.f32 %v1314, %v1402
      %v1404 = vpop.f32.mrf.mxu0
      %v1405 = vadd.f32 %v1316, %v1404
      %1406 = vmatmul.bf16.gmra.mxu0 %v813
      %v1407 = vpop.f32.mrf.mxu0
      %v1408 = vadd.f32 %v1319, %v1407
      %v1409 = vpop.f32.mrf.mxu0
      %v1410 = vadd.f32 %v1321, %v1409
      %1411 = vmatmul.bf16.gmra.mxu0 %v817
      %v1412 = vpop.f32.mrf.mxu0
      %v1413 = vadd.f32 %v1324, %v1412
      %v1414 = vpop.f32.mrf.mxu0
      %v1415 = vadd.f32 %v1326, %v1414
      %1416 = vmatmul.bf16.gmra.mxu0 %v821
      %v1417 = vpop.f32.mrf.mxu0
      %v1418 = vadd.f32 %v1329, %v1417
      %v1419 = vpop.f32.mrf.mxu0
      %v1420 = vadd.f32 %v1331, %v1419
      %1421 = vmatmul.bf16.gmra.mxu0 %v825
      %v1422 = vpop.f32.mrf.mxu0
      %v1423 = vadd.f32 %v1334, %v1422
      %v1424 = vpop.f32.mrf.mxu0
      %v1425 = vadd.f32 %v1336, %v1424
      %1426 = vmatmul.bf16.gmra.mxu0 %v829
      %v1427 = vpop.f32.mrf.mxu0
      %v1428 = vadd.f32 %v1339, %v1427
      %v1429 = vpop.f32.mrf.mxu0
      %v1430 = vadd.f32 %v1341, %v1429
      %1431 = vmatmul.bf16.gmra.mxu0 %v833
      %v1432 = vpop.f32.mrf.mxu0
      %v1433 = vadd.f32 %v1344, %v1432
      %v1434 = vpop.f32.mrf.mxu0
      %v1435 = vadd.f32 %v1346, %v1434
      %1436 = vmatmul.bf16.gmra.mxu0 %v837
      %v1437 = vpop.f32.mrf.mxu0
      %v1438 = vadd.f32 %v1349, %v1437
      %v1439 = vpop.f32.mrf.mxu0
      %v1440 = vadd.f32 %v1351, %v1439
      %1441 = vmatmul.bf16.gmra.mxu0 %v841
      %v1442 = vpop.f32.mrf.mxu0
      %v1443 = vadd.f32 %v1354, %v1442
      %v1444 = vpop.f32.mrf.mxu0
      %v1445 = vadd.f32 %v1356, %v1444
      %1446 = vmatmul.bf16.gmra.mxu0 %v845
      %v1447 = vpop.f32.mrf.mxu0
      %v1448 = vadd.f32 %v1359, %v1447
      %v1449 = vpop.f32.mrf.mxu0
      %v1450 = vadd.f32 %v1361, %v1449
      %1451 = vmatmul.bf16.gmra.mxu0 %v849
      %v1452 = vpop.f32.mrf.mxu0
      %v1453 = vadd.f32 %v1364, %v1452
      %v1454 = vpop.f32.mrf.mxu0
      %v1455 = vadd.f32 %v1366, %v1454
      %1456 = vmatmul.bf16.gmra.mxu0 %v853
      %v1457 = vpop.f32.mrf.mxu0
      %v1458 = vadd.f32 %v1369, %v1457
      %v1459 = vpop.f32.mrf.mxu0
      %v1460 = vadd.f32 %v1371, %v1459
      %1461 = vmatmul.bf16.gmra.mxu0 %v857
      %v1462 = vpop.f32.mrf.mxu0
      %v1463 = vadd.f32 %v1374, %v1462
      %v1464 = vpop.f32.mrf.mxu0
      %v1465 = vadd.f32 %v1376, %v1464
      %1466 = vmatmul.bf16.gmra.mxu0 %v861
      %v1467 = vpop.f32.mrf.mxu0
      %v1468 = vadd.f32 %v1379, %v1467
      %v1469 = vpop.f32.mrf.mxu0
      %v1470 = vadd.f32 %v1381, %v1469
      %1471 = vmatmul.bf16.gmra.mxu0 %v865
      %v1472 = vpop.f32.mrf.mxu0
      %v1473 = vadd.f32 %v1384, %v1472
      %v1474 = vpop.f32.mrf.mxu0
      %v1475 = vadd.f32 %v1386, %v1474
      %1476 = vmatmul.bf16.gmra.mxu0 %v869
      %v1477 = vpop.f32.mrf.mxu0
      %v1478 = vadd.f32 %v1389, %v1477
      %v1479 = vpop.f32.mrf.mxu0
      %v1480 = vadd.f32 %v1391, %v1479
      %1481 = vdwg.mxu0
      %v1482 = vadd.f32 %v454, %v1403
      %v1483 = vadd.f32 %v455, %v1405
      %v1484 = vadd.f32 %v456, %v1408
      %v1485 = vadd.f32 %v457, %v1410
      %v1486 = vadd.f32 %v458, %v1413
      %v1487 = vadd.f32 %v459, %v1415
      %v1488 = vadd.f32 %v460, %v1418
      %v1489 = vadd.f32 %v461, %v1420
      %v1490 = vadd.f32 %v462, %v1423
      %v1491 = vadd.f32 %v463, %v1425
      %v1492 = vadd.f32 %v464, %v1428
      %v1493 = vadd.f32 %v465, %v1430
      %v1494 = vadd.f32 %v466, %v1433
      %v1495 = vadd.f32 %v467, %v1435
      %v1496 = vadd.f32 %v468, %v1438
      %v1497 = vadd.f32 %v469, %v1440
      %v1498 = vadd.f32 %v470, %v1443
      %v1499 = vadd.f32 %v471, %v1445
      %v1500 = vadd.f32 %v472, %v1448
      %v1501 = vadd.f32 %v473, %v1450
      %v1502 = vadd.f32 %v474, %v1453
      %v1503 = vadd.f32 %v475, %v1455
      %v1504 = vadd.f32 %v476, %v1458
      %v1505 = vadd.f32 %v477, %v1460
      %v1506 = vadd.f32 %v478, %v1463
      %v1507 = vadd.f32 %v479, %v1465
      %v1508 = vadd.f32 %v480, %v1468
      %v1509 = vadd.f32 %v481, %v1470
      %v1510 = vadd.f32 %v482, %v1473
      %v1511 = vadd.f32 %v483, %v1475
      %v1512 = vadd.f32 %v484, %v1478
      %v1513 = vadd.f32 %v485, %v1480
      %1514 = vst [vmem:[#allocation2] sm:$0xff] %v1482
      %1515 = vst [vmem:[#allocation2 + $0x8] sm:$0xff] %v1483
      %1516 = vst [vmem:[#allocation2 + $0x10] sm:$0xff] %v1484
      %1517 = vst [vmem:[#allocation2 + $0x18] sm:$0xff] %v1485
      %1518 = vst [vmem:[#allocation2 + $0x20] sm:$0xff] %v1486
      %1519 = vst [vmem:[#allocation2 + $0x28] sm:$0xff] %v1487
      %1520 = vst [vmem:[#allocation2 + $0x30] sm:$0xff] %v1488
      %1521 = vst [vmem:[#allocation2 + $0x38] sm:$0xff] %v1489
      %1522 = vst [vmem:[#allocation2 + $0x40] sm:$0xff] %v1490
      %1523 = vst [vmem:[#allocation2 + $0x48] sm:$0xff] %v1491
      %1524 = vst [vmem:[#allocation2 + $0x50] sm:$0xff] %v1492
      %1525 = vst [vmem:[#allocation2 + $0x58] sm:$0xff] %v1493
      %1526 = vst [vmem:[#allocation2 + $0x60] sm:$0xff] %v1494
      %1527 = vst [vmem:[#allocation2 + $0x68] sm:$0xff] %v1495
      %1528 = vst [vmem:[#allocation2 + $0x70] sm:$0xff] %v1496
      %1529 = vst [vmem:[#allocation2 + $0x78] sm:$0xff] %v1497
      %1530 = vst [vmem:[#allocation2 + $0x80] sm:$0xff] %v1498
      %1531 = vst [vmem:[#allocation2 + $0x88] sm:$0xff] %v1499
      %1532 = vst [vmem:[#allocation2 + $0x90] sm:$0xff] %v1500
      %1533 = vst [vmem:[#allocation2 + $0x98] sm:$0xff] %v1501
      %1534 = vst [vmem:[#allocation2 + $0xa0] sm:$0xff] %v1502
      %1535 = vst [vmem:[#allocation2 + $0xa8] sm:$0xff] %v1503
      %1536 = vst [vmem:[#allocation2 + $0xb0] sm:$0xff] %v1504
      %1537 = vst [vmem:[#allocation2 + $0xb8] sm:$0xff] %v1505
      %1538 = vst [vmem:[#allocation2 + $0xc0] sm:$0xff] %v1506
      %1539 = vst [vmem:[#allocation2 + $0xc8] sm:$0xff] %v1507
      %1540 = vst [vmem:[#allocation2 + $0xd0] sm:$0xff] %v1508
      %1541 = vst [vmem:[#allocation2 + $0xd8] sm:$0xff] %v1509
      %1542 = vst [vmem:[#allocation2 + $0xe0] sm:$0xff] %v1510
      %1543 = vst [vmem:[#allocation2 + $0xe8] sm:$0xff] %v1511
      %1544 = vst [vmem:[#allocation2 + $0xf0] sm:$0xff] %v1512
      %1545 = vst [vmem:[#allocation2 + $0xf8] sm:$0xff] %v1513
      // Predicated region
      $region49: #{forward.4} parent=43 // pred_check
        %p1546 = pneg %p418
      $region50: #{forward.4} parent=43 // pred_check_branch
        %1548 = sbr.rel (%p1546) target = $region52
      $region51: #{forward.4} parent=43 // pred_region
        %v1549 = vld [vmem:[#allocation2] sm:$0xff]
        %v1550 = vld [vmem:[#allocation2 + $0x8] sm:$0xff]
        %v1551 = vld [vmem:[#allocation2 + $0x10] sm:$0xff]
        %v1552 = vld [vmem:[#allocation2 + $0x18] sm:$0xff]
        %v1553 = vld [vmem:[#allocation2 + $0x20] sm:$0xff]
        %v1554 = vld [vmem:[#allocation2 + $0x28] sm:$0xff]
        %v1555 = vld [vmem:[#allocation2 + $0x30] sm:$0xff]
        %v1556 = vld [vmem:[#allocation2 + $0x38] sm:$0xff]
        %v1557 = vld [vmem:[#allocation2 + $0x40] sm:$0xff]
        %v1558 = vld [vmem:[#allocation2 + $0x48] sm:$0xff]
        %v1559 = vld [vmem:[#allocation2 + $0x50] sm:$0xff]
        %v1560 = vld [vmem:[#allocation2 + $0x58] sm:$0xff]
        %v1561 = vld [vmem:[#allocation2 + $0x60] sm:$0xff]
        %v1562 = vld [vmem:[#allocation2 + $0x68] sm:$0xff]
        %v1563 = vld [vmem:[#allocation2 + $0x70] sm:$0xff]
        %v1564 = vld [vmem:[#allocation2 + $0x78] sm:$0xff]
        %v1565 = vld [vmem:[#allocation2 + $0x80] sm:$0xff]
        %v1566 = vld [vmem:[#allocation2 + $0x88] sm:$0xff]
        %v1567 = vld [vmem:[#allocation2 + $0x90] sm:$0xff]
        %v1568 = vld [vmem:[#allocation2 + $0x98] sm:$0xff]
        %v1569 = vld [vmem:[#allocation2 + $0xa0] sm:$0xff]
        %v1570 = vld [vmem:[#allocation2 + $0xa8] sm:$0xff]
        %v1571 = vld [vmem:[#allocation2 + $0xb0] sm:$0xff]
        %v1572 = vld [vmem:[#allocation2 + $0xb8] sm:$0xff]
        %v1573 = vld [vmem:[#allocation2 + $0xc0] sm:$0xff]
        %v1574 = vld [vmem:[#allocation2 + $0xc8] sm:$0xff]
        %v1575 = vld [vmem:[#allocation2 + $0xd0] sm:$0xff]
        %v1576 = vld [vmem:[#allocation2 + $0xd8] sm:$0xff]
        %v1577 = vld [vmem:[#allocation2 + $0xe0] sm:$0xff]
        %v1578 = vld [vmem:[#allocation2 + $0xe8] sm:$0xff]
        %v1579 = vld [vmem:[#allocation2 + $0xf0] sm:$0xff]
        %v1580 = vld [vmem:[#allocation2 + $0xf8] sm:$0xff]
        %v1581 = vld [vmem:[%s397] sm:$0x1]
        %v1583 = vperm.slane %v1581, 0
        %v1585 = vadd.f32 %v1549, %v1583
        %v1586 = vadd.f32 %v1550, %v1583
        %v1587 = vadd.f32 %v1551, %v1583
        %v1588 = vadd.f32 %v1552, %v1583
        %v1589 = vadd.f32 %v1553, %v1583
        %v1590 = vadd.f32 %v1554, %v1583
        %v1591 = vadd.f32 %v1555, %v1583
        %v1592 = vadd.f32 %v1556, %v1583
        %v1593 = vadd.f32 %v1557, %v1583
        %v1594 = vadd.f32 %v1558, %v1583
        %v1595 = vadd.f32 %v1559, %v1583
        %v1596 = vadd.f32 %v1560, %v1583
        %v1597 = vadd.f32 %v1561, %v1583
        %v1598 = vadd.f32 %v1562, %v1583
        %v1599 = vadd.f32 %v1563, %v1583
        %v1600 = vadd.f32 %v1564, %v1583
        %v1601 = vadd.f32 %v1565, %v1583
        %v1602 = vadd.f32 %v1566, %v1583
        %v1603 = vadd.f32 %v1567, %v1583
        %v1604 = vadd.f32 %v1568, %v1583
        %v1605 = vadd.f32 %v1569, %v1583
        %v1606 = vadd.f32 %v1570, %v1583
        %v1607 = vadd.f32 %v1571, %v1583
        %v1608 = vadd.f32 %v1572, %v1583
        %v1609 = vadd.f32 %v1573, %v1583
        %v1610 = vadd.f32 %v1574, %v1583
        %v1611 = vadd.f32 %v1575, %v1583
        %v1612 = vadd.f32 %v1576, %v1583
        %v1613 = vadd.f32 %v1577, %v1583
        %v1614 = vadd.f32 %v1578, %v1583
        %v1615 = vadd.f32 %v1579, %v1583
        %v1616 = vadd.f32 %v1580, %v1583
        %v1617 = vpack.c.bf16 %v1585, %v1585
        %v1618 = vpack.c.bf16 %v1586, %v1586
        %v1619 = vpack.c.bf16 %v1587, %v1587
        %v1620 = vpack.c.bf16 %v1588, %v1588
        %v1621 = vpack.c.bf16 %v1589, %v1589
        %v1622 = vpack.c.bf16 %v1590, %v1590
        %v1623 = vpack.c.bf16 %v1591, %v1591
        %v1624 = vpack.c.bf16 %v1592, %v1592
        %v1625 = vpack.c.bf16 %v1593, %v1593
        %v1626 = vpack.c.bf16 %v1594, %v1594
        %v1627 = vpack.c.bf16 %v1595, %v1595
        %v1628 = vpack.c.bf16 %v1596, %v1596
        %v1629 = vpack.c.bf16 %v1597, %v1597
        %v1630 = vpack.c.bf16 %v1598, %v1598
        %v1631 = vpack.c.bf16 %v1599, %v1599
        %v1632 = vpack.c.bf16 %v1600, %v1600
        %v1633 = vpack.c.bf16 %v1601, %v1601
        %v1634 = vpack.c.bf16 %v1602, %v1602
        %v1635 = vpack.c.bf16 %v1603, %v1603
        %v1636 = vpack.c.bf16 %v1604, %v1604
        %v1637 = vpack.c.bf16 %v1605, %v1605
        %v1638 = vpack.c.bf16 %v1606, %v1606
        %v1639 = vpack.c.bf16 %v1607, %v1607
        %v1640 = vpack.c.bf16 %v1608, %v1608
        %v1641 = vpack.c.bf16 %v1609, %v1609
        %v1642 = vpack.c.bf16 %v1610, %v1610
        %v1643 = vpack.c.bf16 %v1611, %v1611
        %v1644 = vpack.c.bf16 %v1612, %v1612
        %v1645 = vpack.c.bf16 %v1613, %v1613
        %v1646 = vpack.c.bf16 %v1614, %v1614
        %v1647 = vpack.c.bf16 %v1615, %v1615
        %v1648 = vpack.c.bf16 %v1616, %v1616
        %1649 = vst [vmem:[%s406] sm:$0xf] %v1617
        %1650 = vst [vmem:[%s406 + $0x4] sm:$0xf] %v1618
        %1651 = vst [vmem:[%s406 + $0x8] sm:$0xf] %v1619
        %1652 = vst [vmem:[%s406 + $0xc] sm:$0xf] %v1620
        %1653 = vst [vmem:[%s406 + $0x10] sm:$0xf] %v1621
        %1654 = vst [vmem:[%s406 + $0x14] sm:$0xf] %v1622
        %1655 = vst [vmem:[%s406 + $0x18] sm:$0xf] %v1623
        %1656 = vst [vmem:[%s406 + $0x1c] sm:$0xf] %v1624
        %1657 = vst [vmem:[%s406 + $0x20] sm:$0xf] %v1625
        %1658 = vst [vmem:[%s406 + $0x24] sm:$0xf] %v1626
        %1659 = vst [vmem:[%s406 + $0x28] sm:$0xf] %v1627
        %1660 = vst [vmem:[%s406 + $0x2c] sm:$0xf] %v1628
        %1661 = vst [vmem:[%s406 + $0x30] sm:$0xf] %v1629
        %1662 = vst [vmem:[%s406 + $0x34] sm:$0xf] %v1630
        %1663 = vst [vmem:[%s406 + $0x38] sm:$0xf] %v1631
        %1664 = vst [vmem:[%s406 + $0x3c] sm:$0xf] %v1632
        %1665 = vst [vmem:[%s406 + $0x40] sm:$0xf] %v1633
        %1666 = vst [vmem:[%s406 + $0x44] sm:$0xf] %v1634
        %1667 = vst [vmem:[%s406 + $0x48] sm:$0xf] %v1635
        %1668 = vst [vmem:[%s406 + $0x4c] sm:$0xf] %v1636
        %1669 = vst [vmem:[%s406 + $0x50] sm:$0xf] %v1637
        %1670 = vst [vmem:[%s406 + $0x54] sm:$0xf] %v1638
        %1671 = vst [vmem:[%s406 + $0x58] sm:$0xf] %v1639
        %1672 = vst [vmem:[%s406 + $0x5c] sm:$0xf] %v1640
        %1673 = vst [vmem:[%s406 + $0x60] sm:$0xf] %v1641
        %1674 = vst [vmem:[%s406 + $0x64] sm:$0xf] %v1642
        %1675 = vst [vmem:[%s406 + $0x68] sm:$0xf] %v1643
        %1676 = vst [vmem:[%s406 + $0x6c] sm:$0xf] %v1644
        %1677 = vst [vmem:[%s406 + $0x70] sm:$0xf] %v1645
        %1678 = vst [vmem:[%s406 + $0x74] sm:$0xf] %v1646
        %1679 = vst [vmem:[%s406 + $0x78] sm:$0xf] %v1647
        %1680 = vst [vmem:[%s406 + $0x7c] sm:$0xf] %v1648
        %v1681 = vld [vmem:[%s3] sm:$0xf]
        %v1682 = vld [vmem:[%s3 + $0x4] sm:$0xf]
        %v1683 = vld [vmem:[%s3 + $0x8] sm:$0xf]
        %v1684 = vld [vmem:[%s3 + $0xc] sm:$0xf]
        %v1685 = vld [vmem:[%s3 + $0x10] sm:$0xf]
        %v1686 = vld [vmem:[%s3 + $0x14] sm:$0xf]
        %v1687 = vld [vmem:[%s3 + $0x18] sm:$0xf]
        %v1688 = vld [vmem:[%s3 + $0x1c] sm:$0xf]
        %v1689 = vld [vmem:[%s3 + $0x20] sm:$0xf]
        %v1690 = vld [vmem:[%s3 + $0x24] sm:$0xf]
        %v1691 = vld [vmem:[%s3 + $0x28] sm:$0xf]
        %v1692 = vld [vmem:[%s3 + $0x2c] sm:$0xf]
        %v1693 = vld [vmem:[%s3 + $0x30] sm:$0xf]
        %v1694 = vld [vmem:[%s3 + $0x34] sm:$0xf]
        %v1695 = vld [vmem:[%s3 + $0x38] sm:$0xf]
        %v1696 = vld [vmem:[%s3 + $0x3c] sm:$0xf]
        %v1697 = vld [vmem:[%s4] sm:$0x1]
        %v1699 = vperm.slane %v1697, 0
        %v1733 = vunpack.c.l.b16 %v1617
        %v1734 = vunpack.c.l.b16 %v1618
        %v1735 = vunpack.c.l.b16 %v1619
        %v1736 = vunpack.c.l.b16 %v1620
        %v1737 = vunpack.c.l.b16 %v1621
        %v1738 = vunpack.c.l.b16 %v1622
        %v1739 = vunpack.c.l.b16 %v1623
        %v1740 = vunpack.c.l.b16 %v1624
        %v1741 = vunpack.c.l.b16 %v1625
        %v1742 = vunpack.c.l.b16 %v1626
        %v1743 = vunpack.c.l.b16 %v1627
        %v1744 = vunpack.c.l.b16 %v1628
        %v1745 = vunpack.c.l.b16 %v1629
        %v1746 = vunpack.c.l.b16 %v1630
        %v1747 = vunpack.c.l.b16 %v1631
        %v1748 = vunpack.c.l.b16 %v1632
        %v1749 = vunpack.c.l.b16 %v1633
        %v1750 = vunpack.c.l.b16 %v1634
        %v1751 = vunpack.c.l.b16 %v1635
        %v1752 = vunpack.c.l.b16 %v1636
        %v1753 = vunpack.c.l.b16 %v1637
        %v1754 = vunpack.c.l.b16 %v1638
        %v1755 = vunpack.c.l.b16 %v1639
        %v1756 = vunpack.c.l.b16 %v1640
        %v1757 = vunpack.c.l.b16 %v1641
        %v1758 = vunpack.c.l.b16 %v1642
        %v1759 = vunpack.c.l.b16 %v1643
        %v1760 = vunpack.c.l.b16 %v1644
        %v1761 = vunpack.c.l.b16 %v1645
        %v1762 = vunpack.c.l.b16 %v1646
        %v1763 = vunpack.c.l.b16 %v1647
        %v1764 = vunpack.c.l.b16 %v1648
        %v1765 = vpack.c.b16 %v1734, %v1733
        %v1766 = vpack.c.b16 %v1736, %v1735
        %v1767 = vpack.c.b16 %v1738, %v1737
        %v1768 = vpack.c.b16 %v1740, %v1739
        %v1769 = vpack.c.b16 %v1742, %v1741
        %v1770 = vpack.c.b16 %v1744, %v1743
        %v1771 = vpack.c.b16 %v1746, %v1745
        %v1772 = vpack.c.b16 %v1748, %v1747
        %v1773 = vpack.c.b16 %v1750, %v1749
        %v1774 = vpack.c.b16 %v1752, %v1751
        %v1775 = vpack.c.b16 %v1754, %v1753
        %v1776 = vpack.c.b16 %v1756, %v1755
        %v1777 = vpack.c.b16 %v1758, %v1757
        %v1778 = vpack.c.b16 %v1760, %v1759
        %v1779 = vpack.c.b16 %v1762, %v1761
        %v1780 = vpack.c.b16 %v1764, %v1763
        %v1813 = vunpack.c.l.b16 %v1681
        %v1814 = vunpack.c.l.b16 %v1682
        %v1815 = vunpack.c.l.b16 %v1683
        %v1816 = vunpack.c.l.b16 %v1684
        %v1817 = vunpack.c.l.b16 %v1685
        %v1818 = vunpack.c.l.b16 %v1686
        %v1819 = vunpack.c.l.b16 %v1687
        %v1820 = vunpack.c.l.b16 %v1688
        %v1821 = vunpack.c.l.b16 %v1689
        %v1822 = vunpack.c.l.b16 %v1690
        %v1823 = vunpack.c.l.b16 %v1691
        %v1824 = vunpack.c.l.b16 %v1692
        %v1825 = vunpack.c.l.b16 %v1693
        %v1826 = vunpack.c.l.b16 %v1694
        %v1827 = vunpack.c.l.b16 %v1695
        %v1828 = vunpack.c.l.b16 %v1696
        %v1829 = vpack.c.b16 %v1814, %v1813
        %v1830 = vpack.c.b16 %v1816, %v1815
        %v1831 = vpack.c.b16 %v1818, %v1817
        %v1832 = vpack.c.b16 %v1820, %v1819
        %v1833 = vpack.c.b16 %v1822, %v1821
        %v1834 = vpack.c.b16 %v1824, %v1823
        %v1835 = vpack.c.b16 %v1826, %v1825
        %v1836 = vpack.c.b16 %v1828, %v1827
        %1845 = vmatpush.bf16.msra.mxu0 %v1836
        %1846 = vmatpush.bf16.msra.mxu0 %v1835
        %1847 = vmatpush.bf16.msra.mxu0 %v1834
        %1848 = vmatpush.bf16.msra.mxu0 %v1833
        %1849 = vmatpush.bf16.msra.mxu0 %v1832
        %1850 = vmatpush.bf16.msra.mxu0 %v1831
        %1851 = vmatpush.bf16.msra.mxu0 %v1830
        %1852 = vmatpush.bf16.msra.mxu0 %v1829
        %1853 = vmatmul.bf16.gmra.mxu0 %v1765
        %v1854 = vpop.f32.mrf.mxu0
        %v1855 = vadd.f32 %v1699, %v1854
        %v1856 = vpop.f32.mrf.mxu0
        %v1857 = vadd.f32 %v1699, %v1856
        %1858 = vmatmul.bf16.gmra.mxu0 %v1766
        %v1859 = vpop.f32.mrf.mxu0
        %v1860 = vadd.f32 %v1699, %v1859
        %v1861 = vpop.f32.mrf.mxu0
        %v1862 = vadd.f32 %v1699, %v1861
        %1863 = vmatmul.bf16.gmra.mxu0 %v1767
        %v1864 = vpop.f32.mrf.mxu0
        %v1865 = vadd.f32 %v1699, %v1864
        %v1866 = vpop.f32.mrf.mxu0
        %v1867 = vadd.f32 %v1699, %v1866
        %1868 = vmatmul.bf16.gmra.mxu0 %v1768
        %v1869 = vpop.f32.mrf.mxu0
        %v1870 = vadd.f32 %v1699, %v1869
        %v1871 = vpop.f32.mrf.mxu0
        %v1872 = vadd.f32 %v1699, %v1871
        %1873 = vmatmul.bf16.gmra.mxu0 %v1769
        %v1874 = vpop.f32.mrf.mxu0
        %v1875 = vadd.f32 %v1699, %v1874
        %v1876 = vpop.f32.mrf.mxu0
        %v1877 = vadd.f32 %v1699, %v1876
        %1878 = vmatmul.bf16.gmra.mxu0 %v1770
        %v1879 = vpop.f32.mrf.mxu0
        %v1880 = vadd.f32 %v1699, %v1879
        %v1881 = vpop.f32.mrf.mxu0
        %v1882 = vadd.f32 %v1699, %v1881
        %1883 = vmatmul.bf16.gmra.mxu0 %v1771
        %v1884 = vpop.f32.mrf.mxu0
        %v1885 = vadd.f32 %v1699, %v1884
        %v1886 = vpop.f32.mrf.mxu0
        %v1887 = vadd.f32 %v1699, %v1886
        %1888 = vmatmul.bf16.gmra.mxu0 %v1772
        %v1889 = vpop.f32.mrf.mxu0
        %v1890 = vadd.f32 %v1699, %v1889
        %v1891 = vpop.f32.mrf.mxu0
        %v1892 = vadd.f32 %v1699, %v1891
        %1893 = vmatmul.bf16.gmra.mxu0 %v1773
        %v1894 = vpop.f32.mrf.mxu0
        %v1895 = vadd.f32 %v1699, %v1894
        %v1896 = vpop.f32.mrf.mxu0
        %v1897 = vadd.f32 %v1699, %v1896
        %1898 = vmatmul.bf16.gmra.mxu0 %v1774
        %v1899 = vpop.f32.mrf.mxu0
        %v1900 = vadd.f32 %v1699, %v1899
        %v1901 = vpop.f32.mrf.mxu0
        %v1902 = vadd.f32 %v1699, %v1901
        %1903 = vmatmul.bf16.gmra.mxu0 %v1775
        %v1904 = vpop.f32.mrf.mxu0
        %v1905 = vadd.f32 %v1699, %v1904
        %v1906 = vpop.f32.mrf.mxu0
        %v1907 = vadd.f32 %v1699, %v1906
        %1908 = vmatmul.bf16.gmra.mxu0 %v1776
        %v1909 = vpop.f32.mrf.mxu0
        %v1910 = vadd.f32 %v1699, %v1909
        %v1911 = vpop.f32.mrf.mxu0
        %v1912 = vadd.f32 %v1699, %v1911
        %1913 = vmatmul.bf16.gmra.mxu0 %v1777
        %v1914 = vpop.f32.mrf.mxu0
        %v1915 = vadd.f32 %v1699, %v1914
        %v1916 = vpop.f32.mrf.mxu0
        %v1917 = vadd.f32 %v1699, %v1916
        %1918 = vmatmul.bf16.gmra.mxu0 %v1778
        %v1919 = vpop.f32.mrf.mxu0
        %v1920 = vadd.f32 %v1699, %v1919
        %v1921 = vpop.f32.mrf.mxu0
        %v1922 = vadd.f32 %v1699, %v1921
        %1923 = vmatmul.bf16.gmra.mxu0 %v1779
        %v1924 = vpop.f32.mrf.mxu0
        %v1925 = vadd.f32 %v1699, %v1924
        %v1926 = vpop.f32.mrf.mxu0
        %v1927 = vadd.f32 %v1699, %v1926
        %1928 = vmatmul.bf16.gmra.mxu0 %v1780
        %v1929 = vpop.f32.mrf.mxu0
        %v1930 = vadd.f32 %v1699, %v1929
        %v1931 = vpop.f32.mrf.mxu0
        %v1932 = vadd.f32 %v1699, %v1931
        %1933 = vdwg.mxu0
        %v1934 = vtanh.pop %v1855
        %v1935 = vtanh.pop %v1857
        %v1936 = vtanh.pop %v1860
        %v1937 = vtanh.pop %v1862
        %v1938 = vtanh.pop %v1865
        %v1939 = vtanh.pop %v1867
        %v1940 = vtanh.pop %v1870
        %v1941 = vtanh.pop %v1872
        %v1942 = vtanh.pop %v1875
        %v1943 = vtanh.pop %v1877
        %v1944 = vtanh.pop %v1880
        %v1945 = vtanh.pop %v1882
        %v1946 = vtanh.pop %v1885
        %v1947 = vtanh.pop %v1887
        %v1948 = vtanh.pop %v1890
        %v1949 = vtanh.pop %v1892
        %v1950 = vtanh.pop %v1895
        %v1951 = vtanh.pop %v1897
        %v1952 = vtanh.pop %v1900
        %v1953 = vtanh.pop %v1902
        %v1954 = vtanh.pop %v1905
        %v1955 = vtanh.pop %v1907
        %v1956 = vtanh.pop %v1910
        %v1957 = vtanh.pop %v1912
        %v1958 = vtanh.pop %v1915
        %v1959 = vtanh.pop %v1917
        %v1960 = vtanh.pop %v1920
        %v1961 = vtanh.pop %v1922
        %v1962 = vtanh.pop %v1925
        %v1963 = vtanh.pop %v1927
        %v1964 = vtanh.pop %v1930
        %v1965 = vtanh.pop %v1932
        %v1966 = vld [vmem:[%s5] sm:$0x1]
        %v1968 = vperm.slane %v1966, 0
        %v1970 = vmul.f32 %v1934, %v1968
        %v1971 = vmul.f32 %v1935, %v1968
        %v1972 = vmul.f32 %v1936, %v1968
        %v1973 = vmul.f32 %v1937, %v1968
        %v1974 = vmul.f32 %v1938, %v1968
        %v1975 = vmul.f32 %v1939, %v1968
        %v1976 = vmul.f32 %v1940, %v1968
        %v1977 = vmul.f32 %v1941, %v1968
        %v1978 = vmul.f32 %v1942, %v1968
        %v1979 = vmul.f32 %v1943, %v1968
        %v1980 = vmul.f32 %v1944, %v1968
        %v1981 = vmul.f32 %v1945, %v1968
        %v1982 = vmul.f32 %v1946, %v1968
        %v1983 = vmul.f32 %v1947, %v1968
        %v1984 = vmul.f32 %v1948, %v1968
        %v1985 = vmul.f32 %v1949, %v1968
        %v1986 = vmul.f32 %v1950, %v1968
        %v1987 = vmul.f32 %v1951, %v1968
        %v1988 = vmul.f32 %v1952, %v1968
        %v1989 = vmul.f32 %v1953, %v1968
        %v1990 = vmul.f32 %v1954, %v1968
        %v1991 = vmul.f32 %v1955, %v1968
        %v1992 = vmul.f32 %v1956, %v1968
        %v1993 = vmul.f32 %v1957, %v1968
        %v1994 = vmul.f32 %v1958, %v1968
        %v1995 = vmul.f32 %v1959, %v1968
        %v1996 = vmul.f32 %v1960, %v1968
        %v1997 = vmul.f32 %v1961, %v1968
        %v1998 = vmul.f32 %v1962, %v1968
        %v1999 = vmul.f32 %v1963, %v1968
        %v2000 = vmul.f32 %v1964, %v1968
        %v2001 = vmul.f32 %v1965, %v1968
        %2002 = vadd.xlane.f32.xlu0 %v1970
        %v2003 = vpop.xlane.xlu0 %2002
        %2004 = vadd.xlane.f32.xlu0 %v1971
        %v2005 = vpop.xlane.xlu0 %2004
        %2006 = vadd.xlane.f32.xlu0 %v1972
        %v2007 = vpop.xlane.xlu0 %2006
        %2008 = vadd.xlane.f32.xlu0 %v1973
        %v2009 = vpop.xlane.xlu0 %2008
        %2010 = vadd.xlane.f32.xlu0 %v1974
        %v2011 = vpop.xlane.xlu0 %2010
        %2012 = vadd.xlane.f32.xlu0 %v1975
        %v2013 = vpop.xlane.xlu0 %2012
        %2014 = vadd.xlane.f32.xlu0 %v1976
        %v2015 = vpop.xlane.xlu0 %2014
        %2016 = vadd.xlane.f32.xlu0 %v1977
        %v2017 = vpop.xlane.xlu0 %2016
        %2018 = vadd.xlane.f32.xlu0 %v1978
        %v2019 = vpop.xlane.xlu0 %2018
        %2020 = vadd.xlane.f32.xlu0 %v1979
        %v2021 = vpop.xlane.xlu0 %2020
        %2022 = vadd.xlane.f32.xlu0 %v1980
        %v2023 = vpop.xlane.xlu0 %2022
        %2024 = vadd.xlane.f32.xlu0 %v1981
        %v2025 = vpop.xlane.xlu0 %2024
        %2026 = vadd.xlane.f32.xlu0 %v1982
        %v2027 = vpop.xlane.xlu0 %2026
        %2028 = vadd.xlane.f32.xlu0 %v1983
        %v2029 = vpop.xlane.xlu0 %2028
        %2030 = vadd.xlane.f32.xlu0 %v1984
        %v2031 = vpop.xlane.xlu0 %2030
        %2032 = vadd.xlane.f32.xlu0 %v1985
        %v2033 = vpop.xlane.xlu0 %2032
        %2034 = vadd.xlane.f32.xlu0 %v1986
        %v2035 = vpop.xlane.xlu0 %2034
        %2036 = vadd.xlane.f32.xlu0 %v1987
        %v2037 = vpop.xlane.xlu0 %2036
        %2038 = vadd.xlane.f32.xlu0 %v1988
        %v2039 = vpop.xlane.xlu0 %2038
        %2040 = vadd.xlane.f32.xlu0 %v1989
        %v2041 = vpop.xlane.xlu0 %2040
        %2042 = vadd.xlane.f32.xlu0 %v1990
        %v2043 = vpop.xlane.xlu0 %2042
        %2044 = vadd.xlane.f32.xlu0 %v1991
        %v2045 = vpop.xlane.xlu0 %2044
        %2046 = vadd.xlane.f32.xlu0 %v1992
        %v2047 = vpop.xlane.xlu0 %2046
        %2048 = vadd.xlane.f32.xlu0 %v1993
        %v2049 = vpop.xlane.xlu0 %2048
        %2050 = vadd.xlane.f32.xlu0 %v1994
        %v2051 = vpop.xlane.xlu0 %2050
        %2052 = vadd.xlane.f32.xlu0 %v1995
        %v2053 = vpop.xlane.xlu0 %2052
        %2054 = vadd.xlane.f32.xlu0 %v1996
        %v2055 = vpop.xlane.xlu0 %2054
        %2056 = vadd.xlane.f32.xlu0 %v1997
        %v2057 = vpop.xlane.xlu0 %2056
        %2058 = vadd.xlane.f32.xlu0 %v1998
        %v2059 = vpop.xlane.xlu0 %2058
        %2060 = vadd.xlane.f32.xlu0 %v1999
        %v2061 = vpop.xlane.xlu0 %2060
        %2062 = vadd.xlane.f32.xlu0 %v2000
        %v2063 = vpop.xlane.xlu0 %2062
        %2064 = vadd.xlane.f32.xlu0 %v2001
        %v2065 = vpop.xlane.xlu0 %2064
        %vm2066 = vcmask 7168
        %2067 = vst.msk [vmem:[%s416] sm:$0xff] %vm2066, %v2003
        %2068 = vst.msk [vmem:[%s416 + $0x8] sm:$0xff] %vm2066, %v2005
        %2069 = vst.msk [vmem:[%s416 + $0x10] sm:$0xff] %vm2066, %v2007
        %2070 = vst.msk [vmem:[%s416 + $0x18] sm:$0xff] %vm2066, %v2009
        %2071 = vst.msk [vmem:[%s416 + $0x20] sm:$0xff] %vm2066, %v2011
        %2072 = vst.msk [vmem:[%s416 + $0x28] sm:$0xff] %vm2066, %v2013
        %2073 = vst.msk [vmem:[%s416 + $0x30] sm:$0xff] %vm2066, %v2015
        %2074 = vst.msk [vmem:[%s416 + $0x38] sm:$0xff] %vm2066, %v2017
        %2075 = vst.msk [vmem:[%s416 + $0x40] sm:$0xff] %vm2066, %v2019
        %2076 = vst.msk [vmem:[%s416 + $0x48] sm:$0xff] %vm2066, %v2021
        %2077 = vst.msk [vmem:[%s416 + $0x50] sm:$0xff] %vm2066, %v2023
        %2078 = vst.msk [vmem:[%s416 + $0x58] sm:$0xff] %vm2066, %v2025
        %2079 = vst.msk [vmem:[%s416 + $0x60] sm:$0xff] %vm2066, %v2027
        %2080 = vst.msk [vmem:[%s416 + $0x68] sm:$0xff] %vm2066, %v2029
        %2081 = vst.msk [vmem:[%s416 + $0x70] sm:$0xff] %vm2066, %v2031
        %2082 = vst.msk [vmem:[%s416 + $0x78] sm:$0xff] %vm2066, %v2033
        %2083 = vst.msk [vmem:[%s416 + $0x80] sm:$0xff] %vm2066, %v2035
        %2084 = vst.msk [vmem:[%s416 + $0x88] sm:$0xff] %vm2066, %v2037
        %2085 = vst.msk [vmem:[%s416 + $0x90] sm:$0xff] %vm2066, %v2039
        %2086 = vst.msk [vmem:[%s416 + $0x98] sm:$0xff] %vm2066, %v2041
        %2087 = vst.msk [vmem:[%s416 + $0xa0] sm:$0xff] %vm2066, %v2043
        %2088 = vst.msk [vmem:[%s416 + $0xa8] sm:$0xff] %vm2066, %v2045
        %2089 = vst.msk [vmem:[%s416 + $0xb0] sm:$0xff] %vm2066, %v2047
        %2090 = vst.msk [vmem:[%s416 + $0xb8] sm:$0xff] %vm2066, %v2049
        %2091 = vst.msk [vmem:[%s416 + $0xc0] sm:$0xff] %vm2066, %v2051
        %2092 = vst.msk [vmem:[%s416 + $0xc8] sm:$0xff] %vm2066, %v2053
        %2093 = vst.msk [vmem:[%s416 + $0xd0] sm:$0xff] %vm2066, %v2055
        %2094 = vst.msk [vmem:[%s416 + $0xd8] sm:$0xff] %vm2066, %v2057
        %2095 = vst.msk [vmem:[%s416 + $0xe0] sm:$0xff] %vm2066, %v2059
        %2096 = vst.msk [vmem:[%s416 + $0xe8] sm:$0xff] %vm2066, %v2061
        %2097 = vst.msk [vmem:[%s416 + $0xf0] sm:$0xff] %vm2066, %v2063
        %2098 = vst.msk [vmem:[%s416 + $0xf8] sm:$0xff] %vm2066, %v2065
      $region52: #{forward.4} parent=43 // pred_fallthru
        _
      %s2099 = smul.u32 32, %s25
      %p2100 = scmp.lt.s32.totalorder %s24, 1
      %s2101 = scalar_select %p2100, %s24, 1
      %p2102 = scmp.lt.s32.totalorder %s2099, 63
      %s2103 = scalar_select %p2102, %s2099, 63
      %s2104 = smul.addr %s2101, 64
      %s2105 = sadd.s32 %s2103, %s2104
      %s2106 = smul.addr %s2105, 4
      %s2107 = scalar_lea.vmem %s6, %s2106
      %s2108 = smul.u32 32, %s25
      %p2109 = scmp.lt.s32.totalorder %s24, 1
      %s2110 = scalar_select %p2109, %s24, 1
      %p2111 = scmp.lt.s32.totalorder %s2108, 63
      %s2112 = scalar_select %p2111, %s2108, 63
      %s2113 = smul.addr %s2110, 64
      %s2114 = sadd.s32 %s2112, %s2113
      %s2115 = smul.addr %s2114, 8
      %s2116 = scalar_lea.vmem %s7, %s2115
      // Predicated region
      $region53: #{forward.4} parent=43 // pred_check
        %p2117 = pneg %p205
      $region54: #{forward.4} parent=43 // pred_check_branch
        %2119 = sbr.rel (%p2117) target = $region56
      $region55: #{forward.4} parent=43 // pred_region
        %s2120 = smul.u32 32, %s25
      $region56: #{forward.4} parent=43 // pred_fallthru
        _
      // Predicated region
      $region57: #{forward.4} parent=43 // pred_check
        %p2121 = pneg %p233
      $region58: #{forward.4} parent=43 // pred_check_branch
        %2123 = sbr.rel (%p2121) target = $region60
      $region59: #{forward.4} parent=43 // pred_region
        %s2124 = smul.u32 32, %s25
      $region60: #{forward.4} parent=43 // pred_fallthru
        _
    $region44: #{forward.4} parent=5 // pred_fallthru
      _
    %p2125 = scmp.le.s32.totalorder 2, %s14
    // Predicated region
    $region61: #{forward.4} parent=5 // pred_check
      %p2126 = pneg %p2125
    $region62: #{forward.4} parent=5 // pred_check_branch
      %2128 = sbr.rel (%p2126) target = $region64
    $region63: #{forward.4} parent=5 // pred_region
      %s2129 = ssub.s32 %s14, 2
      // Predicated region
      $region65: #{forward.4} parent=63 // pred_check
        %p2130 = pneg %p211
      $region66: #{forward.4} parent=63 // pred_check_branch
        %2132 = sbr.rel (%p2130) target = $region68
      $region67: #{forward.4} parent=63 // pred_region
        %s2133 = smul.u32 32, %s28
        %p2134 = scmp.lt.s32.totalorder %s27, 1
        %s2135 = scalar_select %p2134, %s27, 1
        %p2136 = scmp.lt.s32.totalorder %s2133, 63
        %s2137 = scalar_select %p2136, %s2133, 63
        %s2138 = smul.addr %s2135, 64
        %s2139 = sadd.s32 %s2137, %s2138
        %s2140 = smul.addr %s2139, 4
        %s2141 = scalar_lea.vmem %s6, %s2140
      $region68: #{forward.4} parent=63 // pred_fallthru
        _
      // Predicated region
      $region69: #{forward.4} parent=63 // pred_check
        %p2142 = pneg %p239
      $region70: #{forward.4} parent=63 // pred_check_branch
        %2144 = sbr.rel (%p2142) target = $region72
      $region71: #{forward.4} parent=63 // pred_region
        %s2145 = smul.u32 32, %s28
        %p2146 = scmp.lt.s32.totalorder %s27, 1
        %s2147 = scalar_select %p2146, %s27, 1
        %p2148 = scmp.lt.s32.totalorder %s2145, 63
        %s2149 = scalar_select %p2148, %s2145, 63
        %s2150 = smul.addr %s2147, 64
        %s2151 = sadd.s32 %s2149, %s2150
        %s2152 = smul.addr %s2151, 8
        %s2153 = scalar_lea.vmem %s7, %s2152
      $region72: #{forward.4} parent=63 // pred_fallthru
        _
    $region64: #{forward.4} parent=5 // pred_fallthru
      _
  $region6: #{forward.4} parent=0 // loop_footer
    %s18 = sadd.s32 1, %s14
  $region7: #{forward.4} parent=0 // loop_footer_branch
    %13 = sbr.rel target = $region3
  $region8: #{forward.4} parent=0 // loop_exit
    _

// kernel: forward.3
$region0: #{forward.3}
  #allocation0 [shape = 'u32[]', space=smem, size = 0x4, offset = 0x4, fixed_abs, tag = 'smem constant byte address 0x4 - core index']
  #allocation1 [shape = 'u32[72,128]{1,0:T(1,128)}', space=vmem, size = 0x9000, scoped, tag = 'internal scratch']
  #allocation2 [shape = 'f32[256,128]{1,0:T(8,128)}', space=vmem, size = 0x20000, scoped, tag = 'scratch operand']
  %s0 = inlined_call_operand.hbm [shape: bf16[2,512,512], index: 0, kind: input, shape index: {}]
  %s1 = inlined_call_operand.hbm [shape: bf16[512,128], index: 1, kind: input, shape index: {}]
  %s2 = inlined_call_operand.hbm [shape: bf16[2,128,1024], index: 2, kind: input, shape index: {}]
  %s3 = inlined_call_operand.hbm [shape: f32[2,1,1024], index: 3, kind: input, shape index: {}]
  %s4 = inlined_call_operand.hbm [shape: bf16[2,1024,128], index: 4, kind: input, shape index: {}]
  %s5 = inlined_call_operand.vmem [shape: bf16[2,512,128], index: 5, kind: output, shape index: {}]
  %s6 = sld [smem:[#allocation0]]
  $region81: #{forward.3} parent=0
    _
  %s8 = ssub.s32 1, %s6
  %s9 = scalar_select 0, %s8, %s6
  $region1: #{forward.3} parent=0
    #allocation3 [shape = 'u8[524288]{0}', space=vmem, size = 0x80000, scoped, tag = 'input window, operand 0']
    #allocation4 [shape = 's32[2]{0}', space=sflag, size = 0x8, scoped, tag = 'scoped memory for forward.3']
    #allocation5 [shape = 'u8[131072]{0}', space=vmem, size = 0x20000, scoped, tag = 'input window, operand 1, single buffered']
    #allocation6 [shape = 's32[1]{0}', space=sflag, size = 0x4, scoped, tag = 'scoped memory for forward.3']
    #allocation7 [shape = 'u8[524288]{0}', space=vmem, size = 0x80000, scoped, tag = 'input window, operand 2']
    #allocation8 [shape = 'u8[8192]{0}', space=vmem, size = 0x2000, scoped, tag = 'input window, operand 3']
    #allocation9 [shape = 'u8[524288]{0}', space=vmem, size = 0x80000, scoped, tag = 'input window, operand 4']
    %10 = vsyncpa [#allocation4], 0
    %s11 = scalar_lea.sflag [#allocation4], 1
    %12 = vsyncpa %s11, 0
    %13 = vsyncpa [#allocation6], 0
    loop: start=0, step=1, limit=6
    $region2: #{forward.3} parent=1 // loop_pre_header
      _
    $region3: #{forward.3} parent=1 // loop_header
      %s15 = sphi 0, %s19
      %p16 = scmp.ge.s32.totalorder %s15, 6
      %s22 = sphi 0, %s41
      %s23 = sphi 0, %s37
      %s24 = sphi 0, %s33
      %s25 = sphi 0, %s22
      %s26 = sphi 0, %s23
      %s27 = sphi 0, %s24
      %s28 = sphi 0, %s25
      %s29 = sphi 0, %s26
      %s30 = sphi 0, %s27
      %s48 = sphi 0, %s50
      %s51 = sphi 0, %s48
      %s52 = sphi 0, %s51
      %s68 = sphi 0, %s52
      %s74 = sphi 0, %s76
      %s77 = sphi 0, %s74
      %s78 = sphi 0, %s77
      %s94 = sphi 0, %s78
      %s100 = sphi 0, %s102
      %s103 = sphi 0, %s100
      %s104 = sphi 0, %s103
      %s120 = sphi 0, %s104
      %s126 = sphi 0, %s128
      %s129 = sphi 0, %s126
      %s130 = sphi 0, %s129
      %s146 = sphi 0, %s130
      %s152 = sphi 0, %s154
      %s155 = sphi 0, %s152
      %s156 = sphi 0, %s155
      %s172 = sphi 0, %s156
      %s180 = sphi 0, %s182
      %s183 = sphi 0, %s180
      %s184 = sphi 0, %s183
      %s200 = sphi 0, %s184
    $region4: #{forward.3} parent=1 // loop_header_branch
      %18 = sbr.rel (%p16) target = $region8
    $region5: #{forward.3} parent=1 // loop_body
      %s20 = ssub.s32 %s15, 1
      %s21 = ssub.s32 %s15, 2
      %s31 = sadd.s32 1, %s24
      %p32 = scmp.ge.s32.totalorder %s31, 1
      %s33 = scalar_select %p32, 0, %s31
      %s34 = sadd.s32 1, %s23
      %s35 = scalar_select %p32, %s34, %s23
      %p36 = scmp.ge.s32.totalorder %s35, 2
      %s37 = scalar_select %p36, 0, %s35
      %s38 = sadd.s32 1, %s22
      %s39 = scalar_select %p36, %s38, %s22
      %p40 = scmp.ge.s32.totalorder %s39, 2
      %s41 = scalar_select %p40, 0, %s39
      %s42 = ssub.s32 %s22, %s41
      %s43 = ssub.s32 %s23, %s37
      %s44 = sor.u32 %s42, %s43
      %s45 = ssub.s32 %s24, %s33
      %s46 = sor.u32 %s44, %s45
      %p47 = scmp.eq.s32.totalorder %s46, 0
      %s49 = sadd.s32 %s48, 1
      %s50 = scalar_select %p47, %s48, %s49
      %p53 = pneg %p47
      %p54 = scmp.eq.s32.totalorder %s15, 3
      %p55 = por %p53, %p54
      %p56 = scmp.ne.s32.totalorder %s48, %s51
      %p57 = scmp.eq.s32.totalorder %s15, 0
      %p58 = por %p56, %p57
      %p59 = scmp.ne.s32.totalorder %s48, %s51
      %p60 = scmp.eq.s32.totalorder %s20, 3
      %p61 = por %p59, %p60
      %p62 = scmp.ne.s32.totalorder %s51, %s52
      %p63 = scmp.eq.s32.totalorder %s20, 0
      %p64 = por %p62, %p63
      %p65 = scmp.ne.s32.totalorder %s51, %s52
      %p66 = scmp.eq.s32.totalorder %s21, 3
      %p67 = por %p65, %p66
      %p69 = scmp.ne.s32.totalorder %s52, %s68
      %p70 = scmp.eq.s32.totalorder %s21, 0
      %p71 = por %p69, %p70
      %s72 = ssub.s32 %s24, %s33
      %p73 = scmp.eq.s32.totalorder %s72, 0
      %s75 = sadd.s32 %s74, 1
      %s76 = scalar_select %p73, %s74, %s75
      %p79 = pneg %p73
      %p80 = scmp.eq.s32.totalorder %s15, 3
      %p81 = por %p79, %p80
      %p82 = scmp.ne.s32.totalorder %s74, %s77
      %p83 = scmp.eq.s32.totalorder %s15, 0
      %p84 = por %p82, %p83
      %p85 = scmp.ne.s32.totalorder %s74, %s77
      %p86 = scmp.eq.s32.totalorder %s20, 3
      %p87 = por %p85, %p86
      %p88 = scmp.ne.s32.totalorder %s77, %s78
      %p89 = scmp.eq.s32.totalorder %s20, 0
      %p90 = por %p88, %p89
      %p91 = scmp.ne.s32.totalorder %s77, %s78
      %p92 = scmp.eq.s32.totalorder %s21, 3
      %p93 = por %p91, %p92
      %p95 = scmp.ne.s32.totalorder %s78, %s94
      %p96 = scmp.eq.s32.totalorder %s21, 0
      %p97 = por %p95, %p96
      %s98 = ssub.s32 %s22, %s41
      %p99 = scmp.eq.s32.totalorder %s98, 0
      %s101 = sadd.s32 %s100, 1
      %s102 = scalar_select %p99, %s100, %s101
      %p105 = pneg %p99
      %p106 = scmp.eq.s32.totalorder %s15, 3
      %p107 = por %p105, %p106
      %p108 = scmp.ne.s32.totalorder %s100, %s103
      %p109 = scmp.eq.s32.totalorder %s15, 0
      %p110 = por %p108, %p109
      %p111 = scmp.ne.s32.totalorder %s100, %s103
      %p112 = scmp.eq.s32.totalorder %s20, 3
      %p113 = por %p111, %p112
      %p114 = scmp.ne.s32.totalorder %s103, %s104
      %p115 = scmp.eq.s32.totalorder %s20, 0
      %p116 = por %p114, %p115
      %p117 = scmp.ne.s32.totalorder %s103, %s104
      %p118 = scmp.eq.s32.totalorder %s21, 3
      %p119 = por %p117, %p118
      %p121 = scmp.ne.s32.totalorder %s104, %s120
      %p122 = scmp.eq.s32.totalorder %s21, 0
      %p123 = por %p121, %p122
      %s124 = ssub.s32 %s22, %s41
      %p125 = scmp.eq.s32.totalorder %s124, 0
      %s127 = sadd.s32 %s126, 1
      %s128 = scalar_select %p125, %s126, %s127
      %p131 = pneg %p125
      %p132 = scmp.eq.s32.totalorder %s15, 3
      %p133 = por %p131, %p132
      %p134 = scmp.ne.s32.totalorder %s126, %s129
      %p135 = scmp.eq.s32.totalorder %s15, 0
      %p136 = por %p134, %p135
      %p137 = scmp.ne.s32.totalorder %s126, %s129
      %p138 = scmp.eq.s32.totalorder %s20, 3
      %p139 = por %p137, %p138
      %p140 = scmp.ne.s32.totalorder %s129, %s130
      %p141 = scmp.eq.s32.totalorder %s20, 0
      %p142 = por %p140, %p141
      %p143 = scmp.ne.s32.totalorder %s129, %s130
      %p144 = scmp.eq.s32.totalorder %s21, 3
      %p145 = por %p143, %p144
      %p147 = scmp.ne.s32.totalorder %s130, %s146
      %p148 = scmp.eq.s32.totalorder %s21, 0
      %p149 = por %p147, %p148
      %s150 = ssub.s32 %s22, %s41
      %p151 = scmp.eq.s32.totalorder %s150, 0
      %s153 = sadd.s32 %s152, 1
      %s154 = scalar_select %p151, %s152, %s153
      %p157 = pneg %p151
      %p158 = scmp.eq.s32.totalorder %s15, 3
      %p159 = por %p157, %p158
      %p160 = scmp.ne.s32.totalorder %s152, %s155
      %p161 = scmp.eq.s32.totalorder %s15, 0
      %p162 = por %p160, %p161
      %p163 = scmp.ne.s32.totalorder %s152, %s155
      %p164 = scmp.eq.s32.totalorder %s20, 3
      %p165 = por %p163, %p164
      %p166 = scmp.ne.s32.totalorder %s155, %s156
      %p167 = scmp.eq.s32.totalorder %s20, 0
      %p168 = por %p166, %p167
      %p169 = scmp.ne.s32.totalorder %s155, %s156
      %p170 = scmp.eq.s32.totalorder %s21, 3
      %p171 = por %p169, %p170
      %p173 = scmp.ne.s32.totalorder %s156, %s172
      %p174 = scmp.eq.s32.totalorder %s21, 0
      %p175 = por %p173, %p174
      %s176 = ssub.s32 %s22, %s41
      %s177 = ssub.s32 %s23, %s37
      %s178 = sor.u32 %s176, %s177
      %p179 = scmp.eq.s32.totalorder %s178, 0
      %s181 = sadd.s32 %s180, 1
      %s182 = scalar_select %p179, %s180, %s181
      %p185 = pneg %p179
      %p186 = scmp.eq.s32.totalorder %s15, 3
      %p187 = por %p185, %p186
      %p188 = scmp.ne.s32.totalorder %s180, %s183
      %p189 = scmp.eq.s32.totalorder %s15, 0
      %p190 = por %p188, %p189
      %p191 = scmp.ne.s32.totalorder %s180, %s183
      %p192 = scmp.eq.s32.totalorder %s20, 3
      %p193 = por %p191, %p192
      %p194 = scmp.ne.s32.totalorder %s183, %s184
      %p195 = scmp.eq.s32.totalorder %s20, 0
      %p196 = por %p194, %p195
      %p197 = scmp.ne.s32.totalorder %s183, %s184
      %p198 = scmp.eq.s32.totalorder %s21, 3
      %p199 = por %p197, %p198
      %p201 = scmp.ne.s32.totalorder %s184, %s200
      %p202 = scmp.eq.s32.totalorder %s21, 0
      %p203 = por %p201, %p202
      %p204 = scmp.le.s32.totalorder 1, %s15
      %p205 = scmp.lt.s32.totalorder %s15, 5
      %p206 = pnand %p204, %p205
      %p207 = pneg %p206
      // Predicated region
      $region9: #{forward.3} parent=5 // pred_check
        _
      $region10: #{forward.3} parent=5 // pred_check_branch
        %209 = sbr.rel (%p206) target = $region12
      $region11: #{forward.3} parent=5 // pred_region
        %s210 = ssub.s32 %s15, 1
        // Predicated region
        $region13: #{forward.3} parent=11 // pred_check
          %p211 = pneg %p90
        $region14: #{forward.3} parent=11 // pred_check_branch
          %213 = sbr.rel (%p211) target = $region16
        $region15: #{forward.3} parent=11 // pred_region
          %s214 = smul.u32 64, %s27
          %216 = vsyncadd [#allocation6], 0
          %s217 = smul.addr %s214, 4
          %s218 = scalar_lea.hbm %s1, %s217
          %s219 = sshll.u32 %s218, 4
          %s220 = int_to_ptr.hbm [resolvable:$true] %s219
          %s221 = sshll.u32 [#allocation5], 4
          %s222 = int_to_ptr.vmem [resolvable:$true] %s221
          %227 = dma.hbm_to_vmem [thread:$0]  %s220, 4096, %s222, [#allocation6], 64, 64, 4
        $region16: #{forward.3} parent=11 // pred_fallthru
          _
      $region12: #{forward.3} parent=5 // pred_fallthru
        _
      %p228 = scmp.lt.s32.totalorder %s15, 4
      // Predicated region
      $region17: #{forward.3} parent=5 // pred_check
        %p229 = pneg %p228
      $region18: #{forward.3} parent=5 // pred_check_branch
        %231 = sbr.rel (%p229) target = $region20
      $region19: #{forward.3} parent=5 // pred_region
        // Predicated region
        $region21: #{forward.3} parent=19 // pred_check
          %p232 = pneg %p58
        $region22: #{forward.3} parent=19 // pred_check_branch
          %234 = sbr.rel (%p232) target = $region24
        $region23: #{forward.3} parent=19 // pred_region
          %s235 = sand.u32 %s15, 1
          %s236 = scalar_lea.sflag [#allocation4], %s235
          %s237 = sand.u32 %s48, 1
          %s238 = smul.addr %s237, 512
          %s239 = scalar_lea.vmem [#allocation3], %s238
          %s240 = smul.u32 32, %s23
          %s241 = smul.u32 4, %s24
          %243 = vsyncadd %s236, 0
          %s244 = smul.addr %s240, 4
          %s245 = sadd.s32 %s241, %s244
          %s246 = smul.addr %s22, 256
          %s247 = sadd.s32 %s245, %s246
          %s248 = smul.addr %s247, 4
          %s249 = scalar_lea.hbm %s0, %s248
          %s250 = sshll.u32 %s249, 4
          %s251 = int_to_ptr.hbm [resolvable:$true] %s250
          %s252 = sshll.u32 %s239, 4
          %s253 = int_to_ptr.vmem [resolvable:$true] %s252
          %258 = dma.hbm_to_vmem [thread:$0]  %s251, 8192, %s253, %s236, 256, 256, 16
        $region24: #{forward.3} parent=19 // pred_fallthru
          _
        // Predicated region
        $region25: #{forward.3} parent=19 // pred_check
          %p259 = pneg %p110
        $region26: #{forward.3} parent=19 // pred_check_branch
          %261 = sbr.rel (%p259) target = $region28
        $region27: #{forward.3} parent=19 // pred_region
          %s262 = sand.u32 %s15, 1
          %s263 = scalar_lea.sflag [#allocation4], %s262
          %s264 = sand.u32 %s100, 1
          %s265 = smul.addr %s264, 512
          %s266 = scalar_lea.vmem [#allocation7], %s265
          %268 = vsyncadd %s263, 0
          %s269 = smul.addr %s22, 128
          %s270 = smul.addr %s269, 4
          %s271 = scalar_lea.hbm %s2, %s270
          %s272 = sshll.u32 %s271, 4
          %s273 = int_to_ptr.hbm [resolvable:$true] %s272
          %s274 = sshll.u32 %s266, 4
          %s275 = int_to_ptr.vmem [resolvable:$true] %s274
          %280 = dma.hbm_to_vmem [thread:$0]  %s273, 8192, %s275, %s263, 512, 512, 32
        $region28: #{forward.3} parent=19 // pred_fallthru
          _
        // Predicated region
        $region29: #{forward.3} parent=19 // pred_check
          %p281 = pneg %p136
        $region30: #{forward.3} parent=19 // pred_check_branch
          %283 = sbr.rel (%p281) target = $region32
        $region31: #{forward.3} parent=19 // pred_region
          %s284 = sand.u32 %s15, 1
          %s285 = scalar_lea.sflag [#allocation4], %s284
          %s286 = sand.u32 %s126, 1
          %s287 = smul.addr %s286, 8
          %s288 = scalar_lea.vmem [#allocation8], %s287
          %290 = vsyncadd %s285, 0
          %s291 = smul.addr %s22, 8
          %s292 = scalar_lea.hbm %s3, %s291
          %s294 = sshll.u32 %s292, 4
          %s295 = int_to_ptr.hbm [resolvable:$true] %s294
          %s296 = sshll.u32 %s288, 4
          %s297 = int_to_ptr.vmem [resolvable:$true] %s296
          %299 = dma.hbm_to_vmem [thread:$0]  %s295, 128, %s297, %s285
        $region32: #{forward.3} parent=19 // pred_fallthru
          _
        // Predicated region
        $region33: #{forward.3} parent=19 // pred_check
          %p300 = pneg %p162
        $region34: #{forward.3} parent=19 // pred_check_branch
          %302 = sbr.rel (%p300) target = $region36
        $region35: #{forward.3} parent=19 // pred_region
          %s303 = sand.u32 %s15, 1
          %s304 = scalar_lea.sflag [#allocation4], %s303
          %s305 = sand.u32 %s152, 1
          %s306 = smul.addr %s305, 512
          %s307 = scalar_lea.vmem [#allocation9], %s306
          %309 = vsyncadd %s304, 0
          %s310 = smul.addr %s22, 128
          %s311 = smul.addr %s310, 4
          %s312 = scalar_lea.hbm %s4, %s311
          %s313 = sshll.u32 %s312, 4
          %s314 = int_to_ptr.hbm [resolvable:$true] %s313
          %s315 = sshll.u32 %s307, 4
          %s316 = int_to_ptr.vmem [resolvable:$true] %s315
          %321 = dma.hbm_to_vmem [thread:$0]  %s314, 8192, %s316, %s304, 64, 64, 4
        $region36: #{forward.3} parent=19 // pred_fallthru
          _
      $region20: #{forward.3} parent=5 // pred_fallthru
        _
      %p322 = scmp.le.s32.totalorder 1, %s15
      %p323 = scmp.lt.s32.totalorder %s15, 5
      %p324 = pnand %p322, %p323
      %p325 = pneg %p324
      // Predicated region
      $region37: #{forward.3} parent=5 // pred_check
        _
      $region38: #{forward.3} parent=5 // pred_check_branch
        %327 = sbr.rel (%p324) target = $region40
      $region39: #{forward.3} parent=5 // pred_region
        %s328 = ssub.s32 %s15, 1
        %s329 = sand.u32 %s20, 1
        %s330 = scalar_lea.sflag [#allocation4], %s329
        %s331 = sand.u32 %s51, 1
        %s332 = smul.addr %s331, 512
        %s333 = scalar_lea.vmem [#allocation3], %s332
        // Predicated region
        $region41: #{forward.3} parent=39 // pred_check
          %p334 = pneg %p64
        $region42: #{forward.3} parent=39 // pred_check_branch
          %336 = sbr.rel (%p334) target = $region44
        $region43: #{forward.3} parent=39 // pred_region
          %338 = dma.done %s330, 8192
        $region44: #{forward.3} parent=39 // pred_fallthru
          _
        // Predicated region
        $region45: #{forward.3} parent=39 // pred_check
          %p339 = pneg %p90
        $region46: #{forward.3} parent=39 // pred_check_branch
          %341 = sbr.rel (%p339) target = $region48
        $region47: #{forward.3} parent=39 // pred_region
          %343 = dma.done [#allocation6], 4096
        $region48: #{forward.3} parent=39 // pred_fallthru
          _
        %s344 = sand.u32 %s20, 1
        %s345 = scalar_lea.sflag [#allocation4], %s344
        %s346 = sand.u32 %s103, 1
        %s347 = smul.addr %s346, 512
        %s348 = scalar_lea.vmem [#allocation7], %s347
        // Predicated region
        $region49: #{forward.3} parent=39 // pred_check
          %p349 = pneg %p116
        $region50: #{forward.3} parent=39 // pred_check_branch
          %351 = sbr.rel (%p349) target = $region52
        $region51: #{forward.3} parent=39 // pred_region
          %353 = dma.done %s345, 8192
        $region52: #{forward.3} parent=39 // pred_fallthru
          _
        %s354 = sand.u32 %s20, 1
        %s355 = scalar_lea.sflag [#allocation4], %s354
        %s356 = sand.u32 %s129, 1
        %s357 = smul.addr %s356, 8
        %s358 = scalar_lea.vmem [#allocation8], %s357
        // Predicated region
        $region53: #{forward.3} parent=39 // pred_check
          %p359 = pneg %p142
        $region54: #{forward.3} parent=39 // pred_check_branch
          %361 = sbr.rel (%p359) target = $region56
        $region55: #{forward.3} parent=39 // pred_region
          %363 = dma.done %s355, 128
        $region56: #{forward.3} parent=39 // pred_fallthru
          _
        %s364 = sand.u32 %s20, 1
        %s365 = scalar_lea.sflag [#allocation4], %s364
        %s366 = sand.u32 %s155, 1
        %s367 = smul.addr %s366, 512
        %s368 = scalar_lea.vmem [#allocation9], %s367
        // Predicated region
        $region57: #{forward.3} parent=39 // pred_check
          %p369 = pneg %p168
        $region58: #{forward.3} parent=39 // pred_check_branch
          %371 = sbr.rel (%p369) target = $region60
        $region59: #{forward.3} parent=39 // pred_region
          %373 = dma.done %s365, 8192
        $region60: #{forward.3} parent=39 // pred_fallthru
          _
        %s374 = sand.u32 %s20, 1
        %s375 = scalar_lea.sflag [#allocation4], %s374
        %s376 = sand.u32 %s51, 1
        %s377 = smul.addr %s376, 512
        %s378 = scalar_lea.vmem [#allocation3], %s377
        %p379 = pneg %p64
        %p380 = pneg %p61
        %p381 = pneg %p90
        %p382 = pneg %p87
        %s383 = sand.u32 %s20, 1
        %s384 = scalar_lea.sflag [#allocation4], %s383
        %s385 = sand.u32 %s103, 1
        %s386 = smul.addr %s385, 512
        %s387 = scalar_lea.vmem [#allocation7], %s386
        %p388 = pneg %p116
        %p389 = pneg %p113
        %s390 = sand.u32 %s20, 1
        %s391 = scalar_lea.sflag [#allocation4], %s390
        %s392 = sand.u32 %s129, 1
        %s393 = smul.addr %s392, 8
        %s394 = scalar_lea.vmem [#allocation8], %s393
        %p395 = pneg %p142
        %p396 = pneg %p139
        %s397 = sand.u32 %s20, 1
        %s398 = scalar_lea.sflag [#allocation4], %s397
        %s399 = sand.u32 %s155, 1
        %s400 = smul.addr %s399, 512
        %s401 = scalar_lea.vmem [#allocation9], %s400
        %p402 = pneg %p168
        %p403 = pneg %p165
        %p404 = pneg %p196
        %p405 = pneg %p193
        %s406 = smul.u32 32, %s26
        %p407 = scmp.lt.s32.totalorder %s25, 1
        %s408 = scalar_select %p407, %s25, 1
        %p409 = scmp.lt.s32.totalorder %s406, 63
        %s410 = scalar_select %p409, %s406, 63
        %s411 = smul.addr %s408, 64
        %s412 = sadd.s32 %s410, %s411
        %s413 = smul.addr %s412, 4
        %s414 = scalar_lea.vmem %s5, %s413
        %s415 = smul.u32 32, %s26
        %s416 = smul.u32 4, %s27
        %s417 = smul.u32 64, %s27
        %s418 = smul.u32 32, %s26
        %p419 = scmp.lt.s32.totalorder %s25, 1
        %s420 = scalar_select %p419, %s25, 1
        %p421 = scmp.lt.s32.totalorder %s418, 63
        %s422 = scalar_select %p421, %s418, 63
        %s423 = smul.addr %s420, 64
        %s424 = sadd.s32 %s422, %s423
        %s425 = smul.addr %s424, 4
        %s426 = scalar_lea.vmem %s5, %s425
        %s427 = smul.u32 32, %s26
        %p428 = scmp.eq.s32.totalorder %s27, 0
        // Predicated region
        $region61: #{forward.3} parent=39 // pred_check
          %p429 = pneg %p428
        $region62: #{forward.3} parent=39 // pred_check_branch
          %431 = sbr.rel (%p429) target = $region64
        $region63: #{forward.3} parent=39 // pred_region
          %432 = vst [vmem:[#allocation2] sm:$0xff] 0.0
          %433 = vst [vmem:[#allocation2 + $0x8] sm:$0xff] 0.0
          %434 = vst [vmem:[#allocation2 + $0x10] sm:$0xff] 0.0
          %435 = vst [vmem:[#allocation2 + $0x18] sm:$0xff] 0.0
          %436 = vst [vmem:[#allocation2 + $0x20] sm:$0xff] 0.0
          %437 = vst [vmem:[#allocation2 + $0x28] sm:$0xff] 0.0
          %438 = vst [vmem:[#allocation2 + $0x30] sm:$0xff] 0.0
          %439 = vst [vmem:[#allocation2 + $0x38] sm:$0xff] 0.0
          %440 = vst [vmem:[#allocation2 + $0x40] sm:$0xff] 0.0
          %441 = vst [vmem:[#allocation2 + $0x48] sm:$0xff] 0.0
          %442 = vst [vmem:[#allocation2 + $0x50] sm:$0xff] 0.0
          %443 = vst [vmem:[#allocation2 + $0x58] sm:$0xff] 0.0
          %444 = vst [vmem:[#allocation2 + $0x60] sm:$0xff] 0.0
          %445 = vst [vmem:[#allocation2 + $0x68] sm:$0xff] 0.0
          %446 = vst [vmem:[#allocation2 + $0x70] sm:$0xff] 0.0
          %447 = vst [vmem:[#allocation2 + $0x78] sm:$0xff] 0.0
          %448 = vst [vmem:[#allocation2 + $0x80] sm:$0xff] 0.0
          %449 = vst [vmem:[#allocation2 + $0x88] sm:$0xff] 0.0
          %450 = vst [vmem:[#allocation2 + $0x90] sm:$0xff] 0.0
          %451 = vst [vmem:[#allocation2 + $0x98] sm:$0xff] 0.0
          %452 = vst [vmem:[#allocation2 + $0xa0] sm:$0xff] 0.0
          %453 = vst [vmem:[#allocation2 + $0xa8] sm:$0xff] 0.0
          %454 = vst [vmem:[#allocation2 + $0xb0] sm:$0xff] 0.0
          %455 = vst [vmem:[#allocation2 + $0xb8] sm:$0xff] 0.0
          %456 = vst [vmem:[#allocation2 + $0xc0] sm:$0xff] 0.0
          %457 = vst [vmem:[#allocation2 + $0xc8] sm:$0xff] 0.0
          %458 = vst [vmem:[#allocation2 + $0xd0] sm:$0xff] 0.0
          %459 = vst [vmem:[#allocation2 + $0xd8] sm:$0xff] 0.0
          %460 = vst [vmem:[#allocation2 + $0xe0] sm:$0xff] 0.0
          %461 = vst [vmem:[#allocation2 + $0xe8] sm:$0xff] 0.0
          %462 = vst [vmem:[#allocation2 + $0xf0] sm:$0xff] 0.0
          %463 = vst [vmem:[#allocation2 + $0xf8] sm:$0xff] 0.0
        $region64: #{forward.3} parent=39 // pred_fallthru
          _
        %v464 = vld [vmem:[#allocation2] sm:$0xff]
        %v465 = vld [vmem:[#allocation2 + $0x8] sm:$0xff]
        %v466 = vld [vmem:[#allocation2 + $0x10] sm:$0xff]
        %v467 = vld [vmem:[#allocation2 + $0x18] sm:$0xff]
        %v468 = vld [vmem:[#allocation2 + $0x20] sm:$0xff]
        %v469 = vld [vmem:[#allocation2 + $0x28] sm:$0xff]
        %v470 = vld [vmem:[#allocation2 + $0x30] sm:$0xff]
        %v471 = vld [vmem:[#allocation2 + $0x38] sm:$0xff]
        %v472 = vld [vmem:[#allocation2 + $0x40] sm:$0xff]
        %v473 = vld [vmem:[#allocation2 + $0x48] sm:$0xff]
        %v474 = vld [vmem:[#allocation2 + $0x50] sm:$0xff]
        %v475 = vld [vmem:[#allocation2 + $0x58] sm:$0xff]
        %v476 = vld [vmem:[#allocation2 + $0x60] sm:$0xff]
        %v477 = vld [vmem:[#allocation2 + $0x68] sm:$0xff]
        %v478 = vld [vmem:[#allocation2 + $0x70] sm:$0xff]
        %v479 = vld [vmem:[#allocation2 + $0x78] sm:$0xff]
        %v480 = vld [vmem:[#allocation2 + $0x80] sm:$0xff]
        %v481 = vld [vmem:[#allocation2 + $0x88] sm:$0xff]
        %v482 = vld [vmem:[#allocation2 + $0x90] sm:$0xff]
        %v483 = vld [vmem:[#allocation2 + $0x98] sm:$0xff]
        %v484 = vld [vmem:[#allocation2 + $0xa0] sm:$0xff]
        %v485 = vld [vmem:[#allocation2 + $0xa8] sm:$0xff]
        %v486 = vld [vmem:[#allocation2 + $0xb0] sm:$0xff]
        %v487 = vld [vmem:[#allocation2 + $0xb8] sm:$0xff]
        %v488 = vld [vmem:[#allocation2 + $0xc0] sm:$0xff]
        %v489 = vld [vmem:[#allocation2 + $0xc8] sm:$0xff]
        %v490 = vld [vmem:[#allocation2 + $0xd0] sm:$0xff]
        %v491 = vld [vmem:[#allocation2 + $0xd8] sm:$0xff]
        %v492 = vld [vmem:[#allocation2 + $0xe0] sm:$0xff]
        %v493 = vld [vmem:[#allocation2 + $0xe8] sm:$0xff]
        %v494 = vld [vmem:[#allocation2 + $0xf0] sm:$0xff]
        %v495 = vld [vmem:[#allocation2 + $0xf8] sm:$0xff]
        %v496 = vld [vmem:[%s333] sm:$0xff]
        %v497 = vld [vmem:[%s333 + $0x8] sm:$0xff]
        %v498 = vld [vmem:[%s333 + $0x10] sm:$0xff]
        %v499 = vld [vmem:[%s333 + $0x18] sm:$0xff]
        %v500 = vld [vmem:[%s333 + $0x20] sm:$0xff]
        %v501 = vld [vmem:[%s333 + $0x28] sm:$0xff]
        %v502 = vld [vmem:[%s333 + $0x30] sm:$0xff]
        %v503 = vld [vmem:[%s333 + $0x38] sm:$0xff]
        %v504 = vld [vmem:[%s333 + $0x40] sm:$0xff]
        %v505 = vld [vmem:[%s333 + $0x48] sm:$0xff]
        %v506 = vld [vmem:[%s333 + $0x50] sm:$0xff]
        %v507 = vld [vmem:[%s333 + $0x58] sm:$0xff]
        %v508 = vld [vmem:[%s333 + $0x60] sm:$0xff]
        %v509 = vld [vmem:[%s333 + $0x68] sm:$0xff]
        %v510 = vld [vmem:[%s333 + $0x70] sm:$0xff]
        %v511 = vld [vmem:[%s333 + $0x78] sm:$0xff]
        %v512 = vld [vmem:[%s333 + $0x80] sm:$0xff]
        %v513 = vld [vmem:[%s333 + $0x88] sm:$0xff]
        %v514 = vld [vmem:[%s333 + $0x90] sm:$0xff]
        %v515 = vld [vmem:[%s333 + $0x98] sm:$0xff]
        %v516 = vld [vmem:[%s333 + $0xa0] sm:$0xff]
        %v517 = vld [vmem:[%s333 + $0xa8] sm:$0xff]
        %v518 = vld [vmem:[%s333 + $0xb0] sm:$0xff]
        %v519 = vld [vmem:[%s333 + $0xb8] sm:$0xff]
        %v520 = vld [vmem:[%s333 + $0xc0] sm:$0xff]
        %v521 = vld [vmem:[%s333 + $0xc8] sm:$0xff]
        %v522 = vld [vmem:[%s333 + $0xd0] sm:$0xff]
        %v523 = vld [vmem:[%s333 + $0xd8] sm:$0xff]
        %v524 = vld [vmem:[%s333 + $0xe0] sm:$0xff]
        %v525 = vld [vmem:[%s333 + $0xe8] sm:$0xff]
        %v526 = vld [vmem:[%s333 + $0xf0] sm:$0xff]
        %v527 = vld [vmem:[%s333 + $0xf8] sm:$0xff]
        %v528 = vld [vmem:[%s333 + $0x100] sm:$0xff]
        %v529 = vld [vmem:[%s333 + $0x108] sm:$0xff]
        %v530 = vld [vmem:[%s333 + $0x110] sm:$0xff]
        %v531 = vld [vmem:[%s333 + $0x118] sm:$0xff]
        %v532 = vld [vmem:[%s333 + $0x120] sm:$0xff]
        %v533 = vld [vmem:[%s333 + $0x128] sm:$0xff]
        %v534 = vld [vmem:[%s333 + $0x130] sm:$0xff]
        %v535 = vld [vmem:[%s333 + $0x138] sm:$0xff]
        %v536 = vld [vmem:[%s333 + $0x140] sm:$0xff]
        %v537 = vld [vmem:[%s333 + $0x148] sm:$0xff]
        %v538 = vld [vmem:[%s333 + $0x150] sm:$0xff]
        %v539 = vld [vmem:[%s333 + $0x158] sm:$0xff]
        %v540 = vld [vmem:[%s333 + $0x160] sm:$0xff]
        %v541 = vld [vmem:[%s333 + $0x168] sm:$0xff]
        %v542 = vld [vmem:[%s333 + $0x170] sm:$0xff]
        %v543 = vld [vmem:[%s333 + $0x178] sm:$0xff]
        %v544 = vld [vmem:[%s333 + $0x180] sm:$0xff]
        %v545 = vld [vmem:[%s333 + $0x188] sm:$0xff]
        %v546 = vld [vmem:[%s333 + $0x190] sm:$0xff]
        %v547 = vld [vmem:[%s333 + $0x198] sm:$0xff]
        %v548 = vld [vmem:[%s333 + $0x1a0] sm:$0xff]
        %v549 = vld [vmem:[%s333 + $0x1a8] sm:$0xff]
        %v550 = vld [vmem:[%s333 + $0x1b0] sm:$0xff]
        %v551 = vld [vmem:[%s333 + $0x1b8] sm:$0xff]
        %v552 = vld [vmem:[%s333 + $0x1c0] sm:$0xff]
        %v553 = vld [vmem:[%s333 + $0x1c8] sm:$0xff]
        %v554 = vld [vmem:[%s333 + $0x1d0] sm:$0xff]
        %v555 = vld [vmem:[%s333 + $0x1d8] sm:$0xff]
        %v556 = vld [vmem:[%s333 + $0x1e0] sm:$0xff]
        %v557 = vld [vmem:[%s333 + $0x1e8] sm:$0xff]
        %v558 = vld [vmem:[%s333 + $0x1f0] sm:$0xff]
        %v559 = vld [vmem:[%s333 + $0x1f8] sm:$0xff]
        %v560 = vld [vmem:[#allocation5] sm:$0xf]
        %v561 = vld [vmem:[#allocation5 + $0x4] sm:$0xf]
        %v562 = vld [vmem:[#allocation5 + $0x8] sm:$0xf]
        %v563 = vld [vmem:[#allocation5 + $0xc] sm:$0xf]
        %v564 = vld [vmem:[#allocation5 + $0x10] sm:$0xf]
        %v565 = vld [vmem:[#allocation5 + $0x14] sm:$0xf]
        %v566 = vld [vmem:[#allocation5 + $0x18] sm:$0xf]
        %v567 = vld [vmem:[#allocation5 + $0x1c] sm:$0xf]
        %v568 = vld [vmem:[#allocation5 + $0x20] sm:$0xf]
        %v569 = vld [vmem:[#allocation5 + $0x24] sm:$0xf]
        %v570 = vld [vmem:[#allocation5 + $0x28] sm:$0xf]
        %v571 = vld [vmem:[#allocation5 + $0x2c] sm:$0xf]
        %v572 = vld [vmem:[#allocation5 + $0x30] sm:$0xf]
        %v573 = vld [vmem:[#allocation5 + $0x34] sm:$0xf]
        %v574 = vld [vmem:[#allocation5 + $0x38] sm:$0xf]
        %v575 = vld [vmem:[#allocation5 + $0x3c] sm:$0xf]
        %v576 = vld [vmem:[#allocation5 + $0x40] sm:$0xf]
        %v577 = vld [vmem:[#allocation5 + $0x44] sm:$0xf]
        %v578 = vld [vmem:[#allocation5 + $0x48] sm:$0xf]
        %v579 = vld [vmem:[#allocation5 + $0x4c] sm:$0xf]
        %v580 = vld [vmem:[#allocation5 + $0x50] sm:$0xf]
        %v581 = vld [vmem:[#allocation5 + $0x54] sm:$0xf]
        %v582 = vld [vmem:[#allocation5 + $0x58] sm:$0xf]
        %v583 = vld [vmem:[#allocation5 + $0x5c] sm:$0xf]
        %v584 = vld [vmem:[#allocation5 + $0x60] sm:$0xf]
        %v585 = vld [vmem:[#allocation5 + $0x64] sm:$0xf]
        %v586 = vld [vmem:[#allocation5 + $0x68] sm:$0xf]
        %v587 = vld [vmem:[#allocation5 + $0x6c] sm:$0xf]
        %v588 = vld [vmem:[#allocation5 + $0x70] sm:$0xf]
        %v589 = vld [vmem:[#allocation5 + $0x74] sm:$0xf]
        %v590 = vld [vmem:[#allocation5 + $0x78] sm:$0xf]
        %v591 = vld [vmem:[#allocation5 + $0x7c] sm:$0xf]
        %v592 = vld [vmem:[#allocation5 + $0x80] sm:$0xf]
        %v593 = vld [vmem:[#allocation5 + $0x84] sm:$0xf]
        %v594 = vld [vmem:[#allocation5 + $0x88] sm:$0xf]
        %v595 = vld [vmem:[#allocation5 + $0x8c] sm:$0xf]
        %v596 = vld [vmem:[#allocation5 + $0x90] sm:$0xf]
        %v597 = vld [vmem:[#allocation5 + $0x94] sm:$0xf]
        %v598 = vld [vmem:[#allocation5 + $0x98] sm:$0xf]
        %v599 = vld [vmem:[#allocation5 + $0x9c] sm:$0xf]
        %v600 = vld [vmem:[#allocation5 + $0xa0] sm:$0xf]
        %v601 = vld [vmem:[#allocation5 + $0xa4] sm:$0xf]
        %v602 = vld [vmem:[#allocation5 + $0xa8] sm:$0xf]
        %v603 = vld [vmem:[#allocation5 + $0xac] sm:$0xf]
        %v604 = vld [vmem:[#allocation5 + $0xb0] sm:$0xf]
        %v605 = vld [vmem:[#allocation5 + $0xb4] sm:$0xf]
        %v606 = vld [vmem:[#allocation5 + $0xb8] sm:$0xf]
        %v607 = vld [vmem:[#allocation5 + $0xbc] sm:$0xf]
        %v608 = vld [vmem:[#allocation5 + $0xc0] sm:$0xf]
        %v609 = vld [vmem:[#allocation5 + $0xc4] sm:$0xf]
        %v610 = vld [vmem:[#allocation5 + $0xc8] sm:$0xf]
        %v611 = vld [vmem:[#allocation5 + $0xcc] sm:$0xf]
        %v612 = vld [vmem:[#allocation5 + $0xd0] sm:$0xf]
        %v613 = vld [vmem:[#allocation5 + $0xd4] sm:$0xf]
        %v614 = vld [vmem:[#allocation5 + $0xd8] sm:$0xf]
        %v615 = vld [vmem:[#allocation5 + $0xdc] sm:$0xf]
        %v616 = vld [vmem:[#allocation5 + $0xe0] sm:$0xf]
        %v617 = vld [vmem:[#allocation5 + $0xe4] sm:$0xf]
        %v618 = vld [vmem:[#allocation5 + $0xe8] sm:$0xf]
        %v619 = vld [vmem:[#allocation5 + $0xec] sm:$0xf]
        %v620 = vld [vmem:[#allocation5 + $0xf0] sm:$0xf]
        %v621 = vld [vmem:[#allocation5 + $0xf4] sm:$0xf]
        %v622 = vld [vmem:[#allocation5 + $0xf8] sm:$0xf]
        %v623 = vld [vmem:[#allocation5 + $0xfc] sm:$0xf]
        %v688 = vunpack.c.l.b16 %v496
        %v689 = vunpack.c.h.b16 %v496
        %v690 = vunpack.c.l.b16 %v497
        %v691 = vunpack.c.h.b16 %v497
        %v692 = vunpack.c.l.b16 %v498
        %v693 = vunpack.c.h.b16 %v498
        %v694 = vunpack.c.l.b16 %v499
        %v695 = vunpack.c.h.b16 %v499
        %v696 = vunpack.c.l.b16 %v500
        %v697 = vunpack.c.h.b16 %v500
        %v698 = vunpack.c.l.b16 %v501
        %v699 = vunpack.c.h.b16 %v501
        %v700 = vunpack.c.l.b16 %v502
        %v701 = vunpack.c.h.b16 %v502
        %v702 = vunpack.c.l.b16 %v503
        %v703 = vunpack.c.h.b16 %v503
        %v704 = vunpack.c.l.b16 %v504
        %v705 = vunpack.c.h.b16 %v504
        %v706 = vunpack.c.l.b16 %v505
        %v707 = vunpack.c.h.b16 %v505
        %v708 = vunpack.c.l.b16 %v506
        %v709 = vunpack.c.h.b16 %v506
        %v710 = vunpack.c.l.b16 %v507
        %v711 = vunpack.c.h.b16 %v507
        %v712 = vunpack.c.l.b16 %v508
        %v713 = vunpack.c.h.b16 %v508
        %v714 = vunpack.c.l.b16 %v509
        %v715 = vunpack.c.h.b16 %v509
        %v716 = vunpack.c.l.b16 %v510
        %v717 = vunpack.c.h.b16 %v510
        %v718 = vunpack.c.l.b16 %v511
        %v719 = vunpack.c.h.b16 %v511
        %v720 = vunpack.c.l.b16 %v512
        %v721 = vunpack.c.h.b16 %v512
        %v722 = vunpack.c.l.b16 %v513
        %v723 = vunpack.c.h.b16 %v513
        %v724 = vunpack.c.l.b16 %v514
        %v725 = vunpack.c.h.b16 %v514
        %v726 = vunpack.c.l.b16 %v515
        %v727 = vunpack.c.h.b16 %v515
        %v728 = vunpack.c.l.b16 %v516
        %v729 = vunpack.c.h.b16 %v516
        %v730 = vunpack.c.l.b16 %v517
        %v731 = vunpack.c.h.b16 %v517
        %v732 = vunpack.c.l.b16 %v518
        %v733 = vunpack.c.h.b16 %v518
        %v734 = vunpack.c.l.b16 %v519
        %v735 = vunpack.c.h.b16 %v519
        %v736 = vunpack.c.l.b16 %v520
        %v737 = vunpack.c.h.b16 %v520
        %v738 = vunpack.c.l.b16 %v521
        %v739 = vunpack.c.h.b16 %v521
        %v740 = vunpack.c.l.b16 %v522
        %v741 = vunpack.c.h.b16 %v522
        %v742 = vunpack.c.l.b16 %v523
        %v743 = vunpack.c.h.b16 %v523
        %v744 = vunpack.c.l.b16 %v524
        %v745 = vunpack.c.h.b16 %v524
        %v746 = vunpack.c.l.b16 %v525
        %v747 = vunpack.c.h.b16 %v525
        %v748 = vunpack.c.l.b16 %v526
        %v749 = vunpack.c.h.b16 %v526
        %v750 = vunpack.c.l.b16 %v527
        %v751 = vunpack.c.h.b16 %v527
        %v752 = vunpack.c.l.b16 %v528
        %v753 = vunpack.c.h.b16 %v528
        %v754 = vunpack.c.l.b16 %v529
        %v755 = vunpack.c.h.b16 %v529
        %v756 = vunpack.c.l.b16 %v530
        %v757 = vunpack.c.h.b16 %v530
        %v758 = vunpack.c.l.b16 %v531
        %v759 = vunpack.c.h.b16 %v531
        %v760 = vunpack.c.l.b16 %v532
        %v761 = vunpack.c.h.b16 %v532
        %v762 = vunpack.c.l.b16 %v533
        %v763 = vunpack.c.h.b16 %v533
        %v764 = vunpack.c.l.b16 %v534
        %v765 = vunpack.c.h.b16 %v534
        %v766 = vunpack.c.l.b16 %v535
        %v767 = vunpack.c.h.b16 %v535
        %v768 = vunpack.c.l.b16 %v536
        %v769 = vunpack.c.h.b16 %v536
        %v770 = vunpack.c.l.b16 %v537
        %v771 = vunpack.c.h.b16 %v537
        %v772 = vunpack.c.l.b16 %v538
        %v773 = vunpack.c.h.b16 %v538
        %v774 = vunpack.c.l.b16 %v539
        %v775 = vunpack.c.h.b16 %v539
        %v776 = vunpack.c.l.b16 %v540
        %v777 = vunpack.c.h.b16 %v540
        %v778 = vunpack.c.l.b16 %v541
        %v779 = vunpack.c.h.b16 %v541
        %v780 = vunpack.c.l.b16 %v542
        %v781 = vunpack.c.h.b16 %v542
        %v782 = vunpack.c.l.b16 %v543
        %v783 = vunpack.c.h.b16 %v543
        %v784 = vunpack.c.l.b16 %v544
        %v785 = vunpack.c.h.b16 %v544
        %v786 = vunpack.c.l.b16 %v545
        %v787 = vunpack.c.h.b16 %v545
        %v788 = vunpack.c.l.b16 %v546
        %v789 = vunpack.c.h.b16 %v546
        %v790 = vunpack.c.l.b16 %v547
        %v791 = vunpack.c.h.b16 %v547
        %v792 = vunpack.c.l.b16 %v548
        %v793 = vunpack.c.h.b16 %v548
        %v794 = vunpack.c.l.b16 %v549
        %v795 = vunpack.c.h.b16 %v549
        %v796 = vunpack.c.l.b16 %v550
        %v797 = vunpack.c.h.b16 %v550
        %v798 = vunpack.c.l.b16 %v551
        %v799 = vunpack.c.h.b16 %v551
        %v800 = vunpack.c.l.b16 %v552
        %v801 = vunpack.c.h.b16 %v552
        %v802 = vunpack.c.l.b16 %v553
        %v803 = vunpack.c.h.b16 %v553
        %v804 = vunpack.c.l.b16 %v554
        %v805 = vunpack.c.h.b16 %v554
        %v806 = vunpack.c.l.b16 %v555
        %v807 = vunpack.c.h.b16 %v555
        %v808 = vunpack.c.l.b16 %v556
        %v809 = vunpack.c.h.b16 %v556
        %v810 = vunpack.c.l.b16 %v557
        %v811 = vunpack.c.h.b16 %v557
        %v812 = vunpack.c.l.b16 %v558
        %v813 = vunpack.c.h.b16 %v558
        %v814 = vunpack.c.l.b16 %v559
        %v815 = vunpack.c.h.b16 %v559
        %v816 = vpack.c.b16 %v692, %v688
        %v817 = vpack.c.b16 %v693, %v689
        %v818 = vpack.c.b16 %v694, %v690
        %v819 = vpack.c.b16 %v695, %v691
        %v820 = vpack.c.b16 %v700, %v696
        %v821 = vpack.c.b16 %v701, %v697
        %v822 = vpack.c.b16 %v702, %v698
        %v823 = vpack.c.b16 %v703, %v699
        %v824 = vpack.c.b16 %v708, %v704
        %v825 = vpack.c.b16 %v709, %v705
        %v826 = vpack.c.b16 %v710, %v706
        %v827 = vpack.c.b16 %v711, %v707
        %v828 = vpack.c.b16 %v716, %v712
        %v829 = vpack.c.b16 %v717, %v713
        %v830 = vpack.c.b16 %v718, %v714
        %v831 = vpack.c.b16 %v719, %v715
        %v832 = vpack.c.b16 %v724, %v720
        %v833 = vpack.c.b16 %v725, %v721
        %v834 = vpack.c.b16 %v726, %v722
        %v835 = vpack.c.b16 %v727, %v723
        %v836 = vpack.c.b16 %v732, %v728
        %v837 = vpack.c.b16 %v733, %v729
        %v838 = vpack.c.b16 %v734, %v730
        %v839 = vpack.c.b16 %v735, %v731
        %v840 = vpack.c.b16 %v740, %v736
        %v841 = vpack.c.b16 %v741, %v737
        %v842 = vpack.c.b16 %v742, %v738
        %v843 = vpack.c.b16 %v743, %v739
        %v844 = vpack.c.b16 %v748, %v744
        %v845 = vpack.c.b16 %v749, %v745
        %v846 = vpack.c.b16 %v750, %v746
        %v847 = vpack.c.b16 %v751, %v747
        %v848 = vpack.c.b16 %v756, %v752
        %v849 = vpack.c.b16 %v757, %v753
        %v850 = vpack.c.b16 %v758, %v754
        %v851 = vpack.c.b16 %v759, %v755
        %v852 = vpack.c.b16 %v764, %v760
        %v853 = vpack.c.b16 %v765, %v761
        %v854 = vpack.c.b16 %v766, %v762
        %v855 = vpack.c.b16 %v767, %v763
        %v856 = vpack.c.b16 %v772, %v768
        %v857 = vpack.c.b16 %v773, %v769
        %v858 = vpack.c.b16 %v774, %v770
        %v859 = vpack.c.b16 %v775, %v771
        %v860 = vpack.c.b16 %v780, %v776
        %v861 = vpack.c.b16 %v781, %v777
        %v862 = vpack.c.b16 %v782, %v778
        %v863 = vpack.c.b16 %v783, %v779
        %v864 = vpack.c.b16 %v788, %v784
        %v865 = vpack.c.b16 %v789, %v785
        %v866 = vpack.c.b16 %v790, %v786
        %v867 = vpack.c.b16 %v791, %v787
        %v868 = vpack.c.b16 %v796, %v792
        %v869 = vpack.c.b16 %v797, %v793
        %v870 = vpack.c.b16 %v798, %v794
        %v871 = vpack.c.b16 %v799, %v795
        %v872 = vpack.c.b16 %v804, %v800
        %v873 = vpack.c.b16 %v805, %v801
        %v874 = vpack.c.b16 %v806, %v802
        %v875 = vpack.c.b16 %v807, %v803
        %v876 = vpack.c.b16 %v812, %v808
        %v877 = vpack.c.b16 %v813, %v809
        %v878 = vpack.c.b16 %v814, %v810
        %v879 = vpack.c.b16 %v815, %v811
        %v1008 = vunpack.c.l.b16 %v560
        %v1009 = vunpack.c.l.b16 %v561
        %v1010 = vunpack.c.l.b16 %v562
        %v1011 = vunpack.c.l.b16 %v563
        %v1012 = vunpack.c.l.b16 %v564
        %v1013 = vunpack.c.l.b16 %v565
        %v1014 = vunpack.c.l.b16 %v566
        %v1015 = vunpack.c.l.b16 %v567
        %v1016 = vunpack.c.l.b16 %v568
        %v1017 = vunpack.c.l.b16 %v569
        %v1018 = vunpack.c.l.b16 %v570
        %v1019 = vunpack.c.l.b16 %v571
        %v1020 = vunpack.c.l.b16 %v572
        %v1021 = vunpack.c.l.b16 %v573
        %v1022 = vunpack.c.l.b16 %v574
        %v1023 = vunpack.c.l.b16 %v575
        %v1024 = vunpack.c.l.b16 %v576
        %v1025 = vunpack.c.l.b16 %v577
        %v1026 = vunpack.c.l.b16 %v578
        %v1027 = vunpack.c.l.b16 %v579
        %v1028 = vunpack.c.l.b16 %v580
        %v1029 = vunpack.c.l.b16 %v581
        %v1030 = vunpack.c.l.b16 %v582
        %v1031 = vunpack.c.l.b16 %v583
        %v1032 = vunpack.c.l.b16 %v584
        %v1033 = vunpack.c.l.b16 %v585
        %v1034 = vunpack.c.l.b16 %v586
        %v1035 = vunpack.c.l.b16 %v587
        %v1036 = vunpack.c.l.b16 %v588
        %v1037 = vunpack.c.l.b16 %v589
        %v1038 = vunpack.c.l.b16 %v590
        %v1039 = vunpack.c.l.b16 %v591
        %v1040 = vunpack.c.l.b16 %v592
        %v1041 = vunpack.c.l.b16 %v593
        %v1042 = vunpack.c.l.b16 %v594
        %v1043 = vunpack.c.l.b16 %v595
        %v1044 = vunpack.c.l.b16 %v596
        %v1045 = vunpack.c.l.b16 %v597
        %v1046 = vunpack.c.l.b16 %v598
        %v1047 = vunpack.c.l.b16 %v599
        %v1048 = vunpack.c.l.b16 %v600
        %v1049 = vunpack.c.l.b16 %v601
        %v1050 = vunpack.c.l.b16 %v602
        %v1051 = vunpack.c.l.b16 %v603
        %v1052 = vunpack.c.l.b16 %v604
        %v1053 = vunpack.c.l.b16 %v605
        %v1054 = vunpack.c.l.b16 %v606
        %v1055 = vunpack.c.l.b16 %v607
        %v1056 = vunpack.c.l.b16 %v608
        %v1057 = vunpack.c.l.b16 %v609
        %v1058 = vunpack.c.l.b16 %v610
        %v1059 = vunpack.c.l.b16 %v611
        %v1060 = vunpack.c.l.b16 %v612
        %v1061 = vunpack.c.l.b16 %v613
        %v1062 = vunpack.c.l.b16 %v614
        %v1063 = vunpack.c.l.b16 %v615
        %v1064 = vunpack.c.l.b16 %v616
        %v1065 = vunpack.c.l.b16 %v617
        %v1066 = vunpack.c.l.b16 %v618
        %v1067 = vunpack.c.l.b16 %v619
        %v1068 = vunpack.c.l.b16 %v620
        %v1069 = vunpack.c.l.b16 %v621
        %v1070 = vunpack.c.l.b16 %v622
        %v1071 = vunpack.c.l.b16 %v623
        %v1072 = vpack.c.b16 %v1009, %v1008
        %v1073 = vpack.c.b16 %v1011, %v1010
        %v1074 = vpack.c.b16 %v1013, %v1012
        %v1075 = vpack.c.b16 %v1015, %v1014
        %v1076 = vpack.c.b16 %v1017, %v1016
        %v1077 = vpack.c.b16 %v1019, %v1018
        %v1078 = vpack.c.b16 %v1021, %v1020
        %v1079 = vpack.c.b16 %v1023, %v1022
        %v1080 = vpack.c.b16 %v1025, %v1024
        %v1081 = vpack.c.b16 %v1027, %v1026
        %v1082 = vpack.c.b16 %v1029, %v1028
        %v1083 = vpack.c.b16 %v1031, %v1030
        %v1084 = vpack.c.b16 %v1033, %v1032
        %v1085 = vpack.c.b16 %v1035, %v1034
        %v1086 = vpack.c.b16 %v1037, %v1036
        %v1087 = vpack.c.b16 %v1039, %v1038
        %v1088 = vpack.c.b16 %v1041, %v1040
        %v1089 = vpack.c.b16 %v1043, %v1042
        %v1090 = vpack.c.b16 %v1045, %v1044
        %v1091 = vpack.c.b16 %v1047, %v1046
        %v1092 = vpack.c.b16 %v1049, %v1048
        %v1093 = vpack.c.b16 %v1051, %v1050
        %v1094 = vpack.c.b16 %v1053, %v1052
        %v1095 = vpack.c.b16 %v1055, %v1054
        %v1096 = vpack.c.b16 %v1057, %v1056
        %v1097 = vpack.c.b16 %v1059, %v1058
        %v1098 = vpack.c.b16 %v1061, %v1060
        %v1099 = vpack.c.b16 %v1063, %v1062
        %v1100 = vpack.c.b16 %v1065, %v1064
        %v1101 = vpack.c.b16 %v1067, %v1066
        %v1102 = vpack.c.b16 %v1069, %v1068
        %v1103 = vpack.c.b16 %v1071, %v1070
        %1136 = vmatpush.bf16.msra.mxu0 %v1079
        %1137 = vmatpush.bf16.msra.mxu0 %v1078
        %1138 = vmatpush.bf16.msra.mxu0 %v1077
        %1139 = vmatpush.bf16.msra.mxu0 %v1076
        %1140 = vmatpush.bf16.msra.mxu0 %v1075
        %1141 = vmatpush.bf16.msra.mxu0 %v1074
        %1142 = vmatpush.bf16.msra.mxu0 %v1073
        %1143 = vmatpush.bf16.msra.mxu0 %v1072
        %1144 = vmatmul.bf16.gmra.mxu0 %v816
        %v1145 = vpop.f32.mrf.mxu0
        %v1146 = vadd.f32 0.0, %v1145
        %v1147 = vpop.f32.mrf.mxu0
        %v1148 = vadd.f32 0.0, %v1147
        %1149 = vmatmul.bf16.gmra.mxu0 %v820
        %v1150 = vpop.f32.mrf.mxu0
        %v1151 = vadd.f32 0.0, %v1150
        %v1152 = vpop.f32.mrf.mxu0
        %v1153 = vadd.f32 0.0, %v1152
        %1154 = vmatmul.bf16.gmra.mxu0 %v824
        %v1155 = vpop.f32.mrf.mxu0
        %v1156 = vadd.f32 0.0, %v1155
        %v1157 = vpop.f32.mrf.mxu0
        %v1158 = vadd.f32 0.0, %v1157
        %1159 = vmatmul.bf16.gmra.mxu0 %v828
        %v1160 = vpop.f32.mrf.mxu0
        %v1161 = vadd.f32 0.0, %v1160
        %v1162 = vpop.f32.mrf.mxu0
        %v1163 = vadd.f32 0.0, %v1162
        %1164 = vmatmul.bf16.gmra.mxu0 %v832
        %v1165 = vpop.f32.mrf.mxu0
        %v1166 = vadd.f32 0.0, %v1165
        %v1167 = vpop.f32.mrf.mxu0
        %v1168 = vadd.f32 0.0, %v1167
        %1169 = vmatmul.bf16.gmra.mxu0 %v836
        %v1170 = vpop.f32.mrf.mxu0
        %v1171 = vadd.f32 0.0, %v1170
        %v1172 = vpop.f32.mrf.mxu0
        %v1173 = vadd.f32 0.0, %v1172
        %1174 = vmatmul.bf16.gmra.mxu0 %v840
        %v1175 = vpop.f32.mrf.mxu0
        %v1176 = vadd.f32 0.0, %v1175
        %v1177 = vpop.f32.mrf.mxu0
        %v1178 = vadd.f32 0.0, %v1177
        %1179 = vmatmul.bf16.gmra.mxu0 %v844
        %v1180 = vpop.f32.mrf.mxu0
        %v1181 = vadd.f32 0.0, %v1180
        %v1182 = vpop.f32.mrf.mxu0
        %v1183 = vadd.f32 0.0, %v1182
        %1184 = vmatmul.bf16.gmra.mxu0 %v848
        %v1185 = vpop.f32.mrf.mxu0
        %v1186 = vadd.f32 0.0, %v1185
        %v1187 = vpop.f32.mrf.mxu0
        %v1188 = vadd.f32 0.0, %v1187
        %1189 = vmatmul.bf16.gmra.mxu0 %v852
        %v1190 = vpop.f32.mrf.mxu0
        %v1191 = vadd.f32 0.0, %v1190
        %v1192 = vpop.f32.mrf.mxu0
        %v1193 = vadd.f32 0.0, %v1192
        %1194 = vmatmul.bf16.gmra.mxu0 %v856
        %v1195 = vpop.f32.mrf.mxu0
        %v1196 = vadd.f32 0.0, %v1195
        %v1197 = vpop.f32.mrf.mxu0
        %v1198 = vadd.f32 0.0, %v1197
        %1199 = vmatmul.bf16.gmra.mxu0 %v860
        %v1200 = vpop.f32.mrf.mxu0
        %v1201 = vadd.f32 0.0, %v1200
        %v1202 = vpop.f32.mrf.mxu0
        %v1203 = vadd.f32 0.0, %v1202
        %1204 = vmatmul.bf16.gmra.mxu0 %v864
        %v1205 = vpop.f32.mrf.mxu0
        %v1206 = vadd.f32 0.0, %v1205
        %v1207 = vpop.f32.mrf.mxu0
        %v1208 = vadd.f32 0.0, %v1207
        %1209 = vmatmul.bf16.gmra.mxu0 %v868
        %v1210 = vpop.f32.mrf.mxu0
        %v1211 = vadd.f32 0.0, %v1210
        %v1212 = vpop.f32.mrf.mxu0
        %v1213 = vadd.f32 0.0, %v1212
        %1214 = vmatmul.bf16.gmra.mxu0 %v872
        %v1215 = vpop.f32.mrf.mxu0
        %v1216 = vadd.f32 0.0, %v1215
        %v1217 = vpop.f32.mrf.mxu0
        %v1218 = vadd.f32 0.0, %v1217
        %1219 = vmatmul.bf16.gmra.mxu0 %v876
        %v1220 = vpop.f32.mrf.mxu0
        %v1221 = vadd.f32 0.0, %v1220
        %v1222 = vpop.f32.mrf.mxu0
        %v1223 = vadd.f32 0.0, %v1222
        %1224 = vdwg.mxu0
        %1225 = vmatpush.bf16.msra.mxu0 %v1087
        %1226 = vmatpush.bf16.msra.mxu0 %v1086
        %1227 = vmatpush.bf16.msra.mxu0 %v1085
        %1228 = vmatpush.bf16.msra.mxu0 %v1084
        %1229 = vmatpush.bf16.msra.mxu0 %v1083
        %1230 = vmatpush.bf16.msra.mxu0 %v1082
        %1231 = vmatpush.bf16.msra.mxu0 %v1081
        %1232 = vmatpush.bf16.msra.mxu0 %v1080
        %1233 = vmatmul.bf16.gmra.mxu0 %v817
        %v1234 = vpop.f32.mrf.mxu0
        %v1235 = vadd.f32 %v1146, %v1234
        %v1236 = vpop.f32.mrf.mxu0
        %v1237 = vadd.f32 %v1148, %v1236
        %1238 = vmatmul.bf16.gmra.mxu0 %v821
        %v1239 = vpop.f32.mrf.mxu0
        %v1240 = vadd.f32 %v1151, %v1239
        %v1241 = vpop.f32.mrf.mxu0
        %v1242 = vadd.f32 %v1153, %v1241
        %1243 = vmatmul.bf16.gmra.mxu0 %v825
        %v1244 = vpop.f32.mrf.mxu0
        %v1245 = vadd.f32 %v1156, %v1244
        %v1246 = vpop.f32.mrf.mxu0
        %v1247 = vadd.f32 %v1158, %v1246
        %1248 = vmatmul.bf16.gmra.mxu0 %v829
        %v1249 = vpop.f32.mrf.mxu0
        %v1250 = vadd.f32 %v1161, %v1249
        %v1251 = vpop.f32.mrf.mxu0
        %v1252 = vadd.f32 %v1163, %v1251
        %1253 = vmatmul.bf16.gmra.mxu0 %v833
        %v1254 = vpop.f32.mrf.mxu0
        %v1255 = vadd.f32 %v1166, %v1254
        %v1256 = vpop.f32.mrf.mxu0
        %v1257 = vadd.f32 %v1168, %v1256
        %1258 = vmatmul.bf16.gmra.mxu0 %v837
        %v1259 = vpop.f32.mrf.mxu0
        %v1260 = vadd.f32 %v1171, %v1259
        %v1261 = vpop.f32.mrf.mxu0
        %v1262 = vadd.f32 %v1173, %v1261
        %1263 = vmatmul.bf16.gmra.mxu0 %v841
        %v1264 = vpop.f32.mrf.mxu0
        %v1265 = vadd.f32 %v1176, %v1264
        %v1266 = vpop.f32.mrf.mxu0
        %v1267 = vadd.f32 %v1178, %v1266
        %1268 = vmatmul.bf16.gmra.mxu0 %v845
        %v1269 = vpop.f32.mrf.mxu0
        %v1270 = vadd.f32 %v1181, %v1269
        %v1271 = vpop.f32.mrf.mxu0
        %v1272 = vadd.f32 %v1183, %v1271
        %1273 = vmatmul.bf16.gmra.mxu0 %v849
        %v1274 = vpop.f32.mrf.mxu0
        %v1275 = vadd.f32 %v1186, %v1274
        %v1276 = vpop.f32.mrf.mxu0
        %v1277 = vadd.f32 %v1188, %v1276
        %1278 = vmatmul.bf16.gmra.mxu0 %v853
        %v1279 = vpop.f32.mrf.mxu0
        %v1280 = vadd.f32 %v1191, %v1279
        %v1281 = vpop.f32.mrf.mxu0
        %v1282 = vadd.f32 %v1193, %v1281
        %1283 = vmatmul.bf16.gmra.mxu0 %v857
        %v1284 = vpop.f32.mrf.mxu0
        %v1285 = vadd.f32 %v1196, %v1284
        %v1286 = vpop.f32.mrf.mxu0
        %v1287 = vadd.f32 %v1198, %v1286
        %1288 = vmatmul.bf16.gmra.mxu0 %v861
        %v1289 = vpop.f32.mrf.mxu0
        %v1290 = vadd.f32 %v1201, %v1289
        %v1291 = vpop.f32.mrf.mxu0
        %v1292 = vadd.f32 %v1203, %v1291
        %1293 = vmatmul.bf16.gmra.mxu0 %v865
        %v1294 = vpop.f32.mrf.mxu0
        %v1295 = vadd.f32 %v1206, %v1294
        %v1296 = vpop.f32.mrf.mxu0
        %v1297 = vadd.f32 %v1208, %v1296
        %1298 = vmatmul.bf16.gmra.mxu0 %v869
        %v1299 = vpop.f32.mrf.mxu0
        %v1300 = vadd.f32 %v1211, %v1299
        %v1301 = vpop.f32.mrf.mxu0
        %v1302 = vadd.f32 %v1213, %v1301
        %1303 = vmatmul.bf16.gmra.mxu0 %v873
        %v1304 = vpop.f32.mrf.mxu0
        %v1305 = vadd.f32 %v1216, %v1304
        %v1306 = vpop.f32.mrf.mxu0
        %v1307 = vadd.f32 %v1218, %v1306
        %1308 = vmatmul.bf16.gmra.mxu0 %v877
        %v1309 = vpop.f32.mrf.mxu0
        %v1310 = vadd.f32 %v1221, %v1309
        %v1311 = vpop.f32.mrf.mxu0
        %v1312 = vadd.f32 %v1223, %v1311
        %1313 = vdwg.mxu0
        %1314 = vmatpush.bf16.msra.mxu0 %v1095
        %1315 = vmatpush.bf16.msra.mxu0 %v1094
        %1316 = vmatpush.bf16.msra.mxu0 %v1093
        %1317 = vmatpush.bf16.msra.mxu0 %v1092
        %1318 = vmatpush.bf16.msra.mxu0 %v1091
        %1319 = vmatpush.bf16.msra.mxu0 %v1090
        %1320 = vmatpush.bf16.msra.mxu0 %v1089
        %1321 = vmatpush.bf16.msra.mxu0 %v1088
        %1322 = vmatmul.bf16.gmra.mxu0 %v818
        %v1323 = vpop.f32.mrf.mxu0
        %v1324 = vadd.f32 %v1235, %v1323
        %v1325 = vpop.f32.mrf.mxu0
        %v1326 = vadd.f32 %v1237, %v1325
        %1327 = vmatmul.bf16.gmra.mxu0 %v822
        %v1328 = vpop.f32.mrf.mxu0
        %v1329 = vadd.f32 %v1240, %v1328
        %v1330 = vpop.f32.mrf.mxu0
        %v1331 = vadd.f32 %v1242, %v1330
        %1332 = vmatmul.bf16.gmra.mxu0 %v826
        %v1333 = vpop.f32.mrf.mxu0
        %v1334 = vadd.f32 %v1245, %v1333
        %v1335 = vpop.f32.mrf.mxu0
        %v1336 = vadd.f32 %v1247, %v1335
        %1337 = vmatmul.bf16.gmra.mxu0 %v830
        %v1338 = vpop.f32.mrf.mxu0
        %v1339 = vadd.f32 %v1250, %v1338
        %v1340 = vpop.f32.mrf.mxu0
        %v1341 = vadd.f32 %v1252, %v1340
        %1342 = vmatmul.bf16.gmra.mxu0 %v834
        %v1343 = vpop.f32.mrf.mxu0
        %v1344 = vadd.f32 %v1255, %v1343
        %v1345 = vpop.f32.mrf.mxu0
        %v1346 = vadd.f32 %v1257, %v1345
        %1347 = vmatmul.bf16.gmra.mxu0 %v838
        %v1348 = vpop.f32.mrf.mxu0
        %v1349 = vadd.f32 %v1260, %v1348
        %v1350 = vpop.f32.mrf.mxu0
        %v1351 = vadd.f32 %v1262, %v1350
        %1352 = vmatmul.bf16.gmra.mxu0 %v842
        %v1353 = vpop.f32.mrf.mxu0
        %v1354 = vadd.f32 %v1265, %v1353
        %v1355 = vpop.f32.mrf.mxu0
        %v1356 = vadd.f32 %v1267, %v1355
        %1357 = vmatmul.bf16.gmra.mxu0 %v846
        %v1358 = vpop.f32.mrf.mxu0
        %v1359 = vadd.f32 %v1270, %v1358
        %v1360 = vpop.f32.mrf.mxu0
        %v1361 = vadd.f32 %v1272, %v1360
        %1362 = vmatmul.bf16.gmra.mxu0 %v850
        %v1363 = vpop.f32.mrf.mxu0
        %v1364 = vadd.f32 %v1275, %v1363
        %v1365 = vpop.f32.mrf.mxu0
        %v1366 = vadd.f32 %v1277, %v1365
        %1367 = vmatmul.bf16.gmra.mxu0 %v854
        %v1368 = vpop.f32.mrf.mxu0
        %v1369 = vadd.f32 %v1280, %v1368
        %v1370 = vpop.f32.mrf.mxu0
        %v1371 = vadd.f32 %v1282, %v1370
        %1372 = vmatmul.bf16.gmra.mxu0 %v858
        %v1373 = vpop.f32.mrf.mxu0
        %v1374 = vadd.f32 %v1285, %v1373
        %v1375 = vpop.f32.mrf.mxu0
        %v1376 = vadd.f32 %v1287, %v1375
        %1377 = vmatmul.bf16.gmra.mxu0 %v862
        %v1378 = vpop.f32.mrf.mxu0
        %v1379 = vadd.f32 %v1290, %v1378
        %v1380 = vpop.f32.mrf.mxu0
        %v1381 = vadd.f32 %v1292, %v1380
        %1382 = vmatmul.bf16.gmra.mxu0 %v866
        %v1383 = vpop.f32.mrf.mxu0
        %v1384 = vadd.f32 %v1295, %v1383
        %v1385 = vpop.f32.mrf.mxu0
        %v1386 = vadd.f32 %v1297, %v1385
        %1387 = vmatmul.bf16.gmra.mxu0 %v870
        %v1388 = vpop.f32.mrf.mxu0
        %v1389 = vadd.f32 %v1300, %v1388
        %v1390 = vpop.f32.mrf.mxu0
        %v1391 = vadd.f32 %v1302, %v1390
        %1392 = vmatmul.bf16.gmra.mxu0 %v874
        %v1393 = vpop.f32.mrf.mxu0
        %v1394 = vadd.f32 %v1305, %v1393
        %v1395 = vpop.f32.mrf.mxu0
        %v1396 = vadd.f32 %v1307, %v1395
        %1397 = vmatmul.bf16.gmra.mxu0 %v878
        %v1398 = vpop.f32.mrf.mxu0
        %v1399 = vadd.f32 %v1310, %v1398
        %v1400 = vpop.f32.mrf.mxu0
        %v1401 = vadd.f32 %v1312, %v1400
        %1402 = vdwg.mxu0
        %1403 = vmatpush.bf16.msra.mxu0 %v1103
        %1404 = vmatpush.bf16.msra.mxu0 %v1102
        %1405 = vmatpush.bf16.msra.mxu0 %v1101
        %1406 = vmatpush.bf16.msra.mxu0 %v1100
        %1407 = vmatpush.bf16.msra.mxu0 %v1099
        %1408 = vmatpush.bf16.msra.mxu0 %v1098
        %1409 = vmatpush.bf16.msra.mxu0 %v1097
        %1410 = vmatpush.bf16.msra.mxu0 %v1096
        %1411 = vmatmul.bf16.gmra.mxu0 %v819
        %v1412 = vpop.f32.mrf.mxu0
        %v1413 = vadd.f32 %v1324, %v1412
        %v1414 = vpop.f32.mrf.mxu0
        %v1415 = vadd.f32 %v1326, %v1414
        %1416 = vmatmul.bf16.gmra.mxu0 %v823
        %v1417 = vpop.f32.mrf.mxu0
        %v1418 = vadd.f32 %v1329, %v1417
        %v1419 = vpop.f32.mrf.mxu0
        %v1420 = vadd.f32 %v1331, %v1419
        %1421 = vmatmul.bf16.gmra.mxu0 %v827
        %v1422 = vpop.f32.mrf.mxu0
        %v1423 = vadd.f32 %v1334, %v1422
        %v1424 = vpop.f32.mrf.mxu0
        %v1425 = vadd.f32 %v1336, %v1424
        %1426 = vmatmul.bf16.gmra.mxu0 %v831
        %v1427 = vpop.f32.mrf.mxu0
        %v1428 = vadd.f32 %v1339, %v1427
        %v1429 = vpop.f32.mrf.mxu0
        %v1430 = vadd.f32 %v1341, %v1429
        %1431 = vmatmul.bf16.gmra.mxu0 %v835
        %v1432 = vpop.f32.mrf.mxu0
        %v1433 = vadd.f32 %v1344, %v1432
        %v1434 = vpop.f32.mrf.mxu0
        %v1435 = vadd.f32 %v1346, %v1434
        %1436 = vmatmul.bf16.gmra.mxu0 %v839
        %v1437 = vpop.f32.mrf.mxu0
        %v1438 = vadd.f32 %v1349, %v1437
        %v1439 = vpop.f32.mrf.mxu0
        %v1440 = vadd.f32 %v1351, %v1439
        %1441 = vmatmul.bf16.gmra.mxu0 %v843
        %v1442 = vpop.f32.mrf.mxu0
        %v1443 = vadd.f32 %v1354, %v1442
        %v1444 = vpop.f32.mrf.mxu0
        %v1445 = vadd.f32 %v1356, %v1444
        %1446 = vmatmul.bf16.gmra.mxu0 %v847
        %v1447 = vpop.f32.mrf.mxu0
        %v1448 = vadd.f32 %v1359, %v1447
        %v1449 = vpop.f32.mrf.mxu0
        %v1450 = vadd.f32 %v1361, %v1449
        %1451 = vmatmul.bf16.gmra.mxu0 %v851
        %v1452 = vpop.f32.mrf.mxu0
        %v1453 = vadd.f32 %v1364, %v1452
        %v1454 = vpop.f32.mrf.mxu0
        %v1455 = vadd.f32 %v1366, %v1454
        %1456 = vmatmul.bf16.gmra.mxu0 %v855
        %v1457 = vpop.f32.mrf.mxu0
        %v1458 = vadd.f32 %v1369, %v1457
        %v1459 = vpop.f32.mrf.mxu0
        %v1460 = vadd.f32 %v1371, %v1459
        %1461 = vmatmul.bf16.gmra.mxu0 %v859
        %v1462 = vpop.f32.mrf.mxu0
        %v1463 = vadd.f32 %v1374, %v1462
        %v1464 = vpop.f32.mrf.mxu0
        %v1465 = vadd.f32 %v1376, %v1464
        %1466 = vmatmul.bf16.gmra.mxu0 %v863
        %v1467 = vpop.f32.mrf.mxu0
        %v1468 = vadd.f32 %v1379, %v1467
        %v1469 = vpop.f32.mrf.mxu0
        %v1470 = vadd.f32 %v1381, %v1469
        %1471 = vmatmul.bf16.gmra.mxu0 %v867
        %v1472 = vpop.f32.mrf.mxu0
        %v1473 = vadd.f32 %v1384, %v1472
        %v1474 = vpop.f32.mrf.mxu0
        %v1475 = vadd.f32 %v1386, %v1474
        %1476 = vmatmul.bf16.gmra.mxu0 %v871
        %v1477 = vpop.f32.mrf.mxu0
        %v1478 = vadd.f32 %v1389, %v1477
        %v1479 = vpop.f32.mrf.mxu0
        %v1480 = vadd.f32 %v1391, %v1479
        %1481 = vmatmul.bf16.gmra.mxu0 %v875
        %v1482 = vpop.f32.mrf.mxu0
        %v1483 = vadd.f32 %v1394, %v1482
        %v1484 = vpop.f32.mrf.mxu0
        %v1485 = vadd.f32 %v1396, %v1484
        %1486 = vmatmul.bf16.gmra.mxu0 %v879
        %v1487 = vpop.f32.mrf.mxu0
        %v1488 = vadd.f32 %v1399, %v1487
        %v1489 = vpop.f32.mrf.mxu0
        %v1490 = vadd.f32 %v1401, %v1489
        %1491 = vdwg.mxu0
        %v1492 = vadd.f32 %v464, %v1413
        %v1493 = vadd.f32 %v465, %v1415
        %v1494 = vadd.f32 %v466, %v1418
        %v1495 = vadd.f32 %v467, %v1420
        %v1496 = vadd.f32 %v468, %v1423
        %v1497 = vadd.f32 %v469, %v1425
        %v1498 = vadd.f32 %v470, %v1428
        %v1499 = vadd.f32 %v471, %v1430
        %v1500 = vadd.f32 %v472, %v1433
        %v1501 = vadd.f32 %v473, %v1435
        %v1502 = vadd.f32 %v474, %v1438
        %v1503 = vadd.f32 %v475, %v1440
        %v1504 = vadd.f32 %v476, %v1443
        %v1505 = vadd.f32 %v477, %v1445
        %v1506 = vadd.f32 %v478, %v1448
        %v1507 = vadd.f32 %v479, %v1450
        %v1508 = vadd.f32 %v480, %v1453
        %v1509 = vadd.f32 %v481, %v1455
        %v1510 = vadd.f32 %v482, %v1458
        %v1511 = vadd.f32 %v483, %v1460
        %v1512 = vadd.f32 %v484, %v1463
        %v1513 = vadd.f32 %v485, %v1465
        %v1514 = vadd.f32 %v486, %v1468
        %v1515 = vadd.f32 %v487, %v1470
        %v1516 = vadd.f32 %v488, %v1473
        %v1517 = vadd.f32 %v489, %v1475
        %v1518 = vadd.f32 %v490, %v1478
        %v1519 = vadd.f32 %v491, %v1480
        %v1520 = vadd.f32 %v492, %v1483
        %v1521 = vadd.f32 %v493, %v1485
        %v1522 = vadd.f32 %v494, %v1488
        %v1523 = vadd.f32 %v495, %v1490
        %1524 = vst [vmem:[#allocation2] sm:$0xff] %v1492
        %1525 = vst [vmem:[#allocation2 + $0x8] sm:$0xff] %v1493
        %1526 = vst [vmem:[#allocation2 + $0x10] sm:$0xff] %v1494
        %1527 = vst [vmem:[#allocation2 + $0x18] sm:$0xff] %v1495
        %1528 = vst [vmem:[#allocation2 + $0x20] sm:$0xff] %v1496
        %1529 = vst [vmem:[#allocation2 + $0x28] sm:$0xff] %v1497
        %1530 = vst [vmem:[#allocation2 + $0x30] sm:$0xff] %v1498
        %1531 = vst [vmem:[#allocation2 + $0x38] sm:$0xff] %v1499
        %1532 = vst [vmem:[#allocation2 + $0x40] sm:$0xff] %v1500
        %1533 = vst [vmem:[#allocation2 + $0x48] sm:$0xff] %v1501
        %1534 = vst [vmem:[#allocation2 + $0x50] sm:$0xff] %v1502
        %1535 = vst [vmem:[#allocation2 + $0x58] sm:$0xff] %v1503
        %1536 = vst [vmem:[#allocation2 + $0x60] sm:$0xff] %v1504
        %1537 = vst [vmem:[#allocation2 + $0x68] sm:$0xff] %v1505
        %1538 = vst [vmem:[#allocation2 + $0x70] sm:$0xff] %v1506
        %1539 = vst [vmem:[#allocation2 + $0x78] sm:$0xff] %v1507
        %1540 = vst [vmem:[#allocation2 + $0x80] sm:$0xff] %v1508
        %1541 = vst [vmem:[#allocation2 + $0x88] sm:$0xff] %v1509
        %1542 = vst [vmem:[#allocation2 + $0x90] sm:$0xff] %v1510
        %1543 = vst [vmem:[#allocation2 + $0x98] sm:$0xff] %v1511
        %1544 = vst [vmem:[#allocation2 + $0xa0] sm:$0xff] %v1512
        %1545 = vst [vmem:[#allocation2 + $0xa8] sm:$0xff] %v1513
        %1546 = vst [vmem:[#allocation2 + $0xb0] sm:$0xff] %v1514
        %1547 = vst [vmem:[#allocation2 + $0xb8] sm:$0xff] %v1515
        %1548 = vst [vmem:[#allocation2 + $0xc0] sm:$0xff] %v1516
        %1549 = vst [vmem:[#allocation2 + $0xc8] sm:$0xff] %v1517
        %1550 = vst [vmem:[#allocation2 + $0xd0] sm:$0xff] %v1518
        %1551 = vst [vmem:[#allocation2 + $0xd8] sm:$0xff] %v1519
        %1552 = vst [vmem:[#allocation2 + $0xe0] sm:$0xff] %v1520
        %1553 = vst [vmem:[#allocation2 + $0xe8] sm:$0xff] %v1521
        %1554 = vst [vmem:[#allocation2 + $0xf0] sm:$0xff] %v1522
        %1555 = vst [vmem:[#allocation2 + $0xf8] sm:$0xff] %v1523
        // Predicated region
        $region65: #{forward.3} parent=39 // pred_check
          %p1556 = pneg %p428
        $region66: #{forward.3} parent=39 // pred_check_branch
          %1558 = sbr.rel (%p1556) target = $region68
        $region67: #{forward.3} parent=39 // pred_region
          %v1559 = vld [vmem:[#allocation2] sm:$0xff]
          %v1560 = vld [vmem:[#allocation2 + $0x8] sm:$0xff]
          %v1561 = vld [vmem:[#allocation2 + $0x10] sm:$0xff]
          %v1562 = vld [vmem:[#allocation2 + $0x18] sm:$0xff]
          %v1563 = vld [vmem:[#allocation2 + $0x20] sm:$0xff]
          %v1564 = vld [vmem:[#allocation2 + $0x28] sm:$0xff]
          %v1565 = vld [vmem:[#allocation2 + $0x30] sm:$0xff]
          %v1566 = vld [vmem:[#allocation2 + $0x38] sm:$0xff]
          %v1567 = vld [vmem:[#allocation2 + $0x40] sm:$0xff]
          %v1568 = vld [vmem:[#allocation2 + $0x48] sm:$0xff]
          %v1569 = vld [vmem:[#allocation2 + $0x50] sm:$0xff]
          %v1570 = vld [vmem:[#allocation2 + $0x58] sm:$0xff]
          %v1571 = vld [vmem:[#allocation2 + $0x60] sm:$0xff]
          %v1572 = vld [vmem:[#allocation2 + $0x68] sm:$0xff]
          %v1573 = vld [vmem:[#allocation2 + $0x70] sm:$0xff]
          %v1574 = vld [vmem:[#allocation2 + $0x78] sm:$0xff]
          %v1575 = vld [vmem:[#allocation2 + $0x80] sm:$0xff]
          %v1576 = vld [vmem:[#allocation2 + $0x88] sm:$0xff]
          %v1577 = vld [vmem:[#allocation2 + $0x90] sm:$0xff]
          %v1578 = vld [vmem:[#allocation2 + $0x98] sm:$0xff]
          %v1579 = vld [vmem:[#allocation2 + $0xa0] sm:$0xff]
          %v1580 = vld [vmem:[#allocation2 + $0xa8] sm:$0xff]
          %v1581 = vld [vmem:[#allocation2 + $0xb0] sm:$0xff]
          %v1582 = vld [vmem:[#allocation2 + $0xb8] sm:$0xff]
          %v1583 = vld [vmem:[#allocation2 + $0xc0] sm:$0xff]
          %v1584 = vld [vmem:[#allocation2 + $0xc8] sm:$0xff]
          %v1585 = vld [vmem:[#allocation2 + $0xd0] sm:$0xff]
          %v1586 = vld [vmem:[#allocation2 + $0xd8] sm:$0xff]
          %v1587 = vld [vmem:[#allocation2 + $0xe0] sm:$0xff]
          %v1588 = vld [vmem:[#allocation2 + $0xe8] sm:$0xff]
          %v1589 = vld [vmem:[#allocation2 + $0xf0] sm:$0xff]
          %v1590 = vld [vmem:[#allocation2 + $0xf8] sm:$0xff]
          %v1591 = vpack.c.bf16 %v1560, %v1559
          %v1592 = vpack.c.bf16 %v1562, %v1561
          %v1593 = vpack.c.bf16 %v1564, %v1563
          %v1594 = vpack.c.bf16 %v1566, %v1565
          %v1595 = vpack.c.bf16 %v1568, %v1567
          %v1596 = vpack.c.bf16 %v1570, %v1569
          %v1597 = vpack.c.bf16 %v1572, %v1571
          %v1598 = vpack.c.bf16 %v1574, %v1573
          %v1599 = vpack.c.bf16 %v1576, %v1575
          %v1600 = vpack.c.bf16 %v1578, %v1577
          %v1601 = vpack.c.bf16 %v1580, %v1579
          %v1602 = vpack.c.bf16 %v1582, %v1581
          %v1603 = vpack.c.bf16 %v1584, %v1583
          %v1604 = vpack.c.bf16 %v1586, %v1585
          %v1605 = vpack.c.bf16 %v1588, %v1587
          %v1606 = vpack.c.bf16 %v1590, %v1589
          %v1607 = vld [vmem:[%s348] sm:$0xff]
          %v1608 = vld [vmem:[%s348 + $0x8] sm:$0xff]
          %v1609 = vld [vmem:[%s348 + $0x10] sm:$0xff]
          %v1610 = vld [vmem:[%s348 + $0x18] sm:$0xff]
          %v1611 = vld [vmem:[%s348 + $0x20] sm:$0xff]
          %v1612 = vld [vmem:[%s348 + $0x28] sm:$0xff]
          %v1613 = vld [vmem:[%s348 + $0x30] sm:$0xff]
          %v1614 = vld [vmem:[%s348 + $0x38] sm:$0xff]
          %v1615 = vld [vmem:[%s348 + $0x40] sm:$0xff]
          %v1616 = vld [vmem:[%s348 + $0x48] sm:$0xff]
          %v1617 = vld [vmem:[%s348 + $0x50] sm:$0xff]
          %v1618 = vld [vmem:[%s348 + $0x58] sm:$0xff]
          %v1619 = vld [vmem:[%s348 + $0x60] sm:$0xff]
          %v1620 = vld [vmem:[%s348 + $0x68] sm:$0xff]
          %v1621 = vld [vmem:[%s348 + $0x70] sm:$0xff]
          %v1622 = vld [vmem:[%s348 + $0x78] sm:$0xff]
          %v1623 = vld [vmem:[%s348 + $0x80] sm:$0xff]
          %v1624 = vld [vmem:[%s348 + $0x88] sm:$0xff]
          %v1625 = vld [vmem:[%s348 + $0x90] sm:$0xff]
          %v1626 = vld [vmem:[%s348 + $0x98] sm:$0xff]
          %v1627 = vld [vmem:[%s348 + $0xa0] sm:$0xff]
          %v1628 = vld [vmem:[%s348 + $0xa8] sm:$0xff]
          %v1629 = vld [vmem:[%s348 + $0xb0] sm:$0xff]
          %v1630 = vld [vmem:[%s348 + $0xb8] sm:$0xff]
          %v1631 = vld [vmem:[%s348 + $0xc0] sm:$0xff]
          %v1632 = vld [vmem:[%s348 + $0xc8] sm:$0xff]
          %v1633 = vld [vmem:[%s348 + $0xd0] sm:$0xff]
          %v1634 = vld [vmem:[%s348 + $0xd8] sm:$0xff]
          %v1635 = vld [vmem:[%s348 + $0xe0] sm:$0xff]
          %v1636 = vld [vmem:[%s348 + $0xe8] sm:$0xff]
          %v1637 = vld [vmem:[%s348 + $0xf0] sm:$0xff]
          %v1638 = vld [vmem:[%s348 + $0xf8] sm:$0xff]
          %v1639 = vld [vmem:[%s348 + $0x100] sm:$0xff]
          %v1640 = vld [vmem:[%s348 + $0x108] sm:$0xff]
          %v1641 = vld [vmem:[%s348 + $0x110] sm:$0xff]
          %v1642 = vld [vmem:[%s348 + $0x118] sm:$0xff]
          %v1643 = vld [vmem:[%s348 + $0x120] sm:$0xff]
          %v1644 = vld [vmem:[%s348 + $0x128] sm:$0xff]
          %v1645 = vld [vmem:[%s348 + $0x130] sm:$0xff]
          %v1646 = vld [vmem:[%s348 + $0x138] sm:$0xff]
          %v1647 = vld [vmem:[%s348 + $0x140] sm:$0xff]
          %v1648 = vld [vmem:[%s348 + $0x148] sm:$0xff]
          %v1649 = vld [vmem:[%s348 + $0x150] sm:$0xff]
          %v1650 = vld [vmem:[%s348 + $0x158] sm:$0xff]
          %v1651 = vld [vmem:[%s348 + $0x160] sm:$0xff]
          %v1652 = vld [vmem:[%s348 + $0x168] sm:$0xff]
          %v1653 = vld [vmem:[%s348 + $0x170] sm:$0xff]
          %v1654 = vld [vmem:[%s348 + $0x178] sm:$0xff]
          %v1655 = vld [vmem:[%s348 + $0x180] sm:$0xff]
          %v1656 = vld [vmem:[%s348 + $0x188] sm:$0xff]
          %v1657 = vld [vmem:[%s348 + $0x190] sm:$0xff]
          %v1658 = vld [vmem:[%s348 + $0x198] sm:$0xff]
          %v1659 = vld [vmem:[%s348 + $0x1a0] sm:$0xff]
          %v1660 = vld [vmem:[%s348 + $0x1a8] sm:$0xff]
          %v1661 = vld [vmem:[%s348 + $0x1b0] sm:$0xff]
          %v1662 = vld [vmem:[%s348 + $0x1b8] sm:$0xff]
          %v1663 = vld [vmem:[%s348 + $0x1c0] sm:$0xff]
          %v1664 = vld [vmem:[%s348 + $0x1c8] sm:$0xff]
          %v1665 = vld [vmem:[%s348 + $0x1d0] sm:$0xff]
          %v1666 = vld [vmem:[%s348 + $0x1d8] sm:$0xff]
          %v1667 = vld [vmem:[%s348 + $0x1e0] sm:$0xff]
          %v1668 = vld [vmem:[%s348 + $0x1e8] sm:$0xff]
          %v1669 = vld [vmem:[%s348 + $0x1f0] sm:$0xff]
          %v1670 = vld [vmem:[%s348 + $0x1f8] sm:$0xff]
          %v1671 = vld [vmem:[%s358] sm:$0xff]
          %v1673 = vperm.slane %v1671, 0
          %v1674 = vperm.slane %v1671, 1
          %v1675 = vperm.slane %v1671, 2
          %v1676 = vperm.slane %v1671, 3
          %v1677 = vperm.slane %v1671, 4
          %v1678 = vperm.slane %v1671, 5
          %v1679 = vperm.slane %v1671, 6
          %v1680 = vperm.slane %v1671, 7
          %v1753 = vunpack.c.l.b16 %v1607
          %v1754 = vunpack.c.h.b16 %v1607
          %v1755 = vunpack.c.l.b16 %v1608
          %v1756 = vunpack.c.h.b16 %v1608
          %v1757 = vunpack.c.l.b16 %v1609
          %v1758 = vunpack.c.h.b16 %v1609
          %v1759 = vunpack.c.l.b16 %v1610
          %v1760 = vunpack.c.h.b16 %v1610
          %v1761 = vunpack.c.l.b16 %v1611
          %v1762 = vunpack.c.h.b16 %v1611
          %v1763 = vunpack.c.l.b16 %v1612
          %v1764 = vunpack.c.h.b16 %v1612
          %v1765 = vunpack.c.l.b16 %v1613
          %v1766 = vunpack.c.h.b16 %v1613
          %v1767 = vunpack.c.l.b16 %v1614
          %v1768 = vunpack.c.h.b16 %v1614
          %v1769 = vunpack.c.l.b16 %v1615
          %v1770 = vunpack.c.h.b16 %v1615
          %v1771 = vunpack.c.l.b16 %v1616
          %v1772 = vunpack.c.h.b16 %v1616
          %v1773 = vunpack.c.l.b16 %v1617
          %v1774 = vunpack.c.h.b16 %v1617
          %v1775 = vunpack.c.l.b16 %v1618
          %v1776 = vunpack.c.h.b16 %v1618
          %v1777 = vunpack.c.l.b16 %v1619
          %v1778 = vunpack.c.h.b16 %v1619
          %v1779 = vunpack.c.l.b16 %v1620
          %v1780 = vunpack.c.h.b16 %v1620
          %v1781 = vunpack.c.l.b16 %v1621
          %v1782 = vunpack.c.h.b16 %v1621
          %v1783 = vunpack.c.l.b16 %v1622
          %v1784 = vunpack.c.h.b16 %v1622
          %v1785 = vunpack.c.l.b16 %v1623
          %v1786 = vunpack.c.h.b16 %v1623
          %v1787 = vunpack.c.l.b16 %v1624
          %v1788 = vunpack.c.h.b16 %v1624
          %v1789 = vunpack.c.l.b16 %v1625
          %v1790 = vunpack.c.h.b16 %v1625
          %v1791 = vunpack.c.l.b16 %v1626
          %v1792 = vunpack.c.h.b16 %v1626
          %v1793 = vunpack.c.l.b16 %v1627
          %v1794 = vunpack.c.h.b16 %v1627
          %v1795 = vunpack.c.l.b16 %v1628
          %v1796 = vunpack.c.h.b16 %v1628
          %v1797 = vunpack.c.l.b16 %v1629
          %v1798 = vunpack.c.h.b16 %v1629
          %v1799 = vunpack.c.l.b16 %v1630
          %v1800 = vunpack.c.h.b16 %v1630
          %v1801 = vunpack.c.l.b16 %v1631
          %v1802 = vunpack.c.h.b16 %v1631
          %v1803 = vunpack.c.l.b16 %v1632
          %v1804 = vunpack.c.h.b16 %v1632
          %v1805 = vunpack.c.l.b16 %v1633
          %v1806 = vunpack.c.h.b16 %v1633
          %v1807 = vunpack.c.l.b16 %v1634
          %v1808 = vunpack.c.h.b16 %v1634
          %v1809 = vunpack.c.l.b16 %v1635
          %v1810 = vunpack.c.h.b16 %v1635
          %v1811 = vunpack.c.l.b16 %v1636
          %v1812 = vunpack.c.h.b16 %v1636
          %v1813 = vunpack.c.l.b16 %v1637
          %v1814 = vunpack.c.h.b16 %v1637
          %v1815 = vunpack.c.l.b16 %v1638
          %v1816 = vunpack.c.h.b16 %v1638
          %v1817 = vunpack.c.l.b16 %v1639
          %v1818 = vunpack.c.h.b16 %v1639
          %v1819 = vunpack.c.l.b16 %v1640
          %v1820 = vunpack.c.h.b16 %v1640
          %v1821 = vunpack.c.l.b16 %v1641
          %v1822 = vunpack.c.h.b16 %v1641
          %v1823 = vunpack.c.l.b16 %v1642
          %v1824 = vunpack.c.h.b16 %v1642
          %v1825 = vunpack.c.l.b16 %v1643
          %v1826 = vunpack.c.h.b16 %v1643
          %v1827 = vunpack.c.l.b16 %v1644
          %v1828 = vunpack.c.h.b16 %v1644
          %v1829 = vunpack.c.l.b16 %v1645
          %v1830 = vunpack.c.h.b16 %v1645
          %v1831 = vunpack.c.l.b16 %v1646
          %v1832 = vunpack.c.h.b16 %v1646
          %v1833 = vunpack.c.l.b16 %v1647
          %v1834 = vunpack.c.h.b16 %v1647
          %v1835 = vunpack.c.l.b16 %v1648
          %v1836 = vunpack.c.h.b16 %v1648
          %v1837 = vunpack.c.l.b16 %v1649
          %v1838 = vunpack.c.h.b16 %v1649
          %v1839 = vunpack.c.l.b16 %v1650
          %v1840 = vunpack.c.h.b16 %v1650
          %v1841 = vunpack.c.l.b16 %v1651
          %v1842 = vunpack.c.h.b16 %v1651
          %v1843 = vunpack.c.l.b16 %v1652
          %v1844 = vunpack.c.h.b16 %v1652
          %v1845 = vunpack.c.l.b16 %v1653
          %v1846 = vunpack.c.h.b16 %v1653
          %v1847 = vunpack.c.l.b16 %v1654
          %v1848 = vunpack.c.h.b16 %v1654
          %v1849 = vunpack.c.l.b16 %v1655
          %v1850 = vunpack.c.h.b16 %v1655
          %v1851 = vunpack.c.l.b16 %v1656
          %v1852 = vunpack.c.h.b16 %v1656
          %v1853 = vunpack.c.l.b16 %v1657
          %v1854 = vunpack.c.h.b16 %v1657
          %v1855 = vunpack.c.l.b16 %v1658
          %v1856 = vunpack.c.h.b16 %v1658
          %v1857 = vunpack.c.l.b16 %v1659
          %v1858 = vunpack.c.h.b16 %v1659
          %v1859 = vunpack.c.l.b16 %v1660
          %v1860 = vunpack.c.h.b16 %v1660
          %v1861 = vunpack.c.l.b16 %v1661
          %v1862 = vunpack.c.h.b16 %v1661
          %v1863 = vunpack.c.l.b16 %v1662
          %v1864 = vunpack.c.h.b16 %v1662
          %v1865 = vunpack.c.l.b16 %v1663
          %v1866 = vunpack.c.h.b16 %v1663
          %v1867 = vunpack.c.l.b16 %v1664
          %v1868 = vunpack.c.h.b16 %v1664
          %v1869 = vunpack.c.l.b16 %v1665
          %v1870 = vunpack.c.h.b16 %v1665
          %v1871 = vunpack.c.l.b16 %v1666
          %v1872 = vunpack.c.h.b16 %v1666
          %v1873 = vunpack.c.l.b16 %v1667
          %v1874 = vunpack.c.h.b16 %v1667
          %v1875 = vunpack.c.l.b16 %v1668
          %v1876 = vunpack.c.h.b16 %v1668
          %v1877 = vunpack.c.l.b16 %v1669
          %v1878 = vunpack.c.h.b16 %v1669
          %v1879 = vunpack.c.l.b16 %v1670
          %v1880 = vunpack.c.h.b16 %v1670
          %v1881 = vpack.c.b16 %v1761, %v1753
          %v1882 = vpack.c.b16 %v1762, %v1754
          %v1883 = vpack.c.b16 %v1763, %v1755
          %v1884 = vpack.c.b16 %v1764, %v1756
          %v1885 = vpack.c.b16 %v1765, %v1757
          %v1886 = vpack.c.b16 %v1766, %v1758
          %v1887 = vpack.c.b16 %v1767, %v1759
          %v1888 = vpack.c.b16 %v1768, %v1760
          %v1889 = vpack.c.b16 %v1777, %v1769
          %v1890 = vpack.c.b16 %v1778, %v1770
          %v1891 = vpack.c.b16 %v1779, %v1771
          %v1892 = vpack.c.b16 %v1780, %v1772
          %v1893 = vpack.c.b16 %v1781, %v1773
          %v1894 = vpack.c.b16 %v1782, %v1774
          %v1895 = vpack.c.b16 %v1783, %v1775
          %v1896 = vpack.c.b16 %v1784, %v1776
          %v1897 = vpack.c.b16 %v1793, %v1785
          %v1898 = vpack.c.b16 %v1794, %v1786
          %v1899 = vpack.c.b16 %v1795, %v1787
          %v1900 = vpack.c.b16 %v1796, %v1788
          %v1901 = vpack.c.b16 %v1797, %v1789
          %v1902 = vpack.c.b16 %v1798, %v1790
          %v1903 = vpack.c.b16 %v1799, %v1791
          %v1904 = vpack.c.b16 %v1800, %v1792
          %v1905 = vpack.c.b16 %v1809, %v1801
          %v1906 = vpack.c.b16 %v1810, %v1802
          %v1907 = vpack.c.b16 %v1811, %v1803
          %v1908 = vpack.c.b16 %v1812, %v1804
          %v1909 = vpack.c.b16 %v1813, %v1805
          %v1910 = vpack.c.b16 %v1814, %v1806
          %v1911 = vpack.c.b16 %v1815, %v1807
          %v1912 = vpack.c.b16 %v1816, %v1808
          %v1913 = vpack.c.b16 %v1825, %v1817
          %v1914 = vpack.c.b16 %v1826, %v1818
          %v1915 = vpack.c.b16 %v1827, %v1819
          %v1916 = vpack.c.b16 %v1828, %v1820
          %v1917 = vpack.c.b16 %v1829, %v1821
          %v1918 = vpack.c.b16 %v1830, %v1822
          %v1919 = vpack.c.b16 %v1831, %v1823
          %v1920 = vpack.c.b16 %v1832, %v1824
          %v1921 = vpack.c.b16 %v1841, %v1833
          %v1922 = vpack.c.b16 %v1842, %v1834
          %v1923 = vpack.c.b16 %v1843, %v1835
          %v1924 = vpack.c.b16 %v1844, %v1836
          %v1925 = vpack.c.b16 %v1845, %v1837
          %v1926 = vpack.c.b16 %v1846, %v1838
          %v1927 = vpack.c.b16 %v1847, %v1839
          %v1928 = vpack.c.b16 %v1848, %v1840
          %v1929 = vpack.c.b16 %v1857, %v1849
          %v1930 = vpack.c.b16 %v1858, %v1850
          %v1931 = vpack.c.b16 %v1859, %v1851
          %v1932 = vpack.c.b16 %v1860, %v1852
          %v1933 = vpack.c.b16 %v1861, %v1853
          %v1934 = vpack.c.b16 %v1862, %v1854
          %v1935 = vpack.c.b16 %v1863, %v1855
          %v1936 = vpack.c.b16 %v1864, %v1856
          %v1937 = vpack.c.b16 %v1873, %v1865
          %v1938 = vpack.c.b16 %v1874, %v1866
          %v1939 = vpack.c.b16 %v1875, %v1867
          %v1940 = vpack.c.b16 %v1876, %v1868
          %v1941 = vpack.c.b16 %v1877, %v1869
          %v1942 = vpack.c.b16 %v1878, %v1870
          %v1943 = vpack.c.b16 %v1879, %v1871
          %v1944 = vpack.c.b16 %v1880, %v1872
          %2009 = vmatpush.bf16.msra.mxu0 %v1937
          %2010 = vmatpush.bf16.msra.mxu0 %v1929
          %2011 = vmatpush.bf16.msra.mxu0 %v1921
          %2012 = vmatpush.bf16.msra.mxu0 %v1913
          %2013 = vmatpush.bf16.msra.mxu0 %v1905
          %2014 = vmatpush.bf16.msra.mxu0 %v1897
          %2015 = vmatpush.bf16.msra.mxu0 %v1889
          %2016 = vmatpush.bf16.msra.mxu0 %v1881
          %2017 = vmatmul.bf16.gmra.mxu0 %v1591
          %v2018 = vpop.f32.mrf.mxu0
          %v2019 = vadd.f32 %v1673, %v2018
          %v2020 = vpop.f32.mrf.mxu0
          %v2021 = vadd.f32 %v1673, %v2020
          %2022 = vmatmul.bf16.gmra.mxu0 %v1592
          %v2023 = vpop.f32.mrf.mxu0
          %v2024 = vadd.f32 %v1673, %v2023
          %v2025 = vpop.f32.mrf.mxu0
          %v2026 = vadd.f32 %v1673, %v2025
          %2027 = vmatmul.bf16.gmra.mxu0 %v1593
          %v2028 = vpop.f32.mrf.mxu0
          %v2029 = vadd.f32 %v1673, %v2028
          %v2030 = vpop.f32.mrf.mxu0
          %v2031 = vadd.f32 %v1673, %v2030
          %2032 = vmatmul.bf16.gmra.mxu0 %v1594
          %v2033 = vpop.f32.mrf.mxu0
          %v2034 = vadd.f32 %v1673, %v2033
          %v2035 = vpop.f32.mrf.mxu0
          %v2036 = vadd.f32 %v1673, %v2035
          %2037 = vmatmul.bf16.gmra.mxu0 %v1595
          %v2038 = vpop.f32.mrf.mxu0
          %v2039 = vadd.f32 %v1673, %v2038
          %v2040 = vpop.f32.mrf.mxu0
          %v2041 = vadd.f32 %v1673, %v2040
          %2042 = vmatmul.bf16.gmra.mxu0 %v1596
          %v2043 = vpop.f32.mrf.mxu0
          %v2044 = vadd.f32 %v1673, %v2043
          %v2045 = vpop.f32.mrf.mxu0
          %v2046 = vadd.f32 %v1673, %v2045
          %2047 = vmatmul.bf16.gmra.mxu0 %v1597
          %v2048 = vpop.f32.mrf.mxu0
          %v2049 = vadd.f32 %v1673, %v2048
          %v2050 = vpop.f32.mrf.mxu0
          %v2051 = vadd.f32 %v1673, %v2050
          %2052 = vmatmul.bf16.gmra.mxu0 %v1598
          %v2053 = vpop.f32.mrf.mxu0
          %v2054 = vadd.f32 %v1673, %v2053
          %v2055 = vpop.f32.mrf.mxu0
          %v2056 = vadd.f32 %v1673, %v2055
          %2057 = vmatmul.bf16.gmra.mxu0 %v1599
          %v2058 = vpop.f32.mrf.mxu0
          %v2059 = vadd.f32 %v1673, %v2058
          %v2060 = vpop.f32.mrf.mxu0
          %v2061 = vadd.f32 %v1673, %v2060
          %2062 = vmatmul.bf16.gmra.mxu0 %v1600
          %v2063 = vpop.f32.mrf.mxu0
          %v2064 = vadd.f32 %v1673, %v2063
          %v2065 = vpop.f32.mrf.mxu0
          %v2066 = vadd.f32 %v1673, %v2065
          %2067 = vmatmul.bf16.gmra.mxu0 %v1601
          %v2068 = vpop.f32.mrf.mxu0
          %v2069 = vadd.f32 %v1673, %v2068
          %v2070 = vpop.f32.mrf.mxu0
          %v2071 = vadd.f32 %v1673, %v2070
          %2072 = vmatmul.bf16.gmra.mxu0 %v1602
          %v2073 = vpop.f32.mrf.mxu0
          %v2074 = vadd.f32 %v1673, %v2073
          %v2075 = vpop.f32.mrf.mxu0
          %v2076 = vadd.f32 %v1673, %v2075
          %2077 = vmatmul.bf16.gmra.mxu0 %v1603
          %v2078 = vpop.f32.mrf.mxu0
          %v2079 = vadd.f32 %v1673, %v2078
          %v2080 = vpop.f32.mrf.mxu0
          %v2081 = vadd.f32 %v1673, %v2080
          %2082 = vmatmul.bf16.gmra.mxu0 %v1604
          %v2083 = vpop.f32.mrf.mxu0
          %v2084 = vadd.f32 %v1673, %v2083
          %v2085 = vpop.f32.mrf.mxu0
          %v2086 = vadd.f32 %v1673, %v2085
          %2087 = vmatmul.bf16.gmra.mxu0 %v1605
          %v2088 = vpop.f32.mrf.mxu0
          %v2089 = vadd.f32 %v1673, %v2088
          %v2090 = vpop.f32.mrf.mxu0
          %v2091 = vadd.f32 %v1673, %v2090
          %2092 = vmatmul.bf16.gmra.mxu0 %v1606
          %v2093 = vpop.f32.mrf.mxu0
          %v2094 = vadd.f32 %v1673, %v2093
          %v2095 = vpop.f32.mrf.mxu0
          %v2096 = vadd.f32 %v1673, %v2095
          %2097 = vdwg.mxu0
          %2098 = vmatpush.bf16.msra.mxu0 %v1938
          %2099 = vmatpush.bf16.msra.mxu0 %v1930
          %2100 = vmatpush.bf16.msra.mxu0 %v1922
          %2101 = vmatpush.bf16.msra.mxu0 %v1914
          %2102 = vmatpush.bf16.msra.mxu0 %v1906
          %2103 = vmatpush.bf16.msra.mxu0 %v1898
          %2104 = vmatpush.bf16.msra.mxu0 %v1890
          %2105 = vmatpush.bf16.msra.mxu0 %v1882
          %2106 = vmatmul.bf16.gmra.mxu0 %v1591
          %v2107 = vpop.f32.mrf.mxu0
          %v2108 = vadd.f32 %v1674, %v2107
          %v2109 = vpop.f32.mrf.mxu0
          %v2110 = vadd.f32 %v1674, %v2109
          %2111 = vmatmul.bf16.gmra.mxu0 %v1592
          %v2112 = vpop.f32.mrf.mxu0
          %v2113 = vadd.f32 %v1674, %v2112
          %v2114 = vpop.f32.mrf.mxu0
          %v2115 = vadd.f32 %v1674, %v2114
          %2116 = vmatmul.bf16.gmra.mxu0 %v1593
          %v2117 = vpop.f32.mrf.mxu0
          %v2118 = vadd.f32 %v1674, %v2117
          %v2119 = vpop.f32.mrf.mxu0
          %v2120 = vadd.f32 %v1674, %v2119
          %2121 = vmatmul.bf16.gmra.mxu0 %v1594
          %v2122 = vpop.f32.mrf.mxu0
          %v2123 = vadd.f32 %v1674, %v2122
          %v2124 = vpop.f32.mrf.mxu0
          %v2125 = vadd.f32 %v1674, %v2124
          %2126 = vmatmul.bf16.gmra.mxu0 %v1595
          %v2127 = vpop.f32.mrf.mxu0
          %v2128 = vadd.f32 %v1674, %v2127
          %v2129 = vpop.f32.mrf.mxu0
          %v2130 = vadd.f32 %v1674, %v2129
          %2131 = vmatmul.bf16.gmra.mxu0 %v1596
          %v2132 = vpop.f32.mrf.mxu0
          %v2133 = vadd.f32 %v1674, %v2132
          %v2134 = vpop.f32.mrf.mxu0
          %v2135 = vadd.f32 %v1674, %v2134
          %2136 = vmatmul.bf16.gmra.mxu0 %v1597
          %v2137 = vpop.f32.mrf.mxu0
          %v2138 = vadd.f32 %v1674, %v2137
          %v2139 = vpop.f32.mrf.mxu0
          %v2140 = vadd.f32 %v1674, %v2139
          %2141 = vmatmul.bf16.gmra.mxu0 %v1598
          %v2142 = vpop.f32.mrf.mxu0
          %v2143 = vadd.f32 %v1674, %v2142
          %v2144 = vpop.f32.mrf.mxu0
          %v2145 = vadd.f32 %v1674, %v2144
          %2146 = vmatmul.bf16.gmra.mxu0 %v1599
          %v2147 = vpop.f32.mrf.mxu0
          %v2148 = vadd.f32 %v1674, %v2147
          %v2149 = vpop.f32.mrf.mxu0
          %v2150 = vadd.f32 %v1674, %v2149
          %2151 = vmatmul.bf16.gmra.mxu0 %v1600
          %v2152 = vpop.f32.mrf.mxu0
          %v2153 = vadd.f32 %v1674, %v2152
          %v2154 = vpop.f32.mrf.mxu0
          %v2155 = vadd.f32 %v1674, %v2154
          %2156 = vmatmul.bf16.gmra.mxu0 %v1601
          %v2157 = vpop.f32.mrf.mxu0
          %v2158 = vadd.f32 %v1674, %v2157
          %v2159 = vpop.f32.mrf.mxu0
          %v2160 = vadd.f32 %v1674, %v2159
          %2161 = vmatmul.bf16.gmra.mxu0 %v1602
          %v2162 = vpop.f32.mrf.mxu0
          %v2163 = vadd.f32 %v1674, %v2162
          %v2164 = vpop.f32.mrf.mxu0
          %v2165 = vadd.f32 %v1674, %v2164
          %2166 = vmatmul.bf16.gmra.mxu0 %v1603
          %v2167 = vpop.f32.mrf.mxu0
          %v2168 = vadd.f32 %v1674, %v2167
          %v2169 = vpop.f32.mrf.mxu0
          %v2170 = vadd.f32 %v1674, %v2169
          %2171 = vmatmul.bf16.gmra.mxu0 %v1604
          %v2172 = vpop.f32.mrf.mxu0
          %v2173 = vadd.f32 %v1674, %v2172
          %v2174 = vpop.f32.mrf.mxu0
          %v2175 = vadd.f32 %v1674, %v2174
          %2176 = vmatmul.bf16.gmra.mxu0 %v1605
          %v2177 = vpop.f32.mrf.mxu0
          %v2178 = vadd.f32 %v1674, %v2177
          %v2179 = vpop.f32.mrf.mxu0
          %v2180 = vadd.f32 %v1674, %v2179
          %2181 = vmatmul.bf16.gmra.mxu0 %v1606
          %v2182 = vpop.f32.mrf.mxu0
          %v2183 = vadd.f32 %v1674, %v2182
          %v2184 = vpop.f32.mrf.mxu0
          %v2185 = vadd.f32 %v1674, %v2184
          %2186 = vdwg.mxu0
          %2187 = vmatpush.bf16.msra.mxu0 %v1939
          %2188 = vmatpush.bf16.msra.mxu0 %v1931
          %2189 = vmatpush.bf16.msra.mxu0 %v1923
          %2190 = vmatpush.bf16.msra.mxu0 %v1915
          %2191 = vmatpush.bf16.msra.mxu0 %v1907
          %2192 = vmatpush.bf16.msra.mxu0 %v1899
          %2193 = vmatpush.bf16.msra.mxu0 %v1891
          %2194 = vmatpush.bf16.msra.mxu0 %v1883
          %2195 = vmatmul.bf16.gmra.mxu0 %v1591
          %v2196 = vpop.f32.mrf.mxu0
          %v2197 = vadd.f32 %v1675, %v2196
          %v2198 = vpop.f32.mrf.mxu0
          %v2199 = vadd.f32 %v1675, %v2198
          %2200 = vmatmul.bf16.gmra.mxu0 %v1592
          %v2201 = vpop.f32.mrf.mxu0
          %v2202 = vadd.f32 %v1675, %v2201
          %v2203 = vpop.f32.mrf.mxu0
          %v2204 = vadd.f32 %v1675, %v2203
          %2205 = vmatmul.bf16.gmra.mxu0 %v1593
          %v2206 = vpop.f32.mrf.mxu0
          %v2207 = vadd.f32 %v1675, %v2206
          %v2208 = vpop.f32.mrf.mxu0
          %v2209 = vadd.f32 %v1675, %v2208
          %2210 = vmatmul.bf16.gmra.mxu0 %v1594
          %v2211 = vpop.f32.mrf.mxu0
          %v2212 = vadd.f32 %v1675, %v2211
          %v2213 = vpop.f32.mrf.mxu0
          %v2214 = vadd.f32 %v1675, %v2213
          %2215 = vmatmul.bf16.gmra.mxu0 %v1595
          %v2216 = vpop.f32.mrf.mxu0
          %v2217 = vadd.f32 %v1675, %v2216
          %v2218 = vpop.f32.mrf.mxu0
          %v2219 = vadd.f32 %v1675, %v2218
          %2220 = vmatmul.bf16.gmra.mxu0 %v1596
          %v2221 = vpop.f32.mrf.mxu0
          %v2222 = vadd.f32 %v1675, %v2221
          %v2223 = vpop.f32.mrf.mxu0
          %v2224 = vadd.f32 %v1675, %v2223
          %2225 = vmatmul.bf16.gmra.mxu0 %v1597
          %v2226 = vpop.f32.mrf.mxu0
          %v2227 = vadd.f32 %v1675, %v2226
          %v2228 = vpop.f32.mrf.mxu0
          %v2229 = vadd.f32 %v1675, %v2228
          %2230 = vmatmul.bf16.gmra.mxu0 %v1598
          %v2231 = vpop.f32.mrf.mxu0
          %v2232 = vadd.f32 %v1675, %v2231
          %v2233 = vpop.f32.mrf.mxu0
          %v2234 = vadd.f32 %v1675, %v2233
          %2235 = vmatmul.bf16.gmra.mxu0 %v1599
          %v2236 = vpop.f32.mrf.mxu0
          %v2237 = vadd.f32 %v1675, %v2236
          %v2238 = vpop.f32.mrf.mxu0
          %v2239 = vadd.f32 %v1675, %v2238
          %2240 = vmatmul.bf16.gmra.mxu0 %v1600
          %v2241 = vpop.f32.mrf.mxu0
          %v2242 = vadd.f32 %v1675, %v2241
          %v2243 = vpop.f32.mrf.mxu0
          %v2244 = vadd.f32 %v1675, %v2243
          %2245 = vmatmul.bf16.gmra.mxu0 %v1601
          %v2246 = vpop.f32.mrf.mxu0
          %v2247 = vadd.f32 %v1675, %v2246
          %v2248 = vpop.f32.mrf.mxu0
          %v2249 = vadd.f32 %v1675, %v2248
          %2250 = vmatmul.bf16.gmra.mxu0 %v1602
          %v2251 = vpop.f32.mrf.mxu0
          %v2252 = vadd.f32 %v1675, %v2251
          %v2253 = vpop.f32.mrf.mxu0
          %v2254 = vadd.f32 %v1675, %v2253
          %2255 = vmatmul.bf16.gmra.mxu0 %v1603
          %v2256 = vpop.f32.mrf.mxu0
          %v2257 = vadd.f32 %v1675, %v2256
          %v2258 = vpop.f32.mrf.mxu0
          %v2259 = vadd.f32 %v1675, %v2258
          %2260 = vmatmul.bf16.gmra.mxu0 %v1604
          %v2261 = vpop.f32.mrf.mxu0
          %v2262 = vadd.f32 %v1675, %v2261
          %v2263 = vpop.f32.mrf.mxu0
          %v2264 = vadd.f32 %v1675, %v2263
          %2265 = vmatmul.bf16.gmra.mxu0 %v1605
          %v2266 = vpop.f32.mrf.mxu0
          %v2267 = vadd.f32 %v1675, %v2266
          %v2268 = vpop.f32.mrf.mxu0
          %v2269 = vadd.f32 %v1675, %v2268
          %2270 = vmatmul.bf16.gmra.mxu0 %v1606
          %v2271 = vpop.f32.mrf.mxu0
          %v2272 = vadd.f32 %v1675, %v2271
          %v2273 = vpop.f32.mrf.mxu0
          %v2274 = vadd.f32 %v1675, %v2273
          %2275 = vdwg.mxu0
          %2276 = vmatpush.bf16.msra.mxu0 %v1940
          %2277 = vmatpush.bf16.msra.mxu0 %v1932
          %2278 = vmatpush.bf16.msra.mxu0 %v1924
          %2279 = vmatpush.bf16.msra.mxu0 %v1916
          %2280 = vmatpush.bf16.msra.mxu0 %v1908
          %2281 = vmatpush.bf16.msra.mxu0 %v1900
          %2282 = vmatpush.bf16.msra.mxu0 %v1892
          %2283 = vmatpush.bf16.msra.mxu0 %v1884
          %2284 = vmatmul.bf16.gmra.mxu0 %v1591
          %v2285 = vpop.f32.mrf.mxu0
          %v2286 = vadd.f32 %v1676, %v2285
          %v2287 = vpop.f32.mrf.mxu0
          %v2288 = vadd.f32 %v1676, %v2287
          %2289 = vmatmul.bf16.gmra.mxu0 %v1592
          %v2290 = vpop.f32.mrf.mxu0
          %v2291 = vadd.f32 %v1676, %v2290
          %v2292 = vpop.f32.mrf.mxu0
          %v2293 = vadd.f32 %v1676, %v2292
          %2294 = vmatmul.bf16.gmra.mxu0 %v1593
          %v2295 = vpop.f32.mrf.mxu0
          %v2296 = vadd.f32 %v1676, %v2295
          %v2297 = vpop.f32.mrf.mxu0
          %v2298 = vadd.f32 %v1676, %v2297
          %2299 = vmatmul.bf16.gmra.mxu0 %v1594
          %v2300 = vpop.f32.mrf.mxu0
          %v2301 = vadd.f32 %v1676, %v2300
          %v2302 = vpop.f32.mrf.mxu0
          %v2303 = vadd.f32 %v1676, %v2302
          %2304 = vmatmul.bf16.gmra.mxu0 %v1595
          %v2305 = vpop.f32.mrf.mxu0
          %v2306 = vadd.f32 %v1676, %v2305
          %v2307 = vpop.f32.mrf.mxu0
          %v2308 = vadd.f32 %v1676, %v2307
          %2309 = vmatmul.bf16.gmra.mxu0 %v1596
          %v2310 = vpop.f32.mrf.mxu0
          %v2311 = vadd.f32 %v1676, %v2310
          %v2312 = vpop.f32.mrf.mxu0
          %v2313 = vadd.f32 %v1676, %v2312
          %2314 = vmatmul.bf16.gmra.mxu0 %v1597
          %v2315 = vpop.f32.mrf.mxu0
          %v2316 = vadd.f32 %v1676, %v2315
          %v2317 = vpop.f32.mrf.mxu0
          %v2318 = vadd.f32 %v1676, %v2317
          %2319 = vmatmul.bf16.gmra.mxu0 %v1598
          %v2320 = vpop.f32.mrf.mxu0
          %v2321 = vadd.f32 %v1676, %v2320
          %v2322 = vpop.f32.mrf.mxu0
          %v2323 = vadd.f32 %v1676, %v2322
          %2324 = vmatmul.bf16.gmra.mxu0 %v1599
          %v2325 = vpop.f32.mrf.mxu0
          %v2326 = vadd.f32 %v1676, %v2325
          %v2327 = vpop.f32.mrf.mxu0
          %v2328 = vadd.f32 %v1676, %v2327
          %2329 = vmatmul.bf16.gmra.mxu0 %v1600
          %v2330 = vpop.f32.mrf.mxu0
          %v2331 = vadd.f32 %v1676, %v2330
          %v2332 = vpop.f32.mrf.mxu0
          %v2333 = vadd.f32 %v1676, %v2332
          %2334 = vmatmul.bf16.gmra.mxu0 %v1601
          %v2335 = vpop.f32.mrf.mxu0
          %v2336 = vadd.f32 %v1676, %v2335
          %v2337 = vpop.f32.mrf.mxu0
          %v2338 = vadd.f32 %v1676, %v2337
          %2339 = vmatmul.bf16.gmra.mxu0 %v1602
          %v2340 = vpop.f32.mrf.mxu0
          %v2341 = vadd.f32 %v1676, %v2340
          %v2342 = vpop.f32.mrf.mxu0
          %v2343 = vadd.f32 %v1676, %v2342
          %2344 = vmatmul.bf16.gmra.mxu0 %v1603
          %v2345 = vpop.f32.mrf.mxu0
          %v2346 = vadd.f32 %v1676, %v2345
          %v2347 = vpop.f32.mrf.mxu0
          %v2348 = vadd.f32 %v1676, %v2347
          %2349 = vmatmul.bf16.gmra.mxu0 %v1604
          %v2350 = vpop.f32.mrf.mxu0
          %v2351 = vadd.f32 %v1676, %v2350
          %v2352 = vpop.f32.mrf.mxu0
          %v2353 = vadd.f32 %v1676, %v2352
          %2354 = vmatmul.bf16.gmra.mxu0 %v1605
          %v2355 = vpop.f32.mrf.mxu0
          %v2356 = vadd.f32 %v1676, %v2355
          %v2357 = vpop.f32.mrf.mxu0
          %v2358 = vadd.f32 %v1676, %v2357
          %2359 = vmatmul.bf16.gmra.mxu0 %v1606
          %v2360 = vpop.f32.mrf.mxu0
          %v2361 = vadd.f32 %v1676, %v2360
          %v2362 = vpop.f32.mrf.mxu0
          %v2363 = vadd.f32 %v1676, %v2362
          %2364 = vdwg.mxu0
          %2365 = vmatpush.bf16.msra.mxu0 %v1941
          %2366 = vmatpush.bf16.msra.mxu0 %v1933
          %2367 = vmatpush.bf16.msra.mxu0 %v1925
          %2368 = vmatpush.bf16.msra.mxu0 %v1917
          %2369 = vmatpush.bf16.msra.mxu0 %v1909
          %2370 = vmatpush.bf16.msra.mxu0 %v1901
          %2371 = vmatpush.bf16.msra.mxu0 %v1893
          %2372 = vmatpush.bf16.msra.mxu0 %v1885
          %2373 = vmatmul.bf16.gmra.mxu0 %v1591
          %v2374 = vpop.f32.mrf.mxu0
          %v2375 = vadd.f32 %v1677, %v2374
          %v2376 = vpop.f32.mrf.mxu0
          %v2377 = vadd.f32 %v1677, %v2376
          %2378 = vmatmul.bf16.gmra.mxu0 %v1592
          %v2379 = vpop.f32.mrf.mxu0
          %v2380 = vadd.f32 %v1677, %v2379
          %v2381 = vpop.f32.mrf.mxu0
          %v2382 = vadd.f32 %v1677, %v2381
          %2383 = vmatmul.bf16.gmra.mxu0 %v1593
          %v2384 = vpop.f32.mrf.mxu0
          %v2385 = vadd.f32 %v1677, %v2384
          %v2386 = vpop.f32.mrf.mxu0
          %v2387 = vadd.f32 %v1677, %v2386
          %2388 = vmatmul.bf16.gmra.mxu0 %v1594
          %v2389 = vpop.f32.mrf.mxu0
          %v2390 = vadd.f32 %v1677, %v2389
          %v2391 = vpop.f32.mrf.mxu0
          %v2392 = vadd.f32 %v1677, %v2391
          %2393 = vmatmul.bf16.gmra.mxu0 %v1595
          %v2394 = vpop.f32.mrf.mxu0
          %v2395 = vadd.f32 %v1677, %v2394
          %v2396 = vpop.f32.mrf.mxu0
          %v2397 = vadd.f32 %v1677, %v2396
          %2398 = vmatmul.bf16.gmra.mxu0 %v1596
          %v2399 = vpop.f32.mrf.mxu0
          %v2400 = vadd.f32 %v1677, %v2399
          %v2401 = vpop.f32.mrf.mxu0
          %v2402 = vadd.f32 %v1677, %v2401
          %2403 = vmatmul.bf16.gmra.mxu0 %v1597
          %v2404 = vpop.f32.mrf.mxu0
          %v2405 = vadd.f32 %v1677, %v2404
          %v2406 = vpop.f32.mrf.mxu0
          %v2407 = vadd.f32 %v1677, %v2406
          %2408 = vmatmul.bf16.gmra.mxu0 %v1598
          %v2409 = vpop.f32.mrf.mxu0
          %v2410 = vadd.f32 %v1677, %v2409
          %v2411 = vpop.f32.mrf.mxu0
          %v2412 = vadd.f32 %v1677, %v2411
          %2413 = vmatmul.bf16.gmra.mxu0 %v1599
          %v2414 = vpop.f32.mrf.mxu0
          %v2415 = vadd.f32 %v1677, %v2414
          %v2416 = vpop.f32.mrf.mxu0
          %v2417 = vadd.f32 %v1677, %v2416
          %2418 = vmatmul.bf16.gmra.mxu0 %v1600
          %v2419 = vpop.f32.mrf.mxu0
          %v2420 = vadd.f32 %v1677, %v2419
          %v2421 = vpop.f32.mrf.mxu0
          %v2422 = vadd.f32 %v1677, %v2421
          %2423 = vmatmul.bf16.gmra.mxu0 %v1601
          %v2424 = vpop.f32.mrf.mxu0
          %v2425 = vadd.f32 %v1677, %v2424
          %v2426 = vpop.f32.mrf.mxu0
          %v2427 = vadd.f32 %v1677, %v2426
          %2428 = vmatmul.bf16.gmra.mxu0 %v1602
          %v2429 = vpop.f32.mrf.mxu0
          %v2430 = vadd.f32 %v1677, %v2429
          %v2431 = vpop.f32.mrf.mxu0
          %v2432 = vadd.f32 %v1677, %v2431
          %2433 = vmatmul.bf16.gmra.mxu0 %v1603
          %v2434 = vpop.f32.mrf.mxu0
          %v2435 = vadd.f32 %v1677, %v2434
          %v2436 = vpop.f32.mrf.mxu0
          %v2437 = vadd.f32 %v1677, %v2436
          %2438 = vmatmul.bf16.gmra.mxu0 %v1604
          %v2439 = vpop.f32.mrf.mxu0
          %v2440 = vadd.f32 %v1677, %v2439
          %v2441 = vpop.f32.mrf.mxu0
          %v2442 = vadd.f32 %v1677, %v2441
          %2443 = vmatmul.bf16.gmra.mxu0 %v1605
          %v2444 = vpop.f32.mrf.mxu0
          %v2445 = vadd.f32 %v1677, %v2444
          %v2446 = vpop.f32.mrf.mxu0
          %v2447 = vadd.f32 %v1677, %v2446
          %2448 = vmatmul.bf16.gmra.mxu0 %v1606
          %v2449 = vpop.f32.mrf.mxu0
          %v2450 = vadd.f32 %v1677, %v2449
          %v2451 = vpop.f32.mrf.mxu0
          %v2452 = vadd.f32 %v1677, %v2451
          %2453 = vdwg.mxu0
          %2454 = vmatpush.bf16.msra.mxu0 %v1942
          %2455 = vmatpush.bf16.msra.mxu0 %v1934
          %2456 = vmatpush.bf16.msra.mxu0 %v1926
          %2457 = vmatpush.bf16.msra.mxu0 %v1918
          %2458 = vmatpush.bf16.msra.mxu0 %v1910
          %2459 = vmatpush.bf16.msra.mxu0 %v1902
          %2460 = vmatpush.bf16.msra.mxu0 %v1894
          %2461 = vmatpush.bf16.msra.mxu0 %v1886
          %2462 = vmatmul.bf16.gmra.mxu0 %v1591
          %v2463 = vpop.f32.mrf.mxu0
          %v2464 = vadd.f32 %v1678, %v2463
          %v2465 = vpop.f32.mrf.mxu0
          %v2466 = vadd.f32 %v1678, %v2465
          %2467 = vmatmul.bf16.gmra.mxu0 %v1592
          %v2468 = vpop.f32.mrf.mxu0
          %v2469 = vadd.f32 %v1678, %v2468
          %v2470 = vpop.f32.mrf.mxu0
          %v2471 = vadd.f32 %v1678, %v2470
          %2472 = vmatmul.bf16.gmra.mxu0 %v1593
          %v2473 = vpop.f32.mrf.mxu0
          %v2474 = vadd.f32 %v1678, %v2473
          %v2475 = vpop.f32.mrf.mxu0
          %v2476 = vadd.f32 %v1678, %v2475
          %2477 = vmatmul.bf16.gmra.mxu0 %v1594
          %v2478 = vpop.f32.mrf.mxu0
          %v2479 = vadd.f32 %v1678, %v2478
          %v2480 = vpop.f32.mrf.mxu0
          %v2481 = vadd.f32 %v1678, %v2480
          %2482 = vmatmul.bf16.gmra.mxu0 %v1595
          %v2483 = vpop.f32.mrf.mxu0
          %v2484 = vadd.f32 %v1678, %v2483
          %v2485 = vpop.f32.mrf.mxu0
          %v2486 = vadd.f32 %v1678, %v2485
          %2487 = vmatmul.bf16.gmra.mxu0 %v1596
          %v2488 = vpop.f32.mrf.mxu0
          %v2489 = vadd.f32 %v1678, %v2488
          %v2490 = vpop.f32.mrf.mxu0
          %v2491 = vadd.f32 %v1678, %v2490
          %2492 = vmatmul.bf16.gmra.mxu0 %v1597
          %v2493 = vpop.f32.mrf.mxu0
          %v2494 = vadd.f32 %v1678, %v2493
          %v2495 = vpop.f32.mrf.mxu0
          %v2496 = vadd.f32 %v1678, %v2495
          %2497 = vmatmul.bf16.gmra.mxu0 %v1598
          %v2498 = vpop.f32.mrf.mxu0
          %v2499 = vadd.f32 %v1678, %v2498
          %v2500 = vpop.f32.mrf.mxu0
          %v2501 = vadd.f32 %v1678, %v2500
          %2502 = vmatmul.bf16.gmra.mxu0 %v1599
          %v2503 = vpop.f32.mrf.mxu0
          %v2504 = vadd.f32 %v1678, %v2503
          %v2505 = vpop.f32.mrf.mxu0
          %v2506 = vadd.f32 %v1678, %v2505
          %2507 = vmatmul.bf16.gmra.mxu0 %v1600
          %v2508 = vpop.f32.mrf.mxu0
          %v2509 = vadd.f32 %v1678, %v2508
          %v2510 = vpop.f32.mrf.mxu0
          %v2511 = vadd.f32 %v1678, %v2510
          %2512 = vmatmul.bf16.gmra.mxu0 %v1601
          %v2513 = vpop.f32.mrf.mxu0
          %v2514 = vadd.f32 %v1678, %v2513
          %v2515 = vpop.f32.mrf.mxu0
          %v2516 = vadd.f32 %v1678, %v2515
          %2517 = vmatmul.bf16.gmra.mxu0 %v1602
          %v2518 = vpop.f32.mrf.mxu0
          %v2519 = vadd.f32 %v1678, %v2518
          %v2520 = vpop.f32.mrf.mxu0
          %v2521 = vadd.f32 %v1678, %v2520
          %2522 = vmatmul.bf16.gmra.mxu0 %v1603
          %v2523 = vpop.f32.mrf.mxu0
          %v2524 = vadd.f32 %v1678, %v2523
          %v2525 = vpop.f32.mrf.mxu0
          %v2526 = vadd.f32 %v1678, %v2525
          %2527 = vmatmul.bf16.gmra.mxu0 %v1604
          %v2528 = vpop.f32.mrf.mxu0
          %v2529 = vadd.f32 %v1678, %v2528
          %v2530 = vpop.f32.mrf.mxu0
          %v2531 = vadd.f32 %v1678, %v2530
          %2532 = vmatmul.bf16.gmra.mxu0 %v1605
          %v2533 = vpop.f32.mrf.mxu0
          %v2534 = vadd.f32 %v1678, %v2533
          %v2535 = vpop.f32.mrf.mxu0
          %v2536 = vadd.f32 %v1678, %v2535
          %2537 = vmatmul.bf16.gmra.mxu0 %v1606
          %v2538 = vpop.f32.mrf.mxu0
          %v2539 = vadd.f32 %v1678, %v2538
          %v2540 = vpop.f32.mrf.mxu0
          %v2541 = vadd.f32 %v1678, %v2540
          %2542 = vdwg.mxu0
          %2543 = vmatpush.bf16.msra.mxu0 %v1943
          %2544 = vmatpush.bf16.msra.mxu0 %v1935
          %2545 = vmatpush.bf16.msra.mxu0 %v1927
          %2546 = vmatpush.bf16.msra.mxu0 %v1919
          %2547 = vmatpush.bf16.msra.mxu0 %v1911
          %2548 = vmatpush.bf16.msra.mxu0 %v1903
          %2549 = vmatpush.bf16.msra.mxu0 %v1895
          %2550 = vmatpush.bf16.msra.mxu0 %v1887
          %2551 = vmatmul.bf16.gmra.mxu0 %v1591
          %v2552 = vpop.f32.mrf.mxu0
          %v2553 = vadd.f32 %v1679, %v2552
          %v2554 = vpop.f32.mrf.mxu0
          %v2555 = vadd.f32 %v1679, %v2554
          %2556 = vmatmul.bf16.gmra.mxu0 %v1592
          %v2557 = vpop.f32.mrf.mxu0
          %v2558 = vadd.f32 %v1679, %v2557
          %v2559 = vpop.f32.mrf.mxu0
          %v2560 = vadd.f32 %v1679, %v2559
          %2561 = vmatmul.bf16.gmra.mxu0 %v1593
          %v2562 = vpop.f32.mrf.mxu0
          %v2563 = vadd.f32 %v1679, %v2562
          %v2564 = vpop.f32.mrf.mxu0
          %v2565 = vadd.f32 %v1679, %v2564
          %2566 = vmatmul.bf16.gmra.mxu0 %v1594
          %v2567 = vpop.f32.mrf.mxu0
          %v2568 = vadd.f32 %v1679, %v2567
          %v2569 = vpop.f32.mrf.mxu0
          %v2570 = vadd.f32 %v1679, %v2569
          %2571 = vmatmul.bf16.gmra.mxu0 %v1595
          %v2572 = vpop.f32.mrf.mxu0
          %v2573 = vadd.f32 %v1679, %v2572
          %v2574 = vpop.f32.mrf.mxu0
          %v2575 = vadd.f32 %v1679, %v2574
          %2576 = vmatmul.bf16.gmra.mxu0 %v1596
          %v2577 = vpop.f32.mrf.mxu0
          %v2578 = vadd.f32 %v1679, %v2577
          %v2579 = vpop.f32.mrf.mxu0
          %v2580 = vadd.f32 %v1679, %v2579
          %2581 = vmatmul.bf16.gmra.mxu0 %v1597
          %v2582 = vpop.f32.mrf.mxu0
          %v2583 = vadd.f32 %v1679, %v2582
          %v2584 = vpop.f32.mrf.mxu0
          %v2585 = vadd.f32 %v1679, %v2584
          %2586 = vmatmul.bf16.gmra.mxu0 %v1598
          %v2587 = vpop.f32.mrf.mxu0
          %v2588 = vadd.f32 %v1679, %v2587
          %v2589 = vpop.f32.mrf.mxu0
          %v2590 = vadd.f32 %v1679, %v2589
          %2591 = vmatmul.bf16.gmra.mxu0 %v1599
          %v2592 = vpop.f32.mrf.mxu0
          %v2593 = vadd.f32 %v1679, %v2592
          %v2594 = vpop.f32.mrf.mxu0
          %v2595 = vadd.f32 %v1679, %v2594
          %2596 = vmatmul.bf16.gmra.mxu0 %v1600
          %v2597 = vpop.f32.mrf.mxu0
          %v2598 = vadd.f32 %v1679, %v2597
          %v2599 = vpop.f32.mrf.mxu0
          %v2600 = vadd.f32 %v1679, %v2599
          %2601 = vmatmul.bf16.gmra.mxu0 %v1601
          %v2602 = vpop.f32.mrf.mxu0
          %v2603 = vadd.f32 %v1679, %v2602
          %v2604 = vpop.f32.mrf.mxu0
          %v2605 = vadd.f32 %v1679, %v2604
          %2606 = vmatmul.bf16.gmra.mxu0 %v1602
          %v2607 = vpop.f32.mrf.mxu0
          %v2608 = vadd.f32 %v1679, %v2607
          %v2609 = vpop.f32.mrf.mxu0
          %v2610 = vadd.f32 %v1679, %v2609
          %2611 = vmatmul.bf16.gmra.mxu0 %v1603
          %v2612 = vpop.f32.mrf.mxu0
          %v2613 = vadd.f32 %v1679, %v2612
          %v2614 = vpop.f32.mrf.mxu0
          %v2615 = vadd.f32 %v1679, %v2614
          %2616 = vmatmul.bf16.gmra.mxu0 %v1604
          %v2617 = vpop.f32.mrf.mxu0
          %v2618 = vadd.f32 %v1679, %v2617
          %v2619 = vpop.f32.mrf.mxu0
          %v2620 = vadd.f32 %v1679, %v2619
          %2621 = vmatmul.bf16.gmra.mxu0 %v1605
          %v2622 = vpop.f32.mrf.mxu0
          %v2623 = vadd.f32 %v1679, %v2622
          %v2624 = vpop.f32.mrf.mxu0
          %v2625 = vadd.f32 %v1679, %v2624
          %2626 = vmatmul.bf16.gmra.mxu0 %v1606
          %v2627 = vpop.f32.mrf.mxu0
          %v2628 = vadd.f32 %v1679, %v2627
          %v2629 = vpop.f32.mrf.mxu0
          %v2630 = vadd.f32 %v1679, %v2629
          %2631 = vdwg.mxu0
          %2632 = vmatpush.bf16.msra.mxu0 %v1944
          %2633 = vmatpush.bf16.msra.mxu0 %v1936
          %2634 = vmatpush.bf16.msra.mxu0 %v1928
          %2635 = vmatpush.bf16.msra.mxu0 %v1920
          %2636 = vmatpush.bf16.msra.mxu0 %v1912
          %2637 = vmatpush.bf16.msra.mxu0 %v1904
          %2638 = vmatpush.bf16.msra.mxu0 %v1896
          %2639 = vmatpush.bf16.msra.mxu0 %v1888
          %2640 = vmatmul.bf16.gmra.mxu0 %v1591
          %v2641 = vpop.f32.mrf.mxu0
          %v2642 = vadd.f32 %v1680, %v2641
          %v2643 = vpop.f32.mrf.mxu0
          %v2644 = vadd.f32 %v1680, %v2643
          %2645 = vmatmul.bf16.gmra.mxu0 %v1592
          %v2646 = vpop.f32.mrf.mxu0
          %v2647 = vadd.f32 %v1680, %v2646
          %v2648 = vpop.f32.mrf.mxu0
          %v2649 = vadd.f32 %v1680, %v2648
          %2650 = vmatmul.bf16.gmra.mxu0 %v1593
          %v2651 = vpop.f32.mrf.mxu0
          %v2652 = vadd.f32 %v1680, %v2651
          %v2653 = vpop.f32.mrf.mxu0
          %v2654 = vadd.f32 %v1680, %v2653
          %2655 = vmatmul.bf16.gmra.mxu0 %v1594
          %v2656 = vpop.f32.mrf.mxu0
          %v2657 = vadd.f32 %v1680, %v2656
          %v2658 = vpop.f32.mrf.mxu0
          %v2659 = vadd.f32 %v1680, %v2658
          %2660 = vmatmul.bf16.gmra.mxu0 %v1595
          %v2661 = vpop.f32.mrf.mxu0
          %v2662 = vadd.f32 %v1680, %v2661
          %v2663 = vpop.f32.mrf.mxu0
          %v2664 = vadd.f32 %v1680, %v2663
          %2665 = vmatmul.bf16.gmra.mxu0 %v1596
          %v2666 = vpop.f32.mrf.mxu0
          %v2667 = vadd.f32 %v1680, %v2666
          %v2668 = vpop.f32.mrf.mxu0
          %v2669 = vadd.f32 %v1680, %v2668
          %2670 = vmatmul.bf16.gmra.mxu0 %v1597
          %v2671 = vpop.f32.mrf.mxu0
          %v2672 = vadd.f32 %v1680, %v2671
          %v2673 = vpop.f32.mrf.mxu0
          %v2674 = vadd.f32 %v1680, %v2673
          %2675 = vmatmul.bf16.gmra.mxu0 %v1598
          %v2676 = vpop.f32.mrf.mxu0
          %v2677 = vadd.f32 %v1680, %v2676
          %v2678 = vpop.f32.mrf.mxu0
          %v2679 = vadd.f32 %v1680, %v2678
          %2680 = vmatmul.bf16.gmra.mxu0 %v1599
          %v2681 = vpop.f32.mrf.mxu0
          %v2682 = vadd.f32 %v1680, %v2681
          %v2683 = vpop.f32.mrf.mxu0
          %v2684 = vadd.f32 %v1680, %v2683
          %2685 = vmatmul.bf16.gmra.mxu0 %v1600
          %v2686 = vpop.f32.mrf.mxu0
          %v2687 = vadd.f32 %v1680, %v2686
          %v2688 = vpop.f32.mrf.mxu0
          %v2689 = vadd.f32 %v1680, %v2688
          %2690 = vmatmul.bf16.gmra.mxu0 %v1601
          %v2691 = vpop.f32.mrf.mxu0
          %v2692 = vadd.f32 %v1680, %v2691
          %v2693 = vpop.f32.mrf.mxu0
          %v2694 = vadd.f32 %v1680, %v2693
          %2695 = vmatmul.bf16.gmra.mxu0 %v1602
          %v2696 = vpop.f32.mrf.mxu0
          %v2697 = vadd.f32 %v1680, %v2696
          %v2698 = vpop.f32.mrf.mxu0
          %v2699 = vadd.f32 %v1680, %v2698
          %2700 = vmatmul.bf16.gmra.mxu0 %v1603
          %v2701 = vpop.f32.mrf.mxu0
          %v2702 = vadd.f32 %v1680, %v2701
          %v2703 = vpop.f32.mrf.mxu0
          %v2704 = vadd.f32 %v1680, %v2703
          %2705 = vmatmul.bf16.gmra.mxu0 %v1604
          %v2706 = vpop.f32.mrf.mxu0
          %v2707 = vadd.f32 %v1680, %v2706
          %v2708 = vpop.f32.mrf.mxu0
          %v2709 = vadd.f32 %v1680, %v2708
          %2710 = vmatmul.bf16.gmra.mxu0 %v1605
          %v2711 = vpop.f32.mrf.mxu0
          %v2712 = vadd.f32 %v1680, %v2711
          %v2713 = vpop.f32.mrf.mxu0
          %v2714 = vadd.f32 %v1680, %v2713
          %2715 = vmatmul.bf16.gmra.mxu0 %v1606
          %v2716 = vpop.f32.mrf.mxu0
          %v2717 = vadd.f32 %v1680, %v2716
          %v2718 = vpop.f32.mrf.mxu0
          %v2719 = vadd.f32 %v1680, %v2718
          %2720 = vdwg.mxu0
          %v2721 = vmax.f32 %v2019, 0.0
          %v2722 = vmax.f32 %v2108, 0.0
          %v2723 = vmax.f32 %v2197, 0.0
          %v2724 = vmax.f32 %v2286, 0.0
          %v2725 = vmax.f32 %v2375, 0.0
          %v2726 = vmax.f32 %v2464, 0.0
          %v2727 = vmax.f32 %v2553, 0.0
          %v2728 = vmax.f32 %v2642, 0.0
          %v2729 = vmax.f32 %v2021, 0.0
          %v2730 = vmax.f32 %v2110, 0.0
          %v2731 = vmax.f32 %v2199, 0.0
          %v2732 = vmax.f32 %v2288, 0.0
          %v2733 = vmax.f32 %v2377, 0.0
          %v2734 = vmax.f32 %v2466, 0.0
          %v2735 = vmax.f32 %v2555, 0.0
          %v2736 = vmax.f32 %v2644, 0.0
          %v2737 = vmax.f32 %v2024, 0.0
          %v2738 = vmax.f32 %v2113, 0.0
          %v2739 = vmax.f32 %v2202, 0.0
          %v2740 = vmax.f32 %v2291, 0.0
          %v2741 = vmax.f32 %v2380, 0.0
          %v2742 = vmax.f32 %v2469, 0.0
          %v2743 = vmax.f32 %v2558, 0.0
          %v2744 = vmax.f32 %v2647, 0.0
          %v2745 = vmax.f32 %v2026, 0.0
          %v2746 = vmax.f32 %v2115, 0.0
          %v2747 = vmax.f32 %v2204, 0.0
          %v2748 = vmax.f32 %v2293, 0.0
          %v2749 = vmax.f32 %v2382, 0.0
          %v2750 = vmax.f32 %v2471, 0.0
          %v2751 = vmax.f32 %v2560, 0.0
          %v2752 = vmax.f32 %v2649, 0.0
          %v2753 = vmax.f32 %v2029, 0.0
          %v2754 = vmax.f32 %v2118, 0.0
          %v2755 = vmax.f32 %v2207, 0.0
          %v2756 = vmax.f32 %v2296, 0.0
          %v2757 = vmax.f32 %v2385, 0.0
          %v2758 = vmax.f32 %v2474, 0.0
          %v2759 = vmax.f32 %v2563, 0.0
          %v2760 = vmax.f32 %v2652, 0.0
          %v2761 = vmax.f32 %v2031, 0.0
          %v2762 = vmax.f32 %v2120, 0.0
          %v2763 = vmax.f32 %v2209, 0.0
          %v2764 = vmax.f32 %v2298, 0.0
          %v2765 = vmax.f32 %v2387, 0.0
          %v2766 = vmax.f32 %v2476, 0.0
          %v2767 = vmax.f32 %v2565, 0.0
          %v2768 = vmax.f32 %v2654, 0.0
          %v2769 = vmax.f32 %v2034, 0.0
          %v2770 = vmax.f32 %v2123, 0.0
          %v2771 = vmax.f32 %v2212, 0.0
          %v2772 = vmax.f32 %v2301, 0.0
          %v2773 = vmax.f32 %v2390, 0.0
          %v2774 = vmax.f32 %v2479, 0.0
          %v2775 = vmax.f32 %v2568, 0.0
          %v2776 = vmax.f32 %v2657, 0.0
          %v2777 = vmax.f32 %v2036, 0.0
          %v2778 = vmax.f32 %v2125, 0.0
          %v2779 = vmax.f32 %v2214, 0.0
          %v2780 = vmax.f32 %v2303, 0.0
          %v2781 = vmax.f32 %v2392, 0.0
          %v2782 = vmax.f32 %v2481, 0.0
          %v2783 = vmax.f32 %v2570, 0.0
          %v2784 = vmax.f32 %v2659, 0.0
          %v2785 = vmax.f32 %v2039, 0.0
          %v2786 = vmax.f32 %v2128, 0.0
          %v2787 = vmax.f32 %v2217, 0.0
          %v2788 = vmax.f32 %v2306, 0.0
          %v2789 = vmax.f32 %v2395, 0.0
          %v2790 = vmax.f32 %v2484, 0.0
          %v2791 = vmax.f32 %v2573, 0.0
          %v2792 = vmax.f32 %v2662, 0.0
          %v2793 = vmax.f32 %v2041, 0.0
          %v2794 = vmax.f32 %v2130, 0.0
          %v2795 = vmax.f32 %v2219, 0.0
          %v2796 = vmax.f32 %v2308, 0.0
          %v2797 = vmax.f32 %v2397, 0.0
          %v2798 = vmax.f32 %v2486, 0.0
          %v2799 = vmax.f32 %v2575, 0.0
          %v2800 = vmax.f32 %v2664, 0.0
          %v2801 = vmax.f32 %v2044, 0.0
          %v2802 = vmax.f32 %v2133, 0.0
          %v2803 = vmax.f32 %v2222, 0.0
          %v2804 = vmax.f32 %v2311, 0.0
          %v2805 = vmax.f32 %v2400, 0.0
          %v2806 = vmax.f32 %v2489, 0.0
          %v2807 = vmax.f32 %v2578, 0.0
          %v2808 = vmax.f32 %v2667, 0.0
          %v2809 = vmax.f32 %v2046, 0.0
          %v2810 = vmax.f32 %v2135, 0.0
          %v2811 = vmax.f32 %v2224, 0.0
          %v2812 = vmax.f32 %v2313, 0.0
          %v2813 = vmax.f32 %v2402, 0.0
          %v2814 = vmax.f32 %v2491, 0.0
          %v2815 = vmax.f32 %v2580, 0.0
          %v2816 = vmax.f32 %v2669, 0.0
          %v2817 = vmax.f32 %v2049, 0.0
          %v2818 = vmax.f32 %v2138, 0.0
          %v2819 = vmax.f32 %v2227, 0.0
          %v2820 = vmax.f32 %v2316, 0.0
          %v2821 = vmax.f32 %v2405, 0.0
          %v2822 = vmax.f32 %v2494, 0.0
          %v2823 = vmax.f32 %v2583, 0.0
          %v2824 = vmax.f32 %v2672, 0.0
          %v2825 = vmax.f32 %v2051, 0.0
          %v2826 = vmax.f32 %v2140, 0.0
          %v2827 = vmax.f32 %v2229, 0.0
          %v2828 = vmax.f32 %v2318, 0.0
          %v2829 = vmax.f32 %v2407, 0.0
          %v2830 = vmax.f32 %v2496, 0.0
          %v2831 = vmax.f32 %v2585, 0.0
          %v2832 = vmax.f32 %v2674, 0.0
          %v2833 = vmax.f32 %v2054, 0.0
          %v2834 = vmax.f32 %v2143, 0.0
          %v2835 = vmax.f32 %v2232, 0.0
          %v2836 = vmax.f32 %v2321, 0.0
          %v2837 = vmax.f32 %v2410, 0.0
          %v2838 = vmax.f32 %v2499, 0.0
          %v2839 = vmax.f32 %v2588, 0.0
          %v2840 = vmax.f32 %v2677, 0.0
          %v2841 = vmax.f32 %v2056, 0.0
          %v2842 = vmax.f32 %v2145, 0.0
          %v2843 = vmax.f32 %v2234, 0.0
          %v2844 = vmax.f32 %v2323, 0.0
          %v2845 = vmax.f32 %v2412, 0.0
          %v2846 = vmax.f32 %v2501, 0.0
          %v2847 = vmax.f32 %v2590, 0.0
          %v2848 = vmax.f32 %v2679, 0.0
          %v2849 = vmax.f32 %v2059, 0.0
          %v2850 = vmax.f32 %v2148, 0.0
          %v2851 = vmax.f32 %v2237, 0.0
          %v2852 = vmax.f32 %v2326, 0.0
          %v2853 = vmax.f32 %v2415, 0.0
          %v2854 = vmax.f32 %v2504, 0.0
          %v2855 = vmax.f32 %v2593, 0.0
          %v2856 = vmax.f32 %v2682, 0.0
          %v2857 = vmax.f32 %v2061, 0.0
          %v2858 = vmax.f32 %v2150, 0.0
          %v2859 = vmax.f32 %v2239, 0.0
          %v2860 = vmax.f32 %v2328, 0.0
          %v2861 = vmax.f32 %v2417, 0.0
          %v2862 = vmax.f32 %v2506, 0.0
          %v2863 = vmax.f32 %v2595, 0.0
          %v2864 = vmax.f32 %v2684, 0.0
          %v2865 = vmax.f32 %v2064, 0.0
          %v2866 = vmax.f32 %v2153, 0.0
          %v2867 = vmax.f32 %v2242, 0.0
          %v2868 = vmax.f32 %v2331, 0.0
          %v2869 = vmax.f32 %v2420, 0.0
          %v2870 = vmax.f32 %v2509, 0.0
          %v2871 = vmax.f32 %v2598, 0.0
          %v2872 = vmax.f32 %v2687, 0.0
          %v2873 = vmax.f32 %v2066, 0.0
          %v2874 = vmax.f32 %v2155, 0.0
          %v2875 = vmax.f32 %v2244, 0.0
          %v2876 = vmax.f32 %v2333, 0.0
          %v2877 = vmax.f32 %v2422, 0.0
          %v2878 = vmax.f32 %v2511, 0.0
          %v2879 = vmax.f32 %v2600, 0.0
          %v2880 = vmax.f32 %v2689, 0.0
          %v2881 = vmax.f32 %v2069, 0.0
          %v2882 = vmax.f32 %v2158, 0.0
          %v2883 = vmax.f32 %v2247, 0.0
          %v2884 = vmax.f32 %v2336, 0.0
          %v2885 = vmax.f32 %v2425, 0.0
          %v2886 = vmax.f32 %v2514, 0.0
          %v2887 = vmax.f32 %v2603, 0.0
          %v2888 = vmax.f32 %v2692, 0.0
          %v2889 = vmax.f32 %v2071, 0.0
          %v2890 = vmax.f32 %v2160, 0.0
          %v2891 = vmax.f32 %v2249, 0.0
          %v2892 = vmax.f32 %v2338, 0.0
          %v2893 = vmax.f32 %v2427, 0.0
          %v2894 = vmax.f32 %v2516, 0.0
          %v2895 = vmax.f32 %v2605, 0.0
          %v2896 = vmax.f32 %v2694, 0.0
          %v2897 = vmax.f32 %v2074, 0.0
          %v2898 = vmax.f32 %v2163, 0.0
          %v2899 = vmax.f32 %v2252, 0.0
          %v2900 = vmax.f32 %v2341, 0.0
          %v2901 = vmax.f32 %v2430, 0.0
          %v2902 = vmax.f32 %v2519, 0.0
          %v2903 = vmax.f32 %v2608, 0.0
          %v2904 = vmax.f32 %v2697, 0.0
          %v2905 = vmax.f32 %v2076, 0.0
          %v2906 = vmax.f32 %v2165, 0.0
          %v2907 = vmax.f32 %v2254, 0.0
          %v2908 = vmax.f32 %v2343, 0.0
          %v2909 = vmax.f32 %v2432, 0.0
          %v2910 = vmax.f32 %v2521, 0.0
          %v2911 = vmax.f32 %v2610, 0.0
          %v2912 = vmax.f32 %v2699, 0.0
          %v2913 = vmax.f32 %v2079, 0.0
          %v2914 = vmax.f32 %v2168, 0.0
          %v2915 = vmax.f32 %v2257, 0.0
          %v2916 = vmax.f32 %v2346, 0.0
          %v2917 = vmax.f32 %v2435, 0.0
          %v2918 = vmax.f32 %v2524, 0.0
          %v2919 = vmax.f32 %v2613, 0.0
          %v2920 = vmax.f32 %v2702, 0.0
          %v2921 = vmax.f32 %v2081, 0.0
          %v2922 = vmax.f32 %v2170, 0.0
          %v2923 = vmax.f32 %v2259, 0.0
          %v2924 = vmax.f32 %v2348, 0.0
          %v2925 = vmax.f32 %v2437, 0.0
          %v2926 = vmax.f32 %v2526, 0.0
          %v2927 = vmax.f32 %v2615, 0.0
          %v2928 = vmax.f32 %v2704, 0.0
          %v2929 = vmax.f32 %v2084, 0.0
          %v2930 = vmax.f32 %v2173, 0.0
          %v2931 = vmax.f32 %v2262, 0.0
          %v2932 = vmax.f32 %v2351, 0.0
          %v2933 = vmax.f32 %v2440, 0.0
          %v2934 = vmax.f32 %v2529, 0.0
          %v2935 = vmax.f32 %v2618, 0.0
          %v2936 = vmax.f32 %v2707, 0.0
          %v2937 = vmax.f32 %v2086, 0.0
          %v2938 = vmax.f32 %v2175, 0.0
          %v2939 = vmax.f32 %v2264, 0.0
          %v2940 = vmax.f32 %v2353, 0.0
          %v2941 = vmax.f32 %v2442, 0.0
          %v2942 = vmax.f32 %v2531, 0.0
          %v2943 = vmax.f32 %v2620, 0.0
          %v2944 = vmax.f32 %v2709, 0.0
          %v2945 = vmax.f32 %v2089, 0.0
          %v2946 = vmax.f32 %v2178, 0.0
          %v2947 = vmax.f32 %v2267, 0.0
          %v2948 = vmax.f32 %v2356, 0.0
          %v2949 = vmax.f32 %v2445, 0.0
          %v2950 = vmax.f32 %v2534, 0.0
          %v2951 = vmax.f32 %v2623, 0.0
          %v2952 = vmax.f32 %v2712, 0.0
          %v2953 = vmax.f32 %v2091, 0.0
          %v2954 = vmax.f32 %v2180, 0.0
          %v2955 = vmax.f32 %v2269, 0.0
          %v2956 = vmax.f32 %v2358, 0.0
          %v2957 = vmax.f32 %v2447, 0.0
          %v2958 = vmax.f32 %v2536, 0.0
          %v2959 = vmax.f32 %v2625, 0.0
          %v2960 = vmax.f32 %v2714, 0.0
          %v2961 = vmax.f32 %v2094, 0.0
          %v2962 = vmax.f32 %v2183, 0.0
          %v2963 = vmax.f32 %v2272, 0.0
          %v2964 = vmax.f32 %v2361, 0.0
          %v2965 = vmax.f32 %v2450, 0.0
          %v2966 = vmax.f32 %v2539, 0.0
          %v2967 = vmax.f32 %v2628, 0.0
          %v2968 = vmax.f32 %v2717, 0.0
          %v2969 = vmax.f32 %v2096, 0.0
          %v2970 = vmax.f32 %v2185, 0.0
          %v2971 = vmax.f32 %v2274, 0.0
          %v2972 = vmax.f32 %v2363, 0.0
          %v2973 = vmax.f32 %v2452, 0.0
          %v2974 = vmax.f32 %v2541, 0.0
          %v2975 = vmax.f32 %v2630, 0.0
          %v2976 = vmax.f32 %v2719, 0.0
          %v2977 = vpack.c.bf16 %v2729, %v2721
          %v2978 = vpack.c.bf16 %v2730, %v2722
          %v2979 = vpack.c.bf16 %v2731, %v2723
          %v2980 = vpack.c.bf16 %v2732, %v2724
          %v2981 = vpack.c.bf16 %v2733, %v2725
          %v2982 = vpack.c.bf16 %v2734, %v2726
          %v2983 = vpack.c.bf16 %v2735, %v2727
          %v2984 = vpack.c.bf16 %v2736, %v2728
          %v2985 = vpack.c.bf16 %v2745, %v2737
          %v2986 = vpack.c.bf16 %v2746, %v2738
          %v2987 = vpack.c.bf16 %v2747, %v2739
          %v2988 = vpack.c.bf16 %v2748, %v2740
          %v2989 = vpack.c.bf16 %v2749, %v2741
          %v2990 = vpack.c.bf16 %v2750, %v2742
          %v2991 = vpack.c.bf16 %v2751, %v2743
          %v2992 = vpack.c.bf16 %v2752, %v2744
          %v2993 = vpack.c.bf16 %v2761, %v2753
          %v2994 = vpack.c.bf16 %v2762, %v2754
          %v2995 = vpack.c.bf16 %v2763, %v2755
          %v2996 = vpack.c.bf16 %v2764, %v2756
          %v2997 = vpack.c.bf16 %v2765, %v2757
          %v2998 = vpack.c.bf16 %v2766, %v2758
          %v2999 = vpack.c.bf16 %v2767, %v2759
          %v3000 = vpack.c.bf16 %v2768, %v2760
          %v3001 = vpack.c.bf16 %v2777, %v2769
          %v3002 = vpack.c.bf16 %v2778, %v2770
          %v3003 = vpack.c.bf16 %v2779, %v2771
          %v3004 = vpack.c.bf16 %v2780, %v2772
          %v3005 = vpack.c.bf16 %v2781, %v2773
          %v3006 = vpack.c.bf16 %v2782, %v2774
          %v3007 = vpack.c.bf16 %v2783, %v2775
          %v3008 = vpack.c.bf16 %v2784, %v2776
          %v3009 = vpack.c.bf16 %v2793, %v2785
          %v3010 = vpack.c.bf16 %v2794, %v2786
          %v3011 = vpack.c.bf16 %v2795, %v2787
          %v3012 = vpack.c.bf16 %v2796, %v2788
          %v3013 = vpack.c.bf16 %v2797, %v2789
          %v3014 = vpack.c.bf16 %v2798, %v2790
          %v3015 = vpack.c.bf16 %v2799, %v2791
          %v3016 = vpack.c.bf16 %v2800, %v2792
          %v3017 = vpack.c.bf16 %v2809, %v2801
          %v3018 = vpack.c.bf16 %v2810, %v2802
          %v3019 = vpack.c.bf16 %v2811, %v2803
          %v3020 = vpack.c.bf16 %v2812, %v2804
          %v3021 = vpack.c.bf16 %v2813, %v2805
          %v3022 = vpack.c.bf16 %v2814, %v2806
          %v3023 = vpack.c.bf16 %v2815, %v2807
          %v3024 = vpack.c.bf16 %v2816, %v2808
          %v3025 = vpack.c.bf16 %v2825, %v2817
          %v3026 = vpack.c.bf16 %v2826, %v2818
          %v3027 = vpack.c.bf16 %v2827, %v2819
          %v3028 = vpack.c.bf16 %v2828, %v2820
          %v3029 = vpack.c.bf16 %v2829, %v2821
          %v3030 = vpack.c.bf16 %v2830, %v2822
          %v3031 = vpack.c.bf16 %v2831, %v2823
          %v3032 = vpack.c.bf16 %v2832, %v2824
          %v3033 = vpack.c.bf16 %v2841, %v2833
          %v3034 = vpack.c.bf16 %v2842, %v2834
          %v3035 = vpack.c.bf16 %v2843, %v2835
          %v3036 = vpack.c.bf16 %v2844, %v2836
          %v3037 = vpack.c.bf16 %v2845, %v2837
          %v3038 = vpack.c.bf16 %v2846, %v2838
          %v3039 = vpack.c.bf16 %v2847, %v2839
          %v3040 = vpack.c.bf16 %v2848, %v2840
          %v3041 = vpack.c.bf16 %v2857, %v2849
          %v3042 = vpack.c.bf16 %v2858, %v2850
          %v3043 = vpack.c.bf16 %v2859, %v2851
          %v3044 = vpack.c.bf16 %v2860, %v2852
          %v3045 = vpack.c.bf16 %v2861, %v2853
          %v3046 = vpack.c.bf16 %v2862, %v2854
          %v3047 = vpack.c.bf16 %v2863, %v2855
          %v3048 = vpack.c.bf16 %v2864, %v2856
          %v3049 = vpack.c.bf16 %v2873, %v2865
          %v3050 = vpack.c.bf16 %v2874, %v2866
          %v3051 = vpack.c.bf16 %v2875, %v2867
          %v3052 = vpack.c.bf16 %v2876, %v2868
          %v3053 = vpack.c.bf16 %v2877, %v2869
          %v3054 = vpack.c.bf16 %v2878, %v2870
          %v3055 = vpack.c.bf16 %v2879, %v2871
          %v3056 = vpack.c.bf16 %v2880, %v2872
          %v3057 = vpack.c.bf16 %v2889, %v2881
          %v3058 = vpack.c.bf16 %v2890, %v2882
          %v3059 = vpack.c.bf16 %v2891, %v2883
          %v3060 = vpack.c.bf16 %v2892, %v2884
          %v3061 = vpack.c.bf16 %v2893, %v2885
          %v3062 = vpack.c.bf16 %v2894, %v2886
          %v3063 = vpack.c.bf16 %v2895, %v2887
          %v3064 = vpack.c.bf16 %v2896, %v2888
          %v3065 = vpack.c.bf16 %v2905, %v2897
          %v3066 = vpack.c.bf16 %v2906, %v2898
          %v3067 = vpack.c.bf16 %v2907, %v2899
          %v3068 = vpack.c.bf16 %v2908, %v2900
          %v3069 = vpack.c.bf16 %v2909, %v2901
          %v3070 = vpack.c.bf16 %v2910, %v2902
          %v3071 = vpack.c.bf16 %v2911, %v2903
          %v3072 = vpack.c.bf16 %v2912, %v2904
          %v3073 = vpack.c.bf16 %v2921, %v2913
          %v3074 = vpack.c.bf16 %v2922, %v2914
          %v3075 = vpack.c.bf16 %v2923, %v2915
          %v3076 = vpack.c.bf16 %v2924, %v2916
          %v3077 = vpack.c.bf16 %v2925, %v2917
          %v3078 = vpack.c.bf16 %v2926, %v2918
          %v3079 = vpack.c.bf16 %v2927, %v2919
          %v3080 = vpack.c.bf16 %v2928, %v2920
          %v3081 = vpack.c.bf16 %v2937, %v2929
          %v3082 = vpack.c.bf16 %v2938, %v2930
          %v3083 = vpack.c.bf16 %v2939, %v2931
          %v3084 = vpack.c.bf16 %v2940, %v2932
          %v3085 = vpack.c.bf16 %v2941, %v2933
          %v3086 = vpack.c.bf16 %v2942, %v2934
          %v3087 = vpack.c.bf16 %v2943, %v2935
          %v3088 = vpack.c.bf16 %v2944, %v2936
          %v3089 = vpack.c.bf16 %v2953, %v2945
          %v3090 = vpack.c.bf16 %v2954, %v2946
          %v3091 = vpack.c.bf16 %v2955, %v2947
          %v3092 = vpack.c.bf16 %v2956, %v2948
          %v3093 = vpack.c.bf16 %v2957, %v2949
          %v3094 = vpack.c.bf16 %v2958, %v2950
          %v3095 = vpack.c.bf16 %v2959, %v2951
          %v3096 = vpack.c.bf16 %v2960, %v2952
          %v3097 = vpack.c.bf16 %v2969, %v2961
          %v3098 = vpack.c.bf16 %v2970, %v2962
          %v3099 = vpack.c.bf16 %v2971, %v2963
          %v3100 = vpack.c.bf16 %v2972, %v2964
          %v3101 = vpack.c.bf16 %v2973, %v2965
          %v3102 = vpack.c.bf16 %v2974, %v2966
          %v3103 = vpack.c.bf16 %v2975, %v2967
          %v3104 = vpack.c.bf16 %v2976, %v2968
          %v3105 = vld [vmem:[%s368] sm:$0xf]
          %v3106 = vld [vmem:[%s368 + $0x4] sm:$0xf]
          %v3107 = vld [vmem:[%s368 + $0x8] sm:$0xf]
          %v3108 = vld [vmem:[%s368 + $0xc] sm:$0xf]
          %v3109 = vld [vmem:[%s368 + $0x10] sm:$0xf]
          %v3110 = vld [vmem:[%s368 + $0x14] sm:$0xf]
          %v3111 = vld [vmem:[%s368 + $0x18] sm:$0xf]
          %v3112 = vld [vmem:[%s368 + $0x1c] sm:$0xf]
          %v3113 = vld [vmem:[%s368 + $0x20] sm:$0xf]
          %v3114 = vld [vmem:[%s368 + $0x24] sm:$0xf]
          %v3115 = vld [vmem:[%s368 + $0x28] sm:$0xf]
          %v3116 = vld [vmem:[%s368 + $0x2c] sm:$0xf]
          %v3117 = vld [vmem:[%s368 + $0x30] sm:$0xf]
          %v3118 = vld [vmem:[%s368 + $0x34] sm:$0xf]
          %v3119 = vld [vmem:[%s368 + $0x38] sm:$0xf]
          %v3120 = vld [vmem:[%s368 + $0x3c] sm:$0xf]
          %v3121 = vld [vmem:[%s368 + $0x40] sm:$0xf]
          %v3122 = vld [vmem:[%s368 + $0x44] sm:$0xf]
          %v3123 = vld [vmem:[%s368 + $0x48] sm:$0xf]
          %v3124 = vld [vmem:[%s368 + $0x4c] sm:$0xf]
          %v3125 = vld [vmem:[%s368 + $0x50] sm:$0xf]
          %v3126 = vld [vmem:[%s368 + $0x54] sm:$0xf]
          %v3127 = vld [vmem:[%s368 + $0x58] sm:$0xf]
          %v3128 = vld [vmem:[%s368 + $0x5c] sm:$0xf]
          %v3129 = vld [vmem:[%s368 + $0x60] sm:$0xf]
          %v3130 = vld [vmem:[%s368 + $0x64] sm:$0xf]
          %v3131 = vld [vmem:[%s368 + $0x68] sm:$0xf]
          %v3132 = vld [vmem:[%s368 + $0x6c] sm:$0xf]
          %v3133 = vld [vmem:[%s368 + $0x70] sm:$0xf]
          %v3134 = vld [vmem:[%s368 + $0x74] sm:$0xf]
          %v3135 = vld [vmem:[%s368 + $0x78] sm:$0xf]
          %v3136 = vld [vmem:[%s368 + $0x7c] sm:$0xf]
          %v3137 = vld [vmem:[%s368 + $0x80] sm:$0xf]
          %v3138 = vld [vmem:[%s368 + $0x84] sm:$0xf]
          %v3139 = vld [vmem:[%s368 + $0x88] sm:$0xf]
          %v3140 = vld [vmem:[%s368 + $0x8c] sm:$0xf]
          %v3141 = vld [vmem:[%s368 + $0x90] sm:$0xf]
          %v3142 = vld [vmem:[%s368 + $0x94] sm:$0xf]
          %v3143 = vld [vmem:[%s368 + $0x98] sm:$0xf]
          %v3144 = vld [vmem:[%s368 + $0x9c] sm:$0xf]
          %v3145 = vld [vmem:[%s368 + $0xa0] sm:$0xf]
          %v3146 = vld [vmem:[%s368 + $0xa4] sm:$0xf]
          %v3147 = vld [vmem:[%s368 + $0xa8] sm:$0xf]
          %v3148 = vld [vmem:[%s368 + $0xac] sm:$0xf]
          %v3149 = vld [vmem:[%s368 + $0xb0] sm:$0xf]
          %v3150 = vld [vmem:[%s368 + $0xb4] sm:$0xf]
          %v3151 = vld [vmem:[%s368 + $0xb8] sm:$0xf]
          %v3152 = vld [vmem:[%s368 + $0xbc] sm:$0xf]
          %v3153 = vld [vmem:[%s368 + $0xc0] sm:$0xf]
          %v3154 = vld [vmem:[%s368 + $0xc4] sm:$0xf]
          %v3155 = vld [vmem:[%s368 + $0xc8] sm:$0xf]
          %v3156 = vld [vmem:[%s368 + $0xcc] sm:$0xf]
          %v3157 = vld [vmem:[%s368 + $0xd0] sm:$0xf]
          %v3158 = vld [vmem:[%s368 + $0xd4] sm:$0xf]
          %v3159 = vld [vmem:[%s368 + $0xd8] sm:$0xf]
          %v3160 = vld [vmem:[%s368 + $0xdc] sm:$0xf]
          %v3161 = vld [vmem:[%s368 + $0xe0] sm:$0xf]
          %v3162 = vld [vmem:[%s368 + $0xe4] sm:$0xf]
          %v3163 = vld [vmem:[%s368 + $0xe8] sm:$0xf]
          %v3164 = vld [vmem:[%s368 + $0xec] sm:$0xf]
          %v3165 = vld [vmem:[%s368 + $0xf0] sm:$0xf]
          %v3166 = vld [vmem:[%s368 + $0xf4] sm:$0xf]
          %v3167 = vld [vmem:[%s368 + $0xf8] sm:$0xf]
          %v3168 = vld [vmem:[%s368 + $0xfc] sm:$0xf]
          %v3169 = vld [vmem:[%s368 + $0x100] sm:$0xf]
          %v3170 = vld [vmem:[%s368 + $0x104] sm:$0xf]
          %v3171 = vld [vmem:[%s368 + $0x108] sm:$0xf]
          %v3172 = vld [vmem:[%s368 + $0x10c] sm:$0xf]
          %v3173 = vld [vmem:[%s368 + $0x110] sm:$0xf]
          %v3174 = vld [vmem:[%s368 + $0x114] sm:$0xf]
          %v3175 = vld [vmem:[%s368 + $0x118] sm:$0xf]
          %v3176 = vld [vmem:[%s368 + $0x11c] sm:$0xf]
          %v3177 = vld [vmem:[%s368 + $0x120] sm:$0xf]
          %v3178 = vld [vmem:[%s368 + $0x124] sm:$0xf]
          %v3179 = vld [vmem:[%s368 + $0x128] sm:$0xf]
          %v3180 = vld [vmem:[%s368 + $0x12c] sm:$0xf]
          %v3181 = vld [vmem:[%s368 + $0x130] sm:$0xf]
          %v3182 = vld [vmem:[%s368 + $0x134] sm:$0xf]
          %v3183 = vld [vmem:[%s368 + $0x138] sm:$0xf]
          %v3184 = vld [vmem:[%s368 + $0x13c] sm:$0xf]
          %v3185 = vld [vmem:[%s368 + $0x140] sm:$0xf]
          %v3186 = vld [vmem:[%s368 + $0x144] sm:$0xf]
          %v3187 = vld [vmem:[%s368 + $0x148] sm:$0xf]
          %v3188 = vld [vmem:[%s368 + $0x14c] sm:$0xf]
          %v3189 = vld [vmem:[%s368 + $0x150] sm:$0xf]
          %v3190 = vld [vmem:[%s368 + $0x154] sm:$0xf]
          %v3191 = vld [vmem:[%s368 + $0x158] sm:$0xf]
          %v3192 = vld [vmem:[%s368 + $0x15c] sm:$0xf]
          %v3193 = vld [vmem:[%s368 + $0x160] sm:$0xf]
          %v3194 = vld [vmem:[%s368 + $0x164] sm:$0xf]
          %v3195 = vld [vmem:[%s368 + $0x168] sm:$0xf]
          %v3196 = vld [vmem:[%s368 + $0x16c] sm:$0xf]
          %v3197 = vld [vmem:[%s368 + $0x170] sm:$0xf]
          %v3198 = vld [vmem:[%s368 + $0x174] sm:$0xf]
          %v3199 = vld [vmem:[%s368 + $0x178] sm:$0xf]
          %v3200 = vld [vmem:[%s368 + $0x17c] sm:$0xf]
          %v3201 = vld [vmem:[%s368 + $0x180] sm:$0xf]
          %v3202 = vld [vmem:[%s368 + $0x184] sm:$0xf]
          %v3203 = vld [vmem:[%s368 + $0x188] sm:$0xf]
          %v3204 = vld [vmem:[%s368 + $0x18c] sm:$0xf]
          %v3205 = vld [vmem:[%s368 + $0x190] sm:$0xf]
          %v3206 = vld [vmem:[%s368 + $0x194] sm:$0xf]
          %v3207 = vld [vmem:[%s368 + $0x198] sm:$0xf]
          %v3208 = vld [vmem:[%s368 + $0x19c] sm:$0xf]
          %v3209 = vld [vmem:[%s368 + $0x1a0] sm:$0xf]
          %v3210 = vld [vmem:[%s368 + $0x1a4] sm:$0xf]
          %v3211 = vld [vmem:[%s368 + $0x1a8] sm:$0xf]
          %v3212 = vld [vmem:[%s368 + $0x1ac] sm:$0xf]
          %v3213 = vld [vmem:[%s368 + $0x1b0] sm:$0xf]
          %v3214 = vld [vmem:[%s368 + $0x1b4] sm:$0xf]
          %v3215 = vld [vmem:[%s368 + $0x1b8] sm:$0xf]
          %v3216 = vld [vmem:[%s368 + $0x1bc] sm:$0xf]
          %v3217 = vld [vmem:[%s368 + $0x1c0] sm:$0xf]
          %v3218 = vld [vmem:[%s368 + $0x1c4] sm:$0xf]
          %v3219 = vld [vmem:[%s368 + $0x1c8] sm:$0xf]
          %v3220 = vld [vmem:[%s368 + $0x1cc] sm:$0xf]
          %v3221 = vld [vmem:[%s368 + $0x1d0] sm:$0xf]
          %v3222 = vld [vmem:[%s368 + $0x1d4] sm:$0xf]
          %v3223 = vld [vmem:[%s368 + $0x1d8] sm:$0xf]
          %v3224 = vld [vmem:[%s368 + $0x1dc] sm:$0xf]
          %v3225 = vld [vmem:[%s368 + $0x1e0] sm:$0xf]
          %v3226 = vld [vmem:[%s368 + $0x1e4] sm:$0xf]
          %v3227 = vld [vmem:[%s368 + $0x1e8] sm:$0xf]
          %v3228 = vld [vmem:[%s368 + $0x1ec] sm:$0xf]
          %v3229 = vld [vmem:[%s368 + $0x1f0] sm:$0xf]
          %v3230 = vld [vmem:[%s368 + $0x1f4] sm:$0xf]
          %v3231 = vld [vmem:[%s368 + $0x1f8] sm:$0xf]
          %v3232 = vld [vmem:[%s368 + $0x1fc] sm:$0xf]
          %v3361 = vunpack.c.l.b16 %v3105
          %v3362 = vunpack.c.l.b16 %v3106
          %v3363 = vunpack.c.l.b16 %v3107
          %v3364 = vunpack.c.l.b16 %v3108
          %v3365 = vunpack.c.l.b16 %v3109
          %v3366 = vunpack.c.l.b16 %v3110
          %v3367 = vunpack.c.l.b16 %v3111
          %v3368 = vunpack.c.l.b16 %v3112
          %v3369 = vunpack.c.l.b16 %v3113
          %v3370 = vunpack.c.l.b16 %v3114
          %v3371 = vunpack.c.l.b16 %v3115
          %v3372 = vunpack.c.l.b16 %v3116
          %v3373 = vunpack.c.l.b16 %v3117
          %v3374 = vunpack.c.l.b16 %v3118
          %v3375 = vunpack.c.l.b16 %v3119
          %v3376 = vunpack.c.l.b16 %v3120
          %v3377 = vunpack.c.l.b16 %v3121
          %v3378 = vunpack.c.l.b16 %v3122
          %v3379 = vunpack.c.l.b16 %v3123
          %v3380 = vunpack.c.l.b16 %v3124
          %v3381 = vunpack.c.l.b16 %v3125
          %v3382 = vunpack.c.l.b16 %v3126
          %v3383 = vunpack.c.l.b16 %v3127
          %v3384 = vunpack.c.l.b16 %v3128
          %v3385 = vunpack.c.l.b16 %v3129
          %v3386 = vunpack.c.l.b16 %v3130
          %v3387 = vunpack.c.l.b16 %v3131
          %v3388 = vunpack.c.l.b16 %v3132
          %v3389 = vunpack.c.l.b16 %v3133
          %v3390 = vunpack.c.l.b16 %v3134
          %v3391 = vunpack.c.l.b16 %v3135
          %v3392 = vunpack.c.l.b16 %v3136
          %v3393 = vunpack.c.l.b16 %v3137
          %v3394 = vunpack.c.l.b16 %v3138
          %v3395 = vunpack.c.l.b16 %v3139
          %v3396 = vunpack.c.l.b16 %v3140
          %v3397 = vunpack.c.l.b16 %v3141
          %v3398 = vunpack.c.l.b16 %v3142
          %v3399 = vunpack.c.l.b16 %v3143
          %v3400 = vunpack.c.l.b16 %v3144
          %v3401 = vunpack.c.l.b16 %v3145
          %v3402 = vunpack.c.l.b16 %v3146
          %v3403 = vunpack.c.l.b16 %v3147
          %v3404 = vunpack.c.l.b16 %v3148
          %v3405 = vunpack.c.l.b16 %v3149
          %v3406 = vunpack.c.l.b16 %v3150
          %v3407 = vunpack.c.l.b16 %v3151
          %v3408 = vunpack.c.l.b16 %v3152
          %v3409 = vunpack.c.l.b16 %v3153
          %v3410 = vunpack.c.l.b16 %v3154
          %v3411 = vunpack.c.l.b16 %v3155
          %v3412 = vunpack.c.l.b16 %v3156
          %v3413 = vunpack.c.l.b16 %v3157
          %v3414 = vunpack.c.l.b16 %v3158
          %v3415 = vunpack.c.l.b16 %v3159
          %v3416 = vunpack.c.l.b16 %v3160
          %v3417 = vunpack.c.l.b16 %v3161
          %v3418 = vunpack.c.l.b16 %v3162
          %v3419 = vunpack.c.l.b16 %v3163
          %v3420 = vunpack.c.l.b16 %v3164
          %v3421 = vunpack.c.l.b16 %v3165
          %v3422 = vunpack.c.l.b16 %v3166
          %v3423 = vunpack.c.l.b16 %v3167
          %v3424 = vunpack.c.l.b16 %v3168
          %v3425 = vunpack.c.l.b16 %v3169
          %v3426 = vunpack.c.l.b16 %v3170
          %v3427 = vunpack.c.l.b16 %v3171
          %v3428 = vunpack.c.l.b16 %v3172
          %v3429 = vunpack.c.l.b16 %v3173
          %v3430 = vunpack.c.l.b16 %v3174
          %v3431 = vunpack.c.l.b16 %v3175
          %v3432 = vunpack.c.l.b16 %v3176
          %v3433 = vunpack.c.l.b16 %v3177
          %v3434 = vunpack.c.l.b16 %v3178
          %v3435 = vunpack.c.l.b16 %v3179
          %v3436 = vunpack.c.l.b16 %v3180
          %v3437 = vunpack.c.l.b16 %v3181
          %v3438 = vunpack.c.l.b16 %v3182
          %v3439 = vunpack.c.l.b16 %v3183
          %v3440 = vunpack.c.l.b16 %v3184
          %v3441 = vunpack.c.l.b16 %v3185
          %v3442 = vunpack.c.l.b16 %v3186
          %v3443 = vunpack.c.l.b16 %v3187
          %v3444 = vunpack.c.l.b16 %v3188
          %v3445 = vunpack.c.l.b16 %v3189
          %v3446 = vunpack.c.l.b16 %v3190
          %v3447 = vunpack.c.l.b16 %v3191
          %v3448 = vunpack.c.l.b16 %v3192
          %v3449 = vunpack.c.l.b16 %v3193
          %v3450 = vunpack.c.l.b16 %v3194
          %v3451 = vunpack.c.l.b16 %v3195
          %v3452 = vunpack.c.l.b16 %v3196
          %v3453 = vunpack.c.l.b16 %v3197
          %v3454 = vunpack.c.l.b16 %v3198
          %v3455 = vunpack.c.l.b16 %v3199
          %v3456 = vunpack.c.l.b16 %v3200
          %v3457 = vunpack.c.l.b16 %v3201
          %v3458 = vunpack.c.l.b16 %v3202
          %v3459 = vunpack.c.l.b16 %v3203
          %v3460 = vunpack.c.l.b16 %v3204
          %v3461 = vunpack.c.l.b16 %v3205
          %v3462 = vunpack.c.l.b16 %v3206
          %v3463 = vunpack.c.l.b16 %v3207
          %v3464 = vunpack.c.l.b16 %v3208
          %v3465 = vunpack.c.l.b16 %v3209
          %v3466 = vunpack.c.l.b16 %v3210
          %v3467 = vunpack.c.l.b16 %v3211
          %v3468 = vunpack.c.l.b16 %v3212
          %v3469 = vunpack.c.l.b16 %v3213
          %v3470 = vunpack.c.l.b16 %v3214
          %v3471 = vunpack.c.l.b16 %v3215
          %v3472 = vunpack.c.l.b16 %v3216
          %v3473 = vunpack.c.l.b16 %v3217
          %v3474 = vunpack.c.l.b16 %v3218
          %v3475 = vunpack.c.l.b16 %v3219
          %v3476 = vunpack.c.l.b16 %v3220
          %v3477 = vunpack.c.l.b16 %v3221
          %v3478 = vunpack.c.l.b16 %v3222
          %v3479 = vunpack.c.l.b16 %v3223
          %v3480 = vunpack.c.l.b16 %v3224
          %v3481 = vunpack.c.l.b16 %v3225
          %v3482 = vunpack.c.l.b16 %v3226
          %v3483 = vunpack.c.l.b16 %v3227
          %v3484 = vunpack.c.l.b16 %v3228
          %v3485 = vunpack.c.l.b16 %v3229
          %v3486 = vunpack.c.l.b16 %v3230
          %v3487 = vunpack.c.l.b16 %v3231
          %v3488 = vunpack.c.l.b16 %v3232
          %v3489 = vpack.c.b16 %v3362, %v3361
          %v3490 = vpack.c.b16 %v3364, %v3363
          %v3491 = vpack.c.b16 %v3366, %v3365
          %v3492 = vpack.c.b16 %v3368, %v3367
          %v3493 = vpack.c.b16 %v3370, %v3369
          %v3494 = vpack.c.b16 %v3372, %v3371
          %v3495 = vpack.c.b16 %v3374, %v3373
          %v3496 = vpack.c.b16 %v3376, %v3375
          %v3497 = vpack.c.b16 %v3378, %v3377
          %v3498 = vpack.c.b16 %v3380, %v3379
          %v3499 = vpack.c.b16 %v3382, %v3381
          %v3500 = vpack.c.b16 %v3384, %v3383
          %v3501 = vpack.c.b16 %v3386, %v3385
          %v3502 = vpack.c.b16 %v3388, %v3387
          %v3503 = vpack.c.b16 %v3390, %v3389
          %v3504 = vpack.c.b16 %v3392, %v3391
          %v3505 = vpack.c.b16 %v3394, %v3393
          %v3506 = vpack.c.b16 %v3396, %v3395
          %v3507 = vpack.c.b16 %v3398, %v3397
          %v3508 = vpack.c.b16 %v3400, %v3399
          %v3509 = vpack.c.b16 %v3402, %v3401
          %v3510 = vpack.c.b16 %v3404, %v3403
          %v3511 = vpack.c.b16 %v3406, %v3405
          %v3512 = vpack.c.b16 %v3408, %v3407
          %v3513 = vpack.c.b16 %v3410, %v3409
          %v3514 = vpack.c.b16 %v3412, %v3411
          %v3515 = vpack.c.b16 %v3414, %v3413
          %v3516 = vpack.c.b16 %v3416, %v3415
          %v3517 = vpack.c.b16 %v3418, %v3417
          %v3518 = vpack.c.b16 %v3420, %v3419
          %v3519 = vpack.c.b16 %v3422, %v3421
          %v3520 = vpack.c.b16 %v3424, %v3423
          %v3521 = vpack.c.b16 %v3426, %v3425
          %v3522 = vpack.c.b16 %v3428, %v3427
          %v3523 = vpack.c.b16 %v3430, %v3429
          %v3524 = vpack.c.b16 %v3432, %v3431
          %v3525 = vpack.c.b16 %v3434, %v3433
          %v3526 = vpack.c.b16 %v3436, %v3435
          %v3527 = vpack.c.b16 %v3438, %v3437
          %v3528 = vpack.c.b16 %v3440, %v3439
          %v3529 = vpack.c.b16 %v3442, %v3441
          %v3530 = vpack.c.b16 %v3444, %v3443
          %v3531 = vpack.c.b16 %v3446, %v3445
          %v3532 = vpack.c.b16 %v3448, %v3447
          %v3533 = vpack.c.b16 %v3450, %v3449
          %v3534 = vpack.c.b16 %v3452, %v3451
          %v3535 = vpack.c.b16 %v3454, %v3453
          %v3536 = vpack.c.b16 %v3456, %v3455
          %v3537 = vpack.c.b16 %v3458, %v3457
          %v3538 = vpack.c.b16 %v3460, %v3459
          %v3539 = vpack.c.b16 %v3462, %v3461
          %v3540 = vpack.c.b16 %v3464, %v3463
          %v3541 = vpack.c.b16 %v3466, %v3465
          %v3542 = vpack.c.b16 %v3468, %v3467
          %v3543 = vpack.c.b16 %v3470, %v3469
          %v3544 = vpack.c.b16 %v3472, %v3471
          %v3545 = vpack.c.b16 %v3474, %v3473
          %v3546 = vpack.c.b16 %v3476, %v3475
          %v3547 = vpack.c.b16 %v3478, %v3477
          %v3548 = vpack.c.b16 %v3480, %v3479
          %v3549 = vpack.c.b16 %v3482, %v3481
          %v3550 = vpack.c.b16 %v3484, %v3483
          %v3551 = vpack.c.b16 %v3486, %v3485
          %v3552 = vpack.c.b16 %v3488, %v3487
          %3617 = vmatpush.bf16.msra.mxu0 %v3496
          %3618 = vmatpush.bf16.msra.mxu0 %v3495
          %3619 = vmatpush.bf16.msra.mxu0 %v3494
          %3620 = vmatpush.bf16.msra.mxu0 %v3493
          %3621 = vmatpush.bf16.msra.mxu0 %v3492
          %3622 = vmatpush.bf16.msra.mxu0 %v3491
          %3623 = vmatpush.bf16.msra.mxu0 %v3490
          %3624 = vmatpush.bf16.msra.mxu0 %v3489
          %3625 = vmatmul.bf16.gmra.mxu0 %v2977
          %v3626 = vpop.f32.mrf.mxu0
          %v3627 = vadd.f32 0.0, %v3626
          %v3628 = vpop.f32.mrf.mxu0
          %v3629 = vadd.f32 0.0, %v3628
          %3630 = vmatmul.bf16.gmra.mxu0 %v2985
          %v3631 = vpop.f32.mrf.mxu0
          %v3632 = vadd.f32 0.0, %v3631
          %v3633 = vpop.f32.mrf.mxu0
          %v3634 = vadd.f32 0.0, %v3633
          %3635 = vmatmul.bf16.gmra.mxu0 %v2993
          %v3636 = vpop.f32.mrf.mxu0
          %v3637 = vadd.f32 0.0, %v3636
          %v3638 = vpop.f32.mrf.mxu0
          %v3639 = vadd.f32 0.0, %v3638
          %3640 = vmatmul.bf16.gmra.mxu0 %v3001
          %v3641 = vpop.f32.mrf.mxu0
          %v3642 = vadd.f32 0.0, %v3641
          %v3643 = vpop.f32.mrf.mxu0
          %v3644 = vadd.f32 0.0, %v3643
          %3645 = vmatmul.bf16.gmra.mxu0 %v3009
          %v3646 = vpop.f32.mrf.mxu0
          %v3647 = vadd.f32 0.0, %v3646
          %v3648 = vpop.f32.mrf.mxu0
          %v3649 = vadd.f32 0.0, %v3648
          %3650 = vmatmul.bf16.gmra.mxu0 %v3017
          %v3651 = vpop.f32.mrf.mxu0
          %v3652 = vadd.f32 0.0, %v3651
          %v3653 = vpop.f32.mrf.mxu0
          %v3654 = vadd.f32 0.0, %v3653
          %3655 = vmatmul.bf16.gmra.mxu0 %v3025
          %v3656 = vpop.f32.mrf.mxu0
          %v3657 = vadd.f32 0.0, %v3656
          %v3658 = vpop.f32.mrf.mxu0
          %v3659 = vadd.f32 0.0, %v3658
          %3660 = vmatmul.bf16.gmra.mxu0 %v3033
          %v3661 = vpop.f32.mrf.mxu0
          %v3662 = vadd.f32 0.0, %v3661
          %v3663 = vpop.f32.mrf.mxu0
          %v3664 = vadd.f32 0.0, %v3663
          %3665 = vmatmul.bf16.gmra.mxu0 %v3041
          %v3666 = vpop.f32.mrf.mxu0
          %v3667 = vadd.f32 0.0, %v3666
          %v3668 = vpop.f32.mrf.mxu0
          %v3669 = vadd.f32 0.0, %v3668
          %3670 = vmatmul.bf16.gmra.mxu0 %v3049
          %v3671 = vpop.f32.mrf.mxu0
          %v3672 = vadd.f32 0.0, %v3671
          %v3673 = vpop.f32.mrf.mxu0
          %v3674 = vadd.f32 0.0, %v3673
          %3675 = vmatmul.bf16.gmra.mxu0 %v3057
          %v3676 = vpop.f32.mrf.mxu0
          %v3677 = vadd.f32 0.0, %v3676
          %v3678 = vpop.f32.mrf.mxu0
          %v3679 = vadd.f32 0.0, %v3678
          %3680 = vmatmul.bf16.gmra.mxu0 %v3065
          %v3681 = vpop.f32.mrf.mxu0
          %v3682 = vadd.f32 0.0, %v3681
          %v3683 = vpop.f32.mrf.mxu0
          %v3684 = vadd.f32 0.0, %v3683
          %3685 = vmatmul.bf16.gmra.mxu0 %v3073
          %v3686 = vpop.f32.mrf.mxu0
          %v3687 = vadd.f32 0.0, %v3686
          %v3688 = vpop.f32.mrf.mxu0
          %v3689 = vadd.f32 0.0, %v3688
          %3690 = vmatmul.bf16.gmra.mxu0 %v3081
          %v3691 = vpop.f32.mrf.mxu0
          %v3692 = vadd.f32 0.0, %v3691
          %v3693 = vpop.f32.mrf.mxu0
          %v3694 = vadd.f32 0.0, %v3693
          %3695 = vmatmul.bf16.gmra.mxu0 %v3089
          %v3696 = vpop.f32.mrf.mxu0
          %v3697 = vadd.f32 0.0, %v3696
          %v3698 = vpop.f32.mrf.mxu0
          %v3699 = vadd.f32 0.0, %v3698
          %3700 = vmatmul.bf16.gmra.mxu0 %v3097
          %v3701 = vpop.f32.mrf.mxu0
          %v3702 = vadd.f32 0.0, %v3701
          %v3703 = vpop.f32.mrf.mxu0
          %v3704 = vadd.f32 0.0, %v3703
          %3705 = vdwg.mxu0
          %3706 = vmatpush.bf16.msra.mxu0 %v3504
          %3707 = vmatpush.bf16.msra.mxu0 %v3503
          %3708 = vmatpush.bf16.msra.mxu0 %v3502
          %3709 = vmatpush.bf16.msra.mxu0 %v3501
          %3710 = vmatpush.bf16.msra.mxu0 %v3500
          %3711 = vmatpush.bf16.msra.mxu0 %v3499
          %3712 = vmatpush.bf16.msra.mxu0 %v3498
          %3713 = vmatpush.bf16.msra.mxu0 %v3497
          %3714 = vmatmul.bf16.gmra.mxu0 %v2978
          %v3715 = vpop.f32.mrf.mxu0
          %v3716 = vadd.f32 %v3627, %v3715
          %v3717 = vpop.f32.mrf.mxu0
          %v3718 = vadd.f32 %v3629, %v3717
          %3719 = vmatmul.bf16.gmra.mxu0 %v2986
          %v3720 = vpop.f32.mrf.mxu0
          %v3721 = vadd.f32 %v3632, %v3720
          %v3722 = vpop.f32.mrf.mxu0
          %v3723 = vadd.f32 %v3634, %v3722
          %3724 = vmatmul.bf16.gmra.mxu0 %v2994
          %v3725 = vpop.f32.mrf.mxu0
          %v3726 = vadd.f32 %v3637, %v3725
          %v3727 = vpop.f32.mrf.mxu0
          %v3728 = vadd.f32 %v3639, %v3727
          %3729 = vmatmul.bf16.gmra.mxu0 %v3002
          %v3730 = vpop.f32.mrf.mxu0
          %v3731 = vadd.f32 %v3642, %v3730
          %v3732 = vpop.f32.mrf.mxu0
          %v3733 = vadd.f32 %v3644, %v3732
          %3734 = vmatmul.bf16.gmra.mxu0 %v3010
          %v3735 = vpop.f32.mrf.mxu0
          %v3736 = vadd.f32 %v3647, %v3735
          %v3737 = vpop.f32.mrf.mxu0
          %v3738 = vadd.f32 %v3649, %v3737
          %3739 = vmatmul.bf16.gmra.mxu0 %v3018
          %v3740 = vpop.f32.mrf.mxu0
          %v3741 = vadd.f32 %v3652, %v3740
          %v3742 = vpop.f32.mrf.mxu0
          %v3743 = vadd.f32 %v3654, %v3742
          %3744 = vmatmul.bf16.gmra.mxu0 %v3026
          %v3745 = vpop.f32.mrf.mxu0
          %v3746 = vadd.f32 %v3657, %v3745
          %v3747 = vpop.f32.mrf.mxu0
          %v3748 = vadd.f32 %v3659, %v3747
          %3749 = vmatmul.bf16.gmra.mxu0 %v3034
          %v3750 = vpop.f32.mrf.mxu0
          %v3751 = vadd.f32 %v3662, %v3750
          %v3752 = vpop.f32.mrf.mxu0
          %v3753 = vadd.f32 %v3664, %v3752
          %3754 = vmatmul.bf16.gmra.mxu0 %v3042
          %v3755 = vpop.f32.mrf.mxu0
          %v3756 = vadd.f32 %v3667, %v3755
          %v3757 = vpop.f32.mrf.mxu0
          %v3758 = vadd.f32 %v3669, %v3757
          %3759 = vmatmul.bf16.gmra.mxu0 %v3050
          %v3760 = vpop.f32.mrf.mxu0
          %v3761 = vadd.f32 %v3672, %v3760
          %v3762 = vpop.f32.mrf.mxu0
          %v3763 = vadd.f32 %v3674, %v3762
          %3764 = vmatmul.bf16.gmra.mxu0 %v3058
          %v3765 = vpop.f32.mrf.mxu0
          %v3766 = vadd.f32 %v3677, %v3765
          %v3767 = vpop.f32.mrf.mxu0
          %v3768 = vadd.f32 %v3679, %v3767
          %3769 = vmatmul.bf16.gmra.mxu0 %v3066
          %v3770 = vpop.f32.mrf.mxu0
          %v3771 = vadd.f32 %v3682, %v3770
          %v3772 = vpop.f32.mrf.mxu0
          %v3773 = vadd.f32 %v3684, %v3772
          %3774 = vmatmul.bf16.gmra.mxu0 %v3074
          %v3775 = vpop.f32.mrf.mxu0
          %v3776 = vadd.f32 %v3687, %v3775
          %v3777 = vpop.f32.mrf.mxu0
          %v3778 = vadd.f32 %v3689, %v3777
          %3779 = vmatmul.bf16.gmra.mxu0 %v3082
          %v3780 = vpop.f32.mrf.mxu0
          %v3781 = vadd.f32 %v3692, %v3780
          %v3782 = vpop.f32.mrf.mxu0
          %v3783 = vadd.f32 %v3694, %v3782
          %3784 = vmatmul.bf16.gmra.mxu0 %v3090
          %v3785 = vpop.f32.mrf.mxu0
          %v3786 = vadd.f32 %v3697, %v3785
          %v3787 = vpop.f32.mrf.mxu0
          %v3788 = vadd.f32 %v3699, %v3787
          %3789 = vmatmul.bf16.gmra.mxu0 %v3098
          %v3790 = vpop.f32.mrf.mxu0
          %v3791 = vadd.f32 %v3702, %v3790
          %v3792 = vpop.f32.mrf.mxu0
          %v3793 = vadd.f32 %v3704, %v3792
          %3794 = vdwg.mxu0
          %3795 = vmatpush.bf16.msra.mxu0 %v3512
          %3796 = vmatpush.bf16.msra.mxu0 %v3511
          %3797 = vmatpush.bf16.msra.mxu0 %v3510
          %3798 = vmatpush.bf16.msra.mxu0 %v3509
          %3799 = vmatpush.bf16.msra.mxu0 %v3508
          %3800 = vmatpush.bf16.msra.mxu0 %v3507
          %3801 = vmatpush.bf16.msra.mxu0 %v3506
          %3802 = vmatpush.bf16.msra.mxu0 %v3505
          %3803 = vmatmul.bf16.gmra.mxu0 %v2979
          %v3804 = vpop.f32.mrf.mxu0
          %v3805 = vadd.f32 %v3716, %v3804
          %v3806 = vpop.f32.mrf.mxu0
          %v3807 = vadd.f32 %v3718, %v3806
          %3808 = vmatmul.bf16.gmra.mxu0 %v2987
          %v3809 = vpop.f32.mrf.mxu0
          %v3810 = vadd.f32 %v3721, %v3809
          %v3811 = vpop.f32.mrf.mxu0
          %v3812 = vadd.f32 %v3723, %v3811
          %3813 = vmatmul.bf16.gmra.mxu0 %v2995
          %v3814 = vpop.f32.mrf.mxu0
          %v3815 = vadd.f32 %v3726, %v3814
          %v3816 = vpop.f32.mrf.mxu0
          %v3817 = vadd.f32 %v3728, %v3816
          %3818 = vmatmul.bf16.gmra.mxu0 %v3003
          %v3819 = vpop.f32.mrf.mxu0
          %v3820 = vadd.f32 %v3731, %v3819
          %v3821 = vpop.f32.mrf.mxu0
          %v3822 = vadd.f32 %v3733, %v3821
          %3823 = vmatmul.bf16.gmra.mxu0 %v3011
          %v3824 = vpop.f32.mrf.mxu0
          %v3825 = vadd.f32 %v3736, %v3824
          %v3826 = vpop.f32.mrf.mxu0
          %v3827 = vadd.f32 %v3738, %v3826
          %3828 = vmatmul.bf16.gmra.mxu0 %v3019
          %v3829 = vpop.f32.mrf.mxu0
          %v3830 = vadd.f32 %v3741, %v3829
          %v3831 = vpop.f32.mrf.mxu0
          %v3832 = vadd.f32 %v3743, %v3831
          %3833 = vmatmul.bf16.gmra.mxu0 %v3027
          %v3834 = vpop.f32.mrf.mxu0
          %v3835 = vadd.f32 %v3746, %v3834
          %v3836 = vpop.f32.mrf.mxu0
          %v3837 = vadd.f32 %v3748, %v3836
          %3838 = vmatmul.bf16.gmra.mxu0 %v3035
          %v3839 = vpop.f32.mrf.mxu0
          %v3840 = vadd.f32 %v3751, %v3839
          %v3841 = vpop.f32.mrf.mxu0
          %v3842 = vadd.f32 %v3753, %v3841
          %3843 = vmatmul.bf16.gmra.mxu0 %v3043
          %v3844 = vpop.f32.mrf.mxu0
          %v3845 = vadd.f32 %v3756, %v3844
          %v3846 = vpop.f32.mrf.mxu0
          %v3847 = vadd.f32 %v3758, %v3846
          %3848 = vmatmul.bf16.gmra.mxu0 %v3051
          %v3849 = vpop.f32.mrf.mxu0
          %v3850 = vadd.f32 %v3761, %v3849
          %v3851 = vpop.f32.mrf.mxu0
          %v3852 = vadd.f32 %v3763, %v3851
          %3853 = vmatmul.bf16.gmra.mxu0 %v3059
          %v3854 = vpop.f32.mrf.mxu0
          %v3855 = vadd.f32 %v3766, %v3854
          %v3856 = vpop.f32.mrf.mxu0
          %v3857 = vadd.f32 %v3768, %v3856
          %3858 = vmatmul.bf16.gmra.mxu0 %v3067
          %v3859 = vpop.f32.mrf.mxu0
          %v3860 = vadd.f32 %v3771, %v3859
          %v3861 = vpop.f32.mrf.mxu0
          %v3862 = vadd.f32 %v3773, %v3861
          %3863 = vmatmul.bf16.gmra.mxu0 %v3075
          %v3864 = vpop.f32.mrf.mxu0
          %v3865 = vadd.f32 %v3776, %v3864
          %v3866 = vpop.f32.mrf.mxu0
          %v3867 = vadd.f32 %v3778, %v3866
          %3868 = vmatmul.bf16.gmra.mxu0 %v3083
          %v3869 = vpop.f32.mrf.mxu0
          %v3870 = vadd.f32 %v3781, %v3869
          %v3871 = vpop.f32.mrf.mxu0
          %v3872 = vadd.f32 %v3783, %v3871
          %3873 = vmatmul.bf16.gmra.mxu0 %v3091
          %v3874 = vpop.f32.mrf.mxu0
          %v3875 = vadd.f32 %v3786, %v3874
          %v3876 = vpop.f32.mrf.mxu0
          %v3877 = vadd.f32 %v3788, %v3876
          %3878 = vmatmul.bf16.gmra.mxu0 %v3099
          %v3879 = vpop.f32.mrf.mxu0
          %v3880 = vadd.f32 %v3791, %v3879
          %v3881 = vpop.f32.mrf.mxu0
          %v3882 = vadd.f32 %v3793, %v3881
          %3883 = vdwg.mxu0
          %3884 = vmatpush.bf16.msra.mxu0 %v3520
          %3885 = vmatpush.bf16.msra.mxu0 %v3519
          %3886 = vmatpush.bf16.msra.mxu0 %v3518
          %3887 = vmatpush.bf16.msra.mxu0 %v3517
          %3888 = vmatpush.bf16.msra.mxu0 %v3516
          %3889 = vmatpush.bf16.msra.mxu0 %v3515
          %3890 = vmatpush.bf16.msra.mxu0 %v3514
          %3891 = vmatpush.bf16.msra.mxu0 %v3513
          %3892 = vmatmul.bf16.gmra.mxu0 %v2980
          %v3893 = vpop.f32.mrf.mxu0
          %v3894 = vadd.f32 %v3805, %v3893
          %v3895 = vpop.f32.mrf.mxu0
          %v3896 = vadd.f32 %v3807, %v3895
          %3897 = vmatmul.bf16.gmra.mxu0 %v2988
          %v3898 = vpop.f32.mrf.mxu0
          %v3899 = vadd.f32 %v3810, %v3898
          %v3900 = vpop.f32.mrf.mxu0
          %v3901 = vadd.f32 %v3812, %v3900
          %3902 = vmatmul.bf16.gmra.mxu0 %v2996
          %v3903 = vpop.f32.mrf.mxu0
          %v3904 = vadd.f32 %v3815, %v3903
          %v3905 = vpop.f32.mrf.mxu0
          %v3906 = vadd.f32 %v3817, %v3905
          %3907 = vmatmul.bf16.gmra.mxu0 %v3004
          %v3908 = vpop.f32.mrf.mxu0
          %v3909 = vadd.f32 %v3820, %v3908
          %v3910 = vpop.f32.mrf.mxu0
          %v3911 = vadd.f32 %v3822, %v3910
          %3912 = vmatmul.bf16.gmra.mxu0 %v3012
          %v3913 = vpop.f32.mrf.mxu0
          %v3914 = vadd.f32 %v3825, %v3913
          %v3915 = vpop.f32.mrf.mxu0
          %v3916 = vadd.f32 %v3827, %v3915
          %3917 = vmatmul.bf16.gmra.mxu0 %v3020
          %v3918 = vpop.f32.mrf.mxu0
          %v3919 = vadd.f32 %v3830, %v3918
          %v3920 = vpop.f32.mrf.mxu0
          %v3921 = vadd.f32 %v3832, %v3920
          %3922 = vmatmul.bf16.gmra.mxu0 %v3028
          %v3923 = vpop.f32.mrf.mxu0
          %v3924 = vadd.f32 %v3835, %v3923
          %v3925 = vpop.f32.mrf.mxu0
          %v3926 = vadd.f32 %v3837, %v3925
          %3927 = vmatmul.bf16.gmra.mxu0 %v3036
          %v3928 = vpop.f32.mrf.mxu0
          %v3929 = vadd.f32 %v3840, %v3928
          %v3930 = vpop.f32.mrf.mxu0
          %v3931 = vadd.f32 %v3842, %v3930
          %3932 = vmatmul.bf16.gmra.mxu0 %v3044
          %v3933 = vpop.f32.mrf.mxu0
          %v3934 = vadd.f32 %v3845, %v3933
          %v3935 = vpop.f32.mrf.mxu0
          %v3936 = vadd.f32 %v3847, %v3935
          %3937 = vmatmul.bf16.gmra.mxu0 %v3052
          %v3938 = vpop.f32.mrf.mxu0
          %v3939 = vadd.f32 %v3850, %v3938
          %v3940 = vpop.f32.mrf.mxu0
          %v3941 = vadd.f32 %v3852, %v3940
          %3942 = vmatmul.bf16.gmra.mxu0 %v3060
          %v3943 = vpop.f32.mrf.mxu0
          %v3944 = vadd.f32 %v3855, %v3943
          %v3945 = vpop.f32.mrf.mxu0
          %v3946 = vadd.f32 %v3857, %v3945
          %3947 = vmatmul.bf16.gmra.mxu0 %v3068
          %v3948 = vpop.f32.mrf.mxu0
          %v3949 = vadd.f32 %v3860, %v3948
          %v3950 = vpop.f32.mrf.mxu0
          %v3951 = vadd.f32 %v3862, %v3950
          %3952 = vmatmul.bf16.gmra.mxu0 %v3076
          %v3953 = vpop.f32.mrf.mxu0
          %v3954 = vadd.f32 %v3865, %v3953
          %v3955 = vpop.f32.mrf.mxu0
          %v3956 = vadd.f32 %v3867, %v3955
          %3957 = vmatmul.bf16.gmra.mxu0 %v3084
          %v3958 = vpop.f32.mrf.mxu0
          %v3959 = vadd.f32 %v3870, %v3958
          %v3960 = vpop.f32.mrf.mxu0
          %v3961 = vadd.f32 %v3872, %v3960
          %3962 = vmatmul.bf16.gmra.mxu0 %v3092
          %v3963 = vpop.f32.mrf.mxu0
          %v3964 = vadd.f32 %v3875, %v3963
          %v3965 = vpop.f32.mrf.mxu0
          %v3966 = vadd.f32 %v3877, %v3965
          %3967 = vmatmul.bf16.gmra.mxu0 %v3100
          %v3968 = vpop.f32.mrf.mxu0
          %v3969 = vadd.f32 %v3880, %v3968
          %v3970 = vpop.f32.mrf.mxu0
          %v3971 = vadd.f32 %v3882, %v3970
          %3972 = vdwg.mxu0
          %3973 = vmatpush.bf16.msra.mxu0 %v3528
          %3974 = vmatpush.bf16.msra.mxu0 %v3527
          %3975 = vmatpush.bf16.msra.mxu0 %v3526
          %3976 = vmatpush.bf16.msra.mxu0 %v3525
          %3977 = vmatpush.bf16.msra.mxu0 %v3524
          %3978 = vmatpush.bf16.msra.mxu0 %v3523
          %3979 = vmatpush.bf16.msra.mxu0 %v3522
          %3980 = vmatpush.bf16.msra.mxu0 %v3521
          %3981 = vmatmul.bf16.gmra.mxu0 %v2981
          %v3982 = vpop.f32.mrf.mxu0
          %v3983 = vadd.f32 %v3894, %v3982
          %v3984 = vpop.f32.mrf.mxu0
          %v3985 = vadd.f32 %v3896, %v3984
          %3986 = vmatmul.bf16.gmra.mxu0 %v2989
          %v3987 = vpop.f32.mrf.mxu0
          %v3988 = vadd.f32 %v3899, %v3987
          %v3989 = vpop.f32.mrf.mxu0
          %v3990 = vadd.f32 %v3901, %v3989
          %3991 = vmatmul.bf16.gmra.mxu0 %v2997
          %v3992 = vpop.f32.mrf.mxu0
          %v3993 = vadd.f32 %v3904, %v3992
          %v3994 = vpop.f32.mrf.mxu0
          %v3995 = vadd.f32 %v3906, %v3994
          %3996 = vmatmul.bf16.gmra.mxu0 %v3005
          %v3997 = vpop.f32.mrf.mxu0
          %v3998 = vadd.f32 %v3909, %v3997
          %v3999 = vpop.f32.mrf.mxu0
          %v4000 = vadd.f32 %v3911, %v3999
          %4001 = vmatmul.bf16.gmra.mxu0 %v3013
          %v4002 = vpop.f32.mrf.mxu0
          %v4003 = vadd.f32 %v3914, %v4002
          %v4004 = vpop.f32.mrf.mxu0
          %v4005 = vadd.f32 %v3916, %v4004
          %4006 = vmatmul.bf16.gmra.mxu0 %v3021
          %v4007 = vpop.f32.mrf.mxu0
          %v4008 = vadd.f32 %v3919, %v4007
          %v4009 = vpop.f32.mrf.mxu0
          %v4010 = vadd.f32 %v3921, %v4009
          %4011 = vmatmul.bf16.gmra.mxu0 %v3029
          %v4012 = vpop.f32.mrf.mxu0
          %v4013 = vadd.f32 %v3924, %v4012
          %v4014 = vpop.f32.mrf.mxu0
          %v4015 = vadd.f32 %v3926, %v4014
          %4016 = vmatmul.bf16.gmra.mxu0 %v3037
          %v4017 = vpop.f32.mrf.mxu0
          %v4018 = vadd.f32 %v3929, %v4017
          %v4019 = vpop.f32.mrf.mxu0
          %v4020 = vadd.f32 %v3931, %v4019
          %4021 = vmatmul.bf16.gmra.mxu0 %v3045
          %v4022 = vpop.f32.mrf.mxu0
          %v4023 = vadd.f32 %v3934, %v4022
          %v4024 = vpop.f32.mrf.mxu0
          %v4025 = vadd.f32 %v3936, %v4024
          %4026 = vmatmul.bf16.gmra.mxu0 %v3053
          %v4027 = vpop.f32.mrf.mxu0
          %v4028 = vadd.f32 %v3939, %v4027
          %v4029 = vpop.f32.mrf.mxu0
          %v4030 = vadd.f32 %v3941, %v4029
          %4031 = vmatmul.bf16.gmra.mxu0 %v3061
          %v4032 = vpop.f32.mrf.mxu0
          %v4033 = vadd.f32 %v3944, %v4032
          %v4034 = vpop.f32.mrf.mxu0
          %v4035 = vadd.f32 %v3946, %v4034
          %4036 = vmatmul.bf16.gmra.mxu0 %v3069
          %v4037 = vpop.f32.mrf.mxu0
          %v4038 = vadd.f32 %v3949, %v4037
          %v4039 = vpop.f32.mrf.mxu0
          %v4040 = vadd.f32 %v3951, %v4039
          %4041 = vmatmul.bf16.gmra.mxu0 %v3077
          %v4042 = vpop.f32.mrf.mxu0
          %v4043 = vadd.f32 %v3954, %v4042
          %v4044 = vpop.f32.mrf.mxu0
          %v4045 = vadd.f32 %v3956, %v4044
          %4046 = vmatmul.bf16.gmra.mxu0 %v3085
          %v4047 = vpop.f32.mrf.mxu0
          %v4048 = vadd.f32 %v3959, %v4047
          %v4049 = vpop.f32.mrf.mxu0
          %v4050 = vadd.f32 %v3961, %v4049
          %4051 = vmatmul.bf16.gmra.mxu0 %v3093
          %v4052 = vpop.f32.mrf.mxu0
          %v4053 = vadd.f32 %v3964, %v4052
          %v4054 = vpop.f32.mrf.mxu0
          %v4055 = vadd.f32 %v3966, %v4054
          %4056 = vmatmul.bf16.gmra.mxu0 %v3101
          %v4057 = vpop.f32.mrf.mxu0
          %v4058 = vadd.f32 %v3969, %v4057
          %v4059 = vpop.f32.mrf.mxu0
          %v4060 = vadd.f32 %v3971, %v4059
          %4061 = vdwg.mxu0
          %4062 = vmatpush.bf16.msra.mxu0 %v3536
          %4063 = vmatpush.bf16.msra.mxu0 %v3535
          %4064 = vmatpush.bf16.msra.mxu0 %v3534
          %4065 = vmatpush.bf16.msra.mxu0 %v3533
          %4066 = vmatpush.bf16.msra.mxu0 %v3532
          %4067 = vmatpush.bf16.msra.mxu0 %v3531
          %4068 = vmatpush.bf16.msra.mxu0 %v3530
          %4069 = vmatpush.bf16.msra.mxu0 %v3529
          %4070 = vmatmul.bf16.gmra.mxu0 %v2982
          %v4071 = vpop.f32.mrf.mxu0
          %v4072 = vadd.f32 %v3983, %v4071
          %v4073 = vpop.f32.mrf.mxu0
          %v4074 = vadd.f32 %v3985, %v4073
          %4075 = vmatmul.bf16.gmra.mxu0 %v2990
          %v4076 = vpop.f32.mrf.mxu0
          %v4077 = vadd.f32 %v3988, %v4076
          %v4078 = vpop.f32.mrf.mxu0
          %v4079 = vadd.f32 %v3990, %v4078
          %4080 = vmatmul.bf16.gmra.mxu0 %v2998
          %v4081 = vpop.f32.mrf.mxu0
          %v4082 = vadd.f32 %v3993, %v4081
          %v4083 = vpop.f32.mrf.mxu0
          %v4084 = vadd.f32 %v3995, %v4083
          %4085 = vmatmul.bf16.gmra.mxu0 %v3006
          %v4086 = vpop.f32.mrf.mxu0
          %v4087 = vadd.f32 %v3998, %v4086
          %v4088 = vpop.f32.mrf.mxu0
          %v4089 = vadd.f32 %v4000, %v4088
          %4090 = vmatmul.bf16.gmra.mxu0 %v3014
          %v4091 = vpop.f32.mrf.mxu0
          %v4092 = vadd.f32 %v4003, %v4091
          %v4093 = vpop.f32.mrf.mxu0
          %v4094 = vadd.f32 %v4005, %v4093
          %4095 = vmatmul.bf16.gmra.mxu0 %v3022
          %v4096 = vpop.f32.mrf.mxu0
          %v4097 = vadd.f32 %v4008, %v4096
          %v4098 = vpop.f32.mrf.mxu0
          %v4099 = vadd.f32 %v4010, %v4098
          %4100 = vmatmul.bf16.gmra.mxu0 %v3030
          %v4101 = vpop.f32.mrf.mxu0
          %v4102 = vadd.f32 %v4013, %v4101
          %v4103 = vpop.f32.mrf.mxu0
          %v4104 = vadd.f32 %v4015, %v4103
          %4105 = vmatmul.bf16.gmra.mxu0 %v3038
          %v4106 = vpop.f32.mrf.mxu0
          %v4107 = vadd.f32 %v4018, %v4106
          %v4108 = vpop.f32.mrf.mxu0
          %v4109 = vadd.f32 %v4020, %v4108
          %4110 = vmatmul.bf16.gmra.mxu0 %v3046
          %v4111 = vpop.f32.mrf.mxu0
          %v4112 = vadd.f32 %v4023, %v4111
          %v4113 = vpop.f32.mrf.mxu0
          %v4114 = vadd.f32 %v4025, %v4113
          %4115 = vmatmul.bf16.gmra.mxu0 %v3054
          %v4116 = vpop.f32.mrf.mxu0
          %v4117 = vadd.f32 %v4028, %v4116
          %v4118 = vpop.f32.mrf.mxu0
          %v4119 = vadd.f32 %v4030, %v4118
          %4120 = vmatmul.bf16.gmra.mxu0 %v3062
          %v4121 = vpop.f32.mrf.mxu0
          %v4122 = vadd.f32 %v4033, %v4121
          %v4123 = vpop.f32.mrf.mxu0
          %v4124 = vadd.f32 %v4035, %v4123
          %4125 = vmatmul.bf16.gmra.mxu0 %v3070
          %v4126 = vpop.f32.mrf.mxu0
          %v4127 = vadd.f32 %v4038, %v4126
          %v4128 = vpop.f32.mrf.mxu0
          %v4129 = vadd.f32 %v4040, %v4128
          %4130 = vmatmul.bf16.gmra.mxu0 %v3078
          %v4131 = vpop.f32.mrf.mxu0
          %v4132 = vadd.f32 %v4043, %v4131
          %v4133 = vpop.f32.mrf.mxu0
          %v4134 = vadd.f32 %v4045, %v4133
          %4135 = vmatmul.bf16.gmra.mxu0 %v3086
          %v4136 = vpop.f32.mrf.mxu0
          %v4137 = vadd.f32 %v4048, %v4136
          %v4138 = vpop.f32.mrf.mxu0
          %v4139 = vadd.f32 %v4050, %v4138
          %4140 = vmatmul.bf16.gmra.mxu0 %v3094
          %v4141 = vpop.f32.mrf.mxu0
          %v4142 = vadd.f32 %v4053, %v4141
          %v4143 = vpop.f32.mrf.mxu0
          %v4144 = vadd.f32 %v4055, %v4143
          %4145 = vmatmul.bf16.gmra.mxu0 %v3102
          %v4146 = vpop.f32.mrf.mxu0
          %v4147 = vadd.f32 %v4058, %v4146
          %v4148 = vpop.f32.mrf.mxu0
          %v4149 = vadd.f32 %v4060, %v4148
          %4150 = vdwg.mxu0
          %4151 = vmatpush.bf16.msra.mxu0 %v3544
          %4152 = vmatpush.bf16.msra.mxu0 %v3543
          %4153 = vmatpush.bf16.msra.mxu0 %v3542
          %4154 = vmatpush.bf16.msra.mxu0 %v3541
          %4155 = vmatpush.bf16.msra.mxu0 %v3540
          %4156 = vmatpush.bf16.msra.mxu0 %v3539
          %4157 = vmatpush.bf16.msra.mxu0 %v3538
          %4158 = vmatpush.bf16.msra.mxu0 %v3537
          %4159 = vmatmul.bf16.gmra.mxu0 %v2983
          %v4160 = vpop.f32.mrf.mxu0
          %v4161 = vadd.f32 %v4072, %v4160
          %v4162 = vpop.f32.mrf.mxu0
          %v4163 = vadd.f32 %v4074, %v4162
          %4164 = vmatmul.bf16.gmra.mxu0 %v2991
          %v4165 = vpop.f32.mrf.mxu0
          %v4166 = vadd.f32 %v4077, %v4165
          %v4167 = vpop.f32.mrf.mxu0
          %v4168 = vadd.f32 %v4079, %v4167
          %4169 = vmatmul.bf16.gmra.mxu0 %v2999
          %v4170 = vpop.f32.mrf.mxu0
          %v4171 = vadd.f32 %v4082, %v4170
          %v4172 = vpop.f32.mrf.mxu0
          %v4173 = vadd.f32 %v4084, %v4172
          %4174 = vmatmul.bf16.gmra.mxu0 %v3007
          %v4175 = vpop.f32.mrf.mxu0
          %v4176 = vadd.f32 %v4087, %v4175
          %v4177 = vpop.f32.mrf.mxu0
          %v4178 = vadd.f32 %v4089, %v4177
          %4179 = vmatmul.bf16.gmra.mxu0 %v3015
          %v4180 = vpop.f32.mrf.mxu0
          %v4181 = vadd.f32 %v4092, %v4180
          %v4182 = vpop.f32.mrf.mxu0
          %v4183 = vadd.f32 %v4094, %v4182
          %4184 = vmatmul.bf16.gmra.mxu0 %v3023
          %v4185 = vpop.f32.mrf.mxu0
          %v4186 = vadd.f32 %v4097, %v4185
          %v4187 = vpop.f32.mrf.mxu0
          %v4188 = vadd.f32 %v4099, %v4187
          %4189 = vmatmul.bf16.gmra.mxu0 %v3031
          %v4190 = vpop.f32.mrf.mxu0
          %v4191 = vadd.f32 %v4102, %v4190
          %v4192 = vpop.f32.mrf.mxu0
          %v4193 = vadd.f32 %v4104, %v4192
          %4194 = vmatmul.bf16.gmra.mxu0 %v3039
          %v4195 = vpop.f32.mrf.mxu0
          %v4196 = vadd.f32 %v4107, %v4195
          %v4197 = vpop.f32.mrf.mxu0
          %v4198 = vadd.f32 %v4109, %v4197
          %4199 = vmatmul.bf16.gmra.mxu0 %v3047
          %v4200 = vpop.f32.mrf.mxu0
          %v4201 = vadd.f32 %v4112, %v4200
          %v4202 = vpop.f32.mrf.mxu0
          %v4203 = vadd.f32 %v4114, %v4202
          %4204 = vmatmul.bf16.gmra.mxu0 %v3055
          %v4205 = vpop.f32.mrf.mxu0
          %v4206 = vadd.f32 %v4117, %v4205
          %v4207 = vpop.f32.mrf.mxu0
          %v4208 = vadd.f32 %v4119, %v4207
          %4209 = vmatmul.bf16.gmra.mxu0 %v3063
          %v4210 = vpop.f32.mrf.mxu0
          %v4211 = vadd.f32 %v4122, %v4210
          %v4212 = vpop.f32.mrf.mxu0
          %v4213 = vadd.f32 %v4124, %v4212
          %4214 = vmatmul.bf16.gmra.mxu0 %v3071
          %v4215 = vpop.f32.mrf.mxu0
          %v4216 = vadd.f32 %v4127, %v4215
          %v4217 = vpop.f32.mrf.mxu0
          %v4218 = vadd.f32 %v4129, %v4217
          %4219 = vmatmul.bf16.gmra.mxu0 %v3079
          %v4220 = vpop.f32.mrf.mxu0
          %v4221 = vadd.f32 %v4132, %v4220
          %v4222 = vpop.f32.mrf.mxu0
          %v4223 = vadd.f32 %v4134, %v4222
          %4224 = vmatmul.bf16.gmra.mxu0 %v3087
          %v4225 = vpop.f32.mrf.mxu0
          %v4226 = vadd.f32 %v4137, %v4225
          %v4227 = vpop.f32.mrf.mxu0
          %v4228 = vadd.f32 %v4139, %v4227
          %4229 = vmatmul.bf16.gmra.mxu0 %v3095
          %v4230 = vpop.f32.mrf.mxu0
          %v4231 = vadd.f32 %v4142, %v4230
          %v4232 = vpop.f32.mrf.mxu0
          %v4233 = vadd.f32 %v4144, %v4232
          %4234 = vmatmul.bf16.gmra.mxu0 %v3103
          %v4235 = vpop.f32.mrf.mxu0
          %v4236 = vadd.f32 %v4147, %v4235
          %v4237 = vpop.f32.mrf.mxu0
          %v4238 = vadd.f32 %v4149, %v4237
          %4239 = vdwg.mxu0
          %4240 = vmatpush.bf16.msra.mxu0 %v3552
          %4241 = vmatpush.bf16.msra.mxu0 %v3551
          %4242 = vmatpush.bf16.msra.mxu0 %v3550
          %4243 = vmatpush.bf16.msra.mxu0 %v3549
          %4244 = vmatpush.bf16.msra.mxu0 %v3548
          %4245 = vmatpush.bf16.msra.mxu0 %v3547
          %4246 = vmatpush.bf16.msra.mxu0 %v3546
          %4247 = vmatpush.bf16.msra.mxu0 %v3545
          %4248 = vmatmul.bf16.gmra.mxu0 %v2984
          %v4249 = vpop.f32.mrf.mxu0
          %v4250 = vadd.f32 %v4161, %v4249
          %v4251 = vpop.f32.mrf.mxu0
          %v4252 = vadd.f32 %v4163, %v4251
          %4253 = vmatmul.bf16.gmra.mxu0 %v2992
          %v4254 = vpop.f32.mrf.mxu0
          %v4255 = vadd.f32 %v4166, %v4254
          %v4256 = vpop.f32.mrf.mxu0
          %v4257 = vadd.f32 %v4168, %v4256
          %4258 = vmatmul.bf16.gmra.mxu0 %v3000
          %v4259 = vpop.f32.mrf.mxu0
          %v4260 = vadd.f32 %v4171, %v4259
          %v4261 = vpop.f32.mrf.mxu0
          %v4262 = vadd.f32 %v4173, %v4261
          %4263 = vmatmul.bf16.gmra.mxu0 %v3008
          %v4264 = vpop.f32.mrf.mxu0
          %v4265 = vadd.f32 %v4176, %v4264
          %v4266 = vpop.f32.mrf.mxu0
          %v4267 = vadd.f32 %v4178, %v4266
          %4268 = vmatmul.bf16.gmra.mxu0 %v3016
          %v4269 = vpop.f32.mrf.mxu0
          %v4270 = vadd.f32 %v4181, %v4269
          %v4271 = vpop.f32.mrf.mxu0
          %v4272 = vadd.f32 %v4183, %v4271
          %4273 = vmatmul.bf16.gmra.mxu0 %v3024
          %v4274 = vpop.f32.mrf.mxu0
          %v4275 = vadd.f32 %v4186, %v4274
          %v4276 = vpop.f32.mrf.mxu0
          %v4277 = vadd.f32 %v4188, %v4276
          %4278 = vmatmul.bf16.gmra.mxu0 %v3032
          %v4279 = vpop.f32.mrf.mxu0
          %v4280 = vadd.f32 %v4191, %v4279
          %v4281 = vpop.f32.mrf.mxu0
          %v4282 = vadd.f32 %v4193, %v4281
          %4283 = vmatmul.bf16.gmra.mxu0 %v3040
          %v4284 = vpop.f32.mrf.mxu0
          %v4285 = vadd.f32 %v4196, %v4284
          %v4286 = vpop.f32.mrf.mxu0
          %v4287 = vadd.f32 %v4198, %v4286
          %4288 = vmatmul.bf16.gmra.mxu0 %v3048
          %v4289 = vpop.f32.mrf.mxu0
          %v4290 = vadd.f32 %v4201, %v4289
          %v4291 = vpop.f32.mrf.mxu0
          %v4292 = vadd.f32 %v4203, %v4291
          %4293 = vmatmul.bf16.gmra.mxu0 %v3056
          %v4294 = vpop.f32.mrf.mxu0
          %v4295 = vadd.f32 %v4206, %v4294
          %v4296 = vpop.f32.mrf.mxu0
          %v4297 = vadd.f32 %v4208, %v4296
          %4298 = vmatmul.bf16.gmra.mxu0 %v3064
          %v4299 = vpop.f32.mrf.mxu0
          %v4300 = vadd.f32 %v4211, %v4299
          %v4301 = vpop.f32.mrf.mxu0
          %v4302 = vadd.f32 %v4213, %v4301
          %4303 = vmatmul.bf16.gmra.mxu0 %v3072
          %v4304 = vpop.f32.mrf.mxu0
          %v4305 = vadd.f32 %v4216, %v4304
          %v4306 = vpop.f32.mrf.mxu0
          %v4307 = vadd.f32 %v4218, %v4306
          %4308 = vmatmul.bf16.gmra.mxu0 %v3080
          %v4309 = vpop.f32.mrf.mxu0
          %v4310 = vadd.f32 %v4221, %v4309
          %v4311 = vpop.f32.mrf.mxu0
          %v4312 = vadd.f32 %v4223, %v4311
          %4313 = vmatmul.bf16.gmra.mxu0 %v3088
          %v4314 = vpop.f32.mrf.mxu0
          %v4315 = vadd.f32 %v4226, %v4314
          %v4316 = vpop.f32.mrf.mxu0
          %v4317 = vadd.f32 %v4228, %v4316
          %4318 = vmatmul.bf16.gmra.mxu0 %v3096
          %v4319 = vpop.f32.mrf.mxu0
          %v4320 = vadd.f32 %v4231, %v4319
          %v4321 = vpop.f32.mrf.mxu0
          %v4322 = vadd.f32 %v4233, %v4321
          %4323 = vmatmul.bf16.gmra.mxu0 %v3104
          %v4324 = vpop.f32.mrf.mxu0
          %v4325 = vadd.f32 %v4236, %v4324
          %v4326 = vpop.f32.mrf.mxu0
          %v4327 = vadd.f32 %v4238, %v4326
          %4328 = vdwg.mxu0
          %v4329 = vpack.c.bf16 %v4250, %v4250
          %v4330 = vpack.c.bf16 %v4252, %v4252
          %v4331 = vpack.c.bf16 %v4255, %v4255
          %v4332 = vpack.c.bf16 %v4257, %v4257
          %v4333 = vpack.c.bf16 %v4260, %v4260
          %v4334 = vpack.c.bf16 %v4262, %v4262
          %v4335 = vpack.c.bf16 %v4265, %v4265
          %v4336 = vpack.c.bf16 %v4267, %v4267
          %v4337 = vpack.c.bf16 %v4270, %v4270
          %v4338 = vpack.c.bf16 %v4272, %v4272
          %v4339 = vpack.c.bf16 %v4275, %v4275
          %v4340 = vpack.c.bf16 %v4277, %v4277
          %v4341 = vpack.c.bf16 %v4280, %v4280
          %v4342 = vpack.c.bf16 %v4282, %v4282
          %v4343 = vpack.c.bf16 %v4285, %v4285
          %v4344 = vpack.c.bf16 %v4287, %v4287
          %v4345 = vpack.c.bf16 %v4290, %v4290
          %v4346 = vpack.c.bf16 %v4292, %v4292
          %v4347 = vpack.c.bf16 %v4295, %v4295
          %v4348 = vpack.c.bf16 %v4297, %v4297
          %v4349 = vpack.c.bf16 %v4300, %v4300
          %v4350 = vpack.c.bf16 %v4302, %v4302
          %v4351 = vpack.c.bf16 %v4305, %v4305
          %v4352 = vpack.c.bf16 %v4307, %v4307
          %v4353 = vpack.c.bf16 %v4310, %v4310
          %v4354 = vpack.c.bf16 %v4312, %v4312
          %v4355 = vpack.c.bf16 %v4315, %v4315
          %v4356 = vpack.c.bf16 %v4317, %v4317
          %v4357 = vpack.c.bf16 %v4320, %v4320
          %v4358 = vpack.c.bf16 %v4322, %v4322
          %v4359 = vpack.c.bf16 %v4325, %v4325
          %v4360 = vpack.c.bf16 %v4327, %v4327
          %4361 = vst [vmem:[%s426] sm:$0xf] %v4329
          %4362 = vst [vmem:[%s426 + $0x4] sm:$0xf] %v4330
          %4363 = vst [vmem:[%s426 + $0x8] sm:$0xf] %v4331
          %4364 = vst [vmem:[%s426 + $0xc] sm:$0xf] %v4332
          %4365 = vst [vmem:[%s426 + $0x10] sm:$0xf] %v4333
          %4366 = vst [vmem:[%s426 + $0x14] sm:$0xf] %v4334
          %4367 = vst [vmem:[%s426 + $0x18] sm:$0xf] %v4335
          %4368 = vst [vmem:[%s426 + $0x1c] sm:$0xf] %v4336
          %4369 = vst [vmem:[%s426 + $0x20] sm:$0xf] %v4337
          %4370 = vst [vmem:[%s426 + $0x24] sm:$0xf] %v4338
          %4371 = vst [vmem:[%s426 + $0x28] sm:$0xf] %v4339
          %4372 = vst [vmem:[%s426 + $0x2c] sm:$0xf] %v4340
          %4373 = vst [vmem:[%s426 + $0x30] sm:$0xf] %v4341
          %4374 = vst [vmem:[%s426 + $0x34] sm:$0xf] %v4342
          %4375 = vst [vmem:[%s426 + $0x38] sm:$0xf] %v4343
          %4376 = vst [vmem:[%s426 + $0x3c] sm:$0xf] %v4344
          %4377 = vst [vmem:[%s426 + $0x40] sm:$0xf] %v4345
          %4378 = vst [vmem:[%s426 + $0x44] sm:$0xf] %v4346
          %4379 = vst [vmem:[%s426 + $0x48] sm:$0xf] %v4347
          %4380 = vst [vmem:[%s426 + $0x4c] sm:$0xf] %v4348
          %4381 = vst [vmem:[%s426 + $0x50] sm:$0xf] %v4349
          %4382 = vst [vmem:[%s426 + $0x54] sm:$0xf] %v4350
          %4383 = vst [vmem:[%s426 + $0x58] sm:$0xf] %v4351
          %4384 = vst [vmem:[%s426 + $0x5c] sm:$0xf] %v4352
          %4385 = vst [vmem:[%s426 + $0x60] sm:$0xf] %v4353
          %4386 = vst [vmem:[%s426 + $0x64] sm:$0xf] %v4354
          %4387 = vst [vmem:[%s426 + $0x68] sm:$0xf] %v4355
          %4388 = vst [vmem:[%s426 + $0x6c] sm:$0xf] %v4356
          %4389 = vst [vmem:[%s426 + $0x70] sm:$0xf] %v4357
          %4390 = vst [vmem:[%s426 + $0x74] sm:$0xf] %v4358
          %4391 = vst [vmem:[%s426 + $0x78] sm:$0xf] %v4359
          %4392 = vst [vmem:[%s426 + $0x7c] sm:$0xf] %v4360
        $region68: #{forward.3} parent=39 // pred_fallthru
          _
        %s4393 = smul.u32 32, %s26
        %p4394 = scmp.lt.s32.totalorder %s25, 1
        %s4395 = scalar_select %p4394, %s25, 1
        %p4396 = scmp.lt.s32.totalorder %s4393, 63
        %s4397 = scalar_select %p4396, %s4393, 63
        %s4398 = smul.addr %s4395, 64
        %s4399 = sadd.s32 %s4397, %s4398
        %s4400 = smul.addr %s4399, 4
        %s4401 = scalar_lea.vmem %s5, %s4400
        // Predicated region
        $region69: #{forward.3} parent=39 // pred_check
          %p4402 = pneg %p193
        $region70: #{forward.3} parent=39 // pred_check_branch
          %4404 = sbr.rel (%p4402) target = $region72
        $region71: #{forward.3} parent=39 // pred_region
          %s4405 = smul.u32 32, %s26
        $region72: #{forward.3} parent=39 // pred_fallthru
          _
      $region40: #{forward.3} parent=5 // pred_fallthru
        _
      %p4406 = scmp.le.s32.totalorder 2, %s15
      // Predicated region
      $region73: #{forward.3} parent=5 // pred_check
        %p4407 = pneg %p4406
      $region74: #{forward.3} parent=5 // pred_check_branch
        %4409 = sbr.rel (%p4407) target = $region76
      $region75: #{forward.3} parent=5 // pred_region
        %s4410 = ssub.s32 %s15, 2
        // Predicated region
        $region77: #{forward.3} parent=75 // pred_check
          %p4411 = pneg %p199
        $region78: #{forward.3} parent=75 // pred_check_branch
          %4413 = sbr.rel (%p4411) target = $region80
        $region79: #{forward.3} parent=75 // pred_region
          %s4414 = smul.u32 32, %s29
          %p4415 = scmp.lt.s32.totalorder %s28, 1
          %s4416 = scalar_select %p4415, %s28, 1
          %p4417 = scmp.lt.s32.totalorder %s4414, 63
          %s4418 = scalar_select %p4417, %s4414, 63
          %s4419 = smul.addr %s4416, 64
          %s4420 = sadd.s32 %s4418, %s4419
          %s4421 = smul.addr %s4420, 4
          %s4422 = scalar_lea.vmem %s5, %s4421
        $region80: #{forward.3} parent=75 // pred_fallthru
          _
      $region76: #{forward.3} parent=5 // pred_fallthru
        _
    $region6: #{forward.3} parent=1 // loop_footer
      %s19 = sadd.s32 1, %s15
    $region7: #{forward.3} parent=1 // loop_footer_branch
      %14 = sbr.rel target = $region3
    $region8: #{forward.3} parent=1 // loop_exit
      _
    %4423 = vsyncpa [#allocation4], 1
    %s4424 = scalar_lea.sflag [#allocation4], 1
    %4425 = vsyncpa %s4424, 1
    %4426 = vsyncpa [#allocation6], 1

</llo_original>
